<compile_context>
chip_gen: v7x
topology: tpu7x:2x2x1
jax: 0.10.0
libtpu: 0.0.40
codegen_flags: <defaults>
</compile_context>

<pallas_src>
import math

import jax
import jax.numpy as jnp
from jax import lax
from jax.experimental import pallas as pl
from jax.experimental.pallas import tpu as pltpu

VOCAB = 1400          # hard-coded in the PyTorch module (nn.Embedding(1400, input_size))
B = 2
SEQ = 8
HIDDEN = 32           # input_size == hidden_size (required by RETAIN.compute)
NUM_CLASSES = 4

_VMEM = pl.BlockSpec(memory_space=pltpu.MemorySpace.VMEM)


# ----------------------------------------------------------------------------
# Fused kernel: embedding -> 2x BiLSTM -> attention -> output head
#   x_ref      : (b, seq, VOCAB)   multi-hot visit vectors
#   wbig_ref   : (VOCAB, 4*4H + H) columns = [rnn1_fwd | rnn1_bwd | rnn2_fwd | rnn2_bwd | emb2]
#                (each 4H=128 gate block already contains emb1 @ Wih, gates packed i|f|g|o)
#   bias_ref   : (1, 4*4H)         packed b_ih + b_hh per direction/gate
#   whh_ref    : (4, H, 4H)        recurrent weights per direction, gates packed i|f|g|o
#   wa_ref     : (2H, 1), wb_ref : (2H, H), wout_ref : (H, C)
#   logits_ref : (b, C)
#   hbuf_ref   : VMEM scratch (b, seq, 4H)  columns = [h1f | h1r | h2f | h2r]
# ----------------------------------------------------------------------------
def retain_kernel(x_ref, wbig_ref, bias_ref, whh_ref, wa_ref, wb_ref, wout_ref,
                  logits_ref, hbuf_ref):
    b, seq, vocab = x_ref.shape
    H = whh_ref.shape[1]
    G = 4 * H                                   # 128 = packed gate width per direction

    # ---- one wide input projection (embedding + all input-to-hidden matmuls) ----
    x = x_ref[...].reshape(b * seq, vocab)                  # batch-major rows (bi, t)
    proj = jnp.dot(x, wbig_ref[...], preferred_element_type=jnp.float32)   # (b*seq, 4G+H)
    gates_in = proj[:, :4 * G] + bias_ref[...]              # (b*seq, 512)  bias added once
    e2 = proj[:, 4 * G:]                                    # (b*seq, H)    embedded2
    gates_in = gates_in.reshape(b, seq, 4 * G)

    whh = whh_ref[...]                                      # (4, H, 4H)

    def cell(d, t, h_d, c_d):
        z = gates_in[:, t, d * G:(d + 1) * G] + jnp.dot(
            h_d, whh[d], preferred_element_type=jnp.float32)               # (b, 128)
        i = jax.nn.sigmoid(z[:, 0:H])
        f = jax.nn.sigmoid(z[:, H:2 * H])
        g = jnp.tanh(z[:, 2 * H:3 * H])
        o = jax.nn.sigmoid(z[:, 3 * H:4 * H])
        c_new = f * c_d + i * g
        h_new = o * jnp.tanh(c_new)
        return h_new, c_new

    # ---- recurrence, fully unrolled over the compile-time seq ----
    # directions: 0 = rnn1 fwd, 1 = rnn1 bwd, 2 = rnn2 fwd, 3 = rnn2 bwd
    h = [jnp.zeros((b, H), jnp.float32) for _ in range(4)]
    c = [jnp.zeros((b, H), jnp.float32) for _ in range(4)]
    for s in range(seq):
        tr = seq - 1 - s
        for d, t in ((0, s), (1, tr), (2, s), (3, tr)):
            h[d], c[d] = cell(d, t, h[d], c[d])
            hbuf_ref[:, t, d * H:(d + 1) * H] = h[d]

    # ---- attention + output head (vectorized over batch*seq) ----
    hall = hbuf_ref[...].reshape(b * seq, 4 * H)            # batch-major (bi, t)
    out1 = hall[:, 0:2 * H]                                 # [h1f | h1r]
    out2 = hall[:, 2 * H:4 * H]                             # [h2f | h2r]

    E = jnp.dot(out1, wa_ref[...], preferred_element_type=jnp.float32)     # (b*seq, 1)
    E = E.reshape(b, seq, 1)
    E = E - jnp.max(E, axis=1, keepdims=True)
    ex = jnp.exp(E)
    alpha = ex / jnp.sum(ex, axis=1, keepdims=True)         # (b, seq, 1) softmax over seq

    beta = jnp.tanh(jnp.dot(out2, wb_ref[...],
                            preferred_element_type=jnp.float32))           # (b*seq, H)

    weighted = e2 * beta * alpha.reshape(b * seq, 1)
    ctx = jnp.sum(weighted.reshape(b, seq, H), axis=1)      # (b, H)
    logits_ref[...] = jnp.dot(ctx, wout_ref[...],
                              preferred_element_type=jnp.float32)


# ----------------------------------------------------------------------------
# One-time parameter packing (fold emb1 into the LSTM input weights, pack gates)
# ----------------------------------------------------------------------------
def pack_params(params):
    hp = lax.Precision.HIGHEST

    def pack_dir(emb1, wih, whh, bias):
        # wih/whh: (4, D, H) gate order i, f, g, o ; bias: (4, 1, H) (= b_ih + b_hh)
        wih_cat = jnp.concatenate([wih[k] for k in range(4)], axis=1)   # (D, 4H)
        folded = jnp.dot(emb1, wih_cat, precision=hp)                    # (VOCAB, 4H)
        whh_cat = jnp.concatenate([whh[k] for k in range(4)], axis=1)    # (H, 4H)
        b_cat = jnp.concatenate([bias[k] for k in range(4)], axis=1)     # (1, 4H)
        return folded, whh_cat, b_cat

    folds, whhs, biases = [], [], []
    for rnn in ("rnn1", "rnn2"):
        p = params[rnn]
        for sfx in ("f", "r"):
            f_, w_, b_ = pack_dir(params["emb1"], p[f"wih_{sfx}"],
                                  p[f"whh_{sfx}"], p[f"b_{sfx}"])
            folds.append(f_)
            whhs.append(w_)
            biases.append(b_)

    return {
        "wbig": jnp.concatenate(folds + [params["emb2"]], axis=1),  # (VOCAB, 4*4H + H)
        "bias": jnp.concatenate(biases, axis=1),                    # (1, 4*4H)
        "whh": jnp.stack(whhs, axis=0),                             # (4, H, 4H)
        "wa": params["wa"],
        "wb": params["wb"],
        "wout": params["wout"],
    }


# ----------------------------------------------------------------------------
# Wrapper: one fused pallas_call, everything whole-array in VMEM (no grid)
# ----------------------------------------------------------------------------
def retain_forward(packed, inputs, timestamps=None):
    # timestamps unused for decay_ver == 1 (matches the PyTorch forward).
    del timestamps
    b, seq, _ = inputs.shape
    H = HIDDEN
    return pl.pallas_call(
        retain_kernel,
        out_shape=jax.ShapeDtypeStruct((b, NUM_CLASSES), jnp.float32),
        in_specs=[_VMEM] * 7,
        out_specs=_VMEM,
        scratch_shapes=[pltpu.VMEM((b, seq, 4 * H), jnp.float32)],
    )(inputs, packed["wbig"], packed["bias"], packed["whh"],
      packed["wa"], packed["wb"], packed["wout"])


# ----------------------------------------------------------------------------
# Deterministic parameter init (shapes per RETAIN.__init__, PyTorch layout)
# ----------------------------------------------------------------------------
def init_params(key):
    H = HIDDEN
    s = 1.0 / math.sqrt(H)

    def uni(k, shape, scale):
        return jax.random.uniform(k, shape, jnp.float32, -scale, scale)

    def lstm_dir(k, in_dim):
        k1, k2, k3, k4 = jax.random.split(k, 4)
        wih = uni(k1, (4, in_dim, H), s)        # gate order i, f, g, o
        whh = uni(k2, (4, H, H), s)
        bias = uni(k3, (4, 1, H), s) + uni(k4, (4, 1, H), s)  # b_ih + b_hh
        return wih, whh, bias

    ks = jax.random.split(key, 8)
    params = {
        "emb1": jax.random.normal(ks[0], (VOCAB, H), jnp.float32) * 0.1,
        "emb2": jax.random.normal(ks[1], (VOCAB, H), jnp.float32) * 0.1,
        "wa":   uni(ks[4], (2 * H, 1), 1.0 / math.sqrt(2 * H)),
        "wb":   uni(ks[5], (2 * H, H), 1.0 / math.sqrt(2 * H)),
        "wout": uni(ks[6], (H, NUM_CLASSES), s),
    }
    for name, kb in (("rnn1", ks[2]), ("rnn2", ks[3])):
        kf, kr = jax.random.split(kb)
        wih_f, whh_f, b_f = lstm_dir(kf, H)
        wih_r, whh_r, b_r = lstm_dir(kr, H)
        params[name] = dict(wih_f=wih_f, whh_f=whh_f, b_f=b_f,
                            wih_r=wih_r, whh_r=whh_r, b_r=b_r)
    return params


# ----------------------------------------------------------------------------
# Pure-JAX reference (same math, unpacked weights) for a sanity check
# ----------------------------------------------------------------------------
def _bilstm_ref(x, p):  # x: (b, seq, D)
    H = p["whh_f"].shape[1]

    def run(x_seq, wih, whh, bias):  # x_seq: (seq, b, D)
        def cell(carry, x_t):
            h, c = carry
            i = jax.nn.sigmoid(x_t @ wih[0] + h @ whh[0] + bias[0])
            f = jax.nn.sigmoid(x_t @ wih[1] + h @ whh[1] + bias[1])
            g = jnp.tanh(x_t @ wih[2] + h @ whh[2] + bias[2])
            o = jax.nn.sigmoid(x_t @ wih[3] + h @ whh[3] + bias[3])
            c = f * c + i * g
            h = o * jnp.tanh(c)
            return (h, c), h

        z = jnp.zeros((x_seq.shape[1], H), jnp.float32)
        _, hs = lax.scan(cell, (z, z), x_seq)
        return hs  # (seq, b, H)

    x_sbd = jnp.transpose(x, (1, 0, 2))
    out_f = run(x_sbd, p["wih_f"], p["whh_f"], p["b_f"])
    out_r = run(x_sbd[::-1], p["wih_r"], p["whh_r"], p["b_r"])[::-1]
    return jnp.transpose(jnp.concatenate([out_f, out_r], axis=-1), (1, 0, 2))


def retain_ref(params, inputs):
    with jax.default_matmul_precision("float32"):
        b, seq, feat = inputs.shape
        H = HIDDEN
        x2d = inputs.reshape(b * seq, feat)
        e1 = (x2d @ params["emb1"]).reshape(b, seq, H)
        e2 = (x2d @ params["emb2"]).reshape(b, seq, H)
        out1 = _bilstm_ref(e1, params["rnn1"])
        out2 = _bilstm_ref(e1, params["rnn2"])
        E = (out1.reshape(b * seq, 2 * H) @ params["wa"]).reshape(b, seq)
        alpha = jax.nn.softmax(E, axis=1)
        beta = jnp.tanh(out2.reshape(b * seq, 2 * H) @ params["wb"]).reshape(b, seq, H)
        ctx = jnp.sum(e2 * beta * alpha[:, :, None], axis=1)
        return ctx @ params["wout"]


# ----------------------------------------------------------------------------
if __name__ == "__main__":
    key = jax.random.PRNGKey(0)
    k_p, k_x = jax.random.split(key)
    params = init_params(k_p)
    packed = pack_params(params)          # one-time weight folding / gate packing

    # multi-hot visit vectors (like list_to_tensor would produce)
    inputs = (jax.random.uniform(k_x, (B, SEQ, VOCAB)) < 0.01).astype(jnp.float32)
    timestamps = jnp.tile(jnp.arange(1, SEQ + 1, dtype=jnp.float32)[None, :], (B, 1))

    logits = jax.jit(retain_forward)(packed, inputs, timestamps)
    logits = jax.block_until_ready(logits)

    ref = jax.block_until_ready(retain_ref(params, inputs))
    assert logits.shape == (B, NUM_CLASSES)
    assert jnp.allclose(logits, ref, rtol=2e-3, atol=2e-3), (logits, ref)

    print("KERNEL_OK")
</pallas_src>

<mosaic_0001>
module attributes {stable_mosaic.version = 11 : i64} {
  func.func @retain_kernel(%arg0: memref<2x8x1400xf32, #tpu.memory_space<vmem>>, %arg1: memref<1400x544xf32, #tpu.memory_space<vmem>>, %arg2: memref<1x512xf32, #tpu.memory_space<vmem>>, %arg3: memref<4x32x128xf32, #tpu.memory_space<vmem>>, %arg4: memref<64x1xf32, #tpu.memory_space<vmem>>, %arg5: memref<64x32xf32, #tpu.memory_space<vmem>>, %arg6: memref<32x4xf32, #tpu.memory_space<vmem>>, %arg7: memref<2x4xf32, #tpu.memory_space<vmem>>, %arg8: memref<2x8x128xf32, #tpu.memory_space<vmem>>) attributes {dimension_semantics = [], scalar_prefetch = 0 : i64, scratch_operands = 1 : i64, tpu.core_type = #tpu.core_type<tc>} {
    %c0 = arith.constant 0 : index
    %c0_0 = arith.constant 0 : index
    %c0_1 = arith.constant 0 : index
    %0 = vector.load %arg0[%c0, %c0_0, %c0_1] : memref<2x8x1400xf32, #tpu.memory_space<vmem>>, vector<2x8x1400xf32>
    %1 = vector.shape_cast %0 : vector<2x8x1400xf32> to vector<16x1400xf32>
    %c0_2 = arith.constant 0 : index
    %c0_3 = arith.constant 0 : index
    %2 = vector.load %arg1[%c0_2, %c0_3] : memref<1400x544xf32, #tpu.memory_space<vmem>>, vector<1400x544xf32>
    %cst = arith.constant dense<0.000000e+00> : vector<16x544xf32>
    %3 = tpu.matmul %1, %2, %cst {dimension_numbers = #tpu.dot_dimension_numbers<[1], [0], [0], [1], [0, 0, 1, 1], [], []>} : vector<16x1400xf32>, vector<1400x544xf32>, vector<16x544xf32> -> vector<16x544xf32>
    %4 = vector.extract_strided_slice %3 {offsets = [0, 0], sizes = [16, 512], strides = [1, 1]} : vector<16x544xf32> to vector<16x512xf32>
    %c0_4 = arith.constant 0 : index
    %c0_5 = arith.constant 0 : index
    %5 = vector.load %arg2[%c0_4, %c0_5] : memref<1x512xf32, #tpu.memory_space<vmem>>, vector<1x512xf32>
    %6 = vector.broadcast %5 : vector<1x512xf32> to vector<16x512xf32>
    %7 = arith.addf %4, %6 : vector<16x512xf32>
    %8 = vector.extract_strided_slice %3 {offsets = [0, 512], sizes = [16, 32], strides = [1, 1]} : vector<16x544xf32> to vector<16x32xf32>
    %9 = vector.shape_cast %7 : vector<16x512xf32> to vector<2x8x512xf32>
    %c0_6 = arith.constant 0 : index
    %c0_7 = arith.constant 0 : index
    %c0_8 = arith.constant 0 : index
    %10 = vector.load %arg3[%c0_6, %c0_7, %c0_8] : memref<4x32x128xf32, #tpu.memory_space<vmem>>, vector<4x32x128xf32>
    %cst_9 = arith.constant 0.000000e+00 : f32
    %11 = vector.broadcast %cst_9 : f32 to vector<2x32xf32>
    %cst_10 = arith.constant 0.000000e+00 : f32
    %12 = vector.broadcast %cst_10 : f32 to vector<2x32xf32>
    %cst_11 = arith.constant 0.000000e+00 : f32
    %13 = vector.broadcast %cst_11 : f32 to vector<2x32xf32>
    %cst_12 = arith.constant 0.000000e+00 : f32
    %14 = vector.broadcast %cst_12 : f32 to vector<2x32xf32>
    %cst_13 = arith.constant 0.000000e+00 : f32
    %15 = vector.broadcast %cst_13 : f32 to vector<2x32xf32>
    %cst_14 = arith.constant 0.000000e+00 : f32
    %16 = vector.broadcast %cst_14 : f32 to vector<2x32xf32>
    %cst_15 = arith.constant 0.000000e+00 : f32
    %17 = vector.broadcast %cst_15 : f32 to vector<2x32xf32>
    %cst_16 = arith.constant 0.000000e+00 : f32
    %18 = vector.broadcast %cst_16 : f32 to vector<2x32xf32>
    %19 = vector.extract_strided_slice %9 {offsets = [0, 0, 0], sizes = [2, 1, 128], strides = [1, 1, 1]} : vector<2x8x512xf32> to vector<2x1x128xf32>
    %20 = vector.shape_cast %19 : vector<2x1x128xf32> to vector<2x128xf32>
    %21 = vector.extract_strided_slice %10 {offsets = [0, 0, 0], sizes = [1, 32, 128], strides = [1, 1, 1]} : vector<4x32x128xf32> to vector<1x32x128xf32>
    %22 = vector.shape_cast %21 : vector<1x32x128xf32> to vector<32x128xf32>
    %cst_17 = arith.constant dense<0.000000e+00> : vector<2x128xf32>
    %23 = tpu.matmul %11, %22, %cst_17 {dimension_numbers = #tpu.dot_dimension_numbers<[1], [0], [0], [1], [0, 0, 1, 1], [], []>} : vector<2x32xf32>, vector<32x128xf32>, vector<2x128xf32> -> vector<2x128xf32>
    %24 = arith.addf %20, %23 : vector<2x128xf32>
    %25 = vector.extract_strided_slice %24 {offsets = [0, 0], sizes = [2, 32], strides = [1, 1]} : vector<2x128xf32> to vector<2x32xf32>
    %26 = arith.negf %25 : vector<2x32xf32>
    %27 = math.exp %26 : vector<2x32xf32>
    %cst_18 = arith.constant 1.000000e+00 : f32
    %28 = vector.broadcast %cst_18 : f32 to vector<2x32xf32>
    %29 = arith.addf %28, %27 : vector<2x32xf32>
    %30 = arith.divf %28, %29 : vector<2x32xf32>
    %31 = vector.extract_strided_slice %24 {offsets = [0, 32], sizes = [2, 32], strides = [1, 1]} : vector<2x128xf32> to vector<2x32xf32>
    %32 = arith.negf %31 : vector<2x32xf32>
    %33 = math.exp %32 : vector<2x32xf32>
    %cst_19 = arith.constant 1.000000e+00 : f32
    %34 = vector.broadcast %cst_19 : f32 to vector<2x32xf32>
    %35 = arith.addf %34, %33 : vector<2x32xf32>
    %36 = arith.divf %34, %35 : vector<2x32xf32>
    %37 = vector.extract_strided_slice %24 {offsets = [0, 64], sizes = [2, 32], strides = [1, 1]} : vector<2x128xf32> to vector<2x32xf32>
    %38 = math.tanh %37 : vector<2x32xf32>
    %39 = vector.extract_strided_slice %24 {offsets = [0, 96], sizes = [2, 32], strides = [1, 1]} : vector<2x128xf32> to vector<2x32xf32>
    %40 = arith.negf %39 : vector<2x32xf32>
    %41 = math.exp %40 : vector<2x32xf32>
    %cst_20 = arith.constant 1.000000e+00 : f32
    %42 = vector.broadcast %cst_20 : f32 to vector<2x32xf32>
    %43 = arith.addf %42, %41 : vector<2x32xf32>
    %44 = arith.divf %42, %43 : vector<2x32xf32>
    %45 = arith.mulf %36, %15 : vector<2x32xf32>
    %46 = arith.mulf %30, %38 : vector<2x32xf32>
    %47 = arith.addf %45, %46 : vector<2x32xf32>
    %48 = math.tanh %47 : vector<2x32xf32>
    %49 = arith.mulf %44, %48 : vector<2x32xf32>
    %c0_21 = arith.constant 0 : index
    %c0_22 = arith.constant 0 : index
    %c0_23 = arith.constant 0 : index
    %50 = vector.load %arg8[%c0_21, %c0_22, %c0_23] : memref<2x8x128xf32, #tpu.memory_space<vmem>>, vector<2x1x32xf32>
    %51 = vector.shape_cast %50 : vector<2x1x32xf32> to vector<2x32xf32>
    %52 = vector.shape_cast %49 : vector<2x32xf32> to vector<2x1x32xf32>
    tpu.vector_store %arg8[%c0_21, %c0_22, %c0_23], %52 {strides = array<i32>} : memref<2x8x128xf32, #tpu.memory_space<vmem>>, vector<2x1x32xf32>,
    %53 = vector.extract_strided_slice %9 {offsets = [0, 7, 128], sizes = [2, 1, 128], strides = [1, 1, 1]} : vector<2x8x512xf32> to vector<2x1x128xf32>
    %54 = vector.shape_cast %53 : vector<2x1x128xf32> to vector<2x128xf32>
    %55 = vector.extract_strided_slice %10 {offsets = [1, 0, 0], sizes = [1, 32, 128], strides = [1, 1, 1]} : vector<4x32x128xf32> to vector<1x32x128xf32>
    %56 = vector.shape_cast %55 : vector<1x32x128xf32> to vector<32x128xf32>
    %cst_24 = arith.constant dense<0.000000e+00> : vector<2x128xf32>
    %57 = tpu.matmul %12, %56, %cst_24 {dimension_numbers = #tpu.dot_dimension_numbers<[1], [0], [0], [1], [0, 0, 1, 1], [], []>} : vector<2x32xf32>, vector<32x128xf32>, vector<2x128xf32> -> vector<2x128xf32>
    %58 = arith.addf %54, %57 : vector<2x128xf32>
    %59 = vector.extract_strided_slice %58 {offsets = [0, 0], sizes = [2, 32], strides = [1, 1]} : vector<2x128xf32> to vector<2x32xf32>
    %60 = arith.negf %59 : vector<2x32xf32>
    %61 = math.exp %60 : vector<2x32xf32>
    %cst_25 = arith.constant 1.000000e+00 : f32
    %62 = vector.broadcast %cst_25 : f32 to vector<2x32xf32>
    %63 = arith.addf %62, %61 : vector<2x32xf32>
    %64 = arith.divf %62, %63 : vector<2x32xf32>
    %65 = vector.extract_strided_slice %58 {offsets = [0, 32], sizes = [2, 32], strides = [1, 1]} : vector<2x128xf32> to vector<2x32xf32>
    %66 = arith.negf %65 : vector<2x32xf32>
    %67 = math.exp %66 : vector<2x32xf32>
    %cst_26 = arith.constant 1.000000e+00 : f32
    %68 = vector.broadcast %cst_26 : f32 to vector<2x32xf32>
    %69 = arith.addf %68, %67 : vector<2x32xf32>
    %70 = arith.divf %68, %69 : vector<2x32xf32>
    %71 = vector.extract_strided_slice %58 {offsets = [0, 64], sizes = [2, 32], strides = [1, 1]} : vector<2x128xf32> to vector<2x32xf32>
    %72 = math.tanh %71 : vector<2x32xf32>
    %73 = vector.extract_strided_slice %58 {offsets = [0, 96], sizes = [2, 32], strides = [1, 1]} : vector<2x128xf32> to vector<2x32xf32>
    %74 = arith.negf %73 : vector<2x32xf32>
    %75 = math.exp %74 : vector<2x32xf32>
    %cst_27 = arith.constant 1.000000e+00 : f32
    %76 = vector.broadcast %cst_27 : f32 to vector<2x32xf32>
    %77 = arith.addf %76, %75 : vector<2x32xf32>
    %78 = arith.divf %76, %77 : vector<2x32xf32>
    %79 = arith.mulf %70, %16 : vector<2x32xf32>
    %80 = arith.mulf %64, %72 : vector<2x32xf32>
    %81 = arith.addf %79, %80 : vector<2x32xf32>
    %82 = math.tanh %81 : vector<2x32xf32>
    %83 = arith.mulf %78, %82 : vector<2x32xf32>
    %c0_28 = arith.constant 0 : index
    %c7 = arith.constant 7 : index
    %c32 = arith.constant 32 : index
    %84 = vector.load %arg8[%c0_28, %c7, %c32] : memref<2x8x128xf32, #tpu.memory_space<vmem>>, vector<2x1x32xf32>
    %85 = vector.shape_cast %84 : vector<2x1x32xf32> to vector<2x32xf32>
    %86 = vector.shape_cast %83 : vector<2x32xf32> to vector<2x1x32xf32>
    tpu.vector_store %arg8[%c0_28, %c7, %c32], %86 {strides = array<i32>} : memref<2x8x128xf32, #tpu.memory_space<vmem>>, vector<2x1x32xf32>,
    %87 = vector.extract_strided_slice %9 {offsets = [0, 0, 256], sizes = [2, 1, 128], strides = [1, 1, 1]} : vector<2x8x512xf32> to vector<2x1x128xf32>
    %88 = vector.shape_cast %87 : vector<2x1x128xf32> to vector<2x128xf32>
    %89 = vector.extract_strided_slice %10 {offsets = [2, 0, 0], sizes = [1, 32, 128], strides = [1, 1, 1]} : vector<4x32x128xf32> to vector<1x32x128xf32>
    %90 = vector.shape_cast %89 : vector<1x32x128xf32> to vector<32x128xf32>
    %cst_29 = arith.constant dense<0.000000e+00> : vector<2x128xf32>
    %91 = tpu.matmul %13, %90, %cst_29 {dimension_numbers = #tpu.dot_dimension_numbers<[1], [0], [0], [1], [0, 0, 1, 1], [], []>} : vector<2x32xf32>, vector<32x128xf32>, vector<2x128xf32> -> vector<2x128xf32>
    %92 = arith.addf %88, %91 : vector<2x128xf32>
    %93 = vector.extract_strided_slice %92 {offsets = [0, 0], sizes = [2, 32], strides = [1, 1]} : vector<2x128xf32> to vector<2x32xf32>
    %94 = arith.negf %93 : vector<2x32xf32>
    %95 = math.exp %94 : vector<2x32xf32>
    %cst_30 = arith.constant 1.000000e+00 : f32
    %96 = vector.broadcast %cst_30 : f32 to vector<2x32xf32>
    %97 = arith.addf %96, %95 : vector<2x32xf32>
    %98 = arith.divf %96, %97 : vector<2x32xf32>
    %99 = vector.extract_strided_slice %92 {offsets = [0, 32], sizes = [2, 32], strides = [1, 1]} : vector<2x128xf32> to vector<2x32xf32>
    %100 = arith.negf %99 : vector<2x32xf32>
    %101 = math.exp %100 : vector<2x32xf32>
    %cst_31 = arith.constant 1.000000e+00 : f32
    %102 = vector.broadcast %cst_31 : f32 to vector<2x32xf32>
    %103 = arith.addf %102, %101 : vector<2x32xf32>
    %104 = arith.divf %102, %103 : vector<2x32xf32>
    %105 = vector.extract_strided_slice %92 {offsets = [0, 64], sizes = [2, 32], strides = [1, 1]} : vector<2x128xf32> to vector<2x32xf32>
    %106 = math.tanh %105 : vector<2x32xf32>
    %107 = vector.extract_strided_slice %92 {offsets = [0, 96], sizes = [2, 32], strides = [1, 1]} : vector<2x128xf32> to vector<2x32xf32>
    %108 = arith.negf %107 : vector<2x32xf32>
    %109 = math.exp %108 : vector<2x32xf32>
    %cst_32 = arith.constant 1.000000e+00 : f32
    %110 = vector.broadcast %cst_32 : f32 to vector<2x32xf32>
    %111 = arith.addf %110, %109 : vector<2x32xf32>
    %112 = arith.divf %110, %111 : vector<2x32xf32>
    %113 = arith.mulf %104, %17 : vector<2x32xf32>
    %114 = arith.mulf %98, %106 : vector<2x32xf32>
    %115 = arith.addf %113, %114 : vector<2x32xf32>
    %116 = math.tanh %115 : vector<2x32xf32>
    %117 = arith.mulf %112, %116 : vector<2x32xf32>
    %c0_33 = arith.constant 0 : index
    %c0_34 = arith.constant 0 : index
    %c64 = arith.constant 64 : index
    %118 = vector.load %arg8[%c0_33, %c0_34, %c64] : memref<2x8x128xf32, #tpu.memory_space<vmem>>, vector<2x1x32xf32>
    %119 = vector.shape_cast %118 : vector<2x1x32xf32> to vector<2x32xf32>
    %120 = vector.shape_cast %117 : vector<2x32xf32> to vector<2x1x32xf32>
    tpu.vector_store %arg8[%c0_33, %c0_34, %c64], %120 {strides = array<i32>} : memref<2x8x128xf32, #tpu.memory_space<vmem>>, vector<2x1x32xf32>,
    %121 = vector.extract_strided_slice %9 {offsets = [0, 7, 384], sizes = [2, 1, 128], strides = [1, 1, 1]} : vector<2x8x512xf32> to vector<2x1x128xf32>
    %122 = vector.shape_cast %121 : vector<2x1x128xf32> to vector<2x128xf32>
    %123 = vector.extract_strided_slice %10 {offsets = [3, 0, 0], sizes = [1, 32, 128], strides = [1, 1, 1]} : vector<4x32x128xf32> to vector<1x32x128xf32>
    %124 = vector.shape_cast %123 : vector<1x32x128xf32> to vector<32x128xf32>
    %cst_35 = arith.constant dense<0.000000e+00> : vector<2x128xf32>
    %125 = tpu.matmul %14, %124, %cst_35 {dimension_numbers = #tpu.dot_dimension_numbers<[1], [0], [0], [1], [0, 0, 1, 1], [], []>} : vector<2x32xf32>, vector<32x128xf32>, vector<2x128xf32> -> vector<2x128xf32>
    %126 = arith.addf %122, %125 : vector<2x128xf32>
    %127 = vector.extract_strided_slice %126 {offsets = [0, 0], sizes = [2, 32], strides = [1, 1]} : vector<2x128xf32> to vector<2x32xf32>
    %128 = arith.negf %127 : vector<2x32xf32>
    %129 = math.exp %128 : vector<2x32xf32>
    %cst_36 = arith.constant 1.000000e+00 : f32
    %130 = vector.broadcast %cst_36 : f32 to vector<2x32xf32>
    %131 = arith.addf %130, %129 : vector<2x32xf32>
    %132 = arith.divf %130, %131 : vector<2x32xf32>
    %133 = vector.extract_strided_slice %126 {offsets = [0, 32], sizes = [2, 32], strides = [1, 1]} : vector<2x128xf32> to vector<2x32xf32>
    %134 = arith.negf %133 : vector<2x32xf32>
    %135 = math.exp %134 : vector<2x32xf32>
    %cst_37 = arith.constant 1.000000e+00 : f32
    %136 = vector.broadcast %cst_37 : f32 to vector<2x32xf32>
    %137 = arith.addf %136, %135 : vector<2x32xf32>
    %138 = arith.divf %136, %137 : vector<2x32xf32>
    %139 = vector.extract_strided_slice %126 {offsets = [0, 64], sizes = [2, 32], strides = [1, 1]} : vector<2x128xf32> to vector<2x32xf32>
    %140 = math.tanh %139 : vector<2x32xf32>
    %141 = vector.extract_strided_slice %126 {offsets = [0, 96], sizes = [2, 32], strides = [1, 1]} : vector<2x128xf32> to vector<2x32xf32>
    %142 = arith.negf %141 : vector<2x32xf32>
    %143 = math.exp %142 : vector<2x32xf32>
    %cst_38 = arith.constant 1.000000e+00 : f32
    %144 = vector.broadcast %cst_38 : f32 to vector<2x32xf32>
    %145 = arith.addf %144, %143 : vector<2x32xf32>
    %146 = arith.divf %144, %145 : vector<2x32xf32>
    %147 = arith.mulf %138, %18 : vector<2x32xf32>
    %148 = arith.mulf %132, %140 : vector<2x32xf32>
    %149 = arith.addf %147, %148 : vector<2x32xf32>
    %150 = math.tanh %149 : vector<2x32xf32>
    %151 = arith.mulf %146, %150 : vector<2x32xf32>
    %c0_39 = arith.constant 0 : index
    %c7_40 = arith.constant 7 : index
    %c96 = arith.constant 96 : index
    %152 = vector.load %arg8[%c0_39, %c7_40, %c96] : memref<2x8x128xf32, #tpu.memory_space<vmem>>, vector<2x1x32xf32>
    %153 = vector.shape_cast %152 : vector<2x1x32xf32> to vector<2x32xf32>
    %154 = vector.shape_cast %151 : vector<2x32xf32> to vector<2x1x32xf32>
    tpu.vector_store %arg8[%c0_39, %c7_40, %c96], %154 {strides = array<i32>} : memref<2x8x128xf32, #tpu.memory_space<vmem>>, vector<2x1x32xf32>,
    %155 = vector.extract_strided_slice %9 {offsets = [0, 1, 0], sizes = [2, 1, 128], strides = [1, 1, 1]} : vector<2x8x512xf32> to vector<2x1x128xf32>
    %156 = vector.shape_cast %155 : vector<2x1x128xf32> to vector<2x128xf32>
    %157 = vector.extract_strided_slice %10 {offsets = [0, 0, 0], sizes = [1, 32, 128], strides = [1, 1, 1]} : vector<4x32x128xf32> to vector<1x32x128xf32>
    %158 = vector.shape_cast %157 : vector<1x32x128xf32> to vector<32x128xf32>
    %cst_41 = arith.constant dense<0.000000e+00> : vector<2x128xf32>
    %159 = tpu.matmul %49, %158, %cst_41 {dimension_numbers = #tpu.dot_dimension_numbers<[1], [0], [0], [1], [0, 0, 1, 1], [], []>} : vector<2x32xf32>, vector<32x128xf32>, vector<2x128xf32> -> vector<2x128xf32>
    %160 = arith.addf %156, %159 : vector<2x128xf32>
    %161 = vector.extract_strided_slice %160 {offsets = [0, 0], sizes = [2, 32], strides = [1, 1]} : vector<2x128xf32> to vector<2x32xf32>
    %162 = arith.negf %161 : vector<2x32xf32>
    %163 = math.exp %162 : vector<2x32xf32>
    %cst_42 = arith.constant 1.000000e+00 : f32
    %164 = vector.broadcast %cst_42 : f32 to vector<2x32xf32>
    %165 = arith.addf %164, %163 : vector<2x32xf32>
    %166 = arith.divf %164, %165 : vector<2x32xf32>
    %167 = vector.extract_strided_slice %160 {offsets = [0, 32], sizes = [2, 32], strides = [1, 1]} : vector<2x128xf32> to vector<2x32xf32>
    %168 = arith.negf %167 : vector<2x32xf32>
    %169 = math.exp %168 : vector<2x32xf32>
    %cst_43 = arith.constant 1.000000e+00 : f32
    %170 = vector.broadcast %cst_43 : f32 to vector<2x32xf32>
    %171 = arith.addf %170, %169 : vector<2x32xf32>
    %172 = arith.divf %170, %171 : vector<2x32xf32>
    %173 = vector.extract_strided_slice %160 {offsets = [0, 64], sizes = [2, 32], strides = [1, 1]} : vector<2x128xf32> to vector<2x32xf32>
    %174 = math.tanh %173 : vector<2x32xf32>
    %175 = vector.extract_strided_slice %160 {offsets = [0, 96], sizes = [2, 32], strides = [1, 1]} : vector<2x128xf32> to vector<2x32xf32>
    %176 = arith.negf %175 : vector<2x32xf32>
    %177 = math.exp %176 : vector<2x32xf32>
    %cst_44 = arith.constant 1.000000e+00 : f32
    %178 = vector.broadcast %cst_44 : f32 to vector<2x32xf32>
    %179 = arith.addf %178, %177 : vector<2x32xf32>
    %180 = arith.divf %178, %179 : vector<2x32xf32>
    %181 = arith.mulf %172, %47 : vector<2x32xf32>
    %182 = arith.mulf %166, %174 : vector<2x32xf32>
    %183 = arith.addf %181, %182 : vector<2x32xf32>
    %184 = math.tanh %183 : vector<2x32xf32>
    %185 = arith.mulf %180, %184 : vector<2x32xf32>
    %c0_45 = arith.constant 0 : index
    %c1 = arith.constant 1 : index
    %c0_46 = arith.constant 0 : index
    %186 = vector.load %arg8[%c0_45, %c1, %c0_46] : memref<2x8x128xf32, #tpu.memory_space<vmem>>, vector<2x1x32xf32>
    %187 = vector.shape_cast %186 : vector<2x1x32xf32> to vector<2x32xf32>
    %188 = vector.shape_cast %185 : vector<2x32xf32> to vector<2x1x32xf32>
    tpu.vector_store %arg8[%c0_45, %c1, %c0_46], %188 {strides = array<i32>} : memref<2x8x128xf32, #tpu.memory_space<vmem>>, vector<2x1x32xf32>,
    %189 = vector.extract_strided_slice %9 {offsets = [0, 6, 128], sizes = [2, 1, 128], strides = [1, 1, 1]} : vector<2x8x512xf32> to vector<2x1x128xf32>
    %190 = vector.shape_cast %189 : vector<2x1x128xf32> to vector<2x128xf32>
    %191 = vector.extract_strided_slice %10 {offsets = [1, 0, 0], sizes = [1, 32, 128], strides = [1, 1, 1]} : vector<4x32x128xf32> to vector<1x32x128xf32>
    %192 = vector.shape_cast %191 : vector<1x32x128xf32> to vector<32x128xf32>
    %cst_47 = arith.constant dense<0.000000e+00> : vector<2x128xf32>
    %193 = tpu.matmul %83, %192, %cst_47 {dimension_numbers = #tpu.dot_dimension_numbers<[1], [0], [0], [1], [0, 0, 1, 1], [], []>} : vector<2x32xf32>, vector<32x128xf32>, vector<2x128xf32> -> vector<2x128xf32>
    %194 = arith.addf %190, %193 : vector<2x128xf32>
    %195 = vector.extract_strided_slice %194 {offsets = [0, 0], sizes = [2, 32], strides = [1, 1]} : vector<2x128xf32> to vector<2x32xf32>
    %196 = arith.negf %195 : vector<2x32xf32>
    %197 = math.exp %196 : vector<2x32xf32>
    %cst_48 = arith.constant 1.000000e+00 : f32
    %198 = vector.broadcast %cst_48 : f32 to vector<2x32xf32>
    %199 = arith.addf %198, %197 : vector<2x32xf32>
    %200 = arith.divf %198, %199 : vector<2x32xf32>
    %201 = vector.extract_strided_slice %194 {offsets = [0, 32], sizes = [2, 32], strides = [1, 1]} : vector<2x128xf32> to vector<2x32xf32>
    %202 = arith.negf %201 : vector<2x32xf32>
    %203 = math.exp %202 : vector<2x32xf32>
    %cst_49 = arith.constant 1.000000e+00 : f32
    %204 = vector.broadcast %cst_49 : f32 to vector<2x32xf32>
    %205 = arith.addf %204, %203 : vector<2x32xf32>
    %206 = arith.divf %204, %205 : vector<2x32xf32>
    %207 = vector.extract_strided_slice %194 {offsets = [0, 64], sizes = [2, 32], strides = [1, 1]} : vector<2x128xf32> to vector<2x32xf32>
    %208 = math.tanh %207 : vector<2x32xf32>
    %209 = vector.extract_strided_slice %194 {offsets = [0, 96], sizes = [2, 32], strides = [1, 1]} : vector<2x128xf32> to vector<2x32xf32>
    %210 = arith.negf %209 : vector<2x32xf32>
    %211 = math.exp %210 : vector<2x32xf32>
    %cst_50 = arith.constant 1.000000e+00 : f32
    %212 = vector.broadcast %cst_50 : f32 to vector<2x32xf32>
    %213 = arith.addf %212, %211 : vector<2x32xf32>
    %214 = arith.divf %212, %213 : vector<2x32xf32>
    %215 = arith.mulf %206, %81 : vector<2x32xf32>
    %216 = arith.mulf %200, %208 : vector<2x32xf32>
    %217 = arith.addf %215, %216 : vector<2x32xf32>
    %218 = math.tanh %217 : vector<2x32xf32>
    %219 = arith.mulf %214, %218 : vector<2x32xf32>
    %c0_51 = arith.constant 0 : index
    %c6 = arith.constant 6 : index
    %c32_52 = arith.constant 32 : index
    %220 = vector.load %arg8[%c0_51, %c6, %c32_52] : memref<2x8x128xf32, #tpu.memory_space<vmem>>, vector<2x1x32xf32>
    %221 = vector.shape_cast %220 : vector<2x1x32xf32> to vector<2x32xf32>
    %222 = vector.shape_cast %219 : vector<2x32xf32> to vector<2x1x32xf32>
    tpu.vector_store %arg8[%c0_51, %c6, %c32_52], %222 {strides = array<i32>} : memref<2x8x128xf32, #tpu.memory_space<vmem>>, vector<2x1x32xf32>,
    %223 = vector.extract_strided_slice %9 {offsets = [0, 1, 256], sizes = [2, 1, 128], strides = [1, 1, 1]} : vector<2x8x512xf32> to vector<2x1x128xf32>
    %224 = vector.shape_cast %223 : vector<2x1x128xf32> to vector<2x128xf32>
    %225 = vector.extract_strided_slice %10 {offsets = [2, 0, 0], sizes = [1, 32, 128], strides = [1, 1, 1]} : vector<4x32x128xf32> to vector<1x32x128xf32>
    %226 = vector.shape_cast %225 : vector<1x32x128xf32> to vector<32x128xf32>
    %cst_53 = arith.constant dense<0.000000e+00> : vector<2x128xf32>
    %227 = tpu.matmul %117, %226, %cst_53 {dimension_numbers = #tpu.dot_dimension_numbers<[1], [0], [0], [1], [0, 0, 1, 1], [], []>} : vector<2x32xf32>, vector<32x128xf32>, vector<2x128xf32> -> vector<2x128xf32>
    %228 = arith.addf %224, %227 : vector<2x128xf32>
    %229 = vector.extract_strided_slice %228 {offsets = [0, 0], sizes = [2, 32], strides = [1, 1]} : vector<2x128xf32> to vector<2x32xf32>
    %230 = arith.negf %229 : vector<2x32xf32>
    %231 = math.exp %230 : vector<2x32xf32>
    %cst_54 = arith.constant 1.000000e+00 : f32
    %232 = vector.broadcast %cst_54 : f32 to vector<2x32xf32>
    %233 = arith.addf %232, %231 : vector<2x32xf32>
    %234 = arith.divf %232, %233 : vector<2x32xf32>
    %235 = vector.extract_strided_slice %228 {offsets = [0, 32], sizes = [2, 32], strides = [1, 1]} : vector<2x128xf32> to vector<2x32xf32>
    %236 = arith.negf %235 : vector<2x32xf32>
    %237 = math.exp %236 : vector<2x32xf32>
    %cst_55 = arith.constant 1.000000e+00 : f32
    %238 = vector.broadcast %cst_55 : f32 to vector<2x32xf32>
    %239 = arith.addf %238, %237 : vector<2x32xf32>
    %240 = arith.divf %238, %239 : vector<2x32xf32>
    %241 = vector.extract_strided_slice %228 {offsets = [0, 64], sizes = [2, 32], strides = [1, 1]} : vector<2x128xf32> to vector<2x32xf32>
    %242 = math.tanh %241 : vector<2x32xf32>
    %243 = vector.extract_strided_slice %228 {offsets = [0, 96], sizes = [2, 32], strides = [1, 1]} : vector<2x128xf32> to vector<2x32xf32>
    %244 = arith.negf %243 : vector<2x32xf32>
    %245 = math.exp %244 : vector<2x32xf32>
    %cst_56 = arith.constant 1.000000e+00 : f32
    %246 = vector.broadcast %cst_56 : f32 to vector<2x32xf32>
    %247 = arith.addf %246, %245 : vector<2x32xf32>
    %248 = arith.divf %246, %247 : vector<2x32xf32>
    %249 = arith.mulf %240, %115 : vector<2x32xf32>
    %250 = arith.mulf %234, %242 : vector<2x32xf32>
    %251 = arith.addf %249, %250 : vector<2x32xf32>
    %252 = math.tanh %251 : vector<2x32xf32>
    %253 = arith.mulf %248, %252 : vector<2x32xf32>
    %c0_57 = arith.constant 0 : index
    %c1_58 = arith.constant 1 : index
    %c64_59 = arith.constant 64 : index
    %254 = vector.load %arg8[%c0_57, %c1_58, %c64_59] : memref<2x8x128xf32, #tpu.memory_space<vmem>>, vector<2x1x32xf32>
    %255 = vector.shape_cast %254 : vector<2x1x32xf32> to vector<2x32xf32>
    %256 = vector.shape_cast %253 : vector<2x32xf32> to vector<2x1x32xf32>
    tpu.vector_store %arg8[%c0_57, %c1_58, %c64_59], %256 {strides = array<i32>} : memref<2x8x128xf32, #tpu.memory_space<vmem>>, vector<2x1x32xf32>,
    %257 = vector.extract_strided_slice %9 {offsets = [0, 6, 384], sizes = [2, 1, 128], strides = [1, 1, 1]} : vector<2x8x512xf32> to vector<2x1x128xf32>
    %258 = vector.shape_cast %257 : vector<2x1x128xf32> to vector<2x128xf32>
    %259 = vector.extract_strided_slice %10 {offsets = [3, 0, 0], sizes = [1, 32, 128], strides = [1, 1, 1]} : vector<4x32x128xf32> to vector<1x32x128xf32>
    %260 = vector.shape_cast %259 : vector<1x32x128xf32> to vector<32x128xf32>
    %cst_60 = arith.constant dense<0.000000e+00> : vector<2x128xf32>
    %261 = tpu.matmul %151, %260, %cst_60 {dimension_numbers = #tpu.dot_dimension_numbers<[1], [0], [0], [1], [0, 0, 1, 1], [], []>} : vector<2x32xf32>, vector<32x128xf32>, vector<2x128xf32> -> vector<2x128xf32>
    %262 = arith.addf %258, %261 : vector<2x128xf32>
    %263 = vector.extract_strided_slice %262 {offsets = [0, 0], sizes = [2, 32], strides = [1, 1]} : vector<2x128xf32> to vector<2x32xf32>
    %264 = arith.negf %263 : vector<2x32xf32>
    %265 = math.exp %264 : vector<2x32xf32>
    %cst_61 = arith.constant 1.000000e+00 : f32
    %266 = vector.broadcast %cst_61 : f32 to vector<2x32xf32>
    %267 = arith.addf %266, %265 : vector<2x32xf32>
    %268 = arith.divf %266, %267 : vector<2x32xf32>
    %269 = vector.extract_strided_slice %262 {offsets = [0, 32], sizes = [2, 32], strides = [1, 1]} : vector<2x128xf32> to vector<2x32xf32>
    %270 = arith.negf %269 : vector<2x32xf32>
    %271 = math.exp %270 : vector<2x32xf32>
    %cst_62 = arith.constant 1.000000e+00 : f32
    %272 = vector.broadcast %cst_62 : f32 to vector<2x32xf32>
    %273 = arith.addf %272, %271 : vector<2x32xf32>
    %274 = arith.divf %272, %273 : vector<2x32xf32>
    %275 = vector.extract_strided_slice %262 {offsets = [0, 64], sizes = [2, 32], strides = [1, 1]} : vector<2x128xf32> to vector<2x32xf32>
    %276 = math.tanh %275 : vector<2x32xf32>
    %277 = vector.extract_strided_slice %262 {offsets = [0, 96], sizes = [2, 32], strides = [1, 1]} : vector<2x128xf32> to vector<2x32xf32>
    %278 = arith.negf %277 : vector<2x32xf32>
    %279 = math.exp %278 : vector<2x32xf32>
    %cst_63 = arith.constant 1.000000e+00 : f32
    %280 = vector.broadcast %cst_63 : f32 to vector<2x32xf32>
    %281 = arith.addf %280, %279 : vector<2x32xf32>
    %282 = arith.divf %280, %281 : vector<2x32xf32>
    %283 = arith.mulf %274, %149 : vector<2x32xf32>
    %284 = arith.mulf %268, %276 : vector<2x32xf32>
    %285 = arith.addf %283, %284 : vector<2x32xf32>
    %286 = math.tanh %285 : vector<2x32xf32>
    %287 = arith.mulf %282, %286 : vector<2x32xf32>
    %c0_64 = arith.constant 0 : index
    %c6_65 = arith.constant 6 : index
    %c96_66 = arith.constant 96 : index
    %288 = vector.load %arg8[%c0_64, %c6_65, %c96_66] : memref<2x8x128xf32, #tpu.memory_space<vmem>>, vector<2x1x32xf32>
    %289 = vector.shape_cast %288 : vector<2x1x32xf32> to vector<2x32xf32>
    %290 = vector.shape_cast %287 : vector<2x32xf32> to vector<2x1x32xf32>
    tpu.vector_store %arg8[%c0_64, %c6_65, %c96_66], %290 {strides = array<i32>} : memref<2x8x128xf32, #tpu.memory_space<vmem>>, vector<2x1x32xf32>,
    %291 = vector.extract_strided_slice %9 {offsets = [0, 2, 0], sizes = [2, 1, 128], strides = [1, 1, 1]} : vector<2x8x512xf32> to vector<2x1x128xf32>
    %292 = vector.shape_cast %291 : vector<2x1x128xf32> to vector<2x128xf32>
    %293 = vector.extract_strided_slice %10 {offsets = [0, 0, 0], sizes = [1, 32, 128], strides = [1, 1, 1]} : vector<4x32x128xf32> to vector<1x32x128xf32>
    %294 = vector.shape_cast %293 : vector<1x32x128xf32> to vector<32x128xf32>
    %cst_67 = arith.constant dense<0.000000e+00> : vector<2x128xf32>
    %295 = tpu.matmul %185, %294, %cst_67 {dimension_numbers = #tpu.dot_dimension_numbers<[1], [0], [0], [1], [0, 0, 1, 1], [], []>} : vector<2x32xf32>, vector<32x128xf32>, vector<2x128xf32> -> vector<2x128xf32>
    %296 = arith.addf %292, %295 : vector<2x128xf32>
    %297 = vector.extract_strided_slice %296 {offsets = [0, 0], sizes = [2, 32], strides = [1, 1]} : vector<2x128xf32> to vector<2x32xf32>
    %298 = arith.negf %297 : vector<2x32xf32>
    %299 = math.exp %298 : vector<2x32xf32>
    %cst_68 = arith.constant 1.000000e+00 : f32
    %300 = vector.broadcast %cst_68 : f32 to vector<2x32xf32>
    %301 = arith.addf %300, %299 : vector<2x32xf32>
    %302 = arith.divf %300, %301 : vector<2x32xf32>
    %303 = vector.extract_strided_slice %296 {offsets = [0, 32], sizes = [2, 32], strides = [1, 1]} : vector<2x128xf32> to vector<2x32xf32>
    %304 = arith.negf %303 : vector<2x32xf32>
    %305 = math.exp %304 : vector<2x32xf32>
    %cst_69 = arith.constant 1.000000e+00 : f32
    %306 = vector.broadcast %cst_69 : f32 to vector<2x32xf32>
    %307 = arith.addf %306, %305 : vector<2x32xf32>
    %308 = arith.divf %306, %307 : vector<2x32xf32>
    %309 = vector.extract_strided_slice %296 {offsets = [0, 64], sizes = [2, 32], strides = [1, 1]} : vector<2x128xf32> to vector<2x32xf32>
    %310 = math.tanh %309 : vector<2x32xf32>
    %311 = vector.extract_strided_slice %296 {offsets = [0, 96], sizes = [2, 32], strides = [1, 1]} : vector<2x128xf32> to vector<2x32xf32>
    %312 = arith.negf %311 : vector<2x32xf32>
    %313 = math.exp %312 : vector<2x32xf32>
    %cst_70 = arith.constant 1.000000e+00 : f32
    %314 = vector.broadcast %cst_70 : f32 to vector<2x32xf32>
    %315 = arith.addf %314, %313 : vector<2x32xf32>
    %316 = arith.divf %314, %315 : vector<2x32xf32>
    %317 = arith.mulf %308, %183 : vector<2x32xf32>
    %318 = arith.mulf %302, %310 : vector<2x32xf32>
    %319 = arith.addf %317, %318 : vector<2x32xf32>
    %320 = math.tanh %319 : vector<2x32xf32>
    %321 = arith.mulf %316, %320 : vector<2x32xf32>
    %c0_71 = arith.constant 0 : index
    %c2 = arith.constant 2 : index
    %c0_72 = arith.constant 0 : index
    %322 = vector.load %arg8[%c0_71, %c2, %c0_72] : memref<2x8x128xf32, #tpu.memory_space<vmem>>, vector<2x1x32xf32>
    %323 = vector.shape_cast %322 : vector<2x1x32xf32> to vector<2x32xf32>
    %324 = vector.shape_cast %321 : vector<2x32xf32> to vector<2x1x32xf32>
    tpu.vector_store %arg8[%c0_71, %c2, %c0_72], %324 {strides = array<i32>} : memref<2x8x128xf32, #tpu.memory_space<vmem>>, vector<2x1x32xf32>,
    %325 = vector.extract_strided_slice %9 {offsets = [0, 5, 128], sizes = [2, 1, 128], strides = [1, 1, 1]} : vector<2x8x512xf32> to vector<2x1x128xf32>
    %326 = vector.shape_cast %325 : vector<2x1x128xf32> to vector<2x128xf32>
    %327 = vector.extract_strided_slice %10 {offsets = [1, 0, 0], sizes = [1, 32, 128], strides = [1, 1, 1]} : vector<4x32x128xf32> to vector<1x32x128xf32>
    %328 = vector.shape_cast %327 : vector<1x32x128xf32> to vector<32x128xf32>
    %cst_73 = arith.constant dense<0.000000e+00> : vector<2x128xf32>
    %329 = tpu.matmul %219, %328, %cst_73 {dimension_numbers = #tpu.dot_dimension_numbers<[1], [0], [0], [1], [0, 0, 1, 1], [], []>} : vector<2x32xf32>, vector<32x128xf32>, vector<2x128xf32> -> vector<2x128xf32>
    %330 = arith.addf %326, %329 : vector<2x128xf32>
    %331 = vector.extract_strided_slice %330 {offsets = [0, 0], sizes = [2, 32], strides = [1, 1]} : vector<2x128xf32> to vector<2x32xf32>
    %332 = arith.negf %331 : vector<2x32xf32>
    %333 = math.exp %332 : vector<2x32xf32>
    %cst_74 = arith.constant 1.000000e+00 : f32
    %334 = vector.broadcast %cst_74 : f32 to vector<2x32xf32>
    %335 = arith.addf %334, %333 : vector<2x32xf32>
    %336 = arith.divf %334, %335 : vector<2x32xf32>
    %337 = vector.extract_strided_slice %330 {offsets = [0, 32], sizes = [2, 32], strides = [1, 1]} : vector<2x128xf32> to vector<2x32xf32>
    %338 = arith.negf %337 : vector<2x32xf32>
    %339 = math.exp %338 : vector<2x32xf32>
    %cst_75 = arith.constant 1.000000e+00 : f32
    %340 = vector.broadcast %cst_75 : f32 to vector<2x32xf32>
    %341 = arith.addf %340, %339 : vector<2x32xf32>
    %342 = arith.divf %340, %341 : vector<2x32xf32>
    %343 = vector.extract_strided_slice %330 {offsets = [0, 64], sizes = [2, 32], strides = [1, 1]} : vector<2x128xf32> to vector<2x32xf32>
    %344 = math.tanh %343 : vector<2x32xf32>
    %345 = vector.extract_strided_slice %330 {offsets = [0, 96], sizes = [2, 32], strides = [1, 1]} : vector<2x128xf32> to vector<2x32xf32>
    %346 = arith.negf %345 : vector<2x32xf32>
    %347 = math.exp %346 : vector<2x32xf32>
    %cst_76 = arith.constant 1.000000e+00 : f32
    %348 = vector.broadcast %cst_76 : f32 to vector<2x32xf32>
    %349 = arith.addf %348, %347 : vector<2x32xf32>
    %350 = arith.divf %348, %349 : vector<2x32xf32>
    %351 = arith.mulf %342, %217 : vector<2x32xf32>
    %352 = arith.mulf %336, %344 : vector<2x32xf32>
    %353 = arith.addf %351, %352 : vector<2x32xf32>
    %354 = math.tanh %353 : vector<2x32xf32>
    %355 = arith.mulf %350, %354 : vector<2x32xf32>
    %c0_77 = arith.constant 0 : index
    %c5 = arith.constant 5 : index
    %c32_78 = arith.constant 32 : index
    %356 = vector.load %arg8[%c0_77, %c5, %c32_78] : memref<2x8x128xf32, #tpu.memory_space<vmem>>, vector<2x1x32xf32>
    %357 = vector.shape_cast %356 : vector<2x1x32xf32> to vector<2x32xf32>
    %358 = vector.shape_cast %355 : vector<2x32xf32> to vector<2x1x32xf32>
    tpu.vector_store %arg8[%c0_77, %c5, %c32_78], %358 {strides = array<i32>} : memref<2x8x128xf32, #tpu.memory_space<vmem>>, vector<2x1x32xf32>,
    %359 = vector.extract_strided_slice %9 {offsets = [0, 2, 256], sizes = [2, 1, 128], strides = [1, 1, 1]} : vector<2x8x512xf32> to vector<2x1x128xf32>
    %360 = vector.shape_cast %359 : vector<2x1x128xf32> to vector<2x128xf32>
    %361 = vector.extract_strided_slice %10 {offsets = [2, 0, 0], sizes = [1, 32, 128], strides = [1, 1, 1]} : vector<4x32x128xf32> to vector<1x32x128xf32>
    %362 = vector.shape_cast %361 : vector<1x32x128xf32> to vector<32x128xf32>
    %cst_79 = arith.constant dense<0.000000e+00> : vector<2x128xf32>
    %363 = tpu.matmul %253, %362, %cst_79 {dimension_numbers = #tpu.dot_dimension_numbers<[1], [0], [0], [1], [0, 0, 1, 1], [], []>} : vector<2x32xf32>, vector<32x128xf32>, vector<2x128xf32> -> vector<2x128xf32>
    %364 = arith.addf %360, %363 : vector<2x128xf32>
    %365 = vector.extract_strided_slice %364 {offsets = [0, 0], sizes = [2, 32], strides = [1, 1]} : vector<2x128xf32> to vector<2x32xf32>
    %366 = arith.negf %365 : vector<2x32xf32>
    %367 = math.exp %366 : vector<2x32xf32>
    %cst_80 = arith.constant 1.000000e+00 : f32
    %368 = vector.broadcast %cst_80 : f32 to vector<2x32xf32>
    %369 = arith.addf %368, %367 : vector<2x32xf32>
    %370 = arith.divf %368, %369 : vector<2x32xf32>
    %371 = vector.extract_strided_slice %364 {offsets = [0, 32], sizes = [2, 32], strides = [1, 1]} : vector<2x128xf32> to vector<2x32xf32>
    %372 = arith.negf %371 : vector<2x32xf32>
    %373 = math.exp %372 : vector<2x32xf32>
    %cst_81 = arith.constant 1.000000e+00 : f32
    %374 = vector.broadcast %cst_81 : f32 to vector<2x32xf32>
    %375 = arith.addf %374, %373 : vector<2x32xf32>
    %376 = arith.divf %374, %375 : vector<2x32xf32>
    %377 = vector.extract_strided_slice %364 {offsets = [0, 64], sizes = [2, 32], strides = [1, 1]} : vector<2x128xf32> to vector<2x32xf32>
    %378 = math.tanh %377 : vector<2x32xf32>
    %379 = vector.extract_strided_slice %364 {offsets = [0, 96], sizes = [2, 32], strides = [1, 1]} : vector<2x128xf32> to vector<2x32xf32>
    %380 = arith.negf %379 : vector<2x32xf32>
    %381 = math.exp %380 : vector<2x32xf32>
    %cst_82 = arith.constant 1.000000e+00 : f32
    %382 = vector.broadcast %cst_82 : f32 to vector<2x32xf32>
    %383 = arith.addf %382, %381 : vector<2x32xf32>
    %384 = arith.divf %382, %383 : vector<2x32xf32>
    %385 = arith.mulf %376, %251 : vector<2x32xf32>
    %386 = arith.mulf %370, %378 : vector<2x32xf32>
    %387 = arith.addf %385, %386 : vector<2x32xf32>
    %388 = math.tanh %387 : vector<2x32xf32>
    %389 = arith.mulf %384, %388 : vector<2x32xf32>
    %c0_83 = arith.constant 0 : index
    %c2_84 = arith.constant 2 : index
    %c64_85 = arith.constant 64 : index
    %390 = vector.load %arg8[%c0_83, %c2_84, %c64_85] : memref<2x8x128xf32, #tpu.memory_space<vmem>>, vector<2x1x32xf32>
    %391 = vector.shape_cast %390 : vector<2x1x32xf32> to vector<2x32xf32>
    %392 = vector.shape_cast %389 : vector<2x32xf32> to vector<2x1x32xf32>
    tpu.vector_store %arg8[%c0_83, %c2_84, %c64_85], %392 {strides = array<i32>} : memref<2x8x128xf32, #tpu.memory_space<vmem>>, vector<2x1x32xf32>,
    %393 = vector.extract_strided_slice %9 {offsets = [0, 5, 384], sizes = [2, 1, 128], strides = [1, 1, 1]} : vector<2x8x512xf32> to vector<2x1x128xf32>
    %394 = vector.shape_cast %393 : vector<2x1x128xf32> to vector<2x128xf32>
    %395 = vector.extract_strided_slice %10 {offsets = [3, 0, 0], sizes = [1, 32, 128], strides = [1, 1, 1]} : vector<4x32x128xf32> to vector<1x32x128xf32>
    %396 = vector.shape_cast %395 : vector<1x32x128xf32> to vector<32x128xf32>
    %cst_86 = arith.constant dense<0.000000e+00> : vector<2x128xf32>
    %397 = tpu.matmul %287, %396, %cst_86 {dimension_numbers = #tpu.dot_dimension_numbers<[1], [0], [0], [1], [0, 0, 1, 1], [], []>} : vector<2x32xf32>, vector<32x128xf32>, vector<2x128xf32> -> vector<2x128xf32>
    %398 = arith.addf %394, %397 : vector<2x128xf32>
    %399 = vector.extract_strided_slice %398 {offsets = [0, 0], sizes = [2, 32], strides = [1, 1]} : vector<2x128xf32> to vector<2x32xf32>
    %400 = arith.negf %399 : vector<2x32xf32>
    %401 = math.exp %400 : vector<2x32xf32>
    %cst_87 = arith.constant 1.000000e+00 : f32
    %402 = vector.broadcast %cst_87 : f32 to vector<2x32xf32>
    %403 = arith.addf %402, %401 : vector<2x32xf32>
    %404 = arith.divf %402, %403 : vector<2x32xf32>
    %405 = vector.extract_strided_slice %398 {offsets = [0, 32], sizes = [2, 32], strides = [1, 1]} : vector<2x128xf32> to vector<2x32xf32>
    %406 = arith.negf %405 : vector<2x32xf32>
    %407 = math.exp %406 : vector<2x32xf32>
    %cst_88 = arith.constant 1.000000e+00 : f32
    %408 = vector.broadcast %cst_88 : f32 to vector<2x32xf32>
    %409 = arith.addf %408, %407 : vector<2x32xf32>
    %410 = arith.divf %408, %409 : vector<2x32xf32>
    %411 = vector.extract_strided_slice %398 {offsets = [0, 64], sizes = [2, 32], strides = [1, 1]} : vector<2x128xf32> to vector<2x32xf32>
    %412 = math.tanh %411 : vector<2x32xf32>
    %413 = vector.extract_strided_slice %398 {offsets = [0, 96], sizes = [2, 32], strides = [1, 1]} : vector<2x128xf32> to vector<2x32xf32>
    %414 = arith.negf %413 : vector<2x32xf32>
    %415 = math.exp %414 : vector<2x32xf32>
    %cst_89 = arith.constant 1.000000e+00 : f32
    %416 = vector.broadcast %cst_89 : f32 to vector<2x32xf32>
    %417 = arith.addf %416, %415 : vector<2x32xf32>
    %418 = arith.divf %416, %417 : vector<2x32xf32>
    %419 = arith.mulf %410, %285 : vector<2x32xf32>
    %420 = arith.mulf %404, %412 : vector<2x32xf32>
    %421 = arith.addf %419, %420 : vector<2x32xf32>
    %422 = math.tanh %421 : vector<2x32xf32>
    %423 = arith.mulf %418, %422 : vector<2x32xf32>
    %c0_90 = arith.constant 0 : index
    %c5_91 = arith.constant 5 : index
    %c96_92 = arith.constant 96 : index
    %424 = vector.load %arg8[%c0_90, %c5_91, %c96_92] : memref<2x8x128xf32, #tpu.memory_space<vmem>>, vector<2x1x32xf32>
    %425 = vector.shape_cast %424 : vector<2x1x32xf32> to vector<2x32xf32>
    %426 = vector.shape_cast %423 : vector<2x32xf32> to vector<2x1x32xf32>
    tpu.vector_store %arg8[%c0_90, %c5_91, %c96_92], %426 {strides = array<i32>} : memref<2x8x128xf32, #tpu.memory_space<vmem>>, vector<2x1x32xf32>,
    %427 = vector.extract_strided_slice %9 {offsets = [0, 3, 0], sizes = [2, 1, 128], strides = [1, 1, 1]} : vector<2x8x512xf32> to vector<2x1x128xf32>
    %428 = vector.shape_cast %427 : vector<2x1x128xf32> to vector<2x128xf32>
    %429 = vector.extract_strided_slice %10 {offsets = [0, 0, 0], sizes = [1, 32, 128], strides = [1, 1, 1]} : vector<4x32x128xf32> to vector<1x32x128xf32>
    %430 = vector.shape_cast %429 : vector<1x32x128xf32> to vector<32x128xf32>
    %cst_93 = arith.constant dense<0.000000e+00> : vector<2x128xf32>
    %431 = tpu.matmul %321, %430, %cst_93 {dimension_numbers = #tpu.dot_dimension_numbers<[1], [0], [0], [1], [0, 0, 1, 1], [], []>} : vector<2x32xf32>, vector<32x128xf32>, vector<2x128xf32> -> vector<2x128xf32>
    %432 = arith.addf %428, %431 : vector<2x128xf32>
    %433 = vector.extract_strided_slice %432 {offsets = [0, 0], sizes = [2, 32], strides = [1, 1]} : vector<2x128xf32> to vector<2x32xf32>
    %434 = arith.negf %433 : vector<2x32xf32>
    %435 = math.exp %434 : vector<2x32xf32>
    %cst_94 = arith.constant 1.000000e+00 : f32
    %436 = vector.broadcast %cst_94 : f32 to vector<2x32xf32>
    %437 = arith.addf %436, %435 : vector<2x32xf32>
    %438 = arith.divf %436, %437 : vector<2x32xf32>
    %439 = vector.extract_strided_slice %432 {offsets = [0, 32], sizes = [2, 32], strides = [1, 1]} : vector<2x128xf32> to vector<2x32xf32>
    %440 = arith.negf %439 : vector<2x32xf32>
    %441 = math.exp %440 : vector<2x32xf32>
    %cst_95 = arith.constant 1.000000e+00 : f32
    %442 = vector.broadcast %cst_95 : f32 to vector<2x32xf32>
    %443 = arith.addf %442, %441 : vector<2x32xf32>
    %444 = arith.divf %442, %443 : vector<2x32xf32>
    %445 = vector.extract_strided_slice %432 {offsets = [0, 64], sizes = [2, 32], strides = [1, 1]} : vector<2x128xf32> to vector<2x32xf32>
    %446 = math.tanh %445 : vector<2x32xf32>
    %447 = vector.extract_strided_slice %432 {offsets = [0, 96], sizes = [2, 32], strides = [1, 1]} : vector<2x128xf32> to vector<2x32xf32>
    %448 = arith.negf %447 : vector<2x32xf32>
    %449 = math.exp %448 : vector<2x32xf32>
    %cst_96 = arith.constant 1.000000e+00 : f32
    %450 = vector.broadcast %cst_96 : f32 to vector<2x32xf32>
    %451 = arith.addf %450, %449 : vector<2x32xf32>
    %452 = arith.divf %450, %451 : vector<2x32xf32>
    %453 = arith.mulf %444, %319 : vector<2x32xf32>
    %454 = arith.mulf %438, %446 : vector<2x32xf32>
    %455 = arith.addf %453, %454 : vector<2x32xf32>
    %456 = math.tanh %455 : vector<2x32xf32>
    %457 = arith.mulf %452, %456 : vector<2x32xf32>
    %c0_97 = arith.constant 0 : index
    %c3 = arith.constant 3 : index
    %c0_98 = arith.constant 0 : index
    %458 = vector.load %arg8[%c0_97, %c3, %c0_98] : memref<2x8x128xf32, #tpu.memory_space<vmem>>, vector<2x1x32xf32>
    %459 = vector.shape_cast %458 : vector<2x1x32xf32> to vector<2x32xf32>
    %460 = vector.shape_cast %457 : vector<2x32xf32> to vector<2x1x32xf32>
    tpu.vector_store %arg8[%c0_97, %c3, %c0_98], %460 {strides = array<i32>} : memref<2x8x128xf32, #tpu.memory_space<vmem>>, vector<2x1x32xf32>,
    %461 = vector.extract_strided_slice %9 {offsets = [0, 4, 128], sizes = [2, 1, 128], strides = [1, 1, 1]} : vector<2x8x512xf32> to vector<2x1x128xf32>
    %462 = vector.shape_cast %461 : vector<2x1x128xf32> to vector<2x128xf32>
    %463 = vector.extract_strided_slice %10 {offsets = [1, 0, 0], sizes = [1, 32, 128], strides = [1, 1, 1]} : vector<4x32x128xf32> to vector<1x32x128xf32>
    %464 = vector.shape_cast %463 : vector<1x32x128xf32> to vector<32x128xf32>
    %cst_99 = arith.constant dense<0.000000e+00> : vector<2x128xf32>
    %465 = tpu.matmul %355, %464, %cst_99 {dimension_numbers = #tpu.dot_dimension_numbers<[1], [0], [0], [1], [0, 0, 1, 1], [], []>} : vector<2x32xf32>, vector<32x128xf32>, vector<2x128xf32> -> vector<2x128xf32>
    %466 = arith.addf %462, %465 : vector<2x128xf32>
    %467 = vector.extract_strided_slice %466 {offsets = [0, 0], sizes = [2, 32], strides = [1, 1]} : vector<2x128xf32> to vector<2x32xf32>
    %468 = arith.negf %467 : vector<2x32xf32>
    %469 = math.exp %468 : vector<2x32xf32>
    %cst_100 = arith.constant 1.000000e+00 : f32
    %470 = vector.broadcast %cst_100 : f32 to vector<2x32xf32>
    %471 = arith.addf %470, %469 : vector<2x32xf32>
    %472 = arith.divf %470, %471 : vector<2x32xf32>
    %473 = vector.extract_strided_slice %466 {offsets = [0, 32], sizes = [2, 32], strides = [1, 1]} : vector<2x128xf32> to vector<2x32xf32>
    %474 = arith.negf %473 : vector<2x32xf32>
    %475 = math.exp %474 : vector<2x32xf32>
    %cst_101 = arith.constant 1.000000e+00 : f32
    %476 = vector.broadcast %cst_101 : f32 to vector<2x32xf32>
    %477 = arith.addf %476, %475 : vector<2x32xf32>
    %478 = arith.divf %476, %477 : vector<2x32xf32>
    %479 = vector.extract_strided_slice %466 {offsets = [0, 64], sizes = [2, 32], strides = [1, 1]} : vector<2x128xf32> to vector<2x32xf32>
    %480 = math.tanh %479 : vector<2x32xf32>
    %481 = vector.extract_strided_slice %466 {offsets = [0, 96], sizes = [2, 32], strides = [1, 1]} : vector<2x128xf32> to vector<2x32xf32>
    %482 = arith.negf %481 : vector<2x32xf32>
    %483 = math.exp %482 : vector<2x32xf32>
    %cst_102 = arith.constant 1.000000e+00 : f32
    %484 = vector.broadcast %cst_102 : f32 to vector<2x32xf32>
    %485 = arith.addf %484, %483 : vector<2x32xf32>
    %486 = arith.divf %484, %485 : vector<2x32xf32>
    %487 = arith.mulf %478, %353 : vector<2x32xf32>
    %488 = arith.mulf %472, %480 : vector<2x32xf32>
    %489 = arith.addf %487, %488 : vector<2x32xf32>
    %490 = math.tanh %489 : vector<2x32xf32>
    %491 = arith.mulf %486, %490 : vector<2x32xf32>
    %c0_103 = arith.constant 0 : index
    %c4 = arith.constant 4 : index
    %c32_104 = arith.constant 32 : index
    %492 = vector.load %arg8[%c0_103, %c4, %c32_104] : memref<2x8x128xf32, #tpu.memory_space<vmem>>, vector<2x1x32xf32>
    %493 = vector.shape_cast %492 : vector<2x1x32xf32> to vector<2x32xf32>
    %494 = vector.shape_cast %491 : vector<2x32xf32> to vector<2x1x32xf32>
    tpu.vector_store %arg8[%c0_103, %c4, %c32_104], %494 {strides = array<i32>} : memref<2x8x128xf32, #tpu.memory_space<vmem>>, vector<2x1x32xf32>,
    %495 = vector.extract_strided_slice %9 {offsets = [0, 3, 256], sizes = [2, 1, 128], strides = [1, 1, 1]} : vector<2x8x512xf32> to vector<2x1x128xf32>
    %496 = vector.shape_cast %495 : vector<2x1x128xf32> to vector<2x128xf32>
    %497 = vector.extract_strided_slice %10 {offsets = [2, 0, 0], sizes = [1, 32, 128], strides = [1, 1, 1]} : vector<4x32x128xf32> to vector<1x32x128xf32>
    %498 = vector.shape_cast %497 : vector<1x32x128xf32> to vector<32x128xf32>
    %cst_105 = arith.constant dense<0.000000e+00> : vector<2x128xf32>
    %499 = tpu.matmul %389, %498, %cst_105 {dimension_numbers = #tpu.dot_dimension_numbers<[1], [0], [0], [1], [0, 0, 1, 1], [], []>} : vector<2x32xf32>, vector<32x128xf32>, vector<2x128xf32> -> vector<2x128xf32>
    %500 = arith.addf %496, %499 : vector<2x128xf32>
    %501 = vector.extract_strided_slice %500 {offsets = [0, 0], sizes = [2, 32], strides = [1, 1]} : vector<2x128xf32> to vector<2x32xf32>
    %502 = arith.negf %501 : vector<2x32xf32>
    %503 = math.exp %502 : vector<2x32xf32>
    %cst_106 = arith.constant 1.000000e+00 : f32
    %504 = vector.broadcast %cst_106 : f32 to vector<2x32xf32>
    %505 = arith.addf %504, %503 : vector<2x32xf32>
    %506 = arith.divf %504, %505 : vector<2x32xf32>
    %507 = vector.extract_strided_slice %500 {offsets = [0, 32], sizes = [2, 32], strides = [1, 1]} : vector<2x128xf32> to vector<2x32xf32>
    %508 = arith.negf %507 : vector<2x32xf32>
    %509 = math.exp %508 : vector<2x32xf32>
    %cst_107 = arith.constant 1.000000e+00 : f32
    %510 = vector.broadcast %cst_107 : f32 to vector<2x32xf32>
    %511 = arith.addf %510, %509 : vector<2x32xf32>
    %512 = arith.divf %510, %511 : vector<2x32xf32>
    %513 = vector.extract_strided_slice %500 {offsets = [0, 64], sizes = [2, 32], strides = [1, 1]} : vector<2x128xf32> to vector<2x32xf32>
    %514 = math.tanh %513 : vector<2x32xf32>
    %515 = vector.extract_strided_slice %500 {offsets = [0, 96], sizes = [2, 32], strides = [1, 1]} : vector<2x128xf32> to vector<2x32xf32>
    %516 = arith.negf %515 : vector<2x32xf32>
    %517 = math.exp %516 : vector<2x32xf32>
    %cst_108 = arith.constant 1.000000e+00 : f32
    %518 = vector.broadcast %cst_108 : f32 to vector<2x32xf32>
    %519 = arith.addf %518, %517 : vector<2x32xf32>
    %520 = arith.divf %518, %519 : vector<2x32xf32>
    %521 = arith.mulf %512, %387 : vector<2x32xf32>
    %522 = arith.mulf %506, %514 : vector<2x32xf32>
    %523 = arith.addf %521, %522 : vector<2x32xf32>
    %524 = math.tanh %523 : vector<2x32xf32>
    %525 = arith.mulf %520, %524 : vector<2x32xf32>
    %c0_109 = arith.constant 0 : index
    %c3_110 = arith.constant 3 : index
    %c64_111 = arith.constant 64 : index
    %526 = vector.load %arg8[%c0_109, %c3_110, %c64_111] : memref<2x8x128xf32, #tpu.memory_space<vmem>>, vector<2x1x32xf32>
    %527 = vector.shape_cast %526 : vector<2x1x32xf32> to vector<2x32xf32>
    %528 = vector.shape_cast %525 : vector<2x32xf32> to vector<2x1x32xf32>
    tpu.vector_store %arg8[%c0_109, %c3_110, %c64_111], %528 {strides = array<i32>} : memref<2x8x128xf32, #tpu.memory_space<vmem>>, vector<2x1x32xf32>,
    %529 = vector.extract_strided_slice %9 {offsets = [0, 4, 384], sizes = [2, 1, 128], strides = [1, 1, 1]} : vector<2x8x512xf32> to vector<2x1x128xf32>
    %530 = vector.shape_cast %529 : vector<2x1x128xf32> to vector<2x128xf32>
    %531 = vector.extract_strided_slice %10 {offsets = [3, 0, 0], sizes = [1, 32, 128], strides = [1, 1, 1]} : vector<4x32x128xf32> to vector<1x32x128xf32>
    %532 = vector.shape_cast %531 : vector<1x32x128xf32> to vector<32x128xf32>
    %cst_112 = arith.constant dense<0.000000e+00> : vector<2x128xf32>
    %533 = tpu.matmul %423, %532, %cst_112 {dimension_numbers = #tpu.dot_dimension_numbers<[1], [0], [0], [1], [0, 0, 1, 1], [], []>} : vector<2x32xf32>, vector<32x128xf32>, vector<2x128xf32> -> vector<2x128xf32>
    %534 = arith.addf %530, %533 : vector<2x128xf32>
    %535 = vector.extract_strided_slice %534 {offsets = [0, 0], sizes = [2, 32], strides = [1, 1]} : vector<2x128xf32> to vector<2x32xf32>
    %536 = arith.negf %535 : vector<2x32xf32>
    %537 = math.exp %536 : vector<2x32xf32>
    %cst_113 = arith.constant 1.000000e+00 : f32
    %538 = vector.broadcast %cst_113 : f32 to vector<2x32xf32>
    %539 = arith.addf %538, %537 : vector<2x32xf32>
    %540 = arith.divf %538, %539 : vector<2x32xf32>
    %541 = vector.extract_strided_slice %534 {offsets = [0, 32], sizes = [2, 32], strides = [1, 1]} : vector<2x128xf32> to vector<2x32xf32>
    %542 = arith.negf %541 : vector<2x32xf32>
    %543 = math.exp %542 : vector<2x32xf32>
    %cst_114 = arith.constant 1.000000e+00 : f32
    %544 = vector.broadcast %cst_114 : f32 to vector<2x32xf32>
    %545 = arith.addf %544, %543 : vector<2x32xf32>
    %546 = arith.divf %544, %545 : vector<2x32xf32>
    %547 = vector.extract_strided_slice %534 {offsets = [0, 64], sizes = [2, 32], strides = [1, 1]} : vector<2x128xf32> to vector<2x32xf32>
    %548 = math.tanh %547 : vector<2x32xf32>
    %549 = vector.extract_strided_slice %534 {offsets = [0, 96], sizes = [2, 32], strides = [1, 1]} : vector<2x128xf32> to vector<2x32xf32>
    %550 = arith.negf %549 : vector<2x32xf32>
    %551 = math.exp %550 : vector<2x32xf32>
    %cst_115 = arith.constant 1.000000e+00 : f32
    %552 = vector.broadcast %cst_115 : f32 to vector<2x32xf32>
    %553 = arith.addf %552, %551 : vector<2x32xf32>
    %554 = arith.divf %552, %553 : vector<2x32xf32>
    %555 = arith.mulf %546, %421 : vector<2x32xf32>
    %556 = arith.mulf %540, %548 : vector<2x32xf32>
    %557 = arith.addf %555, %556 : vector<2x32xf32>
    %558 = math.tanh %557 : vector<2x32xf32>
    %559 = arith.mulf %554, %558 : vector<2x32xf32>
    %c0_116 = arith.constant 0 : index
    %c4_117 = arith.constant 4 : index
    %c96_118 = arith.constant 96 : index
    %560 = vector.load %arg8[%c0_116, %c4_117, %c96_118] : memref<2x8x128xf32, #tpu.memory_space<vmem>>, vector<2x1x32xf32>
    %561 = vector.shape_cast %560 : vector<2x1x32xf32> to vector<2x32xf32>
    %562 = vector.shape_cast %559 : vector<2x32xf32> to vector<2x1x32xf32>
    tpu.vector_store %arg8[%c0_116, %c4_117, %c96_118], %562 {strides = array<i32>} : memref<2x8x128xf32, #tpu.memory_space<vmem>>, vector<2x1x32xf32>,
    %563 = vector.extract_strided_slice %9 {offsets = [0, 4, 0], sizes = [2, 1, 128], strides = [1, 1, 1]} : vector<2x8x512xf32> to vector<2x1x128xf32>
    %564 = vector.shape_cast %563 : vector<2x1x128xf32> to vector<2x128xf32>
    %565 = vector.extract_strided_slice %10 {offsets = [0, 0, 0], sizes = [1, 32, 128], strides = [1, 1, 1]} : vector<4x32x128xf32> to vector<1x32x128xf32>
    %566 = vector.shape_cast %565 : vector<1x32x128xf32> to vector<32x128xf32>
    %cst_119 = arith.constant dense<0.000000e+00> : vector<2x128xf32>
    %567 = tpu.matmul %457, %566, %cst_119 {dimension_numbers = #tpu.dot_dimension_numbers<[1], [0], [0], [1], [0, 0, 1, 1], [], []>} : vector<2x32xf32>, vector<32x128xf32>, vector<2x128xf32> -> vector<2x128xf32>
    %568 = arith.addf %564, %567 : vector<2x128xf32>
    %569 = vector.extract_strided_slice %568 {offsets = [0, 0], sizes = [2, 32], strides = [1, 1]} : vector<2x128xf32> to vector<2x32xf32>
    %570 = arith.negf %569 : vector<2x32xf32>
    %571 = math.exp %570 : vector<2x32xf32>
    %cst_120 = arith.constant 1.000000e+00 : f32
    %572 = vector.broadcast %cst_120 : f32 to vector<2x32xf32>
    %573 = arith.addf %572, %571 : vector<2x32xf32>
    %574 = arith.divf %572, %573 : vector<2x32xf32>
    %575 = vector.extract_strided_slice %568 {offsets = [0, 32], sizes = [2, 32], strides = [1, 1]} : vector<2x128xf32> to vector<2x32xf32>
    %576 = arith.negf %575 : vector<2x32xf32>
    %577 = math.exp %576 : vector<2x32xf32>
    %cst_121 = arith.constant 1.000000e+00 : f32
    %578 = vector.broadcast %cst_121 : f32 to vector<2x32xf32>
    %579 = arith.addf %578, %577 : vector<2x32xf32>
    %580 = arith.divf %578, %579 : vector<2x32xf32>
    %581 = vector.extract_strided_slice %568 {offsets = [0, 64], sizes = [2, 32], strides = [1, 1]} : vector<2x128xf32> to vector<2x32xf32>
    %582 = math.tanh %581 : vector<2x32xf32>
    %583 = vector.extract_strided_slice %568 {offsets = [0, 96], sizes = [2, 32], strides = [1, 1]} : vector<2x128xf32> to vector<2x32xf32>
    %584 = arith.negf %583 : vector<2x32xf32>
    %585 = math.exp %584 : vector<2x32xf32>
    %cst_122 = arith.constant 1.000000e+00 : f32
    %586 = vector.broadcast %cst_122 : f32 to vector<2x32xf32>
    %587 = arith.addf %586, %585 : vector<2x32xf32>
    %588 = arith.divf %586, %587 : vector<2x32xf32>
    %589 = arith.mulf %580, %455 : vector<2x32xf32>
    %590 = arith.mulf %574, %582 : vector<2x32xf32>
    %591 = arith.addf %589, %590 : vector<2x32xf32>
    %592 = math.tanh %591 : vector<2x32xf32>
    %593 = arith.mulf %588, %592 : vector<2x32xf32>
    %c0_123 = arith.constant 0 : index
    %c4_124 = arith.constant 4 : index
    %c0_125 = arith.constant 0 : index
    %594 = vector.load %arg8[%c0_123, %c4_124, %c0_125] : memref<2x8x128xf32, #tpu.memory_space<vmem>>, vector<2x1x32xf32>
    %595 = vector.shape_cast %594 : vector<2x1x32xf32> to vector<2x32xf32>
    %596 = vector.shape_cast %593 : vector<2x32xf32> to vector<2x1x32xf32>
    tpu.vector_store %arg8[%c0_123, %c4_124, %c0_125], %596 {strides = array<i32>} : memref<2x8x128xf32, #tpu.memory_space<vmem>>, vector<2x1x32xf32>,
    %597 = vector.extract_strided_slice %9 {offsets = [0, 3, 128], sizes = [2, 1, 128], strides = [1, 1, 1]} : vector<2x8x512xf32> to vector<2x1x128xf32>
    %598 = vector.shape_cast %597 : vector<2x1x128xf32> to vector<2x128xf32>
    %599 = vector.extract_strided_slice %10 {offsets = [1, 0, 0], sizes = [1, 32, 128], strides = [1, 1, 1]} : vector<4x32x128xf32> to vector<1x32x128xf32>
    %600 = vector.shape_cast %599 : vector<1x32x128xf32> to vector<32x128xf32>
    %cst_126 = arith.constant dense<0.000000e+00> : vector<2x128xf32>
    %601 = tpu.matmul %491, %600, %cst_126 {dimension_numbers = #tpu.dot_dimension_numbers<[1], [0], [0], [1], [0, 0, 1, 1], [], []>} : vector<2x32xf32>, vector<32x128xf32>, vector<2x128xf32> -> vector<2x128xf32>
    %602 = arith.addf %598, %601 : vector<2x128xf32>
    %603 = vector.extract_strided_slice %602 {offsets = [0, 0], sizes = [2, 32], strides = [1, 1]} : vector<2x128xf32> to vector<2x32xf32>
    %604 = arith.negf %603 : vector<2x32xf32>
    %605 = math.exp %604 : vector<2x32xf32>
    %cst_127 = arith.constant 1.000000e+00 : f32
    %606 = vector.broadcast %cst_127 : f32 to vector<2x32xf32>
    %607 = arith.addf %606, %605 : vector<2x32xf32>
    %608 = arith.divf %606, %607 : vector<2x32xf32>
    %609 = vector.extract_strided_slice %602 {offsets = [0, 32], sizes = [2, 32], strides = [1, 1]} : vector<2x128xf32> to vector<2x32xf32>
    %610 = arith.negf %609 : vector<2x32xf32>
    %611 = math.exp %610 : vector<2x32xf32>
    %cst_128 = arith.constant 1.000000e+00 : f32
    %612 = vector.broadcast %cst_128 : f32 to vector<2x32xf32>
    %613 = arith.addf %612, %611 : vector<2x32xf32>
    %614 = arith.divf %612, %613 : vector<2x32xf32>
    %615 = vector.extract_strided_slice %602 {offsets = [0, 64], sizes = [2, 32], strides = [1, 1]} : vector<2x128xf32> to vector<2x32xf32>
    %616 = math.tanh %615 : vector<2x32xf32>
    %617 = vector.extract_strided_slice %602 {offsets = [0, 96], sizes = [2, 32], strides = [1, 1]} : vector<2x128xf32> to vector<2x32xf32>
    %618 = arith.negf %617 : vector<2x32xf32>
    %619 = math.exp %618 : vector<2x32xf32>
    %cst_129 = arith.constant 1.000000e+00 : f32
    %620 = vector.broadcast %cst_129 : f32 to vector<2x32xf32>
    %621 = arith.addf %620, %619 : vector<2x32xf32>
    %622 = arith.divf %620, %621 : vector<2x32xf32>
    %623 = arith.mulf %614, %489 : vector<2x32xf32>
    %624 = arith.mulf %608, %616 : vector<2x32xf32>
    %625 = arith.addf %623, %624 : vector<2x32xf32>
    %626 = math.tanh %625 : vector<2x32xf32>
    %627 = arith.mulf %622, %626 : vector<2x32xf32>
    %c0_130 = arith.constant 0 : index
    %c3_131 = arith.constant 3 : index
    %c32_132 = arith.constant 32 : index
    %628 = vector.load %arg8[%c0_130, %c3_131, %c32_132] : memref<2x8x128xf32, #tpu.memory_space<vmem>>, vector<2x1x32xf32>
    %629 = vector.shape_cast %628 : vector<2x1x32xf32> to vector<2x32xf32>
    %630 = vector.shape_cast %627 : vector<2x32xf32> to vector<2x1x32xf32>
    tpu.vector_store %arg8[%c0_130, %c3_131, %c32_132], %630 {strides = array<i32>} : memref<2x8x128xf32, #tpu.memory_space<vmem>>, vector<2x1x32xf32>,
    %631 = vector.extract_strided_slice %9 {offsets = [0, 4, 256], sizes = [2, 1, 128], strides = [1, 1, 1]} : vector<2x8x512xf32> to vector<2x1x128xf32>
    %632 = vector.shape_cast %631 : vector<2x1x128xf32> to vector<2x128xf32>
    %633 = vector.extract_strided_slice %10 {offsets = [2, 0, 0], sizes = [1, 32, 128], strides = [1, 1, 1]} : vector<4x32x128xf32> to vector<1x32x128xf32>
    %634 = vector.shape_cast %633 : vector<1x32x128xf32> to vector<32x128xf32>
    %cst_133 = arith.constant dense<0.000000e+00> : vector<2x128xf32>
    %635 = tpu.matmul %525, %634, %cst_133 {dimension_numbers = #tpu.dot_dimension_numbers<[1], [0], [0], [1], [0, 0, 1, 1], [], []>} : vector<2x32xf32>, vector<32x128xf32>, vector<2x128xf32> -> vector<2x128xf32>
    %636 = arith.addf %632, %635 : vector<2x128xf32>
    %637 = vector.extract_strided_slice %636 {offsets = [0, 0], sizes = [2, 32], strides = [1, 1]} : vector<2x128xf32> to vector<2x32xf32>
    %638 = arith.negf %637 : vector<2x32xf32>
    %639 = math.exp %638 : vector<2x32xf32>
    %cst_134 = arith.constant 1.000000e+00 : f32
    %640 = vector.broadcast %cst_134 : f32 to vector<2x32xf32>
    %641 = arith.addf %640, %639 : vector<2x32xf32>
    %642 = arith.divf %640, %641 : vector<2x32xf32>
    %643 = vector.extract_strided_slice %636 {offsets = [0, 32], sizes = [2, 32], strides = [1, 1]} : vector<2x128xf32> to vector<2x32xf32>
    %644 = arith.negf %643 : vector<2x32xf32>
    %645 = math.exp %644 : vector<2x32xf32>
    %cst_135 = arith.constant 1.000000e+00 : f32
    %646 = vector.broadcast %cst_135 : f32 to vector<2x32xf32>
    %647 = arith.addf %646, %645 : vector<2x32xf32>
    %648 = arith.divf %646, %647 : vector<2x32xf32>
    %649 = vector.extract_strided_slice %636 {offsets = [0, 64], sizes = [2, 32], strides = [1, 1]} : vector<2x128xf32> to vector<2x32xf32>
    %650 = math.tanh %649 : vector<2x32xf32>
    %651 = vector.extract_strided_slice %636 {offsets = [0, 96], sizes = [2, 32], strides = [1, 1]} : vector<2x128xf32> to vector<2x32xf32>
    %652 = arith.negf %651 : vector<2x32xf32>
    %653 = math.exp %652 : vector<2x32xf32>
    %cst_136 = arith.constant 1.000000e+00 : f32
    %654 = vector.broadcast %cst_136 : f32 to vector<2x32xf32>
    %655 = arith.addf %654, %653 : vector<2x32xf32>
    %656 = arith.divf %654, %655 : vector<2x32xf32>
    %657 = arith.mulf %648, %523 : vector<2x32xf32>
    %658 = arith.mulf %642, %650 : vector<2x32xf32>
    %659 = arith.addf %657, %658 : vector<2x32xf32>
    %660 = math.tanh %659 : vector<2x32xf32>
    %661 = arith.mulf %656, %660 : vector<2x32xf32>
    %c0_137 = arith.constant 0 : index
    %c4_138 = arith.constant 4 : index
    %c64_139 = arith.constant 64 : index
    %662 = vector.load %arg8[%c0_137, %c4_138, %c64_139] : memref<2x8x128xf32, #tpu.memory_space<vmem>>, vector<2x1x32xf32>
    %663 = vector.shape_cast %662 : vector<2x1x32xf32> to vector<2x32xf32>
    %664 = vector.shape_cast %661 : vector<2x32xf32> to vector<2x1x32xf32>
    tpu.vector_store %arg8[%c0_137, %c4_138, %c64_139], %664 {strides = array<i32>} : memref<2x8x128xf32, #tpu.memory_space<vmem>>, vector<2x1x32xf32>,
    %665 = vector.extract_strided_slice %9 {offsets = [0, 3, 384], sizes = [2, 1, 128], strides = [1, 1, 1]} : vector<2x8x512xf32> to vector<2x1x128xf32>
    %666 = vector.shape_cast %665 : vector<2x1x128xf32> to vector<2x128xf32>
    %667 = vector.extract_strided_slice %10 {offsets = [3, 0, 0], sizes = [1, 32, 128], strides = [1, 1, 1]} : vector<4x32x128xf32> to vector<1x32x128xf32>
    %668 = vector.shape_cast %667 : vector<1x32x128xf32> to vector<32x128xf32>
    %cst_140 = arith.constant dense<0.000000e+00> : vector<2x128xf32>
    %669 = tpu.matmul %559, %668, %cst_140 {dimension_numbers = #tpu.dot_dimension_numbers<[1], [0], [0], [1], [0, 0, 1, 1], [], []>} : vector<2x32xf32>, vector<32x128xf32>, vector<2x128xf32> -> vector<2x128xf32>
    %670 = arith.addf %666, %669 : vector<2x128xf32>
    %671 = vector.extract_strided_slice %670 {offsets = [0, 0], sizes = [2, 32], strides = [1, 1]} : vector<2x128xf32> to vector<2x32xf32>
    %672 = arith.negf %671 : vector<2x32xf32>
    %673 = math.exp %672 : vector<2x32xf32>
    %cst_141 = arith.constant 1.000000e+00 : f32
    %674 = vector.broadcast %cst_141 : f32 to vector<2x32xf32>
    %675 = arith.addf %674, %673 : vector<2x32xf32>
    %676 = arith.divf %674, %675 : vector<2x32xf32>
    %677 = vector.extract_strided_slice %670 {offsets = [0, 32], sizes = [2, 32], strides = [1, 1]} : vector<2x128xf32> to vector<2x32xf32>
    %678 = arith.negf %677 : vector<2x32xf32>
    %679 = math.exp %678 : vector<2x32xf32>
    %cst_142 = arith.constant 1.000000e+00 : f32
    %680 = vector.broadcast %cst_142 : f32 to vector<2x32xf32>
    %681 = arith.addf %680, %679 : vector<2x32xf32>
    %682 = arith.divf %680, %681 : vector<2x32xf32>
    %683 = vector.extract_strided_slice %670 {offsets = [0, 64], sizes = [2, 32], strides = [1, 1]} : vector<2x128xf32> to vector<2x32xf32>
    %684 = math.tanh %683 : vector<2x32xf32>
    %685 = vector.extract_strided_slice %670 {offsets = [0, 96], sizes = [2, 32], strides = [1, 1]} : vector<2x128xf32> to vector<2x32xf32>
    %686 = arith.negf %685 : vector<2x32xf32>
    %687 = math.exp %686 : vector<2x32xf32>
    %cst_143 = arith.constant 1.000000e+00 : f32
    %688 = vector.broadcast %cst_143 : f32 to vector<2x32xf32>
    %689 = arith.addf %688, %687 : vector<2x32xf32>
    %690 = arith.divf %688, %689 : vector<2x32xf32>
    %691 = arith.mulf %682, %557 : vector<2x32xf32>
    %692 = arith.mulf %676, %684 : vector<2x32xf32>
    %693 = arith.addf %691, %692 : vector<2x32xf32>
    %694 = math.tanh %693 : vector<2x32xf32>
    %695 = arith.mulf %690, %694 : vector<2x32xf32>
    %c0_144 = arith.constant 0 : index
    %c3_145 = arith.constant 3 : index
    %c96_146 = arith.constant 96 : index
    %696 = vector.load %arg8[%c0_144, %c3_145, %c96_146] : memref<2x8x128xf32, #tpu.memory_space<vmem>>, vector<2x1x32xf32>
    %697 = vector.shape_cast %696 : vector<2x1x32xf32> to vector<2x32xf32>
    %698 = vector.shape_cast %695 : vector<2x32xf32> to vector<2x1x32xf32>
    tpu.vector_store %arg8[%c0_144, %c3_145, %c96_146], %698 {strides = array<i32>} : memref<2x8x128xf32, #tpu.memory_space<vmem>>, vector<2x1x32xf32>,
    %699 = vector.extract_strided_slice %9 {offsets = [0, 5, 0], sizes = [2, 1, 128], strides = [1, 1, 1]} : vector<2x8x512xf32> to vector<2x1x128xf32>
    %700 = vector.shape_cast %699 : vector<2x1x128xf32> to vector<2x128xf32>
    %701 = vector.extract_strided_slice %10 {offsets = [0, 0, 0], sizes = [1, 32, 128], strides = [1, 1, 1]} : vector<4x32x128xf32> to vector<1x32x128xf32>
    %702 = vector.shape_cast %701 : vector<1x32x128xf32> to vector<32x128xf32>
    %cst_147 = arith.constant dense<0.000000e+00> : vector<2x128xf32>
    %703 = tpu.matmul %593, %702, %cst_147 {dimension_numbers = #tpu.dot_dimension_numbers<[1], [0], [0], [1], [0, 0, 1, 1], [], []>} : vector<2x32xf32>, vector<32x128xf32>, vector<2x128xf32> -> vector<2x128xf32>
    %704 = arith.addf %700, %703 : vector<2x128xf32>
    %705 = vector.extract_strided_slice %704 {offsets = [0, 0], sizes = [2, 32], strides = [1, 1]} : vector<2x128xf32> to vector<2x32xf32>
    %706 = arith.negf %705 : vector<2x32xf32>
    %707 = math.exp %706 : vector<2x32xf32>
    %cst_148 = arith.constant 1.000000e+00 : f32
    %708 = vector.broadcast %cst_148 : f32 to vector<2x32xf32>
    %709 = arith.addf %708, %707 : vector<2x32xf32>
    %710 = arith.divf %708, %709 : vector<2x32xf32>
    %711 = vector.extract_strided_slice %704 {offsets = [0, 32], sizes = [2, 32], strides = [1, 1]} : vector<2x128xf32> to vector<2x32xf32>
    %712 = arith.negf %711 : vector<2x32xf32>
    %713 = math.exp %712 : vector<2x32xf32>
    %cst_149 = arith.constant 1.000000e+00 : f32
    %714 = vector.broadcast %cst_149 : f32 to vector<2x32xf32>
    %715 = arith.addf %714, %713 : vector<2x32xf32>
    %716 = arith.divf %714, %715 : vector<2x32xf32>
    %717 = vector.extract_strided_slice %704 {offsets = [0, 64], sizes = [2, 32], strides = [1, 1]} : vector<2x128xf32> to vector<2x32xf32>
    %718 = math.tanh %717 : vector<2x32xf32>
    %719 = vector.extract_strided_slice %704 {offsets = [0, 96], sizes = [2, 32], strides = [1, 1]} : vector<2x128xf32> to vector<2x32xf32>
    %720 = arith.negf %719 : vector<2x32xf32>
    %721 = math.exp %720 : vector<2x32xf32>
    %cst_150 = arith.constant 1.000000e+00 : f32
    %722 = vector.broadcast %cst_150 : f32 to vector<2x32xf32>
    %723 = arith.addf %722, %721 : vector<2x32xf32>
    %724 = arith.divf %722, %723 : vector<2x32xf32>
    %725 = arith.mulf %716, %591 : vector<2x32xf32>
    %726 = arith.mulf %710, %718 : vector<2x32xf32>
    %727 = arith.addf %725, %726 : vector<2x32xf32>
    %728 = math.tanh %727 : vector<2x32xf32>
    %729 = arith.mulf %724, %728 : vector<2x32xf32>
    %c0_151 = arith.constant 0 : index
    %c5_152 = arith.constant 5 : index
    %c0_153 = arith.constant 0 : index
    %730 = vector.load %arg8[%c0_151, %c5_152, %c0_153] : memref<2x8x128xf32, #tpu.memory_space<vmem>>, vector<2x1x32xf32>
    %731 = vector.shape_cast %730 : vector<2x1x32xf32> to vector<2x32xf32>
    %732 = vector.shape_cast %729 : vector<2x32xf32> to vector<2x1x32xf32>
    tpu.vector_store %arg8[%c0_151, %c5_152, %c0_153], %732 {strides = array<i32>} : memref<2x8x128xf32, #tpu.memory_space<vmem>>, vector<2x1x32xf32>,
    %733 = vector.extract_strided_slice %9 {offsets = [0, 2, 128], sizes = [2, 1, 128], strides = [1, 1, 1]} : vector<2x8x512xf32> to vector<2x1x128xf32>
    %734 = vector.shape_cast %733 : vector<2x1x128xf32> to vector<2x128xf32>
    %735 = vector.extract_strided_slice %10 {offsets = [1, 0, 0], sizes = [1, 32, 128], strides = [1, 1, 1]} : vector<4x32x128xf32> to vector<1x32x128xf32>
    %736 = vector.shape_cast %735 : vector<1x32x128xf32> to vector<32x128xf32>
    %cst_154 = arith.constant dense<0.000000e+00> : vector<2x128xf32>
    %737 = tpu.matmul %627, %736, %cst_154 {dimension_numbers = #tpu.dot_dimension_numbers<[1], [0], [0], [1], [0, 0, 1, 1], [], []>} : vector<2x32xf32>, vector<32x128xf32>, vector<2x128xf32> -> vector<2x128xf32>
    %738 = arith.addf %734, %737 : vector<2x128xf32>
    %739 = vector.extract_strided_slice %738 {offsets = [0, 0], sizes = [2, 32], strides = [1, 1]} : vector<2x128xf32> to vector<2x32xf32>
    %740 = arith.negf %739 : vector<2x32xf32>
    %741 = math.exp %740 : vector<2x32xf32>
    %cst_155 = arith.constant 1.000000e+00 : f32
    %742 = vector.broadcast %cst_155 : f32 to vector<2x32xf32>
    %743 = arith.addf %742, %741 : vector<2x32xf32>
    %744 = arith.divf %742, %743 : vector<2x32xf32>
    %745 = vector.extract_strided_slice %738 {offsets = [0, 32], sizes = [2, 32], strides = [1, 1]} : vector<2x128xf32> to vector<2x32xf32>
    %746 = arith.negf %745 : vector<2x32xf32>
    %747 = math.exp %746 : vector<2x32xf32>
    %cst_156 = arith.constant 1.000000e+00 : f32
    %748 = vector.broadcast %cst_156 : f32 to vector<2x32xf32>
    %749 = arith.addf %748, %747 : vector<2x32xf32>
    %750 = arith.divf %748, %749 : vector<2x32xf32>
    %751 = vector.extract_strided_slice %738 {offsets = [0, 64], sizes = [2, 32], strides = [1, 1]} : vector<2x128xf32> to vector<2x32xf32>
    %752 = math.tanh %751 : vector<2x32xf32>
    %753 = vector.extract_strided_slice %738 {offsets = [0, 96], sizes = [2, 32], strides = [1, 1]} : vector<2x128xf32> to vector<2x32xf32>
    %754 = arith.negf %753 : vector<2x32xf32>
    %755 = math.exp %754 : vector<2x32xf32>
    %cst_157 = arith.constant 1.000000e+00 : f32
    %756 = vector.broadcast %cst_157 : f32 to vector<2x32xf32>
    %757 = arith.addf %756, %755 : vector<2x32xf32>
    %758 = arith.divf %756, %757 : vector<2x32xf32>
    %759 = arith.mulf %750, %625 : vector<2x32xf32>
    %760 = arith.mulf %744, %752 : vector<2x32xf32>
    %761 = arith.addf %759, %760 : vector<2x32xf32>
    %762 = math.tanh %761 : vector<2x32xf32>
    %763 = arith.mulf %758, %762 : vector<2x32xf32>
    %c0_158 = arith.constant 0 : index
    %c2_159 = arith.constant 2 : index
    %c32_160 = arith.constant 32 : index
    %764 = vector.load %arg8[%c0_158, %c2_159, %c32_160] : memref<2x8x128xf32, #tpu.memory_space<vmem>>, vector<2x1x32xf32>
    %765 = vector.shape_cast %764 : vector<2x1x32xf32> to vector<2x32xf32>
    %766 = vector.shape_cast %763 : vector<2x32xf32> to vector<2x1x32xf32>
    tpu.vector_store %arg8[%c0_158, %c2_159, %c32_160], %766 {strides = array<i32>} : memref<2x8x128xf32, #tpu.memory_space<vmem>>, vector<2x1x32xf32>,
    %767 = vector.extract_strided_slice %9 {offsets = [0, 5, 256], sizes = [2, 1, 128], strides = [1, 1, 1]} : vector<2x8x512xf32> to vector<2x1x128xf32>
    %768 = vector.shape_cast %767 : vector<2x1x128xf32> to vector<2x128xf32>
    %769 = vector.extract_strided_slice %10 {offsets = [2, 0, 0], sizes = [1, 32, 128], strides = [1, 1, 1]} : vector<4x32x128xf32> to vector<1x32x128xf32>
    %770 = vector.shape_cast %769 : vector<1x32x128xf32> to vector<32x128xf32>
    %cst_161 = arith.constant dense<0.000000e+00> : vector<2x128xf32>
    %771 = tpu.matmul %661, %770, %cst_161 {dimension_numbers = #tpu.dot_dimension_numbers<[1], [0], [0], [1], [0, 0, 1, 1], [], []>} : vector<2x32xf32>, vector<32x128xf32>, vector<2x128xf32> -> vector<2x128xf32>
    %772 = arith.addf %768, %771 : vector<2x128xf32>
    %773 = vector.extract_strided_slice %772 {offsets = [0, 0], sizes = [2, 32], strides = [1, 1]} : vector<2x128xf32> to vector<2x32xf32>
    %774 = arith.negf %773 : vector<2x32xf32>
    %775 = math.exp %774 : vector<2x32xf32>
    %cst_162 = arith.constant 1.000000e+00 : f32
    %776 = vector.broadcast %cst_162 : f32 to vector<2x32xf32>
    %777 = arith.addf %776, %775 : vector<2x32xf32>
    %778 = arith.divf %776, %777 : vector<2x32xf32>
    %779 = vector.extract_strided_slice %772 {offsets = [0, 32], sizes = [2, 32], strides = [1, 1]} : vector<2x128xf32> to vector<2x32xf32>
    %780 = arith.negf %779 : vector<2x32xf32>
    %781 = math.exp %780 : vector<2x32xf32>
    %cst_163 = arith.constant 1.000000e+00 : f32
    %782 = vector.broadcast %cst_163 : f32 to vector<2x32xf32>
    %783 = arith.addf %782, %781 : vector<2x32xf32>
    %784 = arith.divf %782, %783 : vector<2x32xf32>
    %785 = vector.extract_strided_slice %772 {offsets = [0, 64], sizes = [2, 32], strides = [1, 1]} : vector<2x128xf32> to vector<2x32xf32>
    %786 = math.tanh %785 : vector<2x32xf32>
    %787 = vector.extract_strided_slice %772 {offsets = [0, 96], sizes = [2, 32], strides = [1, 1]} : vector<2x128xf32> to vector<2x32xf32>
    %788 = arith.negf %787 : vector<2x32xf32>
    %789 = math.exp %788 : vector<2x32xf32>
    %cst_164 = arith.constant 1.000000e+00 : f32
    %790 = vector.broadcast %cst_164 : f32 to vector<2x32xf32>
    %791 = arith.addf %790, %789 : vector<2x32xf32>
    %792 = arith.divf %790, %791 : vector<2x32xf32>
    %793 = arith.mulf %784, %659 : vector<2x32xf32>
    %794 = arith.mulf %778, %786 : vector<2x32xf32>
    %795 = arith.addf %793, %794 : vector<2x32xf32>
    %796 = math.tanh %795 : vector<2x32xf32>
    %797 = arith.mulf %792, %796 : vector<2x32xf32>
    %c0_165 = arith.constant 0 : index
    %c5_166 = arith.constant 5 : index
    %c64_167 = arith.constant 64 : index
    %798 = vector.load %arg8[%c0_165, %c5_166, %c64_167] : memref<2x8x128xf32, #tpu.memory_space<vmem>>, vector<2x1x32xf32>
    %799 = vector.shape_cast %798 : vector<2x1x32xf32> to vector<2x32xf32>
    %800 = vector.shape_cast %797 : vector<2x32xf32> to vector<2x1x32xf32>
    tpu.vector_store %arg8[%c0_165, %c5_166, %c64_167], %800 {strides = array<i32>} : memref<2x8x128xf32, #tpu.memory_space<vmem>>, vector<2x1x32xf32>,
    %801 = vector.extract_strided_slice %9 {offsets = [0, 2, 384], sizes = [2, 1, 128], strides = [1, 1, 1]} : vector<2x8x512xf32> to vector<2x1x128xf32>
    %802 = vector.shape_cast %801 : vector<2x1x128xf32> to vector<2x128xf32>
    %803 = vector.extract_strided_slice %10 {offsets = [3, 0, 0], sizes = [1, 32, 128], strides = [1, 1, 1]} : vector<4x32x128xf32> to vector<1x32x128xf32>
    %804 = vector.shape_cast %803 : vector<1x32x128xf32> to vector<32x128xf32>
    %cst_168 = arith.constant dense<0.000000e+00> : vector<2x128xf32>
    %805 = tpu.matmul %695, %804, %cst_168 {dimension_numbers = #tpu.dot_dimension_numbers<[1], [0], [0], [1], [0, 0, 1, 1], [], []>} : vector<2x32xf32>, vector<32x128xf32>, vector<2x128xf32> -> vector<2x128xf32>
    %806 = arith.addf %802, %805 : vector<2x128xf32>
    %807 = vector.extract_strided_slice %806 {offsets = [0, 0], sizes = [2, 32], strides = [1, 1]} : vector<2x128xf32> to vector<2x32xf32>
    %808 = arith.negf %807 : vector<2x32xf32>
    %809 = math.exp %808 : vector<2x32xf32>
    %cst_169 = arith.constant 1.000000e+00 : f32
    %810 = vector.broadcast %cst_169 : f32 to vector<2x32xf32>
    %811 = arith.addf %810, %809 : vector<2x32xf32>
    %812 = arith.divf %810, %811 : vector<2x32xf32>
    %813 = vector.extract_strided_slice %806 {offsets = [0, 32], sizes = [2, 32], strides = [1, 1]} : vector<2x128xf32> to vector<2x32xf32>
    %814 = arith.negf %813 : vector<2x32xf32>
    %815 = math.exp %814 : vector<2x32xf32>
    %cst_170 = arith.constant 1.000000e+00 : f32
    %816 = vector.broadcast %cst_170 : f32 to vector<2x32xf32>
    %817 = arith.addf %816, %815 : vector<2x32xf32>
    %818 = arith.divf %816, %817 : vector<2x32xf32>
    %819 = vector.extract_strided_slice %806 {offsets = [0, 64], sizes = [2, 32], strides = [1, 1]} : vector<2x128xf32> to vector<2x32xf32>
    %820 = math.tanh %819 : vector<2x32xf32>
    %821 = vector.extract_strided_slice %806 {offsets = [0, 96], sizes = [2, 32], strides = [1, 1]} : vector<2x128xf32> to vector<2x32xf32>
    %822 = arith.negf %821 : vector<2x32xf32>
    %823 = math.exp %822 : vector<2x32xf32>
    %cst_171 = arith.constant 1.000000e+00 : f32
    %824 = vector.broadcast %cst_171 : f32 to vector<2x32xf32>
    %825 = arith.addf %824, %823 : vector<2x32xf32>
    %826 = arith.divf %824, %825 : vector<2x32xf32>
    %827 = arith.mulf %818, %693 : vector<2x32xf32>
    %828 = arith.mulf %812, %820 : vector<2x32xf32>
    %829 = arith.addf %827, %828 : vector<2x32xf32>
    %830 = math.tanh %829 : vector<2x32xf32>
    %831 = arith.mulf %826, %830 : vector<2x32xf32>
    %c0_172 = arith.constant 0 : index
    %c2_173 = arith.constant 2 : index
    %c96_174 = arith.constant 96 : index
    %832 = vector.load %arg8[%c0_172, %c2_173, %c96_174] : memref<2x8x128xf32, #tpu.memory_space<vmem>>, vector<2x1x32xf32>
    %833 = vector.shape_cast %832 : vector<2x1x32xf32> to vector<2x32xf32>
    %834 = vector.shape_cast %831 : vector<2x32xf32> to vector<2x1x32xf32>
    tpu.vector_store %arg8[%c0_172, %c2_173, %c96_174], %834 {strides = array<i32>} : memref<2x8x128xf32, #tpu.memory_space<vmem>>, vector<2x1x32xf32>,
    %835 = vector.extract_strided_slice %9 {offsets = [0, 6, 0], sizes = [2, 1, 128], strides = [1, 1, 1]} : vector<2x8x512xf32> to vector<2x1x128xf32>
    %836 = vector.shape_cast %835 : vector<2x1x128xf32> to vector<2x128xf32>
    %837 = vector.extract_strided_slice %10 {offsets = [0, 0, 0], sizes = [1, 32, 128], strides = [1, 1, 1]} : vector<4x32x128xf32> to vector<1x32x128xf32>
    %838 = vector.shape_cast %837 : vector<1x32x128xf32> to vector<32x128xf32>
    %cst_175 = arith.constant dense<0.000000e+00> : vector<2x128xf32>
    %839 = tpu.matmul %729, %838, %cst_175 {dimension_numbers = #tpu.dot_dimension_numbers<[1], [0], [0], [1], [0, 0, 1, 1], [], []>} : vector<2x32xf32>, vector<32x128xf32>, vector<2x128xf32> -> vector<2x128xf32>
    %840 = arith.addf %836, %839 : vector<2x128xf32>
    %841 = vector.extract_strided_slice %840 {offsets = [0, 0], sizes = [2, 32], strides = [1, 1]} : vector<2x128xf32> to vector<2x32xf32>
    %842 = arith.negf %841 : vector<2x32xf32>
    %843 = math.exp %842 : vector<2x32xf32>
    %cst_176 = arith.constant 1.000000e+00 : f32
    %844 = vector.broadcast %cst_176 : f32 to vector<2x32xf32>
    %845 = arith.addf %844, %843 : vector<2x32xf32>
    %846 = arith.divf %844, %845 : vector<2x32xf32>
    %847 = vector.extract_strided_slice %840 {offsets = [0, 32], sizes = [2, 32], strides = [1, 1]} : vector<2x128xf32> to vector<2x32xf32>
    %848 = arith.negf %847 : vector<2x32xf32>
    %849 = math.exp %848 : vector<2x32xf32>
    %cst_177 = arith.constant 1.000000e+00 : f32
    %850 = vector.broadcast %cst_177 : f32 to vector<2x32xf32>
    %851 = arith.addf %850, %849 : vector<2x32xf32>
    %852 = arith.divf %850, %851 : vector<2x32xf32>
    %853 = vector.extract_strided_slice %840 {offsets = [0, 64], sizes = [2, 32], strides = [1, 1]} : vector<2x128xf32> to vector<2x32xf32>
    %854 = math.tanh %853 : vector<2x32xf32>
    %855 = vector.extract_strided_slice %840 {offsets = [0, 96], sizes = [2, 32], strides = [1, 1]} : vector<2x128xf32> to vector<2x32xf32>
    %856 = arith.negf %855 : vector<2x32xf32>
    %857 = math.exp %856 : vector<2x32xf32>
    %cst_178 = arith.constant 1.000000e+00 : f32
    %858 = vector.broadcast %cst_178 : f32 to vector<2x32xf32>
    %859 = arith.addf %858, %857 : vector<2x32xf32>
    %860 = arith.divf %858, %859 : vector<2x32xf32>
    %861 = arith.mulf %852, %727 : vector<2x32xf32>
    %862 = arith.mulf %846, %854 : vector<2x32xf32>
    %863 = arith.addf %861, %862 : vector<2x32xf32>
    %864 = math.tanh %863 : vector<2x32xf32>
    %865 = arith.mulf %860, %864 : vector<2x32xf32>
    %c0_179 = arith.constant 0 : index
    %c6_180 = arith.constant 6 : index
    %c0_181 = arith.constant 0 : index
    %866 = vector.load %arg8[%c0_179, %c6_180, %c0_181] : memref<2x8x128xf32, #tpu.memory_space<vmem>>, vector<2x1x32xf32>
    %867 = vector.shape_cast %866 : vector<2x1x32xf32> to vector<2x32xf32>
    %868 = vector.shape_cast %865 : vector<2x32xf32> to vector<2x1x32xf32>
    tpu.vector_store %arg8[%c0_179, %c6_180, %c0_181], %868 {strides = array<i32>} : memref<2x8x128xf32, #tpu.memory_space<vmem>>, vector<2x1x32xf32>,
    %869 = vector.extract_strided_slice %9 {offsets = [0, 1, 128], sizes = [2, 1, 128], strides = [1, 1, 1]} : vector<2x8x512xf32> to vector<2x1x128xf32>
    %870 = vector.shape_cast %869 : vector<2x1x128xf32> to vector<2x128xf32>
    %871 = vector.extract_strided_slice %10 {offsets = [1, 0, 0], sizes = [1, 32, 128], strides = [1, 1, 1]} : vector<4x32x128xf32> to vector<1x32x128xf32>
    %872 = vector.shape_cast %871 : vector<1x32x128xf32> to vector<32x128xf32>
    %cst_182 = arith.constant dense<0.000000e+00> : vector<2x128xf32>
    %873 = tpu.matmul %763, %872, %cst_182 {dimension_numbers = #tpu.dot_dimension_numbers<[1], [0], [0], [1], [0, 0, 1, 1], [], []>} : vector<2x32xf32>, vector<32x128xf32>, vector<2x128xf32> -> vector<2x128xf32>
    %874 = arith.addf %870, %873 : vector<2x128xf32>
    %875 = vector.extract_strided_slice %874 {offsets = [0, 0], sizes = [2, 32], strides = [1, 1]} : vector<2x128xf32> to vector<2x32xf32>
    %876 = arith.negf %875 : vector<2x32xf32>
    %877 = math.exp %876 : vector<2x32xf32>
    %cst_183 = arith.constant 1.000000e+00 : f32
    %878 = vector.broadcast %cst_183 : f32 to vector<2x32xf32>
    %879 = arith.addf %878, %877 : vector<2x32xf32>
    %880 = arith.divf %878, %879 : vector<2x32xf32>
    %881 = vector.extract_strided_slice %874 {offsets = [0, 32], sizes = [2, 32], strides = [1, 1]} : vector<2x128xf32> to vector<2x32xf32>
    %882 = arith.negf %881 : vector<2x32xf32>
    %883 = math.exp %882 : vector<2x32xf32>
    %cst_184 = arith.constant 1.000000e+00 : f32
    %884 = vector.broadcast %cst_184 : f32 to vector<2x32xf32>
    %885 = arith.addf %884, %883 : vector<2x32xf32>
    %886 = arith.divf %884, %885 : vector<2x32xf32>
    %887 = vector.extract_strided_slice %874 {offsets = [0, 64], sizes = [2, 32], strides = [1, 1]} : vector<2x128xf32> to vector<2x32xf32>
    %888 = math.tanh %887 : vector<2x32xf32>
    %889 = vector.extract_strided_slice %874 {offsets = [0, 96], sizes = [2, 32], strides = [1, 1]} : vector<2x128xf32> to vector<2x32xf32>
    %890 = arith.negf %889 : vector<2x32xf32>
    %891 = math.exp %890 : vector<2x32xf32>
    %cst_185 = arith.constant 1.000000e+00 : f32
    %892 = vector.broadcast %cst_185 : f32 to vector<2x32xf32>
    %893 = arith.addf %892, %891 : vector<2x32xf32>
    %894 = arith.divf %892, %893 : vector<2x32xf32>
    %895 = arith.mulf %886, %761 : vector<2x32xf32>
    %896 = arith.mulf %880, %888 : vector<2x32xf32>
    %897 = arith.addf %895, %896 : vector<2x32xf32>
    %898 = math.tanh %897 : vector<2x32xf32>
    %899 = arith.mulf %894, %898 : vector<2x32xf32>
    %c0_186 = arith.constant 0 : index
    %c1_187 = arith.constant 1 : index
    %c32_188 = arith.constant 32 : index
    %900 = vector.load %arg8[%c0_186, %c1_187, %c32_188] : memref<2x8x128xf32, #tpu.memory_space<vmem>>, vector<2x1x32xf32>
    %901 = vector.shape_cast %900 : vector<2x1x32xf32> to vector<2x32xf32>
    %902 = vector.shape_cast %899 : vector<2x32xf32> to vector<2x1x32xf32>
    tpu.vector_store %arg8[%c0_186, %c1_187, %c32_188], %902 {strides = array<i32>} : memref<2x8x128xf32, #tpu.memory_space<vmem>>, vector<2x1x32xf32>,
    %903 = vector.extract_strided_slice %9 {offsets = [0, 6, 256], sizes = [2, 1, 128], strides = [1, 1, 1]} : vector<2x8x512xf32> to vector<2x1x128xf32>
    %904 = vector.shape_cast %903 : vector<2x1x128xf32> to vector<2x128xf32>
    %905 = vector.extract_strided_slice %10 {offsets = [2, 0, 0], sizes = [1, 32, 128], strides = [1, 1, 1]} : vector<4x32x128xf32> to vector<1x32x128xf32>
    %906 = vector.shape_cast %905 : vector<1x32x128xf32> to vector<32x128xf32>
    %cst_189 = arith.constant dense<0.000000e+00> : vector<2x128xf32>
    %907 = tpu.matmul %797, %906, %cst_189 {dimension_numbers = #tpu.dot_dimension_numbers<[1], [0], [0], [1], [0, 0, 1, 1], [], []>} : vector<2x32xf32>, vector<32x128xf32>, vector<2x128xf32> -> vector<2x128xf32>
    %908 = arith.addf %904, %907 : vector<2x128xf32>
    %909 = vector.extract_strided_slice %908 {offsets = [0, 0], sizes = [2, 32], strides = [1, 1]} : vector<2x128xf32> to vector<2x32xf32>
    %910 = arith.negf %909 : vector<2x32xf32>
    %911 = math.exp %910 : vector<2x32xf32>
    %cst_190 = arith.constant 1.000000e+00 : f32
    %912 = vector.broadcast %cst_190 : f32 to vector<2x32xf32>
    %913 = arith.addf %912, %911 : vector<2x32xf32>
    %914 = arith.divf %912, %913 : vector<2x32xf32>
    %915 = vector.extract_strided_slice %908 {offsets = [0, 32], sizes = [2, 32], strides = [1, 1]} : vector<2x128xf32> to vector<2x32xf32>
    %916 = arith.negf %915 : vector<2x32xf32>
    %917 = math.exp %916 : vector<2x32xf32>
    %cst_191 = arith.constant 1.000000e+00 : f32
    %918 = vector.broadcast %cst_191 : f32 to vector<2x32xf32>
    %919 = arith.addf %918, %917 : vector<2x32xf32>
    %920 = arith.divf %918, %919 : vector<2x32xf32>
    %921 = vector.extract_strided_slice %908 {offsets = [0, 64], sizes = [2, 32], strides = [1, 1]} : vector<2x128xf32> to vector<2x32xf32>
    %922 = math.tanh %921 : vector<2x32xf32>
    %923 = vector.extract_strided_slice %908 {offsets = [0, 96], sizes = [2, 32], strides = [1, 1]} : vector<2x128xf32> to vector<2x32xf32>
    %924 = arith.negf %923 : vector<2x32xf32>
    %925 = math.exp %924 : vector<2x32xf32>
    %cst_192 = arith.constant 1.000000e+00 : f32
    %926 = vector.broadcast %cst_192 : f32 to vector<2x32xf32>
    %927 = arith.addf %926, %925 : vector<2x32xf32>
    %928 = arith.divf %926, %927 : vector<2x32xf32>
    %929 = arith.mulf %920, %795 : vector<2x32xf32>
    %930 = arith.mulf %914, %922 : vector<2x32xf32>
    %931 = arith.addf %929, %930 : vector<2x32xf32>
    %932 = math.tanh %931 : vector<2x32xf32>
    %933 = arith.mulf %928, %932 : vector<2x32xf32>
    %c0_193 = arith.constant 0 : index
    %c6_194 = arith.constant 6 : index
    %c64_195 = arith.constant 64 : index
    %934 = vector.load %arg8[%c0_193, %c6_194, %c64_195] : memref<2x8x128xf32, #tpu.memory_space<vmem>>, vector<2x1x32xf32>
    %935 = vector.shape_cast %934 : vector<2x1x32xf32> to vector<2x32xf32>
    %936 = vector.shape_cast %933 : vector<2x32xf32> to vector<2x1x32xf32>
    tpu.vector_store %arg8[%c0_193, %c6_194, %c64_195], %936 {strides = array<i32>} : memref<2x8x128xf32, #tpu.memory_space<vmem>>, vector<2x1x32xf32>,
    %937 = vector.extract_strided_slice %9 {offsets = [0, 1, 384], sizes = [2, 1, 128], strides = [1, 1, 1]} : vector<2x8x512xf32> to vector<2x1x128xf32>
    %938 = vector.shape_cast %937 : vector<2x1x128xf32> to vector<2x128xf32>
    %939 = vector.extract_strided_slice %10 {offsets = [3, 0, 0], sizes = [1, 32, 128], strides = [1, 1, 1]} : vector<4x32x128xf32> to vector<1x32x128xf32>
    %940 = vector.shape_cast %939 : vector<1x32x128xf32> to vector<32x128xf32>
    %cst_196 = arith.constant dense<0.000000e+00> : vector<2x128xf32>
    %941 = tpu.matmul %831, %940, %cst_196 {dimension_numbers = #tpu.dot_dimension_numbers<[1], [0], [0], [1], [0, 0, 1, 1], [], []>} : vector<2x32xf32>, vector<32x128xf32>, vector<2x128xf32> -> vector<2x128xf32>
    %942 = arith.addf %938, %941 : vector<2x128xf32>
    %943 = vector.extract_strided_slice %942 {offsets = [0, 0], sizes = [2, 32], strides = [1, 1]} : vector<2x128xf32> to vector<2x32xf32>
    %944 = arith.negf %943 : vector<2x32xf32>
    %945 = math.exp %944 : vector<2x32xf32>
    %cst_197 = arith.constant 1.000000e+00 : f32
    %946 = vector.broadcast %cst_197 : f32 to vector<2x32xf32>
    %947 = arith.addf %946, %945 : vector<2x32xf32>
    %948 = arith.divf %946, %947 : vector<2x32xf32>
    %949 = vector.extract_strided_slice %942 {offsets = [0, 32], sizes = [2, 32], strides = [1, 1]} : vector<2x128xf32> to vector<2x32xf32>
    %950 = arith.negf %949 : vector<2x32xf32>
    %951 = math.exp %950 : vector<2x32xf32>
    %cst_198 = arith.constant 1.000000e+00 : f32
    %952 = vector.broadcast %cst_198 : f32 to vector<2x32xf32>
    %953 = arith.addf %952, %951 : vector<2x32xf32>
    %954 = arith.divf %952, %953 : vector<2x32xf32>
    %955 = vector.extract_strided_slice %942 {offsets = [0, 64], sizes = [2, 32], strides = [1, 1]} : vector<2x128xf32> to vector<2x32xf32>
    %956 = math.tanh %955 : vector<2x32xf32>
    %957 = vector.extract_strided_slice %942 {offsets = [0, 96], sizes = [2, 32], strides = [1, 1]} : vector<2x128xf32> to vector<2x32xf32>
    %958 = arith.negf %957 : vector<2x32xf32>
    %959 = math.exp %958 : vector<2x32xf32>
    %cst_199 = arith.constant 1.000000e+00 : f32
    %960 = vector.broadcast %cst_199 : f32 to vector<2x32xf32>
    %961 = arith.addf %960, %959 : vector<2x32xf32>
    %962 = arith.divf %960, %961 : vector<2x32xf32>
    %963 = arith.mulf %954, %829 : vector<2x32xf32>
    %964 = arith.mulf %948, %956 : vector<2x32xf32>
    %965 = arith.addf %963, %964 : vector<2x32xf32>
    %966 = math.tanh %965 : vector<2x32xf32>
    %967 = arith.mulf %962, %966 : vector<2x32xf32>
    %c0_200 = arith.constant 0 : index
    %c1_201 = arith.constant 1 : index
    %c96_202 = arith.constant 96 : index
    %968 = vector.load %arg8[%c0_200, %c1_201, %c96_202] : memref<2x8x128xf32, #tpu.memory_space<vmem>>, vector<2x1x32xf32>
    %969 = vector.shape_cast %968 : vector<2x1x32xf32> to vector<2x32xf32>
    %970 = vector.shape_cast %967 : vector<2x32xf32> to vector<2x1x32xf32>
    tpu.vector_store %arg8[%c0_200, %c1_201, %c96_202], %970 {strides = array<i32>} : memref<2x8x128xf32, #tpu.memory_space<vmem>>, vector<2x1x32xf32>,
    %971 = vector.extract_strided_slice %9 {offsets = [0, 7, 0], sizes = [2, 1, 128], strides = [1, 1, 1]} : vector<2x8x512xf32> to vector<2x1x128xf32>
    %972 = vector.shape_cast %971 : vector<2x1x128xf32> to vector<2x128xf32>
    %973 = vector.extract_strided_slice %10 {offsets = [0, 0, 0], sizes = [1, 32, 128], strides = [1, 1, 1]} : vector<4x32x128xf32> to vector<1x32x128xf32>
    %974 = vector.shape_cast %973 : vector<1x32x128xf32> to vector<32x128xf32>
    %cst_203 = arith.constant dense<0.000000e+00> : vector<2x128xf32>
    %975 = tpu.matmul %865, %974, %cst_203 {dimension_numbers = #tpu.dot_dimension_numbers<[1], [0], [0], [1], [0, 0, 1, 1], [], []>} : vector<2x32xf32>, vector<32x128xf32>, vector<2x128xf32> -> vector<2x128xf32>
    %976 = arith.addf %972, %975 : vector<2x128xf32>
    %977 = vector.extract_strided_slice %976 {offsets = [0, 0], sizes = [2, 32], strides = [1, 1]} : vector<2x128xf32> to vector<2x32xf32>
    %978 = arith.negf %977 : vector<2x32xf32>
    %979 = math.exp %978 : vector<2x32xf32>
    %cst_204 = arith.constant 1.000000e+00 : f32
    %980 = vector.broadcast %cst_204 : f32 to vector<2x32xf32>
    %981 = arith.addf %980, %979 : vector<2x32xf32>
    %982 = arith.divf %980, %981 : vector<2x32xf32>
    %983 = vector.extract_strided_slice %976 {offsets = [0, 32], sizes = [2, 32], strides = [1, 1]} : vector<2x128xf32> to vector<2x32xf32>
    %984 = arith.negf %983 : vector<2x32xf32>
    %985 = math.exp %984 : vector<2x32xf32>
    %cst_205 = arith.constant 1.000000e+00 : f32
    %986 = vector.broadcast %cst_205 : f32 to vector<2x32xf32>
    %987 = arith.addf %986, %985 : vector<2x32xf32>
    %988 = arith.divf %986, %987 : vector<2x32xf32>
    %989 = vector.extract_strided_slice %976 {offsets = [0, 64], sizes = [2, 32], strides = [1, 1]} : vector<2x128xf32> to vector<2x32xf32>
    %990 = math.tanh %989 : vector<2x32xf32>
    %991 = vector.extract_strided_slice %976 {offsets = [0, 96], sizes = [2, 32], strides = [1, 1]} : vector<2x128xf32> to vector<2x32xf32>
    %992 = arith.negf %991 : vector<2x32xf32>
    %993 = math.exp %992 : vector<2x32xf32>
    %cst_206 = arith.constant 1.000000e+00 : f32
    %994 = vector.broadcast %cst_206 : f32 to vector<2x32xf32>
    %995 = arith.addf %994, %993 : vector<2x32xf32>
    %996 = arith.divf %994, %995 : vector<2x32xf32>
    %997 = arith.mulf %988, %863 : vector<2x32xf32>
    %998 = arith.mulf %982, %990 : vector<2x32xf32>
    %999 = arith.addf %997, %998 : vector<2x32xf32>
    %1000 = math.tanh %999 : vector<2x32xf32>
    %1001 = arith.mulf %996, %1000 : vector<2x32xf32>
    %c0_207 = arith.constant 0 : index
    %c7_208 = arith.constant 7 : index
    %c0_209 = arith.constant 0 : index
    %1002 = vector.load %arg8[%c0_207, %c7_208, %c0_209] : memref<2x8x128xf32, #tpu.memory_space<vmem>>, vector<2x1x32xf32>
    %1003 = vector.shape_cast %1002 : vector<2x1x32xf32> to vector<2x32xf32>
    %1004 = vector.shape_cast %1001 : vector<2x32xf32> to vector<2x1x32xf32>
    tpu.vector_store %arg8[%c0_207, %c7_208, %c0_209], %1004 {strides = array<i32>} : memref<2x8x128xf32, #tpu.memory_space<vmem>>, vector<2x1x32xf32>,
    %1005 = vector.extract_strided_slice %9 {offsets = [0, 0, 128], sizes = [2, 1, 128], strides = [1, 1, 1]} : vector<2x8x512xf32> to vector<2x1x128xf32>
    %1006 = vector.shape_cast %1005 : vector<2x1x128xf32> to vector<2x128xf32>
    %1007 = vector.extract_strided_slice %10 {offsets = [1, 0, 0], sizes = [1, 32, 128], strides = [1, 1, 1]} : vector<4x32x128xf32> to vector<1x32x128xf32>
    %1008 = vector.shape_cast %1007 : vector<1x32x128xf32> to vector<32x128xf32>
    %cst_210 = arith.constant dense<0.000000e+00> : vector<2x128xf32>
    %1009 = tpu.matmul %899, %1008, %cst_210 {dimension_numbers = #tpu.dot_dimension_numbers<[1], [0], [0], [1], [0, 0, 1, 1], [], []>} : vector<2x32xf32>, vector<32x128xf32>, vector<2x128xf32> -> vector<2x128xf32>
    %1010 = arith.addf %1006, %1009 : vector<2x128xf32>
    %1011 = vector.extract_strided_slice %1010 {offsets = [0, 0], sizes = [2, 32], strides = [1, 1]} : vector<2x128xf32> to vector<2x32xf32>
    %1012 = arith.negf %1011 : vector<2x32xf32>
    %1013 = math.exp %1012 : vector<2x32xf32>
    %cst_211 = arith.constant 1.000000e+00 : f32
    %1014 = vector.broadcast %cst_211 : f32 to vector<2x32xf32>
    %1015 = arith.addf %1014, %1013 : vector<2x32xf32>
    %1016 = arith.divf %1014, %1015 : vector<2x32xf32>
    %1017 = vector.extract_strided_slice %1010 {offsets = [0, 32], sizes = [2, 32], strides = [1, 1]} : vector<2x128xf32> to vector<2x32xf32>
    %1018 = arith.negf %1017 : vector<2x32xf32>
    %1019 = math.exp %1018 : vector<2x32xf32>
    %cst_212 = arith.constant 1.000000e+00 : f32
    %1020 = vector.broadcast %cst_212 : f32 to vector<2x32xf32>
    %1021 = arith.addf %1020, %1019 : vector<2x32xf32>
    %1022 = arith.divf %1020, %1021 : vector<2x32xf32>
    %1023 = vector.extract_strided_slice %1010 {offsets = [0, 64], sizes = [2, 32], strides = [1, 1]} : vector<2x128xf32> to vector<2x32xf32>
    %1024 = math.tanh %1023 : vector<2x32xf32>
    %1025 = vector.extract_strided_slice %1010 {offsets = [0, 96], sizes = [2, 32], strides = [1, 1]} : vector<2x128xf32> to vector<2x32xf32>
    %1026 = arith.negf %1025 : vector<2x32xf32>
    %1027 = math.exp %1026 : vector<2x32xf32>
    %cst_213 = arith.constant 1.000000e+00 : f32
    %1028 = vector.broadcast %cst_213 : f32 to vector<2x32xf32>
    %1029 = arith.addf %1028, %1027 : vector<2x32xf32>
    %1030 = arith.divf %1028, %1029 : vector<2x32xf32>
    %1031 = arith.mulf %1022, %897 : vector<2x32xf32>
    %1032 = arith.mulf %1016, %1024 : vector<2x32xf32>
    %1033 = arith.addf %1031, %1032 : vector<2x32xf32>
    %1034 = math.tanh %1033 : vector<2x32xf32>
    %1035 = arith.mulf %1030, %1034 : vector<2x32xf32>
    %c0_214 = arith.constant 0 : index
    %c0_215 = arith.constant 0 : index
    %c32_216 = arith.constant 32 : index
    %1036 = vector.load %arg8[%c0_214, %c0_215, %c32_216] : memref<2x8x128xf32, #tpu.memory_space<vmem>>, vector<2x1x32xf32>
    %1037 = vector.shape_cast %1036 : vector<2x1x32xf32> to vector<2x32xf32>
    %1038 = vector.shape_cast %1035 : vector<2x32xf32> to vector<2x1x32xf32>
    tpu.vector_store %arg8[%c0_214, %c0_215, %c32_216], %1038 {strides = array<i32>} : memref<2x8x128xf32, #tpu.memory_space<vmem>>, vector<2x1x32xf32>,
    %1039 = vector.extract_strided_slice %9 {offsets = [0, 7, 256], sizes = [2, 1, 128], strides = [1, 1, 1]} : vector<2x8x512xf32> to vector<2x1x128xf32>
    %1040 = vector.shape_cast %1039 : vector<2x1x128xf32> to vector<2x128xf32>
    %1041 = vector.extract_strided_slice %10 {offsets = [2, 0, 0], sizes = [1, 32, 128], strides = [1, 1, 1]} : vector<4x32x128xf32> to vector<1x32x128xf32>
    %1042 = vector.shape_cast %1041 : vector<1x32x128xf32> to vector<32x128xf32>
    %cst_217 = arith.constant dense<0.000000e+00> : vector<2x128xf32>
    %1043 = tpu.matmul %933, %1042, %cst_217 {dimension_numbers = #tpu.dot_dimension_numbers<[1], [0], [0], [1], [0, 0, 1, 1], [], []>} : vector<2x32xf32>, vector<32x128xf32>, vector<2x128xf32> -> vector<2x128xf32>
    %1044 = arith.addf %1040, %1043 : vector<2x128xf32>
    %1045 = vector.extract_strided_slice %1044 {offsets = [0, 0], sizes = [2, 32], strides = [1, 1]} : vector<2x128xf32> to vector<2x32xf32>
    %1046 = arith.negf %1045 : vector<2x32xf32>
    %1047 = math.exp %1046 : vector<2x32xf32>
    %cst_218 = arith.constant 1.000000e+00 : f32
    %1048 = vector.broadcast %cst_218 : f32 to vector<2x32xf32>
    %1049 = arith.addf %1048, %1047 : vector<2x32xf32>
    %1050 = arith.divf %1048, %1049 : vector<2x32xf32>
    %1051 = vector.extract_strided_slice %1044 {offsets = [0, 32], sizes = [2, 32], strides = [1, 1]} : vector<2x128xf32> to vector<2x32xf32>
    %1052 = arith.negf %1051 : vector<2x32xf32>
    %1053 = math.exp %1052 : vector<2x32xf32>
    %cst_219 = arith.constant 1.000000e+00 : f32
    %1054 = vector.broadcast %cst_219 : f32 to vector<2x32xf32>
    %1055 = arith.addf %1054, %1053 : vector<2x32xf32>
    %1056 = arith.divf %1054, %1055 : vector<2x32xf32>
    %1057 = vector.extract_strided_slice %1044 {offsets = [0, 64], sizes = [2, 32], strides = [1, 1]} : vector<2x128xf32> to vector<2x32xf32>
    %1058 = math.tanh %1057 : vector<2x32xf32>
    %1059 = vector.extract_strided_slice %1044 {offsets = [0, 96], sizes = [2, 32], strides = [1, 1]} : vector<2x128xf32> to vector<2x32xf32>
    %1060 = arith.negf %1059 : vector<2x32xf32>
    %1061 = math.exp %1060 : vector<2x32xf32>
    %cst_220 = arith.constant 1.000000e+00 : f32
    %1062 = vector.broadcast %cst_220 : f32 to vector<2x32xf32>
    %1063 = arith.addf %1062, %1061 : vector<2x32xf32>
    %1064 = arith.divf %1062, %1063 : vector<2x32xf32>
    %1065 = arith.mulf %1056, %931 : vector<2x32xf32>
    %1066 = arith.mulf %1050, %1058 : vector<2x32xf32>
    %1067 = arith.addf %1065, %1066 : vector<2x32xf32>
    %1068 = math.tanh %1067 : vector<2x32xf32>
    %1069 = arith.mulf %1064, %1068 : vector<2x32xf32>
    %c0_221 = arith.constant 0 : index
    %c7_222 = arith.constant 7 : index
    %c64_223 = arith.constant 64 : index
    %1070 = vector.load %arg8[%c0_221, %c7_222, %c64_223] : memref<2x8x128xf32, #tpu.memory_space<vmem>>, vector<2x1x32xf32>
    %1071 = vector.shape_cast %1070 : vector<2x1x32xf32> to vector<2x32xf32>
    %1072 = vector.shape_cast %1069 : vector<2x32xf32> to vector<2x1x32xf32>
    tpu.vector_store %arg8[%c0_221, %c7_222, %c64_223], %1072 {strides = array<i32>} : memref<2x8x128xf32, #tpu.memory_space<vmem>>, vector<2x1x32xf32>,
    %1073 = vector.extract_strided_slice %9 {offsets = [0, 0, 384], sizes = [2, 1, 128], strides = [1, 1, 1]} : vector<2x8x512xf32> to vector<2x1x128xf32>
    %1074 = vector.shape_cast %1073 : vector<2x1x128xf32> to vector<2x128xf32>
    %1075 = vector.extract_strided_slice %10 {offsets = [3, 0, 0], sizes = [1, 32, 128], strides = [1, 1, 1]} : vector<4x32x128xf32> to vector<1x32x128xf32>
    %1076 = vector.shape_cast %1075 : vector<1x32x128xf32> to vector<32x128xf32>
    %cst_224 = arith.constant dense<0.000000e+00> : vector<2x128xf32>
    %1077 = tpu.matmul %967, %1076, %cst_224 {dimension_numbers = #tpu.dot_dimension_numbers<[1], [0], [0], [1], [0, 0, 1, 1], [], []>} : vector<2x32xf32>, vector<32x128xf32>, vector<2x128xf32> -> vector<2x128xf32>
    %1078 = arith.addf %1074, %1077 : vector<2x128xf32>
    %1079 = vector.extract_strided_slice %1078 {offsets = [0, 0], sizes = [2, 32], strides = [1, 1]} : vector<2x128xf32> to vector<2x32xf32>
    %1080 = arith.negf %1079 : vector<2x32xf32>
    %1081 = math.exp %1080 : vector<2x32xf32>
    %cst_225 = arith.constant 1.000000e+00 : f32
    %1082 = vector.broadcast %cst_225 : f32 to vector<2x32xf32>
    %1083 = arith.addf %1082, %1081 : vector<2x32xf32>
    %1084 = arith.divf %1082, %1083 : vector<2x32xf32>
    %1085 = vector.extract_strided_slice %1078 {offsets = [0, 32], sizes = [2, 32], strides = [1, 1]} : vector<2x128xf32> to vector<2x32xf32>
    %1086 = arith.negf %1085 : vector<2x32xf32>
    %1087 = math.exp %1086 : vector<2x32xf32>
    %cst_226 = arith.constant 1.000000e+00 : f32
    %1088 = vector.broadcast %cst_226 : f32 to vector<2x32xf32>
    %1089 = arith.addf %1088, %1087 : vector<2x32xf32>
    %1090 = arith.divf %1088, %1089 : vector<2x32xf32>
    %1091 = vector.extract_strided_slice %1078 {offsets = [0, 64], sizes = [2, 32], strides = [1, 1]} : vector<2x128xf32> to vector<2x32xf32>
    %1092 = math.tanh %1091 : vector<2x32xf32>
    %1093 = vector.extract_strided_slice %1078 {offsets = [0, 96], sizes = [2, 32], strides = [1, 1]} : vector<2x128xf32> to vector<2x32xf32>
    %1094 = arith.negf %1093 : vector<2x32xf32>
    %1095 = math.exp %1094 : vector<2x32xf32>
    %cst_227 = arith.constant 1.000000e+00 : f32
    %1096 = vector.broadcast %cst_227 : f32 to vector<2x32xf32>
    %1097 = arith.addf %1096, %1095 : vector<2x32xf32>
    %1098 = arith.divf %1096, %1097 : vector<2x32xf32>
    %1099 = arith.mulf %1090, %965 : vector<2x32xf32>
    %1100 = arith.mulf %1084, %1092 : vector<2x32xf32>
    %1101 = arith.addf %1099, %1100 : vector<2x32xf32>
    %1102 = math.tanh %1101 : vector<2x32xf32>
    %1103 = arith.mulf %1098, %1102 : vector<2x32xf32>
    %c0_228 = arith.constant 0 : index
    %c0_229 = arith.constant 0 : index
    %c96_230 = arith.constant 96 : index
    %1104 = vector.load %arg8[%c0_228, %c0_229, %c96_230] : memref<2x8x128xf32, #tpu.memory_space<vmem>>, vector<2x1x32xf32>
    %1105 = vector.shape_cast %1104 : vector<2x1x32xf32> to vector<2x32xf32>
    %1106 = vector.shape_cast %1103 : vector<2x32xf32> to vector<2x1x32xf32>
    tpu.vector_store %arg8[%c0_228, %c0_229, %c96_230], %1106 {strides = array<i32>} : memref<2x8x128xf32, #tpu.memory_space<vmem>>, vector<2x1x32xf32>,
    %c0_231 = arith.constant 0 : index
    %c0_232 = arith.constant 0 : index
    %c0_233 = arith.constant 0 : index
    %1107 = vector.load %arg8[%c0_231, %c0_232, %c0_233] : memref<2x8x128xf32, #tpu.memory_space<vmem>>, vector<2x8x128xf32>
    %1108 = vector.shape_cast %1107 : vector<2x8x128xf32> to vector<16x128xf32>
    %1109 = vector.extract_strided_slice %1108 {offsets = [0, 0], sizes = [16, 64], strides = [1, 1]} : vector<16x128xf32> to vector<16x64xf32>
    %1110 = vector.extract_strided_slice %1108 {offsets = [0, 64], sizes = [16, 64], strides = [1, 1]} : vector<16x128xf32> to vector<16x64xf32>
    %c0_234 = arith.constant 0 : index
    %c0_235 = arith.constant 0 : index
    %1111 = vector.load %arg4[%c0_234, %c0_235] : memref<64x1xf32, #tpu.memory_space<vmem>>, vector<64x1xf32>
    %cst_236 = arith.constant dense<0.000000e+00> : vector<16x1xf32>
    %1112 = tpu.matmul %1109, %1111, %cst_236 {dimension_numbers = #tpu.dot_dimension_numbers<[1], [0], [0], [1], [0, 0, 1, 1], [], []>} : vector<16x64xf32>, vector<64x1xf32>, vector<16x1xf32> -> vector<16x1xf32>
    %1113 = vector.shape_cast %1112 : vector<16x1xf32> to vector<2x8x1xf32>
    %cst_237 = arith.constant dense<0xFF800000> : vector<2x1xf32>
    %1114 = vector.multi_reduction <maximumf>, %1113, %cst_237 [1] : vector<2x8x1xf32> to vector<2x1xf32>
    %1115 = vector.shape_cast %1114 : vector<2x1xf32> to vector<2x1x1xf32>
    %1116 = vector.broadcast %1115 : vector<2x1x1xf32> to vector<2x8x1xf32>
    %1117 = arith.subf %1113, %1116 : vector<2x8x1xf32>
    %1118 = math.exp %1117 : vector<2x8x1xf32>
    %cst_238 = arith.constant dense<0.000000e+00> : vector<2x1xf32>
    %1119 = vector.multi_reduction <add>, %1118, %cst_238 [1] : vector<2x8x1xf32> to vector<2x1xf32>
    %1120 = vector.shape_cast %1119 : vector<2x1xf32> to vector<2x1x1xf32>
    %1121 = vector.broadcast %1120 : vector<2x1x1xf32> to vector<2x8x1xf32>
    %1122 = arith.divf %1118, %1121 : vector<2x8x1xf32>
    %c0_239 = arith.constant 0 : index
    %c0_240 = arith.constant 0 : index
    %1123 = vector.load %arg5[%c0_239, %c0_240] : memref<64x32xf32, #tpu.memory_space<vmem>>, vector<64x32xf32>
    %cst_241 = arith.constant dense<0.000000e+00> : vector<16x32xf32>
    %1124 = tpu.matmul %1110, %1123, %cst_241 {dimension_numbers = #tpu.dot_dimension_numbers<[1], [0], [0], [1], [0, 0, 1, 1], [], []>} : vector<16x64xf32>, vector<64x32xf32>, vector<16x32xf32> -> vector<16x32xf32>
    %1125 = math.tanh %1124 : vector<16x32xf32>
    %1126 = arith.mulf %8, %1125 : vector<16x32xf32>
    %1127 = vector.shape_cast %1122 : vector<2x8x1xf32> to vector<16x1xf32>
    %1128 = vector.broadcast %1127 : vector<16x1xf32> to vector<16x32xf32>
    %1129 = arith.mulf %1126, %1128 : vector<16x32xf32>
    %1130 = vector.shape_cast %1129 : vector<16x32xf32> to vector<2x8x32xf32>
    %cst_242 = arith.constant dense<0.000000e+00> : vector<2x32xf32>
    %1131 = vector.multi_reduction <add>, %1130, %cst_242 [1] : vector<2x8x32xf32> to vector<2x32xf32>
    %c0_243 = arith.constant 0 : index
    %c0_244 = arith.constant 0 : index
    %1132 = vector.load %arg6[%c0_243, %c0_244] : memref<32x4xf32, #tpu.memory_space<vmem>>, vector<32x4xf32>
    %cst_245 = arith.constant dense<0.000000e+00> : vector<2x4xf32>
    %1133 = tpu.matmul %1131, %1132, %cst_245 {dimension_numbers = #tpu.dot_dimension_numbers<[1], [0], [0], [1], [0, 0, 1, 1], [], []>} : vector<2x32xf32>, vector<32x4xf32>, vector<2x4xf32> -> vector<2x4xf32>
    %c0_246 = arith.constant 0 : index
    %c0_247 = arith.constant 0 : index
    %1134 = vector.load %arg7[%c0_246, %c0_247] : memref<2x4xf32, #tpu.memory_space<vmem>>, vector<2x4xf32>
    tpu.vector_store %arg7[%c0_246, %c0_247], %1133 {strides = array<i32>} : memref<2x4xf32, #tpu.memory_space<vmem>>, vector<2x4xf32>,
    return
  }
}

</mosaic_0001>

<llo_original>
// kernel: retain_forward.1
$region0: #{retain_forward.1}
  #allocation0 [shape = 'u32[]', space=smem, size = 0x4, offset = 0x4, fixed_abs, tag = 'smem constant byte address 0x4 - core index']
  #allocation1 [shape = 'u32[144,128]{1,0:T(1,128)}', space=vmem, size = 0x12000, scoped, tag = 'internal scratch']
  #allocation2 [shape = 'f32[2,8,128]{2,1,0:T(8,128)}', space=vmem, size = 0x2000, scoped, tag = 'scratch operand']
  %s0 = inlined_call_operand.vmem [shape: f32[2,8,1400], index: 0, kind: input, shape index: {}]
  %s1 = inlined_call_operand.vmem [shape: f32[1400,544], index: 1, kind: input, shape index: {}]
  %s2 = inlined_call_operand.vmem [shape: f32[1,512], index: 2, kind: input, shape index: {}]
  %s3 = inlined_call_operand.vmem [shape: f32[4,32,128], index: 3, kind: input, shape index: {}]
  %s4 = inlined_call_operand.vmem [shape: f32[64,1], index: 4, kind: input, shape index: {}]
  %s5 = inlined_call_operand.vmem [shape: f32[64,32], index: 5, kind: input, shape index: {}]
  %s6 = inlined_call_operand.vmem [shape: f32[32,4], index: 6, kind: input, shape index: {}]
  %s7 = inlined_call_operand.hbm [shape: f32[2,4], index: 7, kind: output, shape index: {}]
  %s8 = sld [smem:[#allocation0]]
  $region38: #{retain_forward.1} parent=0
    _
  %s10 = ssub.s32 1, %s8
  %s11 = scalar_select 0, %s10, %s8
  $region1: #{retain_forward.1} parent=0
    #allocation3 [shape = 'u8[1024]{0}', space=vmem, size = 0x400, scoped, tag = 'output window, operand 0, single buffered']
    #allocation4 [shape = 's32[1]{0}', space=sflag, size = 0x4, scoped, tag = 'scoped memory for retain_forward.1']
    %12 = vsyncpa [#allocation4], 0
    // Predicated region
    $region2: #{retain_forward.1} parent=1 // pred_check
      _
    $region3: #{retain_forward.1} parent=1 // pred_check_branch
      %14 = sbr.rel (0) target = $region5
    $region4: #{retain_forward.1} parent=1 // pred_region
      _
    $region5: #{retain_forward.1} parent=1 // pred_fallthru
      _
    // Predicated region
    $region6: #{retain_forward.1} parent=1 // pred_check
      _
    $region7: #{retain_forward.1} parent=1 // pred_check_branch
      %16 = sbr.rel (0) target = $region9
    $region8: #{retain_forward.1} parent=1 // pred_region
      _
    $region9: #{retain_forward.1} parent=1 // pred_fallthru
      _
    // Predicated region
    $region10: #{retain_forward.1} parent=1 // pred_check
      _
    $region11: #{retain_forward.1} parent=1 // pred_check_branch
      %18 = sbr.rel (0) target = $region13
    $region12: #{retain_forward.1} parent=1 // pred_region
      _
    $region13: #{retain_forward.1} parent=1 // pred_fallthru
      _
    // Predicated region
    $region14: #{retain_forward.1} parent=1 // pred_check
      _
    $region15: #{retain_forward.1} parent=1 // pred_check_branch
      %20 = sbr.rel (0) target = $region17
    $region16: #{retain_forward.1} parent=1 // pred_region
      _
    $region17: #{retain_forward.1} parent=1 // pred_fallthru
      _
    // Predicated region
    $region18: #{retain_forward.1} parent=1 // pred_check
      _
    $region19: #{retain_forward.1} parent=1 // pred_check_branch
      %22 = sbr.rel (0) target = $region21
    $region20: #{retain_forward.1} parent=1 // pred_region
      _
    $region21: #{retain_forward.1} parent=1 // pred_fallthru
      _
    // Predicated region
    $region22: #{retain_forward.1} parent=1 // pred_check
      _
    $region23: #{retain_forward.1} parent=1 // pred_check_branch
      %24 = sbr.rel (0) target = $region25
    $region24: #{retain_forward.1} parent=1 // pred_region
      _
    $region25: #{retain_forward.1} parent=1 // pred_fallthru
      _
    // Predicated region
    $region26: #{retain_forward.1} parent=1 // pred_check
      _
    $region27: #{retain_forward.1} parent=1 // pred_check_branch
      %26 = sbr.rel (0) target = $region29
    $region28: #{retain_forward.1} parent=1 // pred_region
      _
    $region29: #{retain_forward.1} parent=1 // pred_fallthru
      _
    %v27 = vld [vmem:[%s0] sm:$0xff]
    %v28 = vld [vmem:[%s0 + $0x8] sm:$0xff]
    %v29 = vld [vmem:[%s0 + $0x10] sm:$0xff]
    %v30 = vld [vmem:[%s0 + $0x18] sm:$0xff]
    %v31 = vld [vmem:[%s0 + $0x20] sm:$0xff]
    %v32 = vld [vmem:[%s0 + $0x28] sm:$0xff]
    %v33 = vld [vmem:[%s0 + $0x30] sm:$0xff]
    %v34 = vld [vmem:[%s0 + $0x38] sm:$0xff]
    %v35 = vld [vmem:[%s0 + $0x40] sm:$0xff]
    %v36 = vld [vmem:[%s0 + $0x48] sm:$0xff]
    %v37 = vld [vmem:[%s0 + $0x50] sm:$0xff]
    %v38 = vld [vmem:[%s0 + $0x58] sm:$0xff]
    %v39 = vld [vmem:[%s0 + $0x60] sm:$0xff]
    %v40 = vld [vmem:[%s0 + $0x68] sm:$0xff]
    %v41 = vld [vmem:[%s0 + $0x70] sm:$0xff]
    %v42 = vld [vmem:[%s0 + $0x78] sm:$0xff]
    %v43 = vld [vmem:[%s0 + $0x80] sm:$0xff]
    %v44 = vld [vmem:[%s0 + $0x88] sm:$0xff]
    %v45 = vld [vmem:[%s0 + $0x90] sm:$0xff]
    %v46 = vld [vmem:[%s0 + $0x98] sm:$0xff]
    %v47 = vld [vmem:[%s0 + $0xa0] sm:$0xff]
    %v48 = vld [vmem:[%s0 + $0xa8] sm:$0xff]
    %v49 = vld [vmem:[%s1] sm:$0xff]
    %v50 = vld [vmem:[%s1 + $0x8] sm:$0xff]
    %v51 = vld [vmem:[%s1 + $0x10] sm:$0xff]
    %v52 = vld [vmem:[%s1 + $0x18] sm:$0xff]
    %v53 = vld [vmem:[%s1 + $0x20] sm:$0xff]
    %v54 = vld [vmem:[%s1 + $0x28] sm:$0xff]
    %v55 = vld [vmem:[%s1 + $0x30] sm:$0xff]
    %v56 = vld [vmem:[%s1 + $0x38] sm:$0xff]
    %v57 = vld [vmem:[%s1 + $0x40] sm:$0xff]
    %v58 = vld [vmem:[%s1 + $0x48] sm:$0xff]
    %v59 = vld [vmem:[%s1 + $0x50] sm:$0xff]
    %v60 = vld [vmem:[%s1 + $0x58] sm:$0xff]
    %v61 = vld [vmem:[%s1 + $0x60] sm:$0xff]
    %v62 = vld [vmem:[%s1 + $0x68] sm:$0xff]
    %v63 = vld [vmem:[%s1 + $0x70] sm:$0xff]
    %v64 = vld [vmem:[%s1 + $0x78] sm:$0xff]
    %v65 = vld [vmem:[%s1 + $0x80] sm:$0xff]
    %v66 = vld [vmem:[%s1 + $0x88] sm:$0xff]
    %v67 = vld [vmem:[%s1 + $0x90] sm:$0xff]
    %v68 = vld [vmem:[%s1 + $0x98] sm:$0xff]
    %v69 = vld [vmem:[%s1 + $0xa0] sm:$0xff]
    %v70 = vld [vmem:[%s1 + $0xa8] sm:$0xff]
    %v71 = vld [vmem:[%s1 + $0xb0] sm:$0xff]
    %v72 = vld [vmem:[%s1 + $0xb8] sm:$0xff]
    %v73 = vld [vmem:[%s1 + $0xc0] sm:$0xff]
    %v74 = vld [vmem:[%s1 + $0xc8] sm:$0xff]
    %v75 = vld [vmem:[%s1 + $0xd0] sm:$0xff]
    %v76 = vld [vmem:[%s1 + $0xd8] sm:$0xff]
    %v77 = vld [vmem:[%s1 + $0xe0] sm:$0xff]
    %v78 = vld [vmem:[%s1 + $0xe8] sm:$0xff]
    %v79 = vld [vmem:[%s1 + $0xf0] sm:$0xff]
    %v80 = vld [vmem:[%s1 + $0xf8] sm:$0xff]
    %v81 = vld [vmem:[%s1 + $0x100] sm:$0xff]
    %v82 = vld [vmem:[%s1 + $0x108] sm:$0xff]
    %v83 = vld [vmem:[%s1 + $0x110] sm:$0xff]
    %v84 = vld [vmem:[%s1 + $0x118] sm:$0xff]
    %v85 = vld [vmem:[%s1 + $0x120] sm:$0xff]
    %v86 = vld [vmem:[%s1 + $0x128] sm:$0xff]
    %v87 = vld [vmem:[%s1 + $0x130] sm:$0xff]
    %v88 = vld [vmem:[%s1 + $0x138] sm:$0xff]
    %v89 = vld [vmem:[%s1 + $0x140] sm:$0xff]
    %v90 = vld [vmem:[%s1 + $0x148] sm:$0xff]
    %v91 = vld [vmem:[%s1 + $0x150] sm:$0xff]
    %v92 = vld [vmem:[%s1 + $0x158] sm:$0xff]
    %v93 = vld [vmem:[%s1 + $0x160] sm:$0xff]
    %v94 = vld [vmem:[%s1 + $0x168] sm:$0xff]
    %v95 = vld [vmem:[%s1 + $0x170] sm:$0xff]
    %v96 = vld [vmem:[%s1 + $0x178] sm:$0xff]
    %v97 = vld [vmem:[%s1 + $0x180] sm:$0xff]
    %v98 = vld [vmem:[%s1 + $0x188] sm:$0xff]
    %v99 = vld [vmem:[%s1 + $0x190] sm:$0xff]
    %v100 = vld [vmem:[%s1 + $0x198] sm:$0xff]
    %v101 = vld [vmem:[%s1 + $0x1a0] sm:$0xff]
    %v102 = vld [vmem:[%s1 + $0x1a8] sm:$0xff]
    %v103 = vld [vmem:[%s1 + $0x1b0] sm:$0xff]
    %v104 = vld [vmem:[%s1 + $0x1b8] sm:$0xff]
    %v105 = vld [vmem:[%s1 + $0x1c0] sm:$0xff]
    %v106 = vld [vmem:[%s1 + $0x1c8] sm:$0xff]
    %v107 = vld [vmem:[%s1 + $0x1d0] sm:$0xff]
    %v108 = vld [vmem:[%s1 + $0x1d8] sm:$0xff]
    %v109 = vld [vmem:[%s1 + $0x1e0] sm:$0xff]
    %v110 = vld [vmem:[%s1 + $0x1e8] sm:$0xff]
    %v111 = vld [vmem:[%s1 + $0x1f0] sm:$0xff]
    %v112 = vld [vmem:[%s1 + $0x1f8] sm:$0xff]
    %v113 = vld [vmem:[%s1 + $0x200] sm:$0xff]
    %v114 = vld [vmem:[%s1 + $0x208] sm:$0xff]
    %v115 = vld [vmem:[%s1 + $0x210] sm:$0xff]
    %v116 = vld [vmem:[%s1 + $0x218] sm:$0xff]
    %v117 = vld [vmem:[%s1 + $0x220] sm:$0xff]
    %v118 = vld [vmem:[%s1 + $0x228] sm:$0xff]
    %v119 = vld [vmem:[%s1 + $0x230] sm:$0xff]
    %v120 = vld [vmem:[%s1 + $0x238] sm:$0xff]
    %v121 = vld [vmem:[%s1 + $0x240] sm:$0xff]
    %v122 = vld [vmem:[%s1 + $0x248] sm:$0xff]
    %v123 = vld [vmem:[%s1 + $0x250] sm:$0xff]
    %v124 = vld [vmem:[%s1 + $0x258] sm:$0xff]
    %v125 = vld [vmem:[%s1 + $0x260] sm:$0xff]
    %v126 = vld [vmem:[%s1 + $0x268] sm:$0xff]
    %v127 = vld [vmem:[%s1 + $0x270] sm:$0xff]
    %v128 = vld [vmem:[%s1 + $0x278] sm:$0xff]
    %v129 = vld [vmem:[%s1 + $0x280] sm:$0xff]
    %v130 = vld [vmem:[%s1 + $0x288] sm:$0xff]
    %v131 = vld [vmem:[%s1 + $0x290] sm:$0xff]
    %v132 = vld [vmem:[%s1 + $0x298] sm:$0xff]
    %v133 = vld [vmem:[%s1 + $0x2a0] sm:$0xff]
    %v134 = vld [vmem:[%s1 + $0x2a8] sm:$0xff]
    %v135 = vld [vmem:[%s1 + $0x2b0] sm:$0xff]
    %v136 = vld [vmem:[%s1 + $0x2b8] sm:$0xff]
    %v137 = vld [vmem:[%s1 + $0x2c0] sm:$0xff]
    %v138 = vld [vmem:[%s1 + $0x2c8] sm:$0xff]
    %v139 = vld [vmem:[%s1 + $0x2d0] sm:$0xff]
    %v140 = vld [vmem:[%s1 + $0x2d8] sm:$0xff]
    %v141 = vld [vmem:[%s1 + $0x2e0] sm:$0xff]
    %v142 = vld [vmem:[%s1 + $0x2e8] sm:$0xff]
    %v143 = vld [vmem:[%s1 + $0x2f0] sm:$0xff]
    %v144 = vld [vmem:[%s1 + $0x2f8] sm:$0xff]
    %v145 = vld [vmem:[%s1 + $0x300] sm:$0xff]
    %v146 = vld [vmem:[%s1 + $0x308] sm:$0xff]
    %v147 = vld [vmem:[%s1 + $0x310] sm:$0xff]
    %v148 = vld [vmem:[%s1 + $0x318] sm:$0xff]
    %v149 = vld [vmem:[%s1 + $0x320] sm:$0xff]
    %v150 = vld [vmem:[%s1 + $0x328] sm:$0xff]
    %v151 = vld [vmem:[%s1 + $0x330] sm:$0xff]
    %v152 = vld [vmem:[%s1 + $0x338] sm:$0xff]
    %v153 = vld [vmem:[%s1 + $0x340] sm:$0xff]
    %v154 = vld [vmem:[%s1 + $0x348] sm:$0xff]
    %v155 = vld [vmem:[%s1 + $0x350] sm:$0xff]
    %v156 = vld [vmem:[%s1 + $0x358] sm:$0xff]
    %v157 = vld [vmem:[%s1 + $0x360] sm:$0xff]
    %v158 = vld [vmem:[%s1 + $0x368] sm:$0xff]
    %v159 = vld [vmem:[%s1 + $0x370] sm:$0xff]
    %v160 = vld [vmem:[%s1 + $0x378] sm:$0xff]
    %v161 = vld [vmem:[%s1 + $0x380] sm:$0xff]
    %v162 = vld [vmem:[%s1 + $0x388] sm:$0xff]
    %v163 = vld [vmem:[%s1 + $0x390] sm:$0xff]
    %v164 = vld [vmem:[%s1 + $0x398] sm:$0xff]
    %v165 = vld [vmem:[%s1 + $0x3a0] sm:$0xff]
    %v166 = vld [vmem:[%s1 + $0x3a8] sm:$0xff]
    %v167 = vld [vmem:[%s1 + $0x3b0] sm:$0xff]
    %v168 = vld [vmem:[%s1 + $0x3b8] sm:$0xff]
    %v169 = vld [vmem:[%s1 + $0x3c0] sm:$0xff]
    %v170 = vld [vmem:[%s1 + $0x3c8] sm:$0xff]
    %v171 = vld [vmem:[%s1 + $0x3d0] sm:$0xff]
    %v172 = vld [vmem:[%s1 + $0x3d8] sm:$0xff]
    %v173 = vld [vmem:[%s1 + $0x3e0] sm:$0xff]
    %v174 = vld [vmem:[%s1 + $0x3e8] sm:$0xff]
    %v175 = vld [vmem:[%s1 + $0x3f0] sm:$0xff]
    %v176 = vld [vmem:[%s1 + $0x3f8] sm:$0xff]
    %v177 = vld [vmem:[%s1 + $0x400] sm:$0xff]
    %v178 = vld [vmem:[%s1 + $0x408] sm:$0xff]
    %v179 = vld [vmem:[%s1 + $0x410] sm:$0xff]
    %v180 = vld [vmem:[%s1 + $0x418] sm:$0xff]
    %v181 = vld [vmem:[%s1 + $0x420] sm:$0xff]
    %v182 = vld [vmem:[%s1 + $0x428] sm:$0xff]
    %v183 = vld [vmem:[%s1 + $0x430] sm:$0xff]
    %v184 = vld [vmem:[%s1 + $0x438] sm:$0xff]
    %v185 = vld [vmem:[%s1 + $0x440] sm:$0xff]
    %v186 = vld [vmem:[%s1 + $0x448] sm:$0xff]
    %v187 = vld [vmem:[%s1 + $0x450] sm:$0xff]
    %v188 = vld [vmem:[%s1 + $0x458] sm:$0xff]
    %v189 = vld [vmem:[%s1 + $0x460] sm:$0xff]
    %v190 = vld [vmem:[%s1 + $0x468] sm:$0xff]
    %v191 = vld [vmem:[%s1 + $0x470] sm:$0xff]
    %v192 = vld [vmem:[%s1 + $0x478] sm:$0xff]
    %v193 = vld [vmem:[%s1 + $0x480] sm:$0xff]
    %v194 = vld [vmem:[%s1 + $0x488] sm:$0xff]
    %v195 = vld [vmem:[%s1 + $0x490] sm:$0xff]
    %v196 = vld [vmem:[%s1 + $0x498] sm:$0xff]
    %v197 = vld [vmem:[%s1 + $0x4a0] sm:$0xff]
    %v198 = vld [vmem:[%s1 + $0x4a8] sm:$0xff]
    %v199 = vld [vmem:[%s1 + $0x4b0] sm:$0xff]
    %v200 = vld [vmem:[%s1 + $0x4b8] sm:$0xff]
    %v201 = vld [vmem:[%s1 + $0x4c0] sm:$0xff]
    %v202 = vld [vmem:[%s1 + $0x4c8] sm:$0xff]
    %v203 = vld [vmem:[%s1 + $0x4d0] sm:$0xff]
    %v204 = vld [vmem:[%s1 + $0x4d8] sm:$0xff]
    %v205 = vld [vmem:[%s1 + $0x4e0] sm:$0xff]
    %v206 = vld [vmem:[%s1 + $0x4e8] sm:$0xff]
    %v207 = vld [vmem:[%s1 + $0x4f0] sm:$0xff]
    %v208 = vld [vmem:[%s1 + $0x4f8] sm:$0xff]
    %v209 = vld [vmem:[%s1 + $0x500] sm:$0xff]
    %v210 = vld [vmem:[%s1 + $0x508] sm:$0xff]
    %v211 = vld [vmem:[%s1 + $0x510] sm:$0xff]
    %v212 = vld [vmem:[%s1 + $0x518] sm:$0xff]
    %v213 = vld [vmem:[%s1 + $0x520] sm:$0xff]
    %v214 = vld [vmem:[%s1 + $0x528] sm:$0xff]
    %v215 = vld [vmem:[%s1 + $0x530] sm:$0xff]
    %v216 = vld [vmem:[%s1 + $0x538] sm:$0xff]
    %v217 = vld [vmem:[%s1 + $0x540] sm:$0xff]
    %v218 = vld [vmem:[%s1 + $0x548] sm:$0xff]
    %v219 = vld [vmem:[%s1 + $0x550] sm:$0xff]
    %v220 = vld [vmem:[%s1 + $0x558] sm:$0xff]
    %v221 = vld [vmem:[%s1 + $0x560] sm:$0xff]
    %v222 = vld [vmem:[%s1 + $0x568] sm:$0xff]
    %v223 = vld [vmem:[%s1 + $0x570] sm:$0xff]
    %v224 = vld [vmem:[%s1 + $0x578] sm:$0xff]
    %v225 = vld [vmem:[%s1 + $0x580] sm:$0xff]
    %v226 = vld [vmem:[%s1 + $0x588] sm:$0xff]
    %v227 = vld [vmem:[%s1 + $0x590] sm:$0xff]
    %v228 = vld [vmem:[%s1 + $0x598] sm:$0xff]
    %v229 = vld [vmem:[%s1 + $0x5a0] sm:$0xff]
    %v230 = vld [vmem:[%s1 + $0x5a8] sm:$0xff]
    %v231 = vld [vmem:[%s1 + $0x5b0] sm:$0xff]
    %v232 = vld [vmem:[%s1 + $0x5b8] sm:$0xff]
    %v233 = vld [vmem:[%s1 + $0x5c0] sm:$0xff]
    %v234 = vld [vmem:[%s1 + $0x5c8] sm:$0xff]
    %v235 = vld [vmem:[%s1 + $0x5d0] sm:$0xff]
    %v236 = vld [vmem:[%s1 + $0x5d8] sm:$0xff]
    %v237 = vld [vmem:[%s1 + $0x5e0] sm:$0xff]
    %v238 = vld [vmem:[%s1 + $0x5e8] sm:$0xff]
    %v239 = vld [vmem:[%s1 + $0x5f0] sm:$0xff]
    %v240 = vld [vmem:[%s1 + $0x5f8] sm:$0xff]
    %v241 = vld [vmem:[%s1 + $0x600] sm:$0xff]
    %v242 = vld [vmem:[%s1 + $0x608] sm:$0xff]
    %v243 = vld [vmem:[%s1 + $0x610] sm:$0xff]
    %v244 = vld [vmem:[%s1 + $0x618] sm:$0xff]
    %v245 = vld [vmem:[%s1 + $0x620] sm:$0xff]
    %v246 = vld [vmem:[%s1 + $0x628] sm:$0xff]
    %v247 = vld [vmem:[%s1 + $0x630] sm:$0xff]
    %v248 = vld [vmem:[%s1 + $0x638] sm:$0xff]
    %v249 = vld [vmem:[%s1 + $0x640] sm:$0xff]
    %v250 = vld [vmem:[%s1 + $0x648] sm:$0xff]
    %v251 = vld [vmem:[%s1 + $0x650] sm:$0xff]
    %v252 = vld [vmem:[%s1 + $0x658] sm:$0xff]
    %v253 = vld [vmem:[%s1 + $0x660] sm:$0xff]
    %v254 = vld [vmem:[%s1 + $0x668] sm:$0xff]
    %v255 = vld [vmem:[%s1 + $0x670] sm:$0xff]
    %v256 = vld [vmem:[%s1 + $0x678] sm:$0xff]
    %v257 = vld [vmem:[%s1 + $0x680] sm:$0xff]
    %v258 = vld [vmem:[%s1 + $0x688] sm:$0xff]
    %v259 = vld [vmem:[%s1 + $0x690] sm:$0xff]
    %v260 = vld [vmem:[%s1 + $0x698] sm:$0xff]
    %v261 = vld [vmem:[%s1 + $0x6a0] sm:$0xff]
    %v262 = vld [vmem:[%s1 + $0x6a8] sm:$0xff]
    %v263 = vld [vmem:[%s1 + $0x6b0] sm:$0xff]
    %v264 = vld [vmem:[%s1 + $0x6b8] sm:$0xff]
    %v265 = vld [vmem:[%s1 + $0x6c0] sm:$0xff]
    %v266 = vld [vmem:[%s1 + $0x6c8] sm:$0xff]
    %v267 = vld [vmem:[%s1 + $0x6d0] sm:$0xff]
    %v268 = vld [vmem:[%s1 + $0x6d8] sm:$0xff]
    %v269 = vld [vmem:[%s1 + $0x6e0] sm:$0xff]
    %v270 = vld [vmem:[%s1 + $0x6e8] sm:$0xff]
    %v271 = vld [vmem:[%s1 + $0x6f0] sm:$0xff]
    %v272 = vld [vmem:[%s1 + $0x6f8] sm:$0xff]
    %v273 = vld [vmem:[%s1 + $0x700] sm:$0xff]
    %v274 = vld [vmem:[%s1 + $0x708] sm:$0xff]
    %v275 = vld [vmem:[%s1 + $0x710] sm:$0xff]
    %v276 = vld [vmem:[%s1 + $0x718] sm:$0xff]
    %v277 = vld [vmem:[%s1 + $0x720] sm:$0xff]
    %v278 = vld [vmem:[%s1 + $0x728] sm:$0xff]
    %v279 = vld [vmem:[%s1 + $0x730] sm:$0xff]
    %v280 = vld [vmem:[%s1 + $0x738] sm:$0xff]
    %v281 = vld [vmem:[%s1 + $0x740] sm:$0xff]
    %v282 = vld [vmem:[%s1 + $0x748] sm:$0xff]
    %v283 = vld [vmem:[%s1 + $0x750] sm:$0xff]
    %v284 = vld [vmem:[%s1 + $0x758] sm:$0xff]
    %v285 = vld [vmem:[%s1 + $0x760] sm:$0xff]
    %v286 = vld [vmem:[%s1 + $0x768] sm:$0xff]
    %v287 = vld [vmem:[%s1 + $0x770] sm:$0xff]
    %v288 = vld [vmem:[%s1 + $0x778] sm:$0xff]
    %v289 = vld [vmem:[%s1 + $0x780] sm:$0xff]
    %v290 = vld [vmem:[%s1 + $0x788] sm:$0xff]
    %v291 = vld [vmem:[%s1 + $0x790] sm:$0xff]
    %v292 = vld [vmem:[%s1 + $0x798] sm:$0xff]
    %v293 = vld [vmem:[%s1 + $0x7a0] sm:$0xff]
    %v294 = vld [vmem:[%s1 + $0x7a8] sm:$0xff]
    %v295 = vld [vmem:[%s1 + $0x7b0] sm:$0xff]
    %v296 = vld [vmem:[%s1 + $0x7b8] sm:$0xff]
    %v297 = vld [vmem:[%s1 + $0x7c0] sm:$0xff]
    %v298 = vld [vmem:[%s1 + $0x7c8] sm:$0xff]
    %v299 = vld [vmem:[%s1 + $0x7d0] sm:$0xff]
    %v300 = vld [vmem:[%s1 + $0x7d8] sm:$0xff]
    %v301 = vld [vmem:[%s1 + $0x7e0] sm:$0xff]
    %v302 = vld [vmem:[%s1 + $0x7e8] sm:$0xff]
    %v303 = vld [vmem:[%s1 + $0x7f0] sm:$0xff]
    %v304 = vld [vmem:[%s1 + $0x7f8] sm:$0xff]
    %v305 = vld [vmem:[%s1 + $0x800] sm:$0xff]
    %v306 = vld [vmem:[%s1 + $0x808] sm:$0xff]
    %v307 = vld [vmem:[%s1 + $0x810] sm:$0xff]
    %v308 = vld [vmem:[%s1 + $0x818] sm:$0xff]
    %v309 = vld [vmem:[%s1 + $0x820] sm:$0xff]
    %v310 = vld [vmem:[%s1 + $0x828] sm:$0xff]
    %v311 = vld [vmem:[%s1 + $0x830] sm:$0xff]
    %v312 = vld [vmem:[%s1 + $0x838] sm:$0xff]
    %v313 = vld [vmem:[%s1 + $0x840] sm:$0xff]
    %v314 = vld [vmem:[%s1 + $0x848] sm:$0xff]
    %v315 = vld [vmem:[%s1 + $0x850] sm:$0xff]
    %v316 = vld [vmem:[%s1 + $0x858] sm:$0xff]
    %v317 = vld [vmem:[%s1 + $0x860] sm:$0xff]
    %v318 = vld [vmem:[%s1 + $0x868] sm:$0xff]
    %v319 = vld [vmem:[%s1 + $0x870] sm:$0xff]
    %v320 = vld [vmem:[%s1 + $0x878] sm:$0xff]
    %v321 = vld [vmem:[%s1 + $0x880] sm:$0xff]
    %v322 = vld [vmem:[%s1 + $0x888] sm:$0xff]
    %v323 = vld [vmem:[%s1 + $0x890] sm:$0xff]
    %v324 = vld [vmem:[%s1 + $0x898] sm:$0xff]
    %v325 = vld [vmem:[%s1 + $0x8a0] sm:$0xff]
    %v326 = vld [vmem:[%s1 + $0x8a8] sm:$0xff]
    %v327 = vld [vmem:[%s1 + $0x8b0] sm:$0xff]
    %v328 = vld [vmem:[%s1 + $0x8b8] sm:$0xff]
    %v329 = vld [vmem:[%s1 + $0x8c0] sm:$0xff]
    %v330 = vld [vmem:[%s1 + $0x8c8] sm:$0xff]
    %v331 = vld [vmem:[%s1 + $0x8d0] sm:$0xff]
    %v332 = vld [vmem:[%s1 + $0x8d8] sm:$0xff]
    %v333 = vld [vmem:[%s1 + $0x8e0] sm:$0xff]
    %v334 = vld [vmem:[%s1 + $0x8e8] sm:$0xff]
    %v335 = vld [vmem:[%s1 + $0x8f0] sm:$0xff]
    %v336 = vld [vmem:[%s1 + $0x8f8] sm:$0xff]
    %v337 = vld [vmem:[%s1 + $0x900] sm:$0xff]
    %v338 = vld [vmem:[%s1 + $0x908] sm:$0xff]
    %v339 = vld [vmem:[%s1 + $0x910] sm:$0xff]
    %v340 = vld [vmem:[%s1 + $0x918] sm:$0xff]
    %v341 = vld [vmem:[%s1 + $0x920] sm:$0xff]
    %v342 = vld [vmem:[%s1 + $0x928] sm:$0xff]
    %v343 = vld [vmem:[%s1 + $0x930] sm:$0xff]
    %v344 = vld [vmem:[%s1 + $0x938] sm:$0xff]
    %v345 = vld [vmem:[%s1 + $0x940] sm:$0xff]
    %v346 = vld [vmem:[%s1 + $0x948] sm:$0xff]
    %v347 = vld [vmem:[%s1 + $0x950] sm:$0xff]
    %v348 = vld [vmem:[%s1 + $0x958] sm:$0xff]
    %v349 = vld [vmem:[%s1 + $0x960] sm:$0xff]
    %v350 = vld [vmem:[%s1 + $0x968] sm:$0xff]
    %v351 = vld [vmem:[%s1 + $0x970] sm:$0xff]
    %v352 = vld [vmem:[%s1 + $0x978] sm:$0xff]
    %v353 = vld [vmem:[%s1 + $0x980] sm:$0xff]
    %v354 = vld [vmem:[%s1 + $0x988] sm:$0xff]
    %v355 = vld [vmem:[%s1 + $0x990] sm:$0xff]
    %v356 = vld [vmem:[%s1 + $0x998] sm:$0xff]
    %v357 = vld [vmem:[%s1 + $0x9a0] sm:$0xff]
    %v358 = vld [vmem:[%s1 + $0x9a8] sm:$0xff]
    %v359 = vld [vmem:[%s1 + $0x9b0] sm:$0xff]
    %v360 = vld [vmem:[%s1 + $0x9b8] sm:$0xff]
    %v361 = vld [vmem:[%s1 + $0x9c0] sm:$0xff]
    %v362 = vld [vmem:[%s1 + $0x9c8] sm:$0xff]
    %v363 = vld [vmem:[%s1 + $0x9d0] sm:$0xff]
    %v364 = vld [vmem:[%s1 + $0x9d8] sm:$0xff]
    %v365 = vld [vmem:[%s1 + $0x9e0] sm:$0xff]
    %v366 = vld [vmem:[%s1 + $0x9e8] sm:$0xff]
    %v367 = vld [vmem:[%s1 + $0x9f0] sm:$0xff]
    %v368 = vld [vmem:[%s1 + $0x9f8] sm:$0xff]
    %v369 = vld [vmem:[%s1 + $0xa00] sm:$0xff]
    %v370 = vld [vmem:[%s1 + $0xa08] sm:$0xff]
    %v371 = vld [vmem:[%s1 + $0xa10] sm:$0xff]
    %v372 = vld [vmem:[%s1 + $0xa18] sm:$0xff]
    %v373 = vld [vmem:[%s1 + $0xa20] sm:$0xff]
    %v374 = vld [vmem:[%s1 + $0xa28] sm:$0xff]
    %v375 = vld [vmem:[%s1 + $0xa30] sm:$0xff]
    %v376 = vld [vmem:[%s1 + $0xa38] sm:$0xff]
    %v377 = vld [vmem:[%s1 + $0xa40] sm:$0xff]
    %v378 = vld [vmem:[%s1 + $0xa48] sm:$0xff]
    %v379 = vld [vmem:[%s1 + $0xa50] sm:$0xff]
    %v380 = vld [vmem:[%s1 + $0xa58] sm:$0xff]
    %v381 = vld [vmem:[%s1 + $0xa60] sm:$0xff]
    %v382 = vld [vmem:[%s1 + $0xa68] sm:$0xff]
    %v383 = vld [vmem:[%s1 + $0xa70] sm:$0xff]
    %v384 = vld [vmem:[%s1 + $0xa78] sm:$0xff]
    %v385 = vld [vmem:[%s1 + $0xa80] sm:$0xff]
    %v386 = vld [vmem:[%s1 + $0xa88] sm:$0xff]
    %v387 = vld [vmem:[%s1 + $0xa90] sm:$0xff]
    %v388 = vld [vmem:[%s1 + $0xa98] sm:$0xff]
    %v389 = vld [vmem:[%s1 + $0xaa0] sm:$0xff]
    %v390 = vld [vmem:[%s1 + $0xaa8] sm:$0xff]
    %v391 = vld [vmem:[%s1 + $0xab0] sm:$0xff]
    %v392 = vld [vmem:[%s1 + $0xab8] sm:$0xff]
    %v393 = vld [vmem:[%s1 + $0xac0] sm:$0xff]
    %v394 = vld [vmem:[%s1 + $0xac8] sm:$0xff]
    %v395 = vld [vmem:[%s1 + $0xad0] sm:$0xff]
    %v396 = vld [vmem:[%s1 + $0xad8] sm:$0xff]
    %v397 = vld [vmem:[%s1 + $0xae0] sm:$0xff]
    %v398 = vld [vmem:[%s1 + $0xae8] sm:$0xff]
    %v399 = vld [vmem:[%s1 + $0xaf0] sm:$0xff]
    %v400 = vld [vmem:[%s1 + $0xaf8] sm:$0xff]
    %v401 = vld [vmem:[%s1 + $0xb00] sm:$0xff]
    %v402 = vld [vmem:[%s1 + $0xb08] sm:$0xff]
    %v403 = vld [vmem:[%s1 + $0xb10] sm:$0xff]
    %v404 = vld [vmem:[%s1 + $0xb18] sm:$0xff]
    %v405 = vld [vmem:[%s1 + $0xb20] sm:$0xff]
    %v406 = vld [vmem:[%s1 + $0xb28] sm:$0xff]
    %v407 = vld [vmem:[%s1 + $0xb30] sm:$0xff]
    %v408 = vld [vmem:[%s1 + $0xb38] sm:$0xff]
    %v409 = vld [vmem:[%s1 + $0xb40] sm:$0xff]
    %v410 = vld [vmem:[%s1 + $0xb48] sm:$0xff]
    %v411 = vld [vmem:[%s1 + $0xb50] sm:$0xff]
    %v412 = vld [vmem:[%s1 + $0xb58] sm:$0xff]
    %v413 = vld [vmem:[%s1 + $0xb60] sm:$0xff]
    %v414 = vld [vmem:[%s1 + $0xb68] sm:$0xff]
    %v415 = vld [vmem:[%s1 + $0xb70] sm:$0xff]
    %v416 = vld [vmem:[%s1 + $0xb78] sm:$0xff]
    %v417 = vld [vmem:[%s1 + $0xb80] sm:$0xff]
    %v418 = vld [vmem:[%s1 + $0xb88] sm:$0xff]
    %v419 = vld [vmem:[%s1 + $0xb90] sm:$0xff]
    %v420 = vld [vmem:[%s1 + $0xb98] sm:$0xff]
    %v421 = vld [vmem:[%s1 + $0xba0] sm:$0xff]
    %v422 = vld [vmem:[%s1 + $0xba8] sm:$0xff]
    %v423 = vld [vmem:[%s1 + $0xbb0] sm:$0xff]
    %v424 = vld [vmem:[%s1 + $0xbb8] sm:$0xff]
    %v425 = vld [vmem:[%s1 + $0xbc0] sm:$0xff]
    %v426 = vld [vmem:[%s1 + $0xbc8] sm:$0xff]
    %v427 = vld [vmem:[%s1 + $0xbd0] sm:$0xff]
    %v428 = vld [vmem:[%s1 + $0xbd8] sm:$0xff]
    %v429 = vld [vmem:[%s1 + $0xbe0] sm:$0xff]
    %v430 = vld [vmem:[%s1 + $0xbe8] sm:$0xff]
    %v431 = vld [vmem:[%s1 + $0xbf0] sm:$0xff]
    %v432 = vld [vmem:[%s1 + $0xbf8] sm:$0xff]
    %v433 = vld [vmem:[%s1 + $0xc00] sm:$0xff]
    %v434 = vld [vmem:[%s1 + $0xc08] sm:$0xff]
    %v435 = vld [vmem:[%s1 + $0xc10] sm:$0xff]
    %v436 = vld [vmem:[%s1 + $0xc18] sm:$0xff]
    %v437 = vld [vmem:[%s1 + $0xc20] sm:$0xff]
    %v438 = vld [vmem:[%s1 + $0xc28] sm:$0xff]
    %v439 = vld [vmem:[%s1 + $0xc30] sm:$0xff]
    %v440 = vld [vmem:[%s1 + $0xc38] sm:$0xff]
    %v441 = vld [vmem:[%s1 + $0xc40] sm:$0xff]
    %v442 = vld [vmem:[%s1 + $0xc48] sm:$0xff]
    %v443 = vld [vmem:[%s1 + $0xc50] sm:$0xff]
    %v444 = vld [vmem:[%s1 + $0xc58] sm:$0xff]
    %v445 = vld [vmem:[%s1 + $0xc60] sm:$0xff]
    %v446 = vld [vmem:[%s1 + $0xc68] sm:$0xff]
    %v447 = vld [vmem:[%s1 + $0xc70] sm:$0xff]
    %v448 = vld [vmem:[%s1 + $0xc78] sm:$0xff]
    %v449 = vld [vmem:[%s1 + $0xc80] sm:$0xff]
    %v450 = vld [vmem:[%s1 + $0xc88] sm:$0xff]
    %v451 = vld [vmem:[%s1 + $0xc90] sm:$0xff]
    %v452 = vld [vmem:[%s1 + $0xc98] sm:$0xff]
    %v453 = vld [vmem:[%s1 + $0xca0] sm:$0xff]
    %v454 = vld [vmem:[%s1 + $0xca8] sm:$0xff]
    %v455 = vld [vmem:[%s1 + $0xcb0] sm:$0xff]
    %v456 = vld [vmem:[%s1 + $0xcb8] sm:$0xff]
    %v457 = vld [vmem:[%s1 + $0xcc0] sm:$0xff]
    %v458 = vld [vmem:[%s1 + $0xcc8] sm:$0xff]
    %v459 = vld [vmem:[%s1 + $0xcd0] sm:$0xff]
    %v460 = vld [vmem:[%s1 + $0xcd8] sm:$0xff]
    %v461 = vld [vmem:[%s1 + $0xce0] sm:$0xff]
    %v462 = vld [vmem:[%s1 + $0xce8] sm:$0xff]
    %v463 = vld [vmem:[%s1 + $0xcf0] sm:$0xff]
    %v464 = vld [vmem:[%s1 + $0xcf8] sm:$0xff]
    %v465 = vld [vmem:[%s1 + $0xd00] sm:$0xff]
    %v466 = vld [vmem:[%s1 + $0xd08] sm:$0xff]
    %v467 = vld [vmem:[%s1 + $0xd10] sm:$0xff]
    %v468 = vld [vmem:[%s1 + $0xd18] sm:$0xff]
    %v469 = vld [vmem:[%s1 + $0xd20] sm:$0xff]
    %v470 = vld [vmem:[%s1 + $0xd28] sm:$0xff]
    %v471 = vld [vmem:[%s1 + $0xd30] sm:$0xff]
    %v472 = vld [vmem:[%s1 + $0xd38] sm:$0xff]
    %v473 = vld [vmem:[%s1 + $0xd40] sm:$0xff]
    %v474 = vld [vmem:[%s1 + $0xd48] sm:$0xff]
    %v475 = vld [vmem:[%s1 + $0xd50] sm:$0xff]
    %v476 = vld [vmem:[%s1 + $0xd58] sm:$0xff]
    %v477 = vld [vmem:[%s1 + $0xd60] sm:$0xff]
    %v478 = vld [vmem:[%s1 + $0xd68] sm:$0xff]
    %v479 = vld [vmem:[%s1 + $0xd70] sm:$0xff]
    %v480 = vld [vmem:[%s1 + $0xd78] sm:$0xff]
    %v481 = vld [vmem:[%s1 + $0xd80] sm:$0xff]
    %v482 = vld [vmem:[%s1 + $0xd88] sm:$0xff]
    %v483 = vld [vmem:[%s1 + $0xd90] sm:$0xff]
    %v484 = vld [vmem:[%s1 + $0xd98] sm:$0xff]
    %v485 = vld [vmem:[%s1 + $0xda0] sm:$0xff]
    %v486 = vld [vmem:[%s1 + $0xda8] sm:$0xff]
    %v487 = vld [vmem:[%s1 + $0xdb0] sm:$0xff]
    %v488 = vld [vmem:[%s1 + $0xdb8] sm:$0xff]
    %v489 = vld [vmem:[%s1 + $0xdc0] sm:$0xff]
    %v490 = vld [vmem:[%s1 + $0xdc8] sm:$0xff]
    %v491 = vld [vmem:[%s1 + $0xdd0] sm:$0xff]
    %v492 = vld [vmem:[%s1 + $0xdd8] sm:$0xff]
    %v493 = vld [vmem:[%s1 + $0xde0] sm:$0xff]
    %v494 = vld [vmem:[%s1 + $0xde8] sm:$0xff]
    %v495 = vld [vmem:[%s1 + $0xdf0] sm:$0xff]
    %v496 = vld [vmem:[%s1 + $0xdf8] sm:$0xff]
    %v497 = vld [vmem:[%s1 + $0xe00] sm:$0xff]
    %v498 = vld [vmem:[%s1 + $0xe08] sm:$0xff]
    %v499 = vld [vmem:[%s1 + $0xe10] sm:$0xff]
    %v500 = vld [vmem:[%s1 + $0xe18] sm:$0xff]
    %v501 = vld [vmem:[%s1 + $0xe20] sm:$0xff]
    %v502 = vld [vmem:[%s1 + $0xe28] sm:$0xff]
    %v503 = vld [vmem:[%s1 + $0xe30] sm:$0xff]
    %v504 = vld [vmem:[%s1 + $0xe38] sm:$0xff]
    %v505 = vld [vmem:[%s1 + $0xe40] sm:$0xff]
    %v506 = vld [vmem:[%s1 + $0xe48] sm:$0xff]
    %v507 = vld [vmem:[%s1 + $0xe50] sm:$0xff]
    %v508 = vld [vmem:[%s1 + $0xe58] sm:$0xff]
    %v509 = vld [vmem:[%s1 + $0xe60] sm:$0xff]
    %v510 = vld [vmem:[%s1 + $0xe68] sm:$0xff]
    %v511 = vld [vmem:[%s1 + $0xe70] sm:$0xff]
    %v512 = vld [vmem:[%s1 + $0xe78] sm:$0xff]
    %v513 = vld [vmem:[%s1 + $0xe80] sm:$0xff]
    %v514 = vld [vmem:[%s1 + $0xe88] sm:$0xff]
    %v515 = vld [vmem:[%s1 + $0xe90] sm:$0xff]
    %v516 = vld [vmem:[%s1 + $0xe98] sm:$0xff]
    %v517 = vld [vmem:[%s1 + $0xea0] sm:$0xff]
    %v518 = vld [vmem:[%s1 + $0xea8] sm:$0xff]
    %v519 = vld [vmem:[%s1 + $0xeb0] sm:$0xff]
    %v520 = vld [vmem:[%s1 + $0xeb8] sm:$0xff]
    %v521 = vld [vmem:[%s1 + $0xec0] sm:$0xff]
    %v522 = vld [vmem:[%s1 + $0xec8] sm:$0xff]
    %v523 = vld [vmem:[%s1 + $0xed0] sm:$0xff]
    %v524 = vld [vmem:[%s1 + $0xed8] sm:$0xff]
    %v525 = vld [vmem:[%s1 + $0xee0] sm:$0xff]
    %v526 = vld [vmem:[%s1 + $0xee8] sm:$0xff]
    %v527 = vld [vmem:[%s1 + $0xef0] sm:$0xff]
    %v528 = vld [vmem:[%s1 + $0xef8] sm:$0xff]
    %v529 = vld [vmem:[%s1 + $0xf00] sm:$0xff]
    %v530 = vld [vmem:[%s1 + $0xf08] sm:$0xff]
    %v531 = vld [vmem:[%s1 + $0xf10] sm:$0xff]
    %v532 = vld [vmem:[%s1 + $0xf18] sm:$0xff]
    %v533 = vld [vmem:[%s1 + $0xf20] sm:$0xff]
    %v534 = vld [vmem:[%s1 + $0xf28] sm:$0xff]
    %v535 = vld [vmem:[%s1 + $0xf30] sm:$0xff]
    %v536 = vld [vmem:[%s1 + $0xf38] sm:$0xff]
    %v537 = vld [vmem:[%s1 + $0xf40] sm:$0xff]
    %v538 = vld [vmem:[%s1 + $0xf48] sm:$0xff]
    %v539 = vld [vmem:[%s1 + $0xf50] sm:$0xff]
    %v540 = vld [vmem:[%s1 + $0xf58] sm:$0xff]
    %v541 = vld [vmem:[%s1 + $0xf60] sm:$0xff]
    %v542 = vld [vmem:[%s1 + $0xf68] sm:$0xff]
    %v543 = vld [vmem:[%s1 + $0xf70] sm:$0xff]
    %v544 = vld [vmem:[%s1 + $0xf78] sm:$0xff]
    %v545 = vld [vmem:[%s1 + $0xf80] sm:$0xff]
    %v546 = vld [vmem:[%s1 + $0xf88] sm:$0xff]
    %v547 = vld [vmem:[%s1 + $0xf90] sm:$0xff]
    %v548 = vld [vmem:[%s1 + $0xf98] sm:$0xff]
    %v549 = vld [vmem:[%s1 + $0xfa0] sm:$0xff]
    %v550 = vld [vmem:[%s1 + $0xfa8] sm:$0xff]
    %v551 = vld [vmem:[%s1 + $0xfb0] sm:$0xff]
    %v552 = vld [vmem:[%s1 + $0xfb8] sm:$0xff]
    %v553 = vld [vmem:[%s1 + $0xfc0] sm:$0xff]
    %v554 = vld [vmem:[%s1 + $0xfc8] sm:$0xff]
    %v555 = vld [vmem:[%s1 + $0xfd0] sm:$0xff]
    %v556 = vld [vmem:[%s1 + $0xfd8] sm:$0xff]
    %v557 = vld [vmem:[%s1 + $0xfe0] sm:$0xff]
    %v558 = vld [vmem:[%s1 + $0xfe8] sm:$0xff]
    %v559 = vld [vmem:[%s1 + $0xff0] sm:$0xff]
    %v560 = vld [vmem:[%s1 + $0xff8] sm:$0xff]
    %v561 = vld [vmem:[%s1 + $0x1000] sm:$0xff]
    %v562 = vld [vmem:[%s1 + $0x1008] sm:$0xff]
    %v563 = vld [vmem:[%s1 + $0x1010] sm:$0xff]
    %v564 = vld [vmem:[%s1 + $0x1018] sm:$0xff]
    %v565 = vld [vmem:[%s1 + $0x1020] sm:$0xff]
    %v566 = vld [vmem:[%s1 + $0x1028] sm:$0xff]
    %v567 = vld [vmem:[%s1 + $0x1030] sm:$0xff]
    %v568 = vld [vmem:[%s1 + $0x1038] sm:$0xff]
    %v569 = vld [vmem:[%s1 + $0x1040] sm:$0xff]
    %v570 = vld [vmem:[%s1 + $0x1048] sm:$0xff]
    %v571 = vld [vmem:[%s1 + $0x1050] sm:$0xff]
    %v572 = vld [vmem:[%s1 + $0x1058] sm:$0xff]
    %v573 = vld [vmem:[%s1 + $0x1060] sm:$0xff]
    %v574 = vld [vmem:[%s1 + $0x1068] sm:$0xff]
    %v575 = vld [vmem:[%s1 + $0x1070] sm:$0xff]
    %v576 = vld [vmem:[%s1 + $0x1078] sm:$0xff]
    %v577 = vld [vmem:[%s1 + $0x1080] sm:$0xff]
    %v578 = vld [vmem:[%s1 + $0x1088] sm:$0xff]
    %v579 = vld [vmem:[%s1 + $0x1090] sm:$0xff]
    %v580 = vld [vmem:[%s1 + $0x1098] sm:$0xff]
    %v581 = vld [vmem:[%s1 + $0x10a0] sm:$0xff]
    %v582 = vld [vmem:[%s1 + $0x10a8] sm:$0xff]
    %v583 = vld [vmem:[%s1 + $0x10b0] sm:$0xff]
    %v584 = vld [vmem:[%s1 + $0x10b8] sm:$0xff]
    %v585 = vld [vmem:[%s1 + $0x10c0] sm:$0xff]
    %v586 = vld [vmem:[%s1 + $0x10c8] sm:$0xff]
    %v587 = vld [vmem:[%s1 + $0x10d0] sm:$0xff]
    %v588 = vld [vmem:[%s1 + $0x10d8] sm:$0xff]
    %v589 = vld [vmem:[%s1 + $0x10e0] sm:$0xff]
    %v590 = vld [vmem:[%s1 + $0x10e8] sm:$0xff]
    %v591 = vld [vmem:[%s1 + $0x10f0] sm:$0xff]
    %v592 = vld [vmem:[%s1 + $0x10f8] sm:$0xff]
    %v593 = vld [vmem:[%s1 + $0x1100] sm:$0xff]
    %v594 = vld [vmem:[%s1 + $0x1108] sm:$0xff]
    %v595 = vld [vmem:[%s1 + $0x1110] sm:$0xff]
    %v596 = vld [vmem:[%s1 + $0x1118] sm:$0xff]
    %v597 = vld [vmem:[%s1 + $0x1120] sm:$0xff]
    %v598 = vld [vmem:[%s1 + $0x1128] sm:$0xff]
    %v599 = vld [vmem:[%s1 + $0x1130] sm:$0xff]
    %v600 = vld [vmem:[%s1 + $0x1138] sm:$0xff]
    %v601 = vld [vmem:[%s1 + $0x1140] sm:$0xff]
    %v602 = vld [vmem:[%s1 + $0x1148] sm:$0xff]
    %v603 = vld [vmem:[%s1 + $0x1150] sm:$0xff]
    %v604 = vld [vmem:[%s1 + $0x1158] sm:$0xff]
    %v605 = vld [vmem:[%s1 + $0x1160] sm:$0xff]
    %v606 = vld [vmem:[%s1 + $0x1168] sm:$0xff]
    %v607 = vld [vmem:[%s1 + $0x1170] sm:$0xff]
    %v608 = vld [vmem:[%s1 + $0x1178] sm:$0xff]
    %v609 = vld [vmem:[%s1 + $0x1180] sm:$0xff]
    %v610 = vld [vmem:[%s1 + $0x1188] sm:$0xff]
    %v611 = vld [vmem:[%s1 + $0x1190] sm:$0xff]
    %v612 = vld [vmem:[%s1 + $0x1198] sm:$0xff]
    %v613 = vld [vmem:[%s1 + $0x11a0] sm:$0xff]
    %v614 = vld [vmem:[%s1 + $0x11a8] sm:$0xff]
    %v615 = vld [vmem:[%s1 + $0x11b0] sm:$0xff]
    %v616 = vld [vmem:[%s1 + $0x11b8] sm:$0xff]
    %v617 = vld [vmem:[%s1 + $0x11c0] sm:$0xff]
    %v618 = vld [vmem:[%s1 + $0x11c8] sm:$0xff]
    %v619 = vld [vmem:[%s1 + $0x11d0] sm:$0xff]
    %v620 = vld [vmem:[%s1 + $0x11d8] sm:$0xff]
    %v621 = vld [vmem:[%s1 + $0x11e0] sm:$0xff]
    %v622 = vld [vmem:[%s1 + $0x11e8] sm:$0xff]
    %v623 = vld [vmem:[%s1 + $0x11f0] sm:$0xff]
    %v624 = vld [vmem:[%s1 + $0x11f8] sm:$0xff]
    %v625 = vld [vmem:[%s1 + $0x1200] sm:$0xff]
    %v626 = vld [vmem:[%s1 + $0x1208] sm:$0xff]
    %v627 = vld [vmem:[%s1 + $0x1210] sm:$0xff]
    %v628 = vld [vmem:[%s1 + $0x1218] sm:$0xff]
    %v629 = vld [vmem:[%s1 + $0x1220] sm:$0xff]
    %v630 = vld [vmem:[%s1 + $0x1228] sm:$0xff]
    %v631 = vld [vmem:[%s1 + $0x1230] sm:$0xff]
    %v632 = vld [vmem:[%s1 + $0x1238] sm:$0xff]
    %v633 = vld [vmem:[%s1 + $0x1240] sm:$0xff]
    %v634 = vld [vmem:[%s1 + $0x1248] sm:$0xff]
    %v635 = vld [vmem:[%s1 + $0x1250] sm:$0xff]
    %v636 = vld [vmem:[%s1 + $0x1258] sm:$0xff]
    %v637 = vld [vmem:[%s1 + $0x1260] sm:$0xff]
    %v638 = vld [vmem:[%s1 + $0x1268] sm:$0xff]
    %v639 = vld [vmem:[%s1 + $0x1270] sm:$0xff]
    %v640 = vld [vmem:[%s1 + $0x1278] sm:$0xff]
    %v641 = vld [vmem:[%s1 + $0x1280] sm:$0xff]
    %v642 = vld [vmem:[%s1 + $0x1288] sm:$0xff]
    %v643 = vld [vmem:[%s1 + $0x1290] sm:$0xff]
    %v644 = vld [vmem:[%s1 + $0x1298] sm:$0xff]
    %v645 = vld [vmem:[%s1 + $0x12a0] sm:$0xff]
    %v646 = vld [vmem:[%s1 + $0x12a8] sm:$0xff]
    %v647 = vld [vmem:[%s1 + $0x12b0] sm:$0xff]
    %v648 = vld [vmem:[%s1 + $0x12b8] sm:$0xff]
    %v649 = vld [vmem:[%s1 + $0x12c0] sm:$0xff]
    %v650 = vld [vmem:[%s1 + $0x12c8] sm:$0xff]
    %v651 = vld [vmem:[%s1 + $0x12d0] sm:$0xff]
    %v652 = vld [vmem:[%s1 + $0x12d8] sm:$0xff]
    %v653 = vld [vmem:[%s1 + $0x12e0] sm:$0xff]
    %v654 = vld [vmem:[%s1 + $0x12e8] sm:$0xff]
    %v655 = vld [vmem:[%s1 + $0x12f0] sm:$0xff]
    %v656 = vld [vmem:[%s1 + $0x12f8] sm:$0xff]
    %v657 = vld [vmem:[%s1 + $0x1300] sm:$0xff]
    %v658 = vld [vmem:[%s1 + $0x1308] sm:$0xff]
    %v659 = vld [vmem:[%s1 + $0x1310] sm:$0xff]
    %v660 = vld [vmem:[%s1 + $0x1318] sm:$0xff]
    %v661 = vld [vmem:[%s1 + $0x1320] sm:$0xff]
    %v662 = vld [vmem:[%s1 + $0x1328] sm:$0xff]
    %v663 = vld [vmem:[%s1 + $0x1330] sm:$0xff]
    %v664 = vld [vmem:[%s1 + $0x1338] sm:$0xff]
    %v665 = vld [vmem:[%s1 + $0x1340] sm:$0xff]
    %v666 = vld [vmem:[%s1 + $0x1348] sm:$0xff]
    %v667 = vld [vmem:[%s1 + $0x1350] sm:$0xff]
    %v668 = vld [vmem:[%s1 + $0x1358] sm:$0xff]
    %v669 = vld [vmem:[%s1 + $0x1360] sm:$0xff]
    %v670 = vld [vmem:[%s1 + $0x1368] sm:$0xff]
    %v671 = vld [vmem:[%s1 + $0x1370] sm:$0xff]
    %v672 = vld [vmem:[%s1 + $0x1378] sm:$0xff]
    %v673 = vld [vmem:[%s1 + $0x1380] sm:$0xff]
    %v674 = vld [vmem:[%s1 + $0x1388] sm:$0xff]
    %v675 = vld [vmem:[%s1 + $0x1390] sm:$0xff]
    %v676 = vld [vmem:[%s1 + $0x1398] sm:$0xff]
    %v677 = vld [vmem:[%s1 + $0x13a0] sm:$0xff]
    %v678 = vld [vmem:[%s1 + $0x13a8] sm:$0xff]
    %v679 = vld [vmem:[%s1 + $0x13b0] sm:$0xff]
    %v680 = vld [vmem:[%s1 + $0x13b8] sm:$0xff]
    %v681 = vld [vmem:[%s1 + $0x13c0] sm:$0xff]
    %v682 = vld [vmem:[%s1 + $0x13c8] sm:$0xff]
    %v683 = vld [vmem:[%s1 + $0x13d0] sm:$0xff]
    %v684 = vld [vmem:[%s1 + $0x13d8] sm:$0xff]
    %v685 = vld [vmem:[%s1 + $0x13e0] sm:$0xff]
    %v686 = vld [vmem:[%s1 + $0x13e8] sm:$0xff]
    %v687 = vld [vmem:[%s1 + $0x13f0] sm:$0xff]
    %v688 = vld [vmem:[%s1 + $0x13f8] sm:$0xff]
    %v689 = vld [vmem:[%s1 + $0x1400] sm:$0xff]
    %v690 = vld [vmem:[%s1 + $0x1408] sm:$0xff]
    %v691 = vld [vmem:[%s1 + $0x1410] sm:$0xff]
    %v692 = vld [vmem:[%s1 + $0x1418] sm:$0xff]
    %v693 = vld [vmem:[%s1 + $0x1420] sm:$0xff]
    %v694 = vld [vmem:[%s1 + $0x1428] sm:$0xff]
    %v695 = vld [vmem:[%s1 + $0x1430] sm:$0xff]
    %v696 = vld [vmem:[%s1 + $0x1438] sm:$0xff]
    %v697 = vld [vmem:[%s1 + $0x1440] sm:$0xff]
    %v698 = vld [vmem:[%s1 + $0x1448] sm:$0xff]
    %v699 = vld [vmem:[%s1 + $0x1450] sm:$0xff]
    %v700 = vld [vmem:[%s1 + $0x1458] sm:$0xff]
    %v701 = vld [vmem:[%s1 + $0x1460] sm:$0xff]
    %v702 = vld [vmem:[%s1 + $0x1468] sm:$0xff]
    %v703 = vld [vmem:[%s1 + $0x1470] sm:$0xff]
    %v704 = vld [vmem:[%s1 + $0x1478] sm:$0xff]
    %v705 = vld [vmem:[%s1 + $0x1480] sm:$0xff]
    %v706 = vld [vmem:[%s1 + $0x1488] sm:$0xff]
    %v707 = vld [vmem:[%s1 + $0x1490] sm:$0xff]
    %v708 = vld [vmem:[%s1 + $0x1498] sm:$0xff]
    %v709 = vld [vmem:[%s1 + $0x14a0] sm:$0xff]
    %v710 = vld [vmem:[%s1 + $0x14a8] sm:$0xff]
    %v711 = vld [vmem:[%s1 + $0x14b0] sm:$0xff]
    %v712 = vld [vmem:[%s1 + $0x14b8] sm:$0xff]
    %v713 = vld [vmem:[%s1 + $0x14c0] sm:$0xff]
    %v714 = vld [vmem:[%s1 + $0x14c8] sm:$0xff]
    %v715 = vld [vmem:[%s1 + $0x14d0] sm:$0xff]
    %v716 = vld [vmem:[%s1 + $0x14d8] sm:$0xff]
    %v717 = vld [vmem:[%s1 + $0x14e0] sm:$0xff]
    %v718 = vld [vmem:[%s1 + $0x14e8] sm:$0xff]
    %v719 = vld [vmem:[%s1 + $0x14f0] sm:$0xff]
    %v720 = vld [vmem:[%s1 + $0x14f8] sm:$0xff]
    %v721 = vld [vmem:[%s1 + $0x1500] sm:$0xff]
    %v722 = vld [vmem:[%s1 + $0x1508] sm:$0xff]
    %v723 = vld [vmem:[%s1 + $0x1510] sm:$0xff]
    %v724 = vld [vmem:[%s1 + $0x1518] sm:$0xff]
    %v725 = vld [vmem:[%s1 + $0x1520] sm:$0xff]
    %v726 = vld [vmem:[%s1 + $0x1528] sm:$0xff]
    %v727 = vld [vmem:[%s1 + $0x1530] sm:$0xff]
    %v728 = vld [vmem:[%s1 + $0x1538] sm:$0xff]
    %v729 = vld [vmem:[%s1 + $0x1540] sm:$0xff]
    %v730 = vld [vmem:[%s1 + $0x1548] sm:$0xff]
    %v731 = vld [vmem:[%s1 + $0x1550] sm:$0xff]
    %v732 = vld [vmem:[%s1 + $0x1558] sm:$0xff]
    %v733 = vld [vmem:[%s1 + $0x1560] sm:$0xff]
    %v734 = vld [vmem:[%s1 + $0x1568] sm:$0xff]
    %v735 = vld [vmem:[%s1 + $0x1570] sm:$0xff]
    %v736 = vld [vmem:[%s1 + $0x1578] sm:$0xff]
    %v737 = vld [vmem:[%s1 + $0x1580] sm:$0xff]
    %v738 = vld [vmem:[%s1 + $0x1588] sm:$0xff]
    %v739 = vld [vmem:[%s1 + $0x1590] sm:$0xff]
    %v740 = vld [vmem:[%s1 + $0x1598] sm:$0xff]
    %v741 = vld [vmem:[%s1 + $0x15a0] sm:$0xff]
    %v742 = vld [vmem:[%s1 + $0x15a8] sm:$0xff]
    %v743 = vld [vmem:[%s1 + $0x15b0] sm:$0xff]
    %v744 = vld [vmem:[%s1 + $0x15b8] sm:$0xff]
    %v745 = vld [vmem:[%s1 + $0x15c0] sm:$0xff]
    %v746 = vld [vmem:[%s1 + $0x15c8] sm:$0xff]
    %v747 = vld [vmem:[%s1 + $0x15d0] sm:$0xff]
    %v748 = vld [vmem:[%s1 + $0x15d8] sm:$0xff]
    %v749 = vld [vmem:[%s1 + $0x15e0] sm:$0xff]
    %v750 = vld [vmem:[%s1 + $0x15e8] sm:$0xff]
    %v751 = vld [vmem:[%s1 + $0x15f0] sm:$0xff]
    %v752 = vld [vmem:[%s1 + $0x15f8] sm:$0xff]
    %v753 = vld [vmem:[%s1 + $0x1600] sm:$0xff]
    %v754 = vld [vmem:[%s1 + $0x1608] sm:$0xff]
    %v755 = vld [vmem:[%s1 + $0x1610] sm:$0xff]
    %v756 = vld [vmem:[%s1 + $0x1618] sm:$0xff]
    %v757 = vld [vmem:[%s1 + $0x1620] sm:$0xff]
    %v758 = vld [vmem:[%s1 + $0x1628] sm:$0xff]
    %v759 = vld [vmem:[%s1 + $0x1630] sm:$0xff]
    %v760 = vld [vmem:[%s1 + $0x1638] sm:$0xff]
    %v761 = vld [vmem:[%s1 + $0x1640] sm:$0xff]
    %v762 = vld [vmem:[%s1 + $0x1648] sm:$0xff]
    %v763 = vld [vmem:[%s1 + $0x1650] sm:$0xff]
    %v764 = vld [vmem:[%s1 + $0x1658] sm:$0xff]
    %v765 = vld [vmem:[%s1 + $0x1660] sm:$0xff]
    %v766 = vld [vmem:[%s1 + $0x1668] sm:$0xff]
    %v767 = vld [vmem:[%s1 + $0x1670] sm:$0xff]
    %v768 = vld [vmem:[%s1 + $0x1678] sm:$0xff]
    %v769 = vld [vmem:[%s1 + $0x1680] sm:$0xff]
    %v770 = vld [vmem:[%s1 + $0x1688] sm:$0xff]
    %v771 = vld [vmem:[%s1 + $0x1690] sm:$0xff]
    %v772 = vld [vmem:[%s1 + $0x1698] sm:$0xff]
    %v773 = vld [vmem:[%s1 + $0x16a0] sm:$0xff]
    %v774 = vld [vmem:[%s1 + $0x16a8] sm:$0xff]
    %v775 = vld [vmem:[%s1 + $0x16b0] sm:$0xff]
    %v776 = vld [vmem:[%s1 + $0x16b8] sm:$0xff]
    %v777 = vld [vmem:[%s1 + $0x16c0] sm:$0xff]
    %v778 = vld [vmem:[%s1 + $0x16c8] sm:$0xff]
    %v779 = vld [vmem:[%s1 + $0x16d0] sm:$0xff]
    %v780 = vld [vmem:[%s1 + $0x16d8] sm:$0xff]
    %v781 = vld [vmem:[%s1 + $0x16e0] sm:$0xff]
    %v782 = vld [vmem:[%s1 + $0x16e8] sm:$0xff]
    %v783 = vld [vmem:[%s1 + $0x16f0] sm:$0xff]
    %v784 = vld [vmem:[%s1 + $0x16f8] sm:$0xff]
    %v785 = vld [vmem:[%s1 + $0x1700] sm:$0xff]
    %v786 = vld [vmem:[%s1 + $0x1708] sm:$0xff]
    %v787 = vld [vmem:[%s1 + $0x1710] sm:$0xff]
    %v788 = vld [vmem:[%s1 + $0x1718] sm:$0xff]
    %v789 = vld [vmem:[%s1 + $0x1720] sm:$0xff]
    %v790 = vld [vmem:[%s1 + $0x1728] sm:$0xff]
    %v791 = vld [vmem:[%s1 + $0x1730] sm:$0xff]
    %v792 = vld [vmem:[%s1 + $0x1738] sm:$0xff]
    %v793 = vld [vmem:[%s1 + $0x1740] sm:$0xff]
    %v794 = vld [vmem:[%s1 + $0x1748] sm:$0xff]
    %v795 = vld [vmem:[%s1 + $0x1750] sm:$0xff]
    %v796 = vld [vmem:[%s1 + $0x1758] sm:$0xff]
    %v797 = vld [vmem:[%s1 + $0x1760] sm:$0xff]
    %v798 = vld [vmem:[%s1 + $0x1768] sm:$0xff]
    %v799 = vld [vmem:[%s1 + $0x1770] sm:$0xff]
    %v800 = vld [vmem:[%s1 + $0x1778] sm:$0xff]
    %v801 = vld [vmem:[%s1 + $0x1780] sm:$0xff]
    %v802 = vld [vmem:[%s1 + $0x1788] sm:$0xff]
    %v803 = vld [vmem:[%s1 + $0x1790] sm:$0xff]
    %v804 = vld [vmem:[%s1 + $0x1798] sm:$0xff]
    %v805 = vld [vmem:[%s1 + $0x17a0] sm:$0xff]
    %v806 = vld [vmem:[%s1 + $0x17a8] sm:$0xff]
    %v807 = vld [vmem:[%s1 + $0x17b0] sm:$0xff]
    %v808 = vld [vmem:[%s1 + $0x17b8] sm:$0xff]
    %v809 = vld [vmem:[%s1 + $0x17c0] sm:$0xff]
    %v810 = vld [vmem:[%s1 + $0x17c8] sm:$0xff]
    %v811 = vld [vmem:[%s1 + $0x17d0] sm:$0xff]
    %v812 = vld [vmem:[%s1 + $0x17d8] sm:$0xff]
    %v813 = vld [vmem:[%s1 + $0x17e0] sm:$0xff]
    %v814 = vld [vmem:[%s1 + $0x17e8] sm:$0xff]
    %v815 = vld [vmem:[%s1 + $0x17f0] sm:$0xff]
    %v816 = vld [vmem:[%s1 + $0x17f8] sm:$0xff]
    %v817 = vld [vmem:[%s1 + $0x1800] sm:$0xff]
    %v818 = vld [vmem:[%s1 + $0x1808] sm:$0xff]
    %v819 = vld [vmem:[%s1 + $0x1810] sm:$0xff]
    %v820 = vld [vmem:[%s1 + $0x1818] sm:$0xff]
    %v821 = vld [vmem:[%s1 + $0x1820] sm:$0xff]
    %v822 = vld [vmem:[%s1 + $0x1828] sm:$0xff]
    %v823 = vld [vmem:[%s1 + $0x1830] sm:$0xff]
    %v824 = vld [vmem:[%s1 + $0x1838] sm:$0xff]
    %v825 = vld [vmem:[%s1 + $0x1840] sm:$0xff]
    %v826 = vld [vmem:[%s1 + $0x1848] sm:$0xff]
    %v827 = vld [vmem:[%s1 + $0x1850] sm:$0xff]
    %v828 = vld [vmem:[%s1 + $0x1858] sm:$0xff]
    %v829 = vld [vmem:[%s1 + $0x1860] sm:$0xff]
    %v830 = vld [vmem:[%s1 + $0x1868] sm:$0xff]
    %v831 = vld [vmem:[%s1 + $0x1870] sm:$0xff]
    %v832 = vld [vmem:[%s1 + $0x1878] sm:$0xff]
    %v833 = vld [vmem:[%s1 + $0x1880] sm:$0xff]
    %v834 = vld [vmem:[%s1 + $0x1888] sm:$0xff]
    %v835 = vld [vmem:[%s1 + $0x1890] sm:$0xff]
    %v836 = vld [vmem:[%s1 + $0x1898] sm:$0xff]
    %v837 = vld [vmem:[%s1 + $0x18a0] sm:$0xff]
    %v838 = vld [vmem:[%s1 + $0x18a8] sm:$0xff]
    %v839 = vld [vmem:[%s1 + $0x18b0] sm:$0xff]
    %v840 = vld [vmem:[%s1 + $0x18b8] sm:$0xff]
    %v841 = vld [vmem:[%s1 + $0x18c0] sm:$0xff]
    %v842 = vld [vmem:[%s1 + $0x18c8] sm:$0xff]
    %v843 = vld [vmem:[%s1 + $0x18d0] sm:$0xff]
    %v844 = vld [vmem:[%s1 + $0x18d8] sm:$0xff]
    %v845 = vld [vmem:[%s1 + $0x18e0] sm:$0xff]
    %v846 = vld [vmem:[%s1 + $0x18e8] sm:$0xff]
    %v847 = vld [vmem:[%s1 + $0x18f0] sm:$0xff]
    %v848 = vld [vmem:[%s1 + $0x18f8] sm:$0xff]
    %v849 = vld [vmem:[%s1 + $0x1900] sm:$0xff]
    %v850 = vld [vmem:[%s1 + $0x1908] sm:$0xff]
    %v851 = vld [vmem:[%s1 + $0x1910] sm:$0xff]
    %v852 = vld [vmem:[%s1 + $0x1918] sm:$0xff]
    %v853 = vld [vmem:[%s1 + $0x1920] sm:$0xff]
    %v854 = vld [vmem:[%s1 + $0x1928] sm:$0xff]
    %v855 = vld [vmem:[%s1 + $0x1930] sm:$0xff]
    %v856 = vld [vmem:[%s1 + $0x1938] sm:$0xff]
    %v857 = vld [vmem:[%s1 + $0x1940] sm:$0xff]
    %v858 = vld [vmem:[%s1 + $0x1948] sm:$0xff]
    %v859 = vld [vmem:[%s1 + $0x1950] sm:$0xff]
    %v860 = vld [vmem:[%s1 + $0x1958] sm:$0xff]
    %v861 = vld [vmem:[%s1 + $0x1960] sm:$0xff]
    %v862 = vld [vmem:[%s1 + $0x1968] sm:$0xff]
    %v863 = vld [vmem:[%s1 + $0x1970] sm:$0xff]
    %v864 = vld [vmem:[%s1 + $0x1978] sm:$0xff]
    %v865 = vld [vmem:[%s1 + $0x1980] sm:$0xff]
    %v866 = vld [vmem:[%s1 + $0x1988] sm:$0xff]
    %v867 = vld [vmem:[%s1 + $0x1990] sm:$0xff]
    %v868 = vld [vmem:[%s1 + $0x1998] sm:$0xff]
    %v869 = vld [vmem:[%s1 + $0x19a0] sm:$0xff]
    %v870 = vld [vmem:[%s1 + $0x19a8] sm:$0xff]
    %v871 = vld [vmem:[%s1 + $0x19b0] sm:$0xff]
    %v872 = vld [vmem:[%s1 + $0x19b8] sm:$0xff]
    %v873 = vld [vmem:[%s1 + $0x19c0] sm:$0xff]
    %v874 = vld [vmem:[%s1 + $0x19c8] sm:$0xff]
    %v875 = vld [vmem:[%s1 + $0x19d0] sm:$0xff]
    %v876 = vld [vmem:[%s1 + $0x19d8] sm:$0xff]
    %v877 = vld [vmem:[%s1 + $0x19e0] sm:$0xff]
    %v878 = vld [vmem:[%s1 + $0x19e8] sm:$0xff]
    %v879 = vld [vmem:[%s1 + $0x19f0] sm:$0xff]
    %v880 = vld [vmem:[%s1 + $0x19f8] sm:$0xff]
    %v881 = vld [vmem:[%s1 + $0x1a00] sm:$0xff]
    %v882 = vld [vmem:[%s1 + $0x1a08] sm:$0xff]
    %v883 = vld [vmem:[%s1 + $0x1a10] sm:$0xff]
    %v884 = vld [vmem:[%s1 + $0x1a18] sm:$0xff]
    %v885 = vld [vmem:[%s1 + $0x1a20] sm:$0xff]
    %v886 = vld [vmem:[%s1 + $0x1a28] sm:$0xff]
    %v887 = vld [vmem:[%s1 + $0x1a30] sm:$0xff]
    %v888 = vld [vmem:[%s1 + $0x1a38] sm:$0xff]
    %v889 = vld [vmem:[%s1 + $0x1a40] sm:$0xff]
    %v890 = vld [vmem:[%s1 + $0x1a48] sm:$0xff]
    %v891 = vld [vmem:[%s1 + $0x1a50] sm:$0xff]
    %v892 = vld [vmem:[%s1 + $0x1a58] sm:$0xff]
    %v893 = vld [vmem:[%s1 + $0x1a60] sm:$0xff]
    %v894 = vld [vmem:[%s1 + $0x1a68] sm:$0xff]
    %v895 = vld [vmem:[%s1 + $0x1a70] sm:$0xff]
    %v896 = vld [vmem:[%s1 + $0x1a78] sm:$0xff]
    %v897 = vld [vmem:[%s1 + $0x1a80] sm:$0xff]
    %v898 = vld [vmem:[%s1 + $0x1a88] sm:$0xff]
    %v899 = vld [vmem:[%s1 + $0x1a90] sm:$0xff]
    %v900 = vld [vmem:[%s1 + $0x1a98] sm:$0xff]
    %v901 = vld [vmem:[%s1 + $0x1aa0] sm:$0xff]
    %v902 = vld [vmem:[%s1 + $0x1aa8] sm:$0xff]
    %v903 = vld [vmem:[%s1 + $0x1ab0] sm:$0xff]
    %v904 = vld [vmem:[%s1 + $0x1ab8] sm:$0xff]
    %v905 = vld [vmem:[%s1 + $0x1ac0] sm:$0xff]
    %v906 = vld [vmem:[%s1 + $0x1ac8] sm:$0xff]
    %v907 = vld [vmem:[%s1 + $0x1ad0] sm:$0xff]
    %v908 = vld [vmem:[%s1 + $0x1ad8] sm:$0xff]
    %v909 = vld [vmem:[%s1 + $0x1ae0] sm:$0xff]
    %v910 = vld [vmem:[%s1 + $0x1ae8] sm:$0xff]
    %v911 = vld [vmem:[%s1 + $0x1af0] sm:$0xff]
    %v912 = vld [vmem:[%s1 + $0x1af8] sm:$0xff]
    %v913 = vld [vmem:[%s1 + $0x1b00] sm:$0xff]
    %v914 = vld [vmem:[%s1 + $0x1b08] sm:$0xff]
    %v915 = vld [vmem:[%s1 + $0x1b10] sm:$0xff]
    %v916 = vld [vmem:[%s1 + $0x1b18] sm:$0xff]
    %v917 = vld [vmem:[%s1 + $0x1b20] sm:$0xff]
    %v918 = vld [vmem:[%s1 + $0x1b28] sm:$0xff]
    %v919 = vld [vmem:[%s1 + $0x1b30] sm:$0xff]
    %v920 = vld [vmem:[%s1 + $0x1b38] sm:$0xff]
    %v921 = vld [vmem:[%s1 + $0x1b40] sm:$0xff]
    %v922 = vld [vmem:[%s1 + $0x1b48] sm:$0xff]
    %v923 = vld [vmem:[%s1 + $0x1b50] sm:$0xff]
    %vm924 = vcmask 982016
    %v926 = vsel %vm924, %v37, 0
    %v929 = vsel %vm924, %v48, 0
    %931 = vmatprep.subr.mxu0 %v50
    %932 = vmatpush1.msra.mxu0 %v49
    %933 = vmatprep.subr.mxu0 %v55
    %934 = vmatpush1.msra.mxu0 %v54
    %935 = vmatprep.subr.mxu0 %v60
    %936 = vmatpush1.msra.mxu0 %v59
    %937 = vmatprep.subr.mxu0 %v65
    %938 = vmatpush1.msra.mxu0 %v64
    %939 = vmatprep.subr.mxu0 %v70
    %940 = vmatpush1.msra.mxu0 %v69
    %941 = vmatprep.subr.mxu0 %v75
    %942 = vmatpush1.msra.mxu0 %v74
    %943 = vmatprep.subr.mxu0 %v80
    %944 = vmatpush1.msra.mxu0 %v79
    %945 = vmatprep.subr.mxu0 %v85
    %946 = vmatpush1.msra.mxu0 %v84
    %947 = vmatprep.subr.mxu0 %v90
    %948 = vmatpush1.msra.mxu0 %v89
    %949 = vmatprep.subr.mxu0 %v95
    %950 = vmatpush1.msra.mxu0 %v94
    %951 = vmatprep.subr.mxu0 %v100
    %952 = vmatpush1.msra.mxu0 %v99
    %953 = vmatprep.subr.mxu0 %v105
    %954 = vmatpush1.msra.mxu0 %v104
    %955 = vmatprep.subr.mxu0 %v110
    %956 = vmatpush1.msra.mxu0 %v109
    %957 = vmatprep.subr.mxu0 %v115
    %958 = vmatpush1.msra.mxu0 %v114
    %959 = vmatprep.subr.mxu0 %v120
    %960 = vmatpush1.msra.mxu0 %v119
    %961 = vmatprep.subr.mxu0 %v125
    %962 = vmatpush1.msra.mxu0 %v124
    %963 = vmatprep.subr.mxu0 %v130
    %964 = vmatpush1.msra.mxu0 %v129
    %965 = vmatprep.subr.mxu0 %v135
    %966 = vmatpush1.msra.mxu0 %v134
    %967 = vmatprep.subr.mxu0 %v140
    %968 = vmatpush1.msra.mxu0 %v139
    %969 = vmatprep.subr.mxu0 %v145
    %970 = vmatpush1.msra.mxu0 %v144
    %971 = vmatprep.subr.mxu0 %v150
    %972 = vmatpush1.msra.mxu0 %v149
    %973 = vmatprep.subr.mxu0 %v155
    %974 = vmatpush1.msra.mxu0 %v154
    %975 = vmatprep.subr.mxu0 %v160
    %976 = vmatpush1.msra.mxu0 %v159
    %977 = vmatprep.subr.mxu0 %v165
    %978 = vmatpush1.msra.mxu0 %v164
    %979 = vmatprep.subr.mxu0 %v170
    %980 = vmatpush1.msra.mxu0 %v169
    %981 = vmatprep.subr.mxu0 %v175
    %982 = vmatpush1.msra.mxu0 %v174
    %983 = vmatprep.subr.mxu0 %v180
    %984 = vmatpush1.msra.mxu0 %v179
    %985 = vmatprep.subr.mxu0 %v185
    %986 = vmatpush1.msra.mxu0 %v184
    %987 = vmatprep.subr.mxu0 %v190
    %988 = vmatpush1.msra.mxu0 %v189
    %989 = vmatprep.subr.mxu0 %v195
    %990 = vmatpush1.msra.mxu0 %v194
    %991 = vmatprep.subr.mxu0 %v200
    %992 = vmatpush1.msra.mxu0 %v199
    %993 = vmatprep.subr.mxu0 %v205
    %994 = vmatpush1.msra.mxu0 %v204
    %995 = vmatprep.mubr.f32.mxu0 %v28
    %996 = vmatmul.mubr.f32.gmra.mrb[0].mxu0 %v27
    %v997 = vpop.f32.mrb[0].mxu0
    %v998 = vadd.f32 0.0, %v997
    %v999 = vpop.f32.mrb[0].mxu0
    %v1000 = vadd.f32 0.0, %v999
    %1001 = vmatprep.mubr.f32.mxu0 %v39
    %1002 = vmatmul.mubr.f32.gmra.mrb[0].mxu0 %v38
    %v1003 = vpop.f32.mrb[0].mxu0
    %v1004 = vadd.f32 0.0, %v1003
    %v1005 = vpop.f32.mrb[0].mxu0
    %v1006 = vadd.f32 0.0, %v1005
    %1007 = vdwg.mxu0
    %1008 = vmatprep.subr.mxu0 %v210
    %1009 = vmatpush1.msra.mxu0 %v209
    %1010 = vmatprep.subr.mxu0 %v215
    %1011 = vmatpush1.msra.mxu0 %v214
    %1012 = vmatprep.subr.mxu0 %v220
    %1013 = vmatpush1.msra.mxu0 %v219
    %1014 = vmatprep.subr.mxu0 %v225
    %1015 = vmatpush1.msra.mxu0 %v224
    %1016 = vmatprep.subr.mxu0 %v230
    %1017 = vmatpush1.msra.mxu0 %v229
    %1018 = vmatprep.subr.mxu0 %v235
    %1019 = vmatpush1.msra.mxu0 %v234
    %1020 = vmatprep.subr.mxu0 %v240
    %1021 = vmatpush1.msra.mxu0 %v239
    %1022 = vmatprep.subr.mxu0 %v245
    %1023 = vmatpush1.msra.mxu0 %v244
    %1024 = vmatprep.subr.mxu0 %v250
    %1025 = vmatpush1.msra.mxu0 %v249
    %1026 = vmatprep.subr.mxu0 %v255
    %1027 = vmatpush1.msra.mxu0 %v254
    %1028 = vmatprep.subr.mxu0 %v260
    %1029 = vmatpush1.msra.mxu0 %v259
    %1030 = vmatprep.subr.mxu0 %v265
    %1031 = vmatpush1.msra.mxu0 %v264
    %1032 = vmatprep.subr.mxu0 %v270
    %1033 = vmatpush1.msra.mxu0 %v269
    %1034 = vmatprep.subr.mxu0 %v275
    %1035 = vmatpush1.msra.mxu0 %v274
    %1036 = vmatprep.subr.mxu0 %v280
    %1037 = vmatpush1.msra.mxu0 %v279
    %1038 = vmatprep.subr.mxu0 %v285
    %1039 = vmatpush1.msra.mxu0 %v284
    %1040 = vmatprep.subr.mxu0 %v290
    %1041 = vmatpush1.msra.mxu0 %v289
    %1042 = vmatprep.subr.mxu0 %v295
    %1043 = vmatpush1.msra.mxu0 %v294
    %1044 = vmatprep.subr.mxu0 %v300
    %1045 = vmatpush1.msra.mxu0 %v299
    %1046 = vmatprep.subr.mxu0 %v305
    %1047 = vmatpush1.msra.mxu0 %v304
    %1048 = vmatprep.subr.mxu0 %v310
    %1049 = vmatpush1.msra.mxu0 %v309
    %1050 = vmatprep.subr.mxu0 %v315
    %1051 = vmatpush1.msra.mxu0 %v314
    %1052 = vmatprep.subr.mxu0 %v320
    %1053 = vmatpush1.msra.mxu0 %v319
    %1054 = vmatprep.subr.mxu0 %v325
    %1055 = vmatpush1.msra.mxu0 %v324
    %1056 = vmatprep.subr.mxu0 %v330
    %1057 = vmatpush1.msra.mxu0 %v329
    %1058 = vmatprep.subr.mxu0 %v335
    %1059 = vmatpush1.msra.mxu0 %v334
    %1060 = vmatprep.subr.mxu0 %v340
    %1061 = vmatpush1.msra.mxu0 %v339
    %1062 = vmatprep.subr.mxu0 %v345
    %1063 = vmatpush1.msra.mxu0 %v344
    %1064 = vmatprep.subr.mxu0 %v350
    %1065 = vmatpush1.msra.mxu0 %v349
    %1066 = vmatprep.subr.mxu0 %v355
    %1067 = vmatpush1.msra.mxu0 %v354
    %1068 = vmatprep.subr.mxu0 %v360
    %1069 = vmatpush1.msra.mxu0 %v359
    %1070 = vmatprep.subr.mxu0 %v365
    %1071 = vmatpush1.msra.mxu0 %v364
    %1072 = vmatprep.mubr.f32.mxu0 %v30
    %1073 = vmatmul.mubr.f32.gmra.mrb[0].mxu0 %v29
    %v1074 = vpop.f32.mrb[0].mxu0
    %v1075 = vadd.f32 %v998, %v1074
    %v1076 = vpop.f32.mrb[0].mxu0
    %v1077 = vadd.f32 %v1000, %v1076
    %1078 = vmatprep.mubr.f32.mxu0 %v41
    %1079 = vmatmul.mubr.f32.gmra.mrb[0].mxu0 %v40
    %v1080 = vpop.f32.mrb[0].mxu0
    %v1081 = vadd.f32 %v1004, %v1080
    %v1082 = vpop.f32.mrb[0].mxu0
    %v1083 = vadd.f32 %v1006, %v1082
    %1084 = vdwg.mxu0
    %1085 = vmatprep.subr.mxu0 %v370
    %1086 = vmatpush1.msra.mxu0 %v369
    %1087 = vmatprep.subr.mxu0 %v375
    %1088 = vmatpush1.msra.mxu0 %v374
    %1089 = vmatprep.subr.mxu0 %v380
    %1090 = vmatpush1.msra.mxu0 %v379
    %1091 = vmatprep.subr.mxu0 %v385
    %1092 = vmatpush1.msra.mxu0 %v384
    %1093 = vmatprep.subr.mxu0 %v390
    %1094 = vmatpush1.msra.mxu0 %v389
    %1095 = vmatprep.subr.mxu0 %v395
    %1096 = vmatpush1.msra.mxu0 %v394
    %1097 = vmatprep.subr.mxu0 %v400
    %1098 = vmatpush1.msra.mxu0 %v399
    %1099 = vmatprep.subr.mxu0 %v405
    %1100 = vmatpush1.msra.mxu0 %v404
    %1101 = vmatprep.subr.mxu0 %v410
    %1102 = vmatpush1.msra.mxu0 %v409
    %1103 = vmatprep.subr.mxu0 %v415
    %1104 = vmatpush1.msra.mxu0 %v414
    %1105 = vmatprep.subr.mxu0 %v420
    %1106 = vmatpush1.msra.mxu0 %v419
    %1107 = vmatprep.subr.mxu0 %v425
    %1108 = vmatpush1.msra.mxu0 %v424
    %1109 = vmatprep.subr.mxu0 %v430
    %1110 = vmatpush1.msra.mxu0 %v429
    %1111 = vmatprep.subr.mxu0 %v435
    %1112 = vmatpush1.msra.mxu0 %v434
    %1113 = vmatprep.subr.mxu0 %v440
    %1114 = vmatpush1.msra.mxu0 %v439
    %1115 = vmatprep.subr.mxu0 %v445
    %1116 = vmatpush1.msra.mxu0 %v444
    %1117 = vmatprep.subr.mxu0 %v450
    %1118 = vmatpush1.msra.mxu0 %v449
    %1119 = vmatprep.subr.mxu0 %v455
    %1120 = vmatpush1.msra.mxu0 %v454
    %1121 = vmatprep.subr.mxu0 %v460
    %1122 = vmatpush1.msra.mxu0 %v459
    %1123 = vmatprep.subr.mxu0 %v465
    %1124 = vmatpush1.msra.mxu0 %v464
    %1125 = vmatprep.subr.mxu0 %v470
    %1126 = vmatpush1.msra.mxu0 %v469
    %1127 = vmatprep.subr.mxu0 %v475
    %1128 = vmatpush1.msra.mxu0 %v474
    %1129 = vmatprep.subr.mxu0 %v480
    %1130 = vmatpush1.msra.mxu0 %v479
    %1131 = vmatprep.subr.mxu0 %v485
    %1132 = vmatpush1.msra.mxu0 %v484
    %1133 = vmatprep.subr.mxu0 %v490
    %1134 = vmatpush1.msra.mxu0 %v489
    %1135 = vmatprep.subr.mxu0 %v495
    %1136 = vmatpush1.msra.mxu0 %v494
    %1137 = vmatprep.subr.mxu0 %v500
    %1138 = vmatpush1.msra.mxu0 %v499
    %1139 = vmatprep.subr.mxu0 %v505
    %1140 = vmatpush1.msra.mxu0 %v504
    %1141 = vmatprep.subr.mxu0 %v510
    %1142 = vmatpush1.msra.mxu0 %v509
    %1143 = vmatprep.subr.mxu0 %v515
    %1144 = vmatpush1.msra.mxu0 %v514
    %1145 = vmatprep.subr.mxu0 %v520
    %1146 = vmatpush1.msra.mxu0 %v519
    %1147 = vmatprep.subr.mxu0 %v525
    %1148 = vmatpush1.msra.mxu0 %v524
    %1149 = vmatprep.mubr.f32.mxu0 %v32
    %1150 = vmatmul.mubr.f32.gmra.mrb[0].mxu0 %v31
    %v1151 = vpop.f32.mrb[0].mxu0
    %v1152 = vadd.f32 %v1075, %v1151
    %v1153 = vpop.f32.mrb[0].mxu0
    %v1154 = vadd.f32 %v1077, %v1153
    %1155 = vmatprep.mubr.f32.mxu0 %v43
    %1156 = vmatmul.mubr.f32.gmra.mrb[0].mxu0 %v42
    %v1157 = vpop.f32.mrb[0].mxu0
    %v1158 = vadd.f32 %v1081, %v1157
    %v1159 = vpop.f32.mrb[0].mxu0
    %v1160 = vadd.f32 %v1083, %v1159
    %1161 = vdwg.mxu0
    %1162 = vmatprep.subr.mxu0 %v530
    %1163 = vmatpush1.msra.mxu0 %v529
    %1164 = vmatprep.subr.mxu0 %v535
    %1165 = vmatpush1.msra.mxu0 %v534
    %1166 = vmatprep.subr.mxu0 %v540
    %1167 = vmatpush1.msra.mxu0 %v539
    %1168 = vmatprep.subr.mxu0 %v545
    %1169 = vmatpush1.msra.mxu0 %v544
    %1170 = vmatprep.subr.mxu0 %v550
    %1171 = vmatpush1.msra.mxu0 %v549
    %1172 = vmatprep.subr.mxu0 %v555
    %1173 = vmatpush1.msra.mxu0 %v554
    %1174 = vmatprep.subr.mxu0 %v560
    %1175 = vmatpush1.msra.mxu0 %v559
    %1176 = vmatprep.subr.mxu0 %v565
    %1177 = vmatpush1.msra.mxu0 %v564
    %1178 = vmatprep.subr.mxu0 %v570
    %1179 = vmatpush1.msra.mxu0 %v569
    %1180 = vmatprep.subr.mxu0 %v575
    %1181 = vmatpush1.msra.mxu0 %v574
    %1182 = vmatprep.subr.mxu0 %v580
    %1183 = vmatpush1.msra.mxu0 %v579
    %1184 = vmatprep.subr.mxu0 %v585
    %1185 = vmatpush1.msra.mxu0 %v584
    %1186 = vmatprep.subr.mxu0 %v590
    %1187 = vmatpush1.msra.mxu0 %v589
    %1188 = vmatprep.subr.mxu0 %v595
    %1189 = vmatpush1.msra.mxu0 %v594
    %1190 = vmatprep.subr.mxu0 %v600
    %1191 = vmatpush1.msra.mxu0 %v599
    %1192 = vmatprep.subr.mxu0 %v605
    %1193 = vmatpush1.msra.mxu0 %v604
    %1194 = vmatprep.subr.mxu0 %v610
    %1195 = vmatpush1.msra.mxu0 %v609
    %1196 = vmatprep.subr.mxu0 %v615
    %1197 = vmatpush1.msra.mxu0 %v614
    %1198 = vmatprep.subr.mxu0 %v620
    %1199 = vmatpush1.msra.mxu0 %v619
    %1200 = vmatprep.subr.mxu0 %v625
    %1201 = vmatpush1.msra.mxu0 %v624
    %1202 = vmatprep.subr.mxu0 %v630
    %1203 = vmatpush1.msra.mxu0 %v629
    %1204 = vmatprep.subr.mxu0 %v635
    %1205 = vmatpush1.msra.mxu0 %v634
    %1206 = vmatprep.subr.mxu0 %v640
    %1207 = vmatpush1.msra.mxu0 %v639
    %1208 = vmatprep.subr.mxu0 %v645
    %1209 = vmatpush1.msra.mxu0 %v644
    %1210 = vmatprep.subr.mxu0 %v650
    %1211 = vmatpush1.msra.mxu0 %v649
    %1212 = vmatprep.subr.mxu0 %v655
    %1213 = vmatpush1.msra.mxu0 %v654
    %1214 = vmatprep.subr.mxu0 %v660
    %1215 = vmatpush1.msra.mxu0 %v659
    %1216 = vmatprep.subr.mxu0 %v665
    %1217 = vmatpush1.msra.mxu0 %v664
    %1218 = vmatprep.subr.mxu0 %v670
    %1219 = vmatpush1.msra.mxu0 %v669
    %1220 = vmatprep.subr.mxu0 %v675
    %1221 = vmatpush1.msra.mxu0 %v674
    %1222 = vmatprep.subr.mxu0 %v680
    %1223 = vmatpush1.msra.mxu0 %v679
    %1224 = vmatprep.subr.mxu0 %v685
    %1225 = vmatpush1.msra.mxu0 %v684
    %1226 = vmatprep.mubr.f32.mxu0 %v34
    %1227 = vmatmul.mubr.f32.gmra.mrb[0].mxu0 %v33
    %v1228 = vpop.f32.mrb[0].mxu0
    %v1229 = vadd.f32 %v1152, %v1228
    %v1230 = vpop.f32.mrb[0].mxu0
    %v1231 = vadd.f32 %v1154, %v1230
    %1232 = vmatprep.mubr.f32.mxu0 %v45
    %1233 = vmatmul.mubr.f32.gmra.mrb[0].mxu0 %v44
    %v1234 = vpop.f32.mrb[0].mxu0
    %v1235 = vadd.f32 %v1158, %v1234
    %v1236 = vpop.f32.mrb[0].mxu0
    %v1237 = vadd.f32 %v1160, %v1236
    %1238 = vdwg.mxu0
    %1239 = vmatprep.subr.mxu0 %v690
    %1240 = vmatpush1.msra.mxu0 %v689
    %1241 = vmatprep.subr.mxu0 %v695
    %1242 = vmatpush1.msra.mxu0 %v694
    %1243 = vmatprep.subr.mxu0 %v700
    %1244 = vmatpush1.msra.mxu0 %v699
    %1245 = vmatprep.subr.mxu0 %v705
    %1246 = vmatpush1.msra.mxu0 %v704
    %1247 = vmatprep.subr.mxu0 %v710
    %1248 = vmatpush1.msra.mxu0 %v709
    %1249 = vmatprep.subr.mxu0 %v715
    %1250 = vmatpush1.msra.mxu0 %v714
    %1251 = vmatprep.subr.mxu0 %v720
    %1252 = vmatpush1.msra.mxu0 %v719
    %1253 = vmatprep.subr.mxu0 %v725
    %1254 = vmatpush1.msra.mxu0 %v724
    %1255 = vmatprep.subr.mxu0 %v730
    %1256 = vmatpush1.msra.mxu0 %v729
    %1257 = vmatprep.subr.mxu0 %v735
    %1258 = vmatpush1.msra.mxu0 %v734
    %1259 = vmatprep.subr.mxu0 %v740
    %1260 = vmatpush1.msra.mxu0 %v739
    %1261 = vmatprep.subr.mxu0 %v745
    %1262 = vmatpush1.msra.mxu0 %v744
    %1263 = vmatprep.subr.mxu0 %v750
    %1264 = vmatpush1.msra.mxu0 %v749
    %1265 = vmatprep.subr.mxu0 %v755
    %1266 = vmatpush1.msra.mxu0 %v754
    %1267 = vmatprep.subr.mxu0 %v760
    %1268 = vmatpush1.msra.mxu0 %v759
    %1269 = vmatprep.subr.mxu0 %v765
    %1270 = vmatpush1.msra.mxu0 %v764
    %1271 = vmatprep.subr.mxu0 %v770
    %1272 = vmatpush1.msra.mxu0 %v769
    %1273 = vmatprep.subr.mxu0 %v775
    %1274 = vmatpush1.msra.mxu0 %v774
    %1275 = vmatprep.subr.mxu0 %v780
    %1276 = vmatpush1.msra.mxu0 %v779
    %1277 = vmatprep.subr.mxu0 %v785
    %1278 = vmatpush1.msra.mxu0 %v784
    %1279 = vmatprep.subr.mxu0 %v790
    %1280 = vmatpush1.msra.mxu0 %v789
    %1281 = vmatprep.subr.mxu0 %v795
    %1282 = vmatpush1.msra.mxu0 %v794
    %1283 = vmatprep.subr.mxu0 %v800
    %1284 = vmatpush1.msra.mxu0 %v799
    %1285 = vmatprep.subr.mxu0 %v805
    %1286 = vmatpush1.msra.mxu0 %v804
    %1287 = vmatprep.subr.mxu0 %v810
    %1288 = vmatpush1.msra.mxu0 %v809
    %1289 = vmatprep.subr.mxu0 %v815
    %1290 = vmatpush1.msra.mxu0 %v814
    %1291 = vmatprep.subr.mxu0 %v820
    %1292 = vmatpush1.msra.mxu0 %v819
    %1293 = vmatprep.subr.mxu0 %v825
    %1294 = vmatpush1.msra.mxu0 %v824
    %1295 = vmatprep.subr.mxu0 %v830
    %1296 = vmatpush1.msra.mxu0 %v829
    %1297 = vmatprep.subr.mxu0 %v835
    %1298 = vmatpush1.msra.mxu0 %v834
    %1299 = vmatprep.subr.mxu0 %v840
    %1300 = vmatpush1.msra.mxu0 %v839
    %1301 = vmatprep.subr.mxu0 %v845
    %1302 = vmatpush1.msra.mxu0 %v844
    %1303 = vmatprep.mubr.f32.mxu0 %v36
    %1304 = vmatmul.mubr.f32.gmra.mrb[0].mxu0 %v35
    %v1305 = vpop.f32.mrb[0].mxu0
    %v1306 = vadd.f32 %v1229, %v1305
    %v1307 = vpop.f32.mrb[0].mxu0
    %v1308 = vadd.f32 %v1231, %v1307
    %1309 = vmatprep.mubr.f32.mxu0 %v47
    %1310 = vmatmul.mubr.f32.gmra.mrb[0].mxu0 %v46
    %v1311 = vpop.f32.mrb[0].mxu0
    %v1312 = vadd.f32 %v1235, %v1311
    %v1313 = vpop.f32.mrb[0].mxu0
    %v1314 = vadd.f32 %v1237, %v1313
    %1315 = vdwg.mxu0
    %1316 = vmatprep.subr.mxu0 %v850
    %1317 = vmatpush1.msra.mxu0 %v849
    %1318 = vmatprep.subr.mxu0 %v855
    %1319 = vmatpush1.msra.mxu0 %v854
    %1320 = vmatprep.subr.mxu0 %v860
    %1321 = vmatpush1.msra.mxu0 %v859
    %1322 = vmatprep.subr.mxu0 %v865
    %1323 = vmatpush1.msra.mxu0 %v864
    %1324 = vmatprep.subr.mxu0 %v870
    %1325 = vmatpush1.msra.mxu0 %v869
    %1326 = vmatprep.subr.mxu0 %v875
    %1327 = vmatpush1.msra.mxu0 %v874
    %1328 = vmatprep.subr.mxu0 %v880
    %1329 = vmatpush1.msra.mxu0 %v879
    %1330 = vmatprep.subr.mxu0 %v885
    %1331 = vmatpush1.msra.mxu0 %v884
    %1332 = vmatprep.subr.mxu0 %v890
    %1333 = vmatpush1.msra.mxu0 %v889
    %1334 = vmatprep.subr.mxu0 %v895
    %1335 = vmatpush1.msra.mxu0 %v894
    %1336 = vmatprep.subr.mxu0 %v900
    %1337 = vmatpush1.msra.mxu0 %v899
    %1338 = vmatprep.subr.mxu0 %v905
    %1339 = vmatpush1.msra.mxu0 %v904
    %1340 = vmatprep.subr.mxu0 %v910
    %1341 = vmatpush1.msra.mxu0 %v909
    %1342 = vmatprep.subr.mxu0 %v915
    %1343 = vmatpush1.msra.mxu0 %v914
    %1344 = vmatprep.subr.mxu0 %v920
    %1345 = vmatpush1.msra.mxu0 %v919
    %1346 = vmatprep.subr.mxu0 0.0
    %1347 = vmatpush1.msra.mxu0 0.0
    %1348 = vmatprep.subr.mxu0 0.0
    %1349 = vmatpush1.msra.mxu0 0.0
    %1350 = vmatprep.subr.mxu0 0.0
    %1351 = vmatpush1.msra.mxu0 0.0
    %1352 = vmatprep.subr.mxu0 0.0
    %1353 = vmatpush1.msra.mxu0 0.0
    %1354 = vmatprep.subr.mxu0 0.0
    %1355 = vmatpush1.msra.mxu0 0.0
    %1356 = vmatprep.subr.mxu0 0.0
    %1357 = vmatpush1.msra.mxu0 0.0
    %1358 = vmatprep.subr.mxu0 0.0
    %1359 = vmatpush1.msra.mxu0 0.0
    %1360 = vmatprep.subr.mxu0 0.0
    %1361 = vmatpush1.msra.mxu0 0.0
    %1362 = vmatprep.subr.mxu0 0.0
    %1363 = vmatpush1.msra.mxu0 0.0
    %1364 = vmatprep.subr.mxu0 0.0
    %1365 = vmatpush1.msra.mxu0 0.0
    %1366 = vmatprep.subr.mxu0 0.0
    %1367 = vmatpush1.msra.mxu0 0.0
    %1368 = vmatprep.subr.mxu0 0.0
    %1369 = vmatpush1.msra.mxu0 0.0
    %1370 = vmatprep.subr.mxu0 0.0
    %1371 = vmatpush1.msra.mxu0 0.0
    %1372 = vmatprep.subr.mxu0 0.0
    %1373 = vmatpush1.msra.mxu0 0.0
    %1374 = vmatprep.subr.mxu0 0.0
    %1375 = vmatpush1.msra.mxu0 0.0
    %1376 = vmatprep.subr.mxu0 0.0
    %1377 = vmatpush1.msra.mxu0 0.0
    %1378 = vmatprep.subr.mxu0 0.0
    %1379 = vmatpush1.msra.mxu0 0.0
    %1380 = vmatprep.mubr.f32.mxu0 0.0
    %1381 = vmatmul.mubr.f32.gmra.mrb[0].mxu0 %v926
    %v1382 = vpop.f32.mrb[0].mxu0
    %v1383 = vadd.f32 %v1306, %v1382
    %v1384 = vpop.f32.mrb[0].mxu0
    %v1385 = vadd.f32 %v1308, %v1384
    %1386 = vmatprep.mubr.f32.mxu0 0.0
    %1387 = vmatmul.mubr.f32.gmra.mrb[0].mxu0 %v929
    %v1388 = vpop.f32.mrb[0].mxu0
    %v1389 = vadd.f32 %v1312, %v1388
    %v1390 = vpop.f32.mrb[0].mxu0
    %v1391 = vadd.f32 %v1314, %v1390
    %1392 = vdwg.mxu0
    %1393 = vmatprep.subr.mxu0 %v52
    %1394 = vmatpush1.msra.mxu0 %v51
    %1395 = vmatprep.subr.mxu0 %v57
    %1396 = vmatpush1.msra.mxu0 %v56
    %1397 = vmatprep.subr.mxu0 %v62
    %1398 = vmatpush1.msra.mxu0 %v61
    %1399 = vmatprep.subr.mxu0 %v67
    %1400 = vmatpush1.msra.mxu0 %v66
    %1401 = vmatprep.subr.mxu0 %v72
    %1402 = vmatpush1.msra.mxu0 %v71
    %1403 = vmatprep.subr.mxu0 %v77
    %1404 = vmatpush1.msra.mxu0 %v76
    %1405 = vmatprep.subr.mxu0 %v82
    %1406 = vmatpush1.msra.mxu0 %v81
    %1407 = vmatprep.subr.mxu0 %v87
    %1408 = vmatpush1.msra.mxu0 %v86
    %1409 = vmatprep.subr.mxu0 %v92
    %1410 = vmatpush1.msra.mxu0 %v91
    %1411 = vmatprep.subr.mxu0 %v97
    %1412 = vmatpush1.msra.mxu0 %v96
    %1413 = vmatprep.subr.mxu0 %v102
    %1414 = vmatpush1.msra.mxu0 %v101
    %1415 = vmatprep.subr.mxu0 %v107
    %1416 = vmatpush1.msra.mxu0 %v106
    %1417 = vmatprep.subr.mxu0 %v112
    %1418 = vmatpush1.msra.mxu0 %v111
    %1419 = vmatprep.subr.mxu0 %v117
    %1420 = vmatpush1.msra.mxu0 %v116
    %1421 = vmatprep.subr.mxu0 %v122
    %1422 = vmatpush1.msra.mxu0 %v121
    %1423 = vmatprep.subr.mxu0 %v127
    %1424 = vmatpush1.msra.mxu0 %v126
    %1425 = vmatprep.subr.mxu0 %v132
    %1426 = vmatpush1.msra.mxu0 %v131
    %1427 = vmatprep.subr.mxu0 %v137
    %1428 = vmatpush1.msra.mxu0 %v136
    %1429 = vmatprep.subr.mxu0 %v142
    %1430 = vmatpush1.msra.mxu0 %v141
    %1431 = vmatprep.subr.mxu0 %v147
    %1432 = vmatpush1.msra.mxu0 %v146
    %1433 = vmatprep.subr.mxu0 %v152
    %1434 = vmatpush1.msra.mxu0 %v151
    %1435 = vmatprep.subr.mxu0 %v157
    %1436 = vmatpush1.msra.mxu0 %v156
    %1437 = vmatprep.subr.mxu0 %v162
    %1438 = vmatpush1.msra.mxu0 %v161
    %1439 = vmatprep.subr.mxu0 %v167
    %1440 = vmatpush1.msra.mxu0 %v166
    %1441 = vmatprep.subr.mxu0 %v172
    %1442 = vmatpush1.msra.mxu0 %v171
    %1443 = vmatprep.subr.mxu0 %v177
    %1444 = vmatpush1.msra.mxu0 %v176
    %1445 = vmatprep.subr.mxu0 %v182
    %1446 = vmatpush1.msra.mxu0 %v181
    %1447 = vmatprep.subr.mxu0 %v187
    %1448 = vmatpush1.msra.mxu0 %v186
    %1449 = vmatprep.subr.mxu0 %v192
    %1450 = vmatpush1.msra.mxu0 %v191
    %1451 = vmatprep.subr.mxu0 %v197
    %1452 = vmatpush1.msra.mxu0 %v196
    %1453 = vmatprep.subr.mxu0 %v202
    %1454 = vmatpush1.msra.mxu0 %v201
    %1455 = vmatprep.subr.mxu0 %v207
    %1456 = vmatpush1.msra.mxu0 %v206
    %1457 = vmatprep.mubr.f32.mxu0 %v28
    %1458 = vmatmul.mubr.f32.gmra.mrb[0].mxu0 %v27
    %v1459 = vpop.f32.mrb[0].mxu0
    %v1460 = vadd.f32 0.0, %v1459
    %v1461 = vpop.f32.mrb[0].mxu0
    %v1462 = vadd.f32 0.0, %v1461
    %1463 = vmatprep.mubr.f32.mxu0 %v39
    %1464 = vmatmul.mubr.f32.gmra.mrb[0].mxu0 %v38
    %v1465 = vpop.f32.mrb[0].mxu0
    %v1466 = vadd.f32 0.0, %v1465
    %v1467 = vpop.f32.mrb[0].mxu0
    %v1468 = vadd.f32 0.0, %v1467
    %1469 = vdwg.mxu0
    %1470 = vmatprep.subr.mxu0 %v212
    %1471 = vmatpush1.msra.mxu0 %v211
    %1472 = vmatprep.subr.mxu0 %v217
    %1473 = vmatpush1.msra.mxu0 %v216
    %1474 = vmatprep.subr.mxu0 %v222
    %1475 = vmatpush1.msra.mxu0 %v221
    %1476 = vmatprep.subr.mxu0 %v227
    %1477 = vmatpush1.msra.mxu0 %v226
    %1478 = vmatprep.subr.mxu0 %v232
    %1479 = vmatpush1.msra.mxu0 %v231
    %1480 = vmatprep.subr.mxu0 %v237
    %1481 = vmatpush1.msra.mxu0 %v236
    %1482 = vmatprep.subr.mxu0 %v242
    %1483 = vmatpush1.msra.mxu0 %v241
    %1484 = vmatprep.subr.mxu0 %v247
    %1485 = vmatpush1.msra.mxu0 %v246
    %1486 = vmatprep.subr.mxu0 %v252
    %1487 = vmatpush1.msra.mxu0 %v251
    %1488 = vmatprep.subr.mxu0 %v257
    %1489 = vmatpush1.msra.mxu0 %v256
    %1490 = vmatprep.subr.mxu0 %v262
    %1491 = vmatpush1.msra.mxu0 %v261
    %1492 = vmatprep.subr.mxu0 %v267
    %1493 = vmatpush1.msra.mxu0 %v266
    %1494 = vmatprep.subr.mxu0 %v272
    %1495 = vmatpush1.msra.mxu0 %v271
    %1496 = vmatprep.subr.mxu0 %v277
    %1497 = vmatpush1.msra.mxu0 %v276
    %1498 = vmatprep.subr.mxu0 %v282
    %1499 = vmatpush1.msra.mxu0 %v281
    %1500 = vmatprep.subr.mxu0 %v287
    %1501 = vmatpush1.msra.mxu0 %v286
    %1502 = vmatprep.subr.mxu0 %v292
    %1503 = vmatpush1.msra.mxu0 %v291
    %1504 = vmatprep.subr.mxu0 %v297
    %1505 = vmatpush1.msra.mxu0 %v296
    %1506 = vmatprep.subr.mxu0 %v302
    %1507 = vmatpush1.msra.mxu0 %v301
    %1508 = vmatprep.subr.mxu0 %v307
    %1509 = vmatpush1.msra.mxu0 %v306
    %1510 = vmatprep.subr.mxu0 %v312
    %1511 = vmatpush1.msra.mxu0 %v311
    %1512 = vmatprep.subr.mxu0 %v317
    %1513 = vmatpush1.msra.mxu0 %v316
    %1514 = vmatprep.subr.mxu0 %v322
    %1515 = vmatpush1.msra.mxu0 %v321
    %1516 = vmatprep.subr.mxu0 %v327
    %1517 = vmatpush1.msra.mxu0 %v326
    %1518 = vmatprep.subr.mxu0 %v332
    %1519 = vmatpush1.msra.mxu0 %v331
    %1520 = vmatprep.subr.mxu0 %v337
    %1521 = vmatpush1.msra.mxu0 %v336
    %1522 = vmatprep.subr.mxu0 %v342
    %1523 = vmatpush1.msra.mxu0 %v341
    %1524 = vmatprep.subr.mxu0 %v347
    %1525 = vmatpush1.msra.mxu0 %v346
    %1526 = vmatprep.subr.mxu0 %v352
    %1527 = vmatpush1.msra.mxu0 %v351
    %1528 = vmatprep.subr.mxu0 %v357
    %1529 = vmatpush1.msra.mxu0 %v356
    %1530 = vmatprep.subr.mxu0 %v362
    %1531 = vmatpush1.msra.mxu0 %v361
    %1532 = vmatprep.subr.mxu0 %v367
    %1533 = vmatpush1.msra.mxu0 %v366
    %1534 = vmatprep.mubr.f32.mxu0 %v30
    %1535 = vmatmul.mubr.f32.gmra.mrb[0].mxu0 %v29
    %v1536 = vpop.f32.mrb[0].mxu0
    %v1537 = vadd.f32 %v1460, %v1536
    %v1538 = vpop.f32.mrb[0].mxu0
    %v1539 = vadd.f32 %v1462, %v1538
    %1540 = vmatprep.mubr.f32.mxu0 %v41
    %1541 = vmatmul.mubr.f32.gmra.mrb[0].mxu0 %v40
    %v1542 = vpop.f32.mrb[0].mxu0
    %v1543 = vadd.f32 %v1466, %v1542
    %v1544 = vpop.f32.mrb[0].mxu0
    %v1545 = vadd.f32 %v1468, %v1544
    %1546 = vdwg.mxu0
    %1547 = vmatprep.subr.mxu0 %v372
    %1548 = vmatpush1.msra.mxu0 %v371
    %1549 = vmatprep.subr.mxu0 %v377
    %1550 = vmatpush1.msra.mxu0 %v376
    %1551 = vmatprep.subr.mxu0 %v382
    %1552 = vmatpush1.msra.mxu0 %v381
    %1553 = vmatprep.subr.mxu0 %v387
    %1554 = vmatpush1.msra.mxu0 %v386
    %1555 = vmatprep.subr.mxu0 %v392
    %1556 = vmatpush1.msra.mxu0 %v391
    %1557 = vmatprep.subr.mxu0 %v397
    %1558 = vmatpush1.msra.mxu0 %v396
    %1559 = vmatprep.subr.mxu0 %v402
    %1560 = vmatpush1.msra.mxu0 %v401
    %1561 = vmatprep.subr.mxu0 %v407
    %1562 = vmatpush1.msra.mxu0 %v406
    %1563 = vmatprep.subr.mxu0 %v412
    %1564 = vmatpush1.msra.mxu0 %v411
    %1565 = vmatprep.subr.mxu0 %v417
    %1566 = vmatpush1.msra.mxu0 %v416
    %1567 = vmatprep.subr.mxu0 %v422
    %1568 = vmatpush1.msra.mxu0 %v421
    %1569 = vmatprep.subr.mxu0 %v427
    %1570 = vmatpush1.msra.mxu0 %v426
    %1571 = vmatprep.subr.mxu0 %v432
    %1572 = vmatpush1.msra.mxu0 %v431
    %1573 = vmatprep.subr.mxu0 %v437
    %1574 = vmatpush1.msra.mxu0 %v436
    %1575 = vmatprep.subr.mxu0 %v442
    %1576 = vmatpush1.msra.mxu0 %v441
    %1577 = vmatprep.subr.mxu0 %v447
    %1578 = vmatpush1.msra.mxu0 %v446
    %1579 = vmatprep.subr.mxu0 %v452
    %1580 = vmatpush1.msra.mxu0 %v451
    %1581 = vmatprep.subr.mxu0 %v457
    %1582 = vmatpush1.msra.mxu0 %v456
    %1583 = vmatprep.subr.mxu0 %v462
    %1584 = vmatpush1.msra.mxu0 %v461
    %1585 = vmatprep.subr.mxu0 %v467
    %1586 = vmatpush1.msra.mxu0 %v466
    %1587 = vmatprep.subr.mxu0 %v472
    %1588 = vmatpush1.msra.mxu0 %v471
    %1589 = vmatprep.subr.mxu0 %v477
    %1590 = vmatpush1.msra.mxu0 %v476
    %1591 = vmatprep.subr.mxu0 %v482
    %1592 = vmatpush1.msra.mxu0 %v481
    %1593 = vmatprep.subr.mxu0 %v487
    %1594 = vmatpush1.msra.mxu0 %v486
    %1595 = vmatprep.subr.mxu0 %v492
    %1596 = vmatpush1.msra.mxu0 %v491
    %1597 = vmatprep.subr.mxu0 %v497
    %1598 = vmatpush1.msra.mxu0 %v496
    %1599 = vmatprep.subr.mxu0 %v502
    %1600 = vmatpush1.msra.mxu0 %v501
    %1601 = vmatprep.subr.mxu0 %v507
    %1602 = vmatpush1.msra.mxu0 %v506
    %1603 = vmatprep.subr.mxu0 %v512
    %1604 = vmatpush1.msra.mxu0 %v511
    %1605 = vmatprep.subr.mxu0 %v517
    %1606 = vmatpush1.msra.mxu0 %v516
    %1607 = vmatprep.subr.mxu0 %v522
    %1608 = vmatpush1.msra.mxu0 %v521
    %1609 = vmatprep.subr.mxu0 %v527
    %1610 = vmatpush1.msra.mxu0 %v526
    %1611 = vmatprep.mubr.f32.mxu0 %v32
    %1612 = vmatmul.mubr.f32.gmra.mrb[0].mxu0 %v31
    %v1613 = vpop.f32.mrb[0].mxu0
    %v1614 = vadd.f32 %v1537, %v1613
    %v1615 = vpop.f32.mrb[0].mxu0
    %v1616 = vadd.f32 %v1539, %v1615
    %1617 = vmatprep.mubr.f32.mxu0 %v43
    %1618 = vmatmul.mubr.f32.gmra.mrb[0].mxu0 %v42
    %v1619 = vpop.f32.mrb[0].mxu0
    %v1620 = vadd.f32 %v1543, %v1619
    %v1621 = vpop.f32.mrb[0].mxu0
    %v1622 = vadd.f32 %v1545, %v1621
    %1623 = vdwg.mxu0
    %1624 = vmatprep.subr.mxu0 %v532
    %1625 = vmatpush1.msra.mxu0 %v531
    %1626 = vmatprep.subr.mxu0 %v537
    %1627 = vmatpush1.msra.mxu0 %v536
    %1628 = vmatprep.subr.mxu0 %v542
    %1629 = vmatpush1.msra.mxu0 %v541
    %1630 = vmatprep.subr.mxu0 %v547
    %1631 = vmatpush1.msra.mxu0 %v546
    %1632 = vmatprep.subr.mxu0 %v552
    %1633 = vmatpush1.msra.mxu0 %v551
    %1634 = vmatprep.subr.mxu0 %v557
    %1635 = vmatpush1.msra.mxu0 %v556
    %1636 = vmatprep.subr.mxu0 %v562
    %1637 = vmatpush1.msra.mxu0 %v561
    %1638 = vmatprep.subr.mxu0 %v567
    %1639 = vmatpush1.msra.mxu0 %v566
    %1640 = vmatprep.subr.mxu0 %v572
    %1641 = vmatpush1.msra.mxu0 %v571
    %1642 = vmatprep.subr.mxu0 %v577
    %1643 = vmatpush1.msra.mxu0 %v576
    %1644 = vmatprep.subr.mxu0 %v582
    %1645 = vmatpush1.msra.mxu0 %v581
    %1646 = vmatprep.subr.mxu0 %v587
    %1647 = vmatpush1.msra.mxu0 %v586
    %1648 = vmatprep.subr.mxu0 %v592
    %1649 = vmatpush1.msra.mxu0 %v591
    %1650 = vmatprep.subr.mxu0 %v597
    %1651 = vmatpush1.msra.mxu0 %v596
    %1652 = vmatprep.subr.mxu0 %v602
    %1653 = vmatpush1.msra.mxu0 %v601
    %1654 = vmatprep.subr.mxu0 %v607
    %1655 = vmatpush1.msra.mxu0 %v606
    %1656 = vmatprep.subr.mxu0 %v612
    %1657 = vmatpush1.msra.mxu0 %v611
    %1658 = vmatprep.subr.mxu0 %v617
    %1659 = vmatpush1.msra.mxu0 %v616
    %1660 = vmatprep.subr.mxu0 %v622
    %1661 = vmatpush1.msra.mxu0 %v621
    %1662 = vmatprep.subr.mxu0 %v627
    %1663 = vmatpush1.msra.mxu0 %v626
    %1664 = vmatprep.subr.mxu0 %v632
    %1665 = vmatpush1.msra.mxu0 %v631
    %1666 = vmatprep.subr.mxu0 %v637
    %1667 = vmatpush1.msra.mxu0 %v636
    %1668 = vmatprep.subr.mxu0 %v642
    %1669 = vmatpush1.msra.mxu0 %v641
    %1670 = vmatprep.subr.mxu0 %v647
    %1671 = vmatpush1.msra.mxu0 %v646
    %1672 = vmatprep.subr.mxu0 %v652
    %1673 = vmatpush1.msra.mxu0 %v651
    %1674 = vmatprep.subr.mxu0 %v657
    %1675 = vmatpush1.msra.mxu0 %v656
    %1676 = vmatprep.subr.mxu0 %v662
    %1677 = vmatpush1.msra.mxu0 %v661
    %1678 = vmatprep.subr.mxu0 %v667
    %1679 = vmatpush1.msra.mxu0 %v666
    %1680 = vmatprep.subr.mxu0 %v672
    %1681 = vmatpush1.msra.mxu0 %v671
    %1682 = vmatprep.subr.mxu0 %v677
    %1683 = vmatpush1.msra.mxu0 %v676
    %1684 = vmatprep.subr.mxu0 %v682
    %1685 = vmatpush1.msra.mxu0 %v681
    %1686 = vmatprep.subr.mxu0 %v687
    %1687 = vmatpush1.msra.mxu0 %v686
    %1688 = vmatprep.mubr.f32.mxu0 %v34
    %1689 = vmatmul.mubr.f32.gmra.mrb[0].mxu0 %v33
    %v1690 = vpop.f32.mrb[0].mxu0
    %v1691 = vadd.f32 %v1614, %v1690
    %v1692 = vpop.f32.mrb[0].mxu0
    %v1693 = vadd.f32 %v1616, %v1692
    %1694 = vmatprep.mubr.f32.mxu0 %v45
    %1695 = vmatmul.mubr.f32.gmra.mrb[0].mxu0 %v44
    %v1696 = vpop.f32.mrb[0].mxu0
    %v1697 = vadd.f32 %v1620, %v1696
    %v1698 = vpop.f32.mrb[0].mxu0
    %v1699 = vadd.f32 %v1622, %v1698
    %1700 = vdwg.mxu0
    %1701 = vmatprep.subr.mxu0 %v692
    %1702 = vmatpush1.msra.mxu0 %v691
    %1703 = vmatprep.subr.mxu0 %v697
    %1704 = vmatpush1.msra.mxu0 %v696
    %1705 = vmatprep.subr.mxu0 %v702
    %1706 = vmatpush1.msra.mxu0 %v701
    %1707 = vmatprep.subr.mxu0 %v707
    %1708 = vmatpush1.msra.mxu0 %v706
    %1709 = vmatprep.subr.mxu0 %v712
    %1710 = vmatpush1.msra.mxu0 %v711
    %1711 = vmatprep.subr.mxu0 %v717
    %1712 = vmatpush1.msra.mxu0 %v716
    %1713 = vmatprep.subr.mxu0 %v722
    %1714 = vmatpush1.msra.mxu0 %v721
    %1715 = vmatprep.subr.mxu0 %v727
    %1716 = vmatpush1.msra.mxu0 %v726
    %1717 = vmatprep.subr.mxu0 %v732
    %1718 = vmatpush1.msra.mxu0 %v731
    %1719 = vmatprep.subr.mxu0 %v737
    %1720 = vmatpush1.msra.mxu0 %v736
    %1721 = vmatprep.subr.mxu0 %v742
    %1722 = vmatpush1.msra.mxu0 %v741
    %1723 = vmatprep.subr.mxu0 %v747
    %1724 = vmatpush1.msra.mxu0 %v746
    %1725 = vmatprep.subr.mxu0 %v752
    %1726 = vmatpush1.msra.mxu0 %v751
    %1727 = vmatprep.subr.mxu0 %v757
    %1728 = vmatpush1.msra.mxu0 %v756
    %1729 = vmatprep.subr.mxu0 %v762
    %1730 = vmatpush1.msra.mxu0 %v761
    %1731 = vmatprep.subr.mxu0 %v767
    %1732 = vmatpush1.msra.mxu0 %v766
    %1733 = vmatprep.subr.mxu0 %v772
    %1734 = vmatpush1.msra.mxu0 %v771
    %1735 = vmatprep.subr.mxu0 %v777
    %1736 = vmatpush1.msra.mxu0 %v776
    %1737 = vmatprep.subr.mxu0 %v782
    %1738 = vmatpush1.msra.mxu0 %v781
    %1739 = vmatprep.subr.mxu0 %v787
    %1740 = vmatpush1.msra.mxu0 %v786
    %1741 = vmatprep.subr.mxu0 %v792
    %1742 = vmatpush1.msra.mxu0 %v791
    %1743 = vmatprep.subr.mxu0 %v797
    %1744 = vmatpush1.msra.mxu0 %v796
    %1745 = vmatprep.subr.mxu0 %v802
    %1746 = vmatpush1.msra.mxu0 %v801
    %1747 = vmatprep.subr.mxu0 %v807
    %1748 = vmatpush1.msra.mxu0 %v806
    %1749 = vmatprep.subr.mxu0 %v812
    %1750 = vmatpush1.msra.mxu0 %v811
    %1751 = vmatprep.subr.mxu0 %v817
    %1752 = vmatpush1.msra.mxu0 %v816
    %1753 = vmatprep.subr.mxu0 %v822
    %1754 = vmatpush1.msra.mxu0 %v821
    %1755 = vmatprep.subr.mxu0 %v827
    %1756 = vmatpush1.msra.mxu0 %v826
    %1757 = vmatprep.subr.mxu0 %v832
    %1758 = vmatpush1.msra.mxu0 %v831
    %1759 = vmatprep.subr.mxu0 %v837
    %1760 = vmatpush1.msra.mxu0 %v836
    %1761 = vmatprep.subr.mxu0 %v842
    %1762 = vmatpush1.msra.mxu0 %v841
    %1763 = vmatprep.subr.mxu0 %v847
    %1764 = vmatpush1.msra.mxu0 %v846
    %1765 = vmatprep.mubr.f32.mxu0 %v36
    %1766 = vmatmul.mubr.f32.gmra.mrb[0].mxu0 %v35
    %v1767 = vpop.f32.mrb[0].mxu0
    %v1768 = vadd.f32 %v1691, %v1767
    %v1769 = vpop.f32.mrb[0].mxu0
    %v1770 = vadd.f32 %v1693, %v1769
    %1771 = vmatprep.mubr.f32.mxu0 %v47
    %1772 = vmatmul.mubr.f32.gmra.mrb[0].mxu0 %v46
    %v1773 = vpop.f32.mrb[0].mxu0
    %v1774 = vadd.f32 %v1697, %v1773
    %v1775 = vpop.f32.mrb[0].mxu0
    %v1776 = vadd.f32 %v1699, %v1775
    %1777 = vdwg.mxu0
    %1778 = vmatprep.subr.mxu0 %v852
    %1779 = vmatpush1.msra.mxu0 %v851
    %1780 = vmatprep.subr.mxu0 %v857
    %1781 = vmatpush1.msra.mxu0 %v856
    %1782 = vmatprep.subr.mxu0 %v862
    %1783 = vmatpush1.msra.mxu0 %v861
    %1784 = vmatprep.subr.mxu0 %v867
    %1785 = vmatpush1.msra.mxu0 %v866
    %1786 = vmatprep.subr.mxu0 %v872
    %1787 = vmatpush1.msra.mxu0 %v871
    %1788 = vmatprep.subr.mxu0 %v877
    %1789 = vmatpush1.msra.mxu0 %v876
    %1790 = vmatprep.subr.mxu0 %v882
    %1791 = vmatpush1.msra.mxu0 %v881
    %1792 = vmatprep.subr.mxu0 %v887
    %1793 = vmatpush1.msra.mxu0 %v886
    %1794 = vmatprep.subr.mxu0 %v892
    %1795 = vmatpush1.msra.mxu0 %v891
    %1796 = vmatprep.subr.mxu0 %v897
    %1797 = vmatpush1.msra.mxu0 %v896
    %1798 = vmatprep.subr.mxu0 %v902
    %1799 = vmatpush1.msra.mxu0 %v901
    %1800 = vmatprep.subr.mxu0 %v907
    %1801 = vmatpush1.msra.mxu0 %v906
    %1802 = vmatprep.subr.mxu0 %v912
    %1803 = vmatpush1.msra.mxu0 %v911
    %1804 = vmatprep.subr.mxu0 %v917
    %1805 = vmatpush1.msra.mxu0 %v916
    %1806 = vmatprep.subr.mxu0 %v922
    %1807 = vmatpush1.msra.mxu0 %v921
    %1808 = vmatprep.subr.mxu0 0.0
    %1809 = vmatpush1.msra.mxu0 0.0
    %1810 = vmatprep.subr.mxu0 0.0
    %1811 = vmatpush1.msra.mxu0 0.0
    %1812 = vmatprep.subr.mxu0 0.0
    %1813 = vmatpush1.msra.mxu0 0.0
    %1814 = vmatprep.subr.mxu0 0.0
    %1815 = vmatpush1.msra.mxu0 0.0
    %1816 = vmatprep.subr.mxu0 0.0
    %1817 = vmatpush1.msra.mxu0 0.0
    %1818 = vmatprep.subr.mxu0 0.0
    %1819 = vmatpush1.msra.mxu0 0.0
    %1820 = vmatprep.subr.mxu0 0.0
    %1821 = vmatpush1.msra.mxu0 0.0
    %1822 = vmatprep.subr.mxu0 0.0
    %1823 = vmatpush1.msra.mxu0 0.0
    %1824 = vmatprep.subr.mxu0 0.0
    %1825 = vmatpush1.msra.mxu0 0.0
    %1826 = vmatprep.subr.mxu0 0.0
    %1827 = vmatpush1.msra.mxu0 0.0
    %1828 = vmatprep.subr.mxu0 0.0
    %1829 = vmatpush1.msra.mxu0 0.0
    %1830 = vmatprep.subr.mxu0 0.0
    %1831 = vmatpush1.msra.mxu0 0.0
    %1832 = vmatprep.subr.mxu0 0.0
    %1833 = vmatpush1.msra.mxu0 0.0
    %1834 = vmatprep.subr.mxu0 0.0
    %1835 = vmatpush1.msra.mxu0 0.0
    %1836 = vmatprep.subr.mxu0 0.0
    %1837 = vmatpush1.msra.mxu0 0.0
    %1838 = vmatprep.subr.mxu0 0.0
    %1839 = vmatpush1.msra.mxu0 0.0
    %1840 = vmatprep.subr.mxu0 0.0
    %1841 = vmatpush1.msra.mxu0 0.0
    %1842 = vmatprep.mubr.f32.mxu0 0.0
    %1843 = vmatmul.mubr.f32.gmra.mrb[0].mxu0 %v926
    %v1844 = vpop.f32.mrb[0].mxu0
    %v1845 = vadd.f32 %v1768, %v1844
    %v1846 = vpop.f32.mrb[0].mxu0
    %v1847 = vadd.f32 %v1770, %v1846
    %1848 = vmatprep.mubr.f32.mxu0 0.0
    %1849 = vmatmul.mubr.f32.gmra.mrb[0].mxu0 %v929
    %v1850 = vpop.f32.mrb[0].mxu0
    %v1851 = vadd.f32 %v1774, %v1850
    %v1852 = vpop.f32.mrb[0].mxu0
    %v1853 = vadd.f32 %v1776, %v1852
    %1854 = vdwg.mxu0
    %1855 = vmatprep.subr.mxu0 0.0
    %1856 = vmatpush1.msra.mxu0 %v53
    %1857 = vmatprep.subr.mxu0 0.0
    %1858 = vmatpush1.msra.mxu0 %v58
    %1859 = vmatprep.subr.mxu0 0.0
    %1860 = vmatpush1.msra.mxu0 %v63
    %1861 = vmatprep.subr.mxu0 0.0
    %1862 = vmatpush1.msra.mxu0 %v68
    %1863 = vmatprep.subr.mxu0 0.0
    %1864 = vmatpush1.msra.mxu0 %v73
    %1865 = vmatprep.subr.mxu0 0.0
    %1866 = vmatpush1.msra.mxu0 %v78
    %1867 = vmatprep.subr.mxu0 0.0
    %1868 = vmatpush1.msra.mxu0 %v83
    %1869 = vmatprep.subr.mxu0 0.0
    %1870 = vmatpush1.msra.mxu0 %v88
    %1871 = vmatprep.subr.mxu0 0.0
    %1872 = vmatpush1.msra.mxu0 %v93
    %1873 = vmatprep.subr.mxu0 0.0
    %1874 = vmatpush1.msra.mxu0 %v98
    %1875 = vmatprep.subr.mxu0 0.0
    %1876 = vmatpush1.msra.mxu0 %v103
    %1877 = vmatprep.subr.mxu0 0.0
    %1878 = vmatpush1.msra.mxu0 %v108
    %1879 = vmatprep.subr.mxu0 0.0
    %1880 = vmatpush1.msra.mxu0 %v113
    %1881 = vmatprep.subr.mxu0 0.0
    %1882 = vmatpush1.msra.mxu0 %v118
    %1883 = vmatprep.subr.mxu0 0.0
    %1884 = vmatpush1.msra.mxu0 %v123
    %1885 = vmatprep.subr.mxu0 0.0
    %1886 = vmatpush1.msra.mxu0 %v128
    %1887 = vmatprep.subr.mxu0 0.0
    %1888 = vmatpush1.msra.mxu0 %v133
    %1889 = vmatprep.subr.mxu0 0.0
    %1890 = vmatpush1.msra.mxu0 %v138
    %1891 = vmatprep.subr.mxu0 0.0
    %1892 = vmatpush1.msra.mxu0 %v143
    %1893 = vmatprep.subr.mxu0 0.0
    %1894 = vmatpush1.msra.mxu0 %v148
    %1895 = vmatprep.subr.mxu0 0.0
    %1896 = vmatpush1.msra.mxu0 %v153
    %1897 = vmatprep.subr.mxu0 0.0
    %1898 = vmatpush1.msra.mxu0 %v158
    %1899 = vmatprep.subr.mxu0 0.0
    %1900 = vmatpush1.msra.mxu0 %v163
    %1901 = vmatprep.subr.mxu0 0.0
    %1902 = vmatpush1.msra.mxu0 %v168
    %1903 = vmatprep.subr.mxu0 0.0
    %1904 = vmatpush1.msra.mxu0 %v173
    %1905 = vmatprep.subr.mxu0 0.0
    %1906 = vmatpush1.msra.mxu0 %v178
    %1907 = vmatprep.subr.mxu0 0.0
    %1908 = vmatpush1.msra.mxu0 %v183
    %1909 = vmatprep.subr.mxu0 0.0
    %1910 = vmatpush1.msra.mxu0 %v188
    %1911 = vmatprep.subr.mxu0 0.0
    %1912 = vmatpush1.msra.mxu0 %v193
    %1913 = vmatprep.subr.mxu0 0.0
    %1914 = vmatpush1.msra.mxu0 %v198
    %1915 = vmatprep.subr.mxu0 0.0
    %1916 = vmatpush1.msra.mxu0 %v203
    %1917 = vmatprep.subr.mxu0 0.0
    %1918 = vmatpush1.msra.mxu0 %v208
    %1919 = vmatprep.mubr.f32.mxu0 %v28
    %1920 = vmatmul.mubr.f32.gmra.mrb[0].mxu0 %v27
    %v1921 = vpop.f32.mrb[0].mxu0
    %v1922 = vadd.f32 0.0, %v1921
    %v1923 = vpop.f32.mrb[0].mxu0
    %1924 = vmatprep.mubr.f32.mxu0 %v39
    %1925 = vmatmul.mubr.f32.gmra.mrb[0].mxu0 %v38
    %v1926 = vpop.f32.mrb[0].mxu0
    %v1927 = vadd.f32 0.0, %v1926
    %v1928 = vpop.f32.mrb[0].mxu0
    %1929 = vdwg.mxu0
    %1930 = vmatprep.subr.mxu0 0.0
    %1931 = vmatpush1.msra.mxu0 %v213
    %1932 = vmatprep.subr.mxu0 0.0
    %1933 = vmatpush1.msra.mxu0 %v218
    %1934 = vmatprep.subr.mxu0 0.0
    %1935 = vmatpush1.msra.mxu0 %v223
    %1936 = vmatprep.subr.mxu0 0.0
    %1937 = vmatpush1.msra.mxu0 %v228
    %1938 = vmatprep.subr.mxu0 0.0
    %1939 = vmatpush1.msra.mxu0 %v233
    %1940 = vmatprep.subr.mxu0 0.0
    %1941 = vmatpush1.msra.mxu0 %v238
    %1942 = vmatprep.subr.mxu0 0.0
    %1943 = vmatpush1.msra.mxu0 %v243
    %1944 = vmatprep.subr.mxu0 0.0
    %1945 = vmatpush1.msra.mxu0 %v248
    %1946 = vmatprep.subr.mxu0 0.0
    %1947 = vmatpush1.msra.mxu0 %v253
    %1948 = vmatprep.subr.mxu0 0.0
    %1949 = vmatpush1.msra.mxu0 %v258
    %1950 = vmatprep.subr.mxu0 0.0
    %1951 = vmatpush1.msra.mxu0 %v263
    %1952 = vmatprep.subr.mxu0 0.0
    %1953 = vmatpush1.msra.mxu0 %v268
    %1954 = vmatprep.subr.mxu0 0.0
    %1955 = vmatpush1.msra.mxu0 %v273
    %1956 = vmatprep.subr.mxu0 0.0
    %1957 = vmatpush1.msra.mxu0 %v278
    %1958 = vmatprep.subr.mxu0 0.0
    %1959 = vmatpush1.msra.mxu0 %v283
    %1960 = vmatprep.subr.mxu0 0.0
    %1961 = vmatpush1.msra.mxu0 %v288
    %1962 = vmatprep.subr.mxu0 0.0
    %1963 = vmatpush1.msra.mxu0 %v293
    %1964 = vmatprep.subr.mxu0 0.0
    %1965 = vmatpush1.msra.mxu0 %v298
    %1966 = vmatprep.subr.mxu0 0.0
    %1967 = vmatpush1.msra.mxu0 %v303
    %1968 = vmatprep.subr.mxu0 0.0
    %1969 = vmatpush1.msra.mxu0 %v308
    %1970 = vmatprep.subr.mxu0 0.0
    %1971 = vmatpush1.msra.mxu0 %v313
    %1972 = vmatprep.subr.mxu0 0.0
    %1973 = vmatpush1.msra.mxu0 %v318
    %1974 = vmatprep.subr.mxu0 0.0
    %1975 = vmatpush1.msra.mxu0 %v323
    %1976 = vmatprep.subr.mxu0 0.0
    %1977 = vmatpush1.msra.mxu0 %v328
    %1978 = vmatprep.subr.mxu0 0.0
    %1979 = vmatpush1.msra.mxu0 %v333
    %1980 = vmatprep.subr.mxu0 0.0
    %1981 = vmatpush1.msra.mxu0 %v338
    %1982 = vmatprep.subr.mxu0 0.0
    %1983 = vmatpush1.msra.mxu0 %v343
    %1984 = vmatprep.subr.mxu0 0.0
    %1985 = vmatpush1.msra.mxu0 %v348
    %1986 = vmatprep.subr.mxu0 0.0
    %1987 = vmatpush1.msra.mxu0 %v353
    %1988 = vmatprep.subr.mxu0 0.0
    %1989 = vmatpush1.msra.mxu0 %v358
    %1990 = vmatprep.subr.mxu0 0.0
    %1991 = vmatpush1.msra.mxu0 %v363
    %1992 = vmatprep.subr.mxu0 0.0
    %1993 = vmatpush1.msra.mxu0 %v368
    %1994 = vmatprep.mubr.f32.mxu0 %v30
    %1995 = vmatmul.mubr.f32.gmra.mrb[0].mxu0 %v29
    %v1996 = vpop.f32.mrb[0].mxu0
    %v1997 = vadd.f32 %v1922, %v1996
    %v1998 = vpop.f32.mrb[0].mxu0
    %1999 = vmatprep.mubr.f32.mxu0 %v41
    %2000 = vmatmul.mubr.f32.gmra.mrb[0].mxu0 %v40
    %v2001 = vpop.f32.mrb[0].mxu0
    %v2002 = vadd.f32 %v1927, %v2001
    %v2003 = vpop.f32.mrb[0].mxu0
    %2004 = vdwg.mxu0
    %2005 = vmatprep.subr.mxu0 0.0
    %2006 = vmatpush1.msra.mxu0 %v373
    %2007 = vmatprep.subr.mxu0 0.0
    %2008 = vmatpush1.msra.mxu0 %v378
    %2009 = vmatprep.subr.mxu0 0.0
    %2010 = vmatpush1.msra.mxu0 %v383
    %2011 = vmatprep.subr.mxu0 0.0
    %2012 = vmatpush1.msra.mxu0 %v388
    %2013 = vmatprep.subr.mxu0 0.0
    %2014 = vmatpush1.msra.mxu0 %v393
    %2015 = vmatprep.subr.mxu0 0.0
    %2016 = vmatpush1.msra.mxu0 %v398
    %2017 = vmatprep.subr.mxu0 0.0
    %2018 = vmatpush1.msra.mxu0 %v403
    %2019 = vmatprep.subr.mxu0 0.0
    %2020 = vmatpush1.msra.mxu0 %v408
    %2021 = vmatprep.subr.mxu0 0.0
    %2022 = vmatpush1.msra.mxu0 %v413
    %2023 = vmatprep.subr.mxu0 0.0
    %2024 = vmatpush1.msra.mxu0 %v418
    %2025 = vmatprep.subr.mxu0 0.0
    %2026 = vmatpush1.msra.mxu0 %v423
    %2027 = vmatprep.subr.mxu0 0.0
    %2028 = vmatpush1.msra.mxu0 %v428
    %2029 = vmatprep.subr.mxu0 0.0
    %2030 = vmatpush1.msra.mxu0 %v433
    %2031 = vmatprep.subr.mxu0 0.0
    %2032 = vmatpush1.msra.mxu0 %v438
    %2033 = vmatprep.subr.mxu0 0.0
    %2034 = vmatpush1.msra.mxu0 %v443
    %2035 = vmatprep.subr.mxu0 0.0
    %2036 = vmatpush1.msra.mxu0 %v448
    %2037 = vmatprep.subr.mxu0 0.0
    %2038 = vmatpush1.msra.mxu0 %v453
    %2039 = vmatprep.subr.mxu0 0.0
    %2040 = vmatpush1.msra.mxu0 %v458
    %2041 = vmatprep.subr.mxu0 0.0
    %2042 = vmatpush1.msra.mxu0 %v463
    %2043 = vmatprep.subr.mxu0 0.0
    %2044 = vmatpush1.msra.mxu0 %v468
    %2045 = vmatprep.subr.mxu0 0.0
    %2046 = vmatpush1.msra.mxu0 %v473
    %2047 = vmatprep.subr.mxu0 0.0
    %2048 = vmatpush1.msra.mxu0 %v478
    %2049 = vmatprep.subr.mxu0 0.0
    %2050 = vmatpush1.msra.mxu0 %v483
    %2051 = vmatprep.subr.mxu0 0.0
    %2052 = vmatpush1.msra.mxu0 %v488
    %2053 = vmatprep.subr.mxu0 0.0
    %2054 = vmatpush1.msra.mxu0 %v493
    %2055 = vmatprep.subr.mxu0 0.0
    %2056 = vmatpush1.msra.mxu0 %v498
    %2057 = vmatprep.subr.mxu0 0.0
    %2058 = vmatpush1.msra.mxu0 %v503
    %2059 = vmatprep.subr.mxu0 0.0
    %2060 = vmatpush1.msra.mxu0 %v508
    %2061 = vmatprep.subr.mxu0 0.0
    %2062 = vmatpush1.msra.mxu0 %v513
    %2063 = vmatprep.subr.mxu0 0.0
    %2064 = vmatpush1.msra.mxu0 %v518
    %2065 = vmatprep.subr.mxu0 0.0
    %2066 = vmatpush1.msra.mxu0 %v523
    %2067 = vmatprep.subr.mxu0 0.0
    %2068 = vmatpush1.msra.mxu0 %v528
    %2069 = vmatprep.mubr.f32.mxu0 %v32
    %2070 = vmatmul.mubr.f32.gmra.mrb[0].mxu0 %v31
    %v2071 = vpop.f32.mrb[0].mxu0
    %v2072 = vadd.f32 %v1997, %v2071
    %v2073 = vpop.f32.mrb[0].mxu0
    %2074 = vmatprep.mubr.f32.mxu0 %v43
    %2075 = vmatmul.mubr.f32.gmra.mrb[0].mxu0 %v42
    %v2076 = vpop.f32.mrb[0].mxu0
    %v2077 = vadd.f32 %v2002, %v2076
    %v2078 = vpop.f32.mrb[0].mxu0
    %2079 = vdwg.mxu0
    %2080 = vmatprep.subr.mxu0 0.0
    %2081 = vmatpush1.msra.mxu0 %v533
    %2082 = vmatprep.subr.mxu0 0.0
    %2083 = vmatpush1.msra.mxu0 %v538
    %2084 = vmatprep.subr.mxu0 0.0
    %2085 = vmatpush1.msra.mxu0 %v543
    %2086 = vmatprep.subr.mxu0 0.0
    %2087 = vmatpush1.msra.mxu0 %v548
    %2088 = vmatprep.subr.mxu0 0.0
    %2089 = vmatpush1.msra.mxu0 %v553
    %2090 = vmatprep.subr.mxu0 0.0
    %2091 = vmatpush1.msra.mxu0 %v558
    %2092 = vmatprep.subr.mxu0 0.0
    %2093 = vmatpush1.msra.mxu0 %v563
    %2094 = vmatprep.subr.mxu0 0.0
    %2095 = vmatpush1.msra.mxu0 %v568
    %2096 = vmatprep.subr.mxu0 0.0
    %2097 = vmatpush1.msra.mxu0 %v573
    %2098 = vmatprep.subr.mxu0 0.0
    %2099 = vmatpush1.msra.mxu0 %v578
    %2100 = vmatprep.subr.mxu0 0.0
    %2101 = vmatpush1.msra.mxu0 %v583
    %2102 = vmatprep.subr.mxu0 0.0
    %2103 = vmatpush1.msra.mxu0 %v588
    %2104 = vmatprep.subr.mxu0 0.0
    %2105 = vmatpush1.msra.mxu0 %v593
    %2106 = vmatprep.subr.mxu0 0.0
    %2107 = vmatpush1.msra.mxu0 %v598
    %2108 = vmatprep.subr.mxu0 0.0
    %2109 = vmatpush1.msra.mxu0 %v603
    %2110 = vmatprep.subr.mxu0 0.0
    %2111 = vmatpush1.msra.mxu0 %v608
    %2112 = vmatprep.subr.mxu0 0.0
    %2113 = vmatpush1.msra.mxu0 %v613
    %2114 = vmatprep.subr.mxu0 0.0
    %2115 = vmatpush1.msra.mxu0 %v618
    %2116 = vmatprep.subr.mxu0 0.0
    %2117 = vmatpush1.msra.mxu0 %v623
    %2118 = vmatprep.subr.mxu0 0.0
    %2119 = vmatpush1.msra.mxu0 %v628
    %2120 = vmatprep.subr.mxu0 0.0
    %2121 = vmatpush1.msra.mxu0 %v633
    %2122 = vmatprep.subr.mxu0 0.0
    %2123 = vmatpush1.msra.mxu0 %v638
    %2124 = vmatprep.subr.mxu0 0.0
    %2125 = vmatpush1.msra.mxu0 %v643
    %2126 = vmatprep.subr.mxu0 0.0
    %2127 = vmatpush1.msra.mxu0 %v648
    %2128 = vmatprep.subr.mxu0 0.0
    %2129 = vmatpush1.msra.mxu0 %v653
    %2130 = vmatprep.subr.mxu0 0.0
    %2131 = vmatpush1.msra.mxu0 %v658
    %2132 = vmatprep.subr.mxu0 0.0
    %2133 = vmatpush1.msra.mxu0 %v663
    %2134 = vmatprep.subr.mxu0 0.0
    %2135 = vmatpush1.msra.mxu0 %v668
    %2136 = vmatprep.subr.mxu0 0.0
    %2137 = vmatpush1.msra.mxu0 %v673
    %2138 = vmatprep.subr.mxu0 0.0
    %2139 = vmatpush1.msra.mxu0 %v678
    %2140 = vmatprep.subr.mxu0 0.0
    %2141 = vmatpush1.msra.mxu0 %v683
    %2142 = vmatprep.subr.mxu0 0.0
    %2143 = vmatpush1.msra.mxu0 %v688
    %2144 = vmatprep.mubr.f32.mxu0 %v34
    %2145 = vmatmul.mubr.f32.gmra.mrb[0].mxu0 %v33
    %v2146 = vpop.f32.mrb[0].mxu0
    %v2147 = vadd.f32 %v2072, %v2146
    %v2148 = vpop.f32.mrb[0].mxu0
    %2149 = vmatprep.mubr.f32.mxu0 %v45
    %2150 = vmatmul.mubr.f32.gmra.mrb[0].mxu0 %v44
    %v2151 = vpop.f32.mrb[0].mxu0
    %v2152 = vadd.f32 %v2077, %v2151
    %v2153 = vpop.f32.mrb[0].mxu0
    %2154 = vdwg.mxu0
    %2155 = vmatprep.subr.mxu0 0.0
    %2156 = vmatpush1.msra.mxu0 %v693
    %2157 = vmatprep.subr.mxu0 0.0
    %2158 = vmatpush1.msra.mxu0 %v698
    %2159 = vmatprep.subr.mxu0 0.0
    %2160 = vmatpush1.msra.mxu0 %v703
    %2161 = vmatprep.subr.mxu0 0.0
    %2162 = vmatpush1.msra.mxu0 %v708
    %2163 = vmatprep.subr.mxu0 0.0
    %2164 = vmatpush1.msra.mxu0 %v713
    %2165 = vmatprep.subr.mxu0 0.0
    %2166 = vmatpush1.msra.mxu0 %v718
    %2167 = vmatprep.subr.mxu0 0.0
    %2168 = vmatpush1.msra.mxu0 %v723
    %2169 = vmatprep.subr.mxu0 0.0
    %2170 = vmatpush1.msra.mxu0 %v728
    %2171 = vmatprep.subr.mxu0 0.0
    %2172 = vmatpush1.msra.mxu0 %v733
    %2173 = vmatprep.subr.mxu0 0.0
    %2174 = vmatpush1.msra.mxu0 %v738
    %2175 = vmatprep.subr.mxu0 0.0
    %2176 = vmatpush1.msra.mxu0 %v743
    %2177 = vmatprep.subr.mxu0 0.0
    %2178 = vmatpush1.msra.mxu0 %v748
    %2179 = vmatprep.subr.mxu0 0.0
    %2180 = vmatpush1.msra.mxu0 %v753
    %2181 = vmatprep.subr.mxu0 0.0
    %2182 = vmatpush1.msra.mxu0 %v758
    %2183 = vmatprep.subr.mxu0 0.0
    %2184 = vmatpush1.msra.mxu0 %v763
    %2185 = vmatprep.subr.mxu0 0.0
    %2186 = vmatpush1.msra.mxu0 %v768
    %2187 = vmatprep.subr.mxu0 0.0
    %2188 = vmatpush1.msra.mxu0 %v773
    %2189 = vmatprep.subr.mxu0 0.0
    %2190 = vmatpush1.msra.mxu0 %v778
    %2191 = vmatprep.subr.mxu0 0.0
    %2192 = vmatpush1.msra.mxu0 %v783
    %2193 = vmatprep.subr.mxu0 0.0
    %2194 = vmatpush1.msra.mxu0 %v788
    %2195 = vmatprep.subr.mxu0 0.0
    %2196 = vmatpush1.msra.mxu0 %v793
    %2197 = vmatprep.subr.mxu0 0.0
    %2198 = vmatpush1.msra.mxu0 %v798
    %2199 = vmatprep.subr.mxu0 0.0
    %2200 = vmatpush1.msra.mxu0 %v803
    %2201 = vmatprep.subr.mxu0 0.0
    %2202 = vmatpush1.msra.mxu0 %v808
    %2203 = vmatprep.subr.mxu0 0.0
    %2204 = vmatpush1.msra.mxu0 %v813
    %2205 = vmatprep.subr.mxu0 0.0
    %2206 = vmatpush1.msra.mxu0 %v818
    %2207 = vmatprep.subr.mxu0 0.0
    %2208 = vmatpush1.msra.mxu0 %v823
    %2209 = vmatprep.subr.mxu0 0.0
    %2210 = vmatpush1.msra.mxu0 %v828
    %2211 = vmatprep.subr.mxu0 0.0
    %2212 = vmatpush1.msra.mxu0 %v833
    %2213 = vmatprep.subr.mxu0 0.0
    %2214 = vmatpush1.msra.mxu0 %v838
    %2215 = vmatprep.subr.mxu0 0.0
    %2216 = vmatpush1.msra.mxu0 %v843
    %2217 = vmatprep.subr.mxu0 0.0
    %2218 = vmatpush1.msra.mxu0 %v848
    %2219 = vmatprep.mubr.f32.mxu0 %v36
    %2220 = vmatmul.mubr.f32.gmra.mrb[0].mxu0 %v35
    %v2221 = vpop.f32.mrb[0].mxu0
    %v2222 = vadd.f32 %v2147, %v2221
    %v2223 = vpop.f32.mrb[0].mxu0
    %2224 = vmatprep.mubr.f32.mxu0 %v47
    %2225 = vmatmul.mubr.f32.gmra.mrb[0].mxu0 %v46
    %v2226 = vpop.f32.mrb[0].mxu0
    %v2227 = vadd.f32 %v2152, %v2226
    %v2228 = vpop.f32.mrb[0].mxu0
    %2229 = vdwg.mxu0
    %2230 = vmatprep.subr.mxu0 0.0
    %2231 = vmatpush1.msra.mxu0 %v853
    %2232 = vmatprep.subr.mxu0 0.0
    %2233 = vmatpush1.msra.mxu0 %v858
    %2234 = vmatprep.subr.mxu0 0.0
    %2235 = vmatpush1.msra.mxu0 %v863
    %2236 = vmatprep.subr.mxu0 0.0
    %2237 = vmatpush1.msra.mxu0 %v868
    %2238 = vmatprep.subr.mxu0 0.0
    %2239 = vmatpush1.msra.mxu0 %v873
    %2240 = vmatprep.subr.mxu0 0.0
    %2241 = vmatpush1.msra.mxu0 %v878
    %2242 = vmatprep.subr.mxu0 0.0
    %2243 = vmatpush1.msra.mxu0 %v883
    %2244 = vmatprep.subr.mxu0 0.0
    %2245 = vmatpush1.msra.mxu0 %v888
    %2246 = vmatprep.subr.mxu0 0.0
    %2247 = vmatpush1.msra.mxu0 %v893
    %2248 = vmatprep.subr.mxu0 0.0
    %2249 = vmatpush1.msra.mxu0 %v898
    %2250 = vmatprep.subr.mxu0 0.0
    %2251 = vmatpush1.msra.mxu0 %v903
    %2252 = vmatprep.subr.mxu0 0.0
    %2253 = vmatpush1.msra.mxu0 %v908
    %2254 = vmatprep.subr.mxu0 0.0
    %2255 = vmatpush1.msra.mxu0 %v913
    %2256 = vmatprep.subr.mxu0 0.0
    %2257 = vmatpush1.msra.mxu0 %v918
    %2258 = vmatprep.subr.mxu0 0.0
    %2259 = vmatpush1.msra.mxu0 %v923
    %2260 = vmatprep.subr.mxu0 0.0
    %2261 = vmatpush1.msra.mxu0 0.0
    %2262 = vmatprep.subr.mxu0 0.0
    %2263 = vmatpush1.msra.mxu0 0.0
    %2264 = vmatprep.subr.mxu0 0.0
    %2265 = vmatpush1.msra.mxu0 0.0
    %2266 = vmatprep.subr.mxu0 0.0
    %2267 = vmatpush1.msra.mxu0 0.0
    %2268 = vmatprep.subr.mxu0 0.0
    %2269 = vmatpush1.msra.mxu0 0.0
    %2270 = vmatprep.subr.mxu0 0.0
    %2271 = vmatpush1.msra.mxu0 0.0
    %2272 = vmatprep.subr.mxu0 0.0
    %2273 = vmatpush1.msra.mxu0 0.0
    %2274 = vmatprep.subr.mxu0 0.0
    %2275 = vmatpush1.msra.mxu0 0.0
    %2276 = vmatprep.subr.mxu0 0.0
    %2277 = vmatpush1.msra.mxu0 0.0
    %2278 = vmatprep.subr.mxu0 0.0
    %2279 = vmatpush1.msra.mxu0 0.0
    %2280 = vmatprep.subr.mxu0 0.0
    %2281 = vmatpush1.msra.mxu0 0.0
    %2282 = vmatprep.subr.mxu0 0.0
    %2283 = vmatpush1.msra.mxu0 0.0
    %2284 = vmatprep.subr.mxu0 0.0
    %2285 = vmatpush1.msra.mxu0 0.0
    %2286 = vmatprep.subr.mxu0 0.0
    %2287 = vmatpush1.msra.mxu0 0.0
    %2288 = vmatprep.subr.mxu0 0.0
    %2289 = vmatpush1.msra.mxu0 0.0
    %2290 = vmatprep.subr.mxu0 0.0
    %2291 = vmatpush1.msra.mxu0 0.0
    %2292 = vmatprep.subr.mxu0 0.0
    %2293 = vmatpush1.msra.mxu0 0.0
    %2294 = vmatprep.mubr.f32.mxu0 0.0
    %2295 = vmatmul.mubr.f32.gmra.mrb[0].mxu0 %v926
    %v2296 = vpop.f32.mrb[0].mxu0
    %v2297 = vadd.f32 %v2222, %v2296
    %v2298 = vpop.f32.mrb[0].mxu0
    %2299 = vmatprep.mubr.f32.mxu0 0.0
    %2300 = vmatmul.mubr.f32.gmra.mrb[0].mxu0 %v929
    %v2301 = vpop.f32.mrb[0].mxu0
    %v2302 = vadd.f32 %v2227, %v2301
    %v2303 = vpop.f32.mrb[0].mxu0
    %2304 = vdwg.mxu0
    %v2305 = vld [vmem:[%s2] sm:$0xf]
    %v2307 = vlaneseq
    %v2308 = vshrl.u32 %v2307, 7
    %v2309 = vsub.s32 0, %v2308
    %v2310 = vrot.slane %v2305, %v2309
    %v2311 = vlaneseq
    %v2312 = vshrl.u32 %v2311, 7
    %v2313 = vsub.s32 1, %v2312
    %v2314 = vrot.slane %v2305, %v2313
    %v2315 = vlaneseq
    %v2316 = vshrl.u32 %v2315, 7
    %v2317 = vsub.s32 2, %v2316
    %v2318 = vrot.slane %v2305, %v2317
    %v2319 = vlaneseq
    %v2320 = vshrl.u32 %v2319, 7
    %v2321 = vsub.s32 3, %v2320
    %v2322 = vrot.slane %v2305, %v2321
    %v2327 = vadd.f32 %v1383, %v2310
    %v2328 = vadd.f32 %v1385, %v2314
    %v2329 = vadd.f32 %v1845, %v2318
    %v2330 = vadd.f32 %v1847, %v2322
    %v2331 = vadd.f32 %v1389, %v2310
    %v2332 = vadd.f32 %v1391, %v2314
    %v2333 = vadd.f32 %v1851, %v2318
    %v2334 = vadd.f32 %v1853, %v2322
    %v2335 = vld [vmem:[%s3] sm:$0xff]
    %v2336 = vld [vmem:[%s3 + $0x8] sm:$0xff]
    %v2337 = vld [vmem:[%s3 + $0x10] sm:$0xff]
    %v2338 = vld [vmem:[%s3 + $0x18] sm:$0xff]
    %v2339 = vld [vmem:[%s3 + $0x20] sm:$0xff]
    %v2340 = vld [vmem:[%s3 + $0x28] sm:$0xff]
    %v2341 = vld [vmem:[%s3 + $0x30] sm:$0xff]
    %v2342 = vld [vmem:[%s3 + $0x38] sm:$0xff]
    %v2343 = vld [vmem:[%s3 + $0x40] sm:$0xff]
    %v2344 = vld [vmem:[%s3 + $0x48] sm:$0xff]
    %v2345 = vld [vmem:[%s3 + $0x50] sm:$0xff]
    %v2346 = vld [vmem:[%s3 + $0x58] sm:$0xff]
    %v2347 = vld [vmem:[%s3 + $0x60] sm:$0xff]
    %v2348 = vld [vmem:[%s3 + $0x68] sm:$0xff]
    %v2349 = vld [vmem:[%s3 + $0x70] sm:$0xff]
    %v2350 = vld [vmem:[%s3 + $0x78] sm:$0xff]
    %vm2351 = vcmask 261120
    %v2353 = vsel %vm2351, 0.0, 0
    %2355 = vmatprep.subr.mxu0 0.0
    %2356 = vmatpush1.msra.mxu0 %v2335
    %2357 = vmatprep.subr.mxu0 0.0
    %2358 = vmatpush1.msra.mxu0 %v2336
    %2359 = vmatprep.subr.mxu0 0.0
    %2360 = vmatpush1.msra.mxu0 %v2337
    %2361 = vmatprep.subr.mxu0 0.0
    %2362 = vmatpush1.msra.mxu0 %v2338
    %2363 = vmatprep.subr.mxu0 0.0
    %2364 = vmatpush1.msra.mxu0 0.0
    %2365 = vmatprep.subr.mxu0 0.0
    %2366 = vmatpush1.msra.mxu0 0.0
    %2367 = vmatprep.subr.mxu0 0.0
    %2368 = vmatpush1.msra.mxu0 0.0
    %2369 = vmatprep.subr.mxu0 0.0
    %2370 = vmatpush1.msra.mxu0 0.0
    %2371 = vmatprep.subr.mxu0 0.0
    %2372 = vmatpush1.msra.mxu0 0.0
    %2373 = vmatprep.subr.mxu0 0.0
    %2374 = vmatpush1.msra.mxu0 0.0
    %2375 = vmatprep.subr.mxu0 0.0
    %2376 = vmatpush1.msra.mxu0 0.0
    %2377 = vmatprep.subr.mxu0 0.0
    %2378 = vmatpush1.msra.mxu0 0.0
    %2379 = vmatprep.subr.mxu0 0.0
    %2380 = vmatpush1.msra.mxu0 0.0
    %2381 = vmatprep.subr.mxu0 0.0
    %2382 = vmatpush1.msra.mxu0 0.0
    %2383 = vmatprep.subr.mxu0 0.0
    %2384 = vmatpush1.msra.mxu0 0.0
    %2385 = vmatprep.subr.mxu0 0.0
    %2386 = vmatpush1.msra.mxu0 0.0
    %2387 = vmatprep.subr.mxu0 0.0
    %2388 = vmatpush1.msra.mxu0 0.0
    %2389 = vmatprep.subr.mxu0 0.0
    %2390 = vmatpush1.msra.mxu0 0.0
    %2391 = vmatprep.subr.mxu0 0.0
    %2392 = vmatpush1.msra.mxu0 0.0
    %2393 = vmatprep.subr.mxu0 0.0
    %2394 = vmatpush1.msra.mxu0 0.0
    %2395 = vmatprep.subr.mxu0 0.0
    %2396 = vmatpush1.msra.mxu0 0.0
    %2397 = vmatprep.subr.mxu0 0.0
    %2398 = vmatpush1.msra.mxu0 0.0
    %2399 = vmatprep.subr.mxu0 0.0
    %2400 = vmatpush1.msra.mxu0 0.0
    %2401 = vmatprep.subr.mxu0 0.0
    %2402 = vmatpush1.msra.mxu0 0.0
    %2403 = vmatprep.subr.mxu0 0.0
    %2404 = vmatpush1.msra.mxu0 0.0
    %2405 = vmatprep.subr.mxu0 0.0
    %2406 = vmatpush1.msra.mxu0 0.0
    %2407 = vmatprep.subr.mxu0 0.0
    %2408 = vmatpush1.msra.mxu0 0.0
    %2409 = vmatprep.subr.mxu0 0.0
    %2410 = vmatpush1.msra.mxu0 0.0
    %2411 = vmatprep.subr.mxu0 0.0
    %2412 = vmatpush1.msra.mxu0 0.0
    %2413 = vmatprep.subr.mxu0 0.0
    %2414 = vmatpush1.msra.mxu0 0.0
    %2415 = vmatprep.subr.mxu0 0.0
    %2416 = vmatpush1.msra.mxu0 0.0
    %2417 = vmatprep.subr.mxu0 0.0
    %2418 = vmatpush1.msra.mxu0 0.0
    %2419 = vmatprep.mubr.f32.mxu0 0.0
    %2420 = vmatmul.mubr.f32.gmra.mrb[0].mxu0 %v2353
    %v2421 = vpop.f32.mrb[0].mxu0
    %v2422 = vadd.f32 0.0, %v2421
    %v2423 = vpop.f32.mrb[0].mxu0
    %2424 = vdwg.mxu0
    %v2426 = vrot.slane %v2422, 1
    %v2429 = vadd.f32 %v2327, %v2422
    %v2430 = vadd.f32 %v2331, %v2426
    %v2431 = vxor.u32 %v2429, 2147483648
    %v2432 = vxor.u32 %v2430, 2147483648
    %v2433 = vmul.f32 %v2431, 1.442695
    %v2434 = vpow.pop %v2433
    %v2435 = vmul.f32 %v2432, 1.442695
    %v2436 = vpow.pop %v2435
    %v2437 = vadd.f32 %v2434, 1.0
    %v2438 = vadd.f32 %v2436, 1.0
    %v2439 = vrcp.pop %v2437
    %v2440 = vmul.f32 1.0, %v2439
    %v2441 = vrcp.pop %v2438
    %v2442 = vmul.f32 1.0, %v2441
    %v2443 = vtanh.pop %v2429
    %v2444 = vtanh.pop %v2430
    %v2445 = vmul.f32 %v2440, 0.0
    %v2446 = vmul.f32 %v2442, 0.0
    %2449 = vrot.lane.b32.xlu0 %v2443, 64
    %v2450 = vpop.permute.xlu0 %2449
    %2451 = vrot.lane.b32.xlu0 %v2444, 64
    %v2452 = vpop.permute.xlu0 %2451
    %v2455 = vmul.f32 %v2440, %v2450
    %v2456 = vmul.f32 %v2442, %v2452
    %2459 = vrot.lane.b32.xlu0 %v2455, 32
    %v2460 = vpop.permute.xlu0 %2459
    %2461 = vrot.lane.b32.xlu0 %v2456, 32
    %v2462 = vpop.permute.xlu0 %2461
    %v2465 = vadd.f32 %v2445, %v2460
    %v2466 = vadd.f32 %v2446, %v2462
    %v2467 = vtanh.pop %v2465
    %v2468 = vtanh.pop %v2466
    %2471 = vrot.lane.b32.xlu0 %v2467, 64
    %v2472 = vpop.permute.xlu0 %2471
    %2473 = vrot.lane.b32.xlu0 %v2468, 64
    %v2474 = vpop.permute.xlu0 %2473
    %v2477 = vmul.f32 %v2440, %v2472
    %v2478 = vmul.f32 %v2442, %v2474
    %2481 = vrot.lane.b32.xlu0 %v2477, 32
    %v2482 = vpop.permute.xlu0 %2481
    %2483 = vrot.lane.b32.xlu0 %v2478, 32
    %v2484 = vpop.permute.xlu0 %2483
    %vm2487 = vcmask 253952
    %2488 = vst.msk [vmem:[#allocation2] sm:$0x1] %vm2487, %v2482
    %2489 = vst.msk [vmem:[#allocation2 + $0x8] sm:$0x1] %vm2487, %v2484
    %2490 = vmatprep.subr.mxu0 0.0
    %2491 = vmatpush1.msra.mxu0 %v2339
    %2492 = vmatprep.subr.mxu0 0.0
    %2493 = vmatpush1.msra.mxu0 %v2340
    %2494 = vmatprep.subr.mxu0 0.0
    %2495 = vmatpush1.msra.mxu0 %v2341
    %2496 = vmatprep.subr.mxu0 0.0
    %2497 = vmatpush1.msra.mxu0 %v2342
    %2498 = vmatprep.subr.mxu0 0.0
    %2499 = vmatpush1.msra.mxu0 0.0
    %2500 = vmatprep.subr.mxu0 0.0
    %2501 = vmatpush1.msra.mxu0 0.0
    %2502 = vmatprep.subr.mxu0 0.0
    %2503 = vmatpush1.msra.mxu0 0.0
    %2504 = vmatprep.subr.mxu0 0.0
    %2505 = vmatpush1.msra.mxu0 0.0
    %2506 = vmatprep.subr.mxu0 0.0
    %2507 = vmatpush1.msra.mxu0 0.0
    %2508 = vmatprep.subr.mxu0 0.0
    %2509 = vmatpush1.msra.mxu0 0.0
    %2510 = vmatprep.subr.mxu0 0.0
    %2511 = vmatpush1.msra.mxu0 0.0
    %2512 = vmatprep.subr.mxu0 0.0
    %2513 = vmatpush1.msra.mxu0 0.0
    %2514 = vmatprep.subr.mxu0 0.0
    %2515 = vmatpush1.msra.mxu0 0.0
    %2516 = vmatprep.subr.mxu0 0.0
    %2517 = vmatpush1.msra.mxu0 0.0
    %2518 = vmatprep.subr.mxu0 0.0
    %2519 = vmatpush1.msra.mxu0 0.0
    %2520 = vmatprep.subr.mxu0 0.0
    %2521 = vmatpush1.msra.mxu0 0.0
    %2522 = vmatprep.subr.mxu0 0.0
    %2523 = vmatpush1.msra.mxu0 0.0
    %2524 = vmatprep.subr.mxu0 0.0
    %2525 = vmatpush1.msra.mxu0 0.0
    %2526 = vmatprep.subr.mxu0 0.0
    %2527 = vmatpush1.msra.mxu0 0.0
    %2528 = vmatprep.subr.mxu0 0.0
    %2529 = vmatpush1.msra.mxu0 0.0
    %2530 = vmatprep.subr.mxu0 0.0
    %2531 = vmatpush1.msra.mxu0 0.0
    %2532 = vmatprep.subr.mxu0 0.0
    %2533 = vmatpush1.msra.mxu0 0.0
    %2534 = vmatprep.subr.mxu0 0.0
    %2535 = vmatpush1.msra.mxu0 0.0
    %2536 = vmatprep.subr.mxu0 0.0
    %2537 = vmatpush1.msra.mxu0 0.0
    %2538 = vmatprep.subr.mxu0 0.0
    %2539 = vmatpush1.msra.mxu0 0.0
    %2540 = vmatprep.subr.mxu0 0.0
    %2541 = vmatpush1.msra.mxu0 0.0
    %2542 = vmatprep.subr.mxu0 0.0
    %2543 = vmatpush1.msra.mxu0 0.0
    %2544 = vmatprep.subr.mxu0 0.0
    %2545 = vmatpush1.msra.mxu0 0.0
    %2546 = vmatprep.subr.mxu0 0.0
    %2547 = vmatpush1.msra.mxu0 0.0
    %2548 = vmatprep.subr.mxu0 0.0
    %2549 = vmatpush1.msra.mxu0 0.0
    %2550 = vmatprep.subr.mxu0 0.0
    %2551 = vmatpush1.msra.mxu0 0.0
    %2552 = vmatprep.subr.mxu0 0.0
    %2553 = vmatpush1.msra.mxu0 0.0
    %2554 = vmatprep.mubr.f32.mxu0 0.0
    %2555 = vmatmul.mubr.f32.gmra.mrb[0].mxu0 %v2353
    %v2556 = vpop.f32.mrb[0].mxu0
    %v2557 = vadd.f32 0.0, %v2556
    %v2558 = vpop.f32.mrb[0].mxu0
    %2559 = vdwg.mxu0
    %v2561 = vrot.slane %v2557, 1
    %v2562 = vrot.slane %v2557, 2
    %v2565 = vadd.f32 %v2328, %v2561
    %v2566 = vadd.f32 %v2332, %v2562
    %v2567 = vxor.u32 %v2565, 2147483648
    %v2568 = vxor.u32 %v2566, 2147483648
    %v2569 = vmul.f32 %v2567, 1.442695
    %v2570 = vpow.pop %v2569
    %v2571 = vmul.f32 %v2568, 1.442695
    %v2572 = vpow.pop %v2571
    %v2573 = vadd.f32 %v2570, 1.0
    %v2574 = vadd.f32 %v2572, 1.0
    %v2575 = vrcp.pop %v2573
    %v2576 = vmul.f32 1.0, %v2575
    %v2577 = vrcp.pop %v2574
    %v2578 = vmul.f32 1.0, %v2577
    %v2579 = vtanh.pop %v2565
    %v2580 = vtanh.pop %v2566
    %v2581 = vmul.f32 %v2576, 0.0
    %v2582 = vmul.f32 %v2578, 0.0
    %2585 = vrot.lane.b32.xlu0 %v2579, 64
    %v2586 = vpop.permute.xlu0 %2585
    %2587 = vrot.lane.b32.xlu0 %v2580, 64
    %v2588 = vpop.permute.xlu0 %2587
    %v2591 = vmul.f32 %v2576, %v2586
    %v2592 = vmul.f32 %v2578, %v2588
    %2595 = vrot.lane.b32.xlu0 %v2591, 32
    %v2596 = vpop.permute.xlu0 %2595
    %2597 = vrot.lane.b32.xlu0 %v2592, 32
    %v2598 = vpop.permute.xlu0 %2597
    %v2601 = vadd.f32 %v2581, %v2596
    %v2602 = vadd.f32 %v2582, %v2598
    %v2603 = vtanh.pop %v2601
    %v2604 = vtanh.pop %v2602
    %2607 = vrot.lane.b32.xlu0 %v2603, 64
    %v2608 = vpop.permute.xlu0 %2607
    %2609 = vrot.lane.b32.xlu0 %v2604, 64
    %v2610 = vpop.permute.xlu0 %2609
    %v2613 = vmul.f32 %v2576, %v2608
    %v2614 = vmul.f32 %v2578, %v2610
    %2617 = vrot.lane.b32.xlu0 %v2613, 64
    %v2618 = vpop.permute.xlu0 %2617
    %2619 = vrot.lane.b32.xlu0 %v2614, 64
    %v2620 = vpop.permute.xlu0 %2619
    %vm2623 = vcmask 523527
    %2624 = vst.msk [vmem:[#allocation2] sm:$0x80] %vm2623, %v2618
    %2625 = vst.msk [vmem:[#allocation2 + $0x8] sm:$0x80] %vm2623, %v2620
    %2626 = vmatprep.subr.mxu0 0.0
    %2627 = vmatpush1.msra.mxu0 %v2343
    %2628 = vmatprep.subr.mxu0 0.0
    %2629 = vmatpush1.msra.mxu0 %v2344
    %2630 = vmatprep.subr.mxu0 0.0
    %2631 = vmatpush1.msra.mxu0 %v2345
    %2632 = vmatprep.subr.mxu0 0.0
    %2633 = vmatpush1.msra.mxu0 %v2346
    %2634 = vmatprep.subr.mxu0 0.0
    %2635 = vmatpush1.msra.mxu0 0.0
    %2636 = vmatprep.subr.mxu0 0.0
    %2637 = vmatpush1.msra.mxu0 0.0
    %2638 = vmatprep.subr.mxu0 0.0
    %2639 = vmatpush1.msra.mxu0 0.0
    %2640 = vmatprep.subr.mxu0 0.0
    %2641 = vmatpush1.msra.mxu0 0.0
    %2642 = vmatprep.subr.mxu0 0.0
    %2643 = vmatpush1.msra.mxu0 0.0
    %2644 = vmatprep.subr.mxu0 0.0
    %2645 = vmatpush1.msra.mxu0 0.0
    %2646 = vmatprep.subr.mxu0 0.0
    %2647 = vmatpush1.msra.mxu0 0.0
    %2648 = vmatprep.subr.mxu0 0.0
    %2649 = vmatpush1.msra.mxu0 0.0
    %2650 = vmatprep.subr.mxu0 0.0
    %2651 = vmatpush1.msra.mxu0 0.0
    %2652 = vmatprep.subr.mxu0 0.0
    %2653 = vmatpush1.msra.mxu0 0.0
    %2654 = vmatprep.subr.mxu0 0.0
    %2655 = vmatpush1.msra.mxu0 0.0
    %2656 = vmatprep.subr.mxu0 0.0
    %2657 = vmatpush1.msra.mxu0 0.0
    %2658 = vmatprep.subr.mxu0 0.0
    %2659 = vmatpush1.msra.mxu0 0.0
    %2660 = vmatprep.subr.mxu0 0.0
    %2661 = vmatpush1.msra.mxu0 0.0
    %2662 = vmatprep.subr.mxu0 0.0
    %2663 = vmatpush1.msra.mxu0 0.0
    %2664 = vmatprep.subr.mxu0 0.0
    %2665 = vmatpush1.msra.mxu0 0.0
    %2666 = vmatprep.subr.mxu0 0.0
    %2667 = vmatpush1.msra.mxu0 0.0
    %2668 = vmatprep.subr.mxu0 0.0
    %2669 = vmatpush1.msra.mxu0 0.0
    %2670 = vmatprep.subr.mxu0 0.0
    %2671 = vmatpush1.msra.mxu0 0.0
    %2672 = vmatprep.subr.mxu0 0.0
    %2673 = vmatpush1.msra.mxu0 0.0
    %2674 = vmatprep.subr.mxu0 0.0
    %2675 = vmatpush1.msra.mxu0 0.0
    %2676 = vmatprep.subr.mxu0 0.0
    %2677 = vmatpush1.msra.mxu0 0.0
    %2678 = vmatprep.subr.mxu0 0.0
    %2679 = vmatpush1.msra.mxu0 0.0
    %2680 = vmatprep.subr.mxu0 0.0
    %2681 = vmatpush1.msra.mxu0 0.0
    %2682 = vmatprep.subr.mxu0 0.0
    %2683 = vmatpush1.msra.mxu0 0.0
    %2684 = vmatprep.subr.mxu0 0.0
    %2685 = vmatpush1.msra.mxu0 0.0
    %2686 = vmatprep.subr.mxu0 0.0
    %2687 = vmatpush1.msra.mxu0 0.0
    %2688 = vmatprep.subr.mxu0 0.0
    %2689 = vmatpush1.msra.mxu0 0.0
    %2690 = vmatprep.mubr.f32.mxu0 0.0
    %2691 = vmatmul.mubr.f32.gmra.mrb[0].mxu0 %v2353
    %v2692 = vpop.f32.mrb[0].mxu0
    %v2693 = vadd.f32 0.0, %v2692
    %v2694 = vpop.f32.mrb[0].mxu0
    %2695 = vdwg.mxu0
    %v2697 = vrot.slane %v2693, 1
    %v2700 = vadd.f32 %v2329, %v2693
    %v2701 = vadd.f32 %v2333, %v2697
    %v2702 = vxor.u32 %v2700, 2147483648
    %v2703 = vxor.u32 %v2701, 2147483648
    %v2704 = vmul.f32 %v2702, 1.442695
    %v2705 = vpow.pop %v2704
    %v2706 = vmul.f32 %v2703, 1.442695
    %v2707 = vpow.pop %v2706
    %v2708 = vadd.f32 %v2705, 1.0
    %v2709 = vadd.f32 %v2707, 1.0
    %v2710 = vrcp.pop %v2708
    %v2711 = vmul.f32 1.0, %v2710
    %v2712 = vrcp.pop %v2709
    %v2713 = vmul.f32 1.0, %v2712
    %v2714 = vtanh.pop %v2700
    %v2715 = vtanh.pop %v2701
    %v2716 = vmul.f32 %v2711, 0.0
    %v2717 = vmul.f32 %v2713, 0.0
    %2720 = vrot.lane.b32.xlu0 %v2714, 64
    %v2721 = vpop.permute.xlu0 %2720
    %2722 = vrot.lane.b32.xlu0 %v2715, 64
    %v2723 = vpop.permute.xlu0 %2722
    %v2726 = vmul.f32 %v2711, %v2721
    %v2727 = vmul.f32 %v2713, %v2723
    %2730 = vrot.lane.b32.xlu0 %v2726, 32
    %v2731 = vpop.permute.xlu0 %2730
    %2732 = vrot.lane.b32.xlu0 %v2727, 32
    %v2733 = vpop.permute.xlu0 %2732
    %v2736 = vadd.f32 %v2716, %v2731
    %v2737 = vadd.f32 %v2717, %v2733
    %v2738 = vtanh.pop %v2736
    %v2739 = vtanh.pop %v2737
    %2742 = vrot.lane.b32.xlu0 %v2738, 64
    %v2743 = vpop.permute.xlu0 %2742
    %2744 = vrot.lane.b32.xlu0 %v2739, 64
    %v2745 = vpop.permute.xlu0 %2744
    %v2748 = vmul.f32 %v2711, %v2743
    %v2749 = vmul.f32 %v2713, %v2745
    %2752 = vrot.lane.b32.xlu0 %v2748, 96
    %v2753 = vpop.permute.xlu0 %2752
    %2754 = vrot.lane.b32.xlu0 %v2749, 96
    %v2755 = vpop.permute.xlu0 %2754
    %vm2758 = vcmask 778752
    %2759 = vst.msk [vmem:[#allocation2] sm:$0x1] %vm2758, %v2753
    %2760 = vst.msk [vmem:[#allocation2 + $0x8] sm:$0x1] %vm2758, %v2755
    %2761 = vmatprep.subr.mxu0 0.0
    %2762 = vmatpush1.msra.mxu0 %v2347
    %2763 = vmatprep.subr.mxu0 0.0
    %2764 = vmatpush1.msra.mxu0 %v2348
    %2765 = vmatprep.subr.mxu0 0.0
    %2766 = vmatpush1.msra.mxu0 %v2349
    %2767 = vmatprep.subr.mxu0 0.0
    %2768 = vmatpush1.msra.mxu0 %v2350
    %2769 = vmatprep.subr.mxu0 0.0
    %2770 = vmatpush1.msra.mxu0 0.0
    %2771 = vmatprep.subr.mxu0 0.0
    %2772 = vmatpush1.msra.mxu0 0.0
    %2773 = vmatprep.subr.mxu0 0.0
    %2774 = vmatpush1.msra.mxu0 0.0
    %2775 = vmatprep.subr.mxu0 0.0
    %2776 = vmatpush1.msra.mxu0 0.0
    %2777 = vmatprep.subr.mxu0 0.0
    %2778 = vmatpush1.msra.mxu0 0.0
    %2779 = vmatprep.subr.mxu0 0.0
    %2780 = vmatpush1.msra.mxu0 0.0
    %2781 = vmatprep.subr.mxu0 0.0
    %2782 = vmatpush1.msra.mxu0 0.0
    %2783 = vmatprep.subr.mxu0 0.0
    %2784 = vmatpush1.msra.mxu0 0.0
    %2785 = vmatprep.subr.mxu0 0.0
    %2786 = vmatpush1.msra.mxu0 0.0
    %2787 = vmatprep.subr.mxu0 0.0
    %2788 = vmatpush1.msra.mxu0 0.0
    %2789 = vmatprep.subr.mxu0 0.0
    %2790 = vmatpush1.msra.mxu0 0.0
    %2791 = vmatprep.subr.mxu0 0.0
    %2792 = vmatpush1.msra.mxu0 0.0
    %2793 = vmatprep.subr.mxu0 0.0
    %2794 = vmatpush1.msra.mxu0 0.0
    %2795 = vmatprep.subr.mxu0 0.0
    %2796 = vmatpush1.msra.mxu0 0.0
    %2797 = vmatprep.subr.mxu0 0.0
    %2798 = vmatpush1.msra.mxu0 0.0
    %2799 = vmatprep.subr.mxu0 0.0
    %2800 = vmatpush1.msra.mxu0 0.0
    %2801 = vmatprep.subr.mxu0 0.0
    %2802 = vmatpush1.msra.mxu0 0.0
    %2803 = vmatprep.subr.mxu0 0.0
    %2804 = vmatpush1.msra.mxu0 0.0
    %2805 = vmatprep.subr.mxu0 0.0
    %2806 = vmatpush1.msra.mxu0 0.0
    %2807 = vmatprep.subr.mxu0 0.0
    %2808 = vmatpush1.msra.mxu0 0.0
    %2809 = vmatprep.subr.mxu0 0.0
    %2810 = vmatpush1.msra.mxu0 0.0
    %2811 = vmatprep.subr.mxu0 0.0
    %2812 = vmatpush1.msra.mxu0 0.0
    %2813 = vmatprep.subr.mxu0 0.0
    %2814 = vmatpush1.msra.mxu0 0.0
    %2815 = vmatprep.subr.mxu0 0.0
    %2816 = vmatpush1.msra.mxu0 0.0
    %2817 = vmatprep.subr.mxu0 0.0
    %2818 = vmatpush1.msra.mxu0 0.0
    %2819 = vmatprep.subr.mxu0 0.0
    %2820 = vmatpush1.msra.mxu0 0.0
    %2821 = vmatprep.subr.mxu0 0.0
    %2822 = vmatpush1.msra.mxu0 0.0
    %2823 = vmatprep.subr.mxu0 0.0
    %2824 = vmatpush1.msra.mxu0 0.0
    %2825 = vmatprep.mubr.f32.mxu0 0.0
    %2826 = vmatmul.mubr.f32.gmra.mrb[0].mxu0 %v2353
    %v2827 = vpop.f32.mrb[0].mxu0
    %v2828 = vadd.f32 0.0, %v2827
    %v2829 = vpop.f32.mrb[0].mxu0
    %2830 = vdwg.mxu0
    %v2832 = vrot.slane %v2828, 1
    %v2833 = vrot.slane %v2828, 2
    %v2836 = vadd.f32 %v2330, %v2832
    %v2837 = vadd.f32 %v2334, %v2833
    %v2838 = vxor.u32 %v2836, 2147483648
    %v2839 = vxor.u32 %v2837, 2147483648
    %v2840 = vmul.f32 %v2838, 1.442695
    %v2841 = vpow.pop %v2840
    %v2842 = vmul.f32 %v2839, 1.442695
    %v2843 = vpow.pop %v2842
    %v2844 = vadd.f32 %v2841, 1.0
    %v2845 = vadd.f32 %v2843, 1.0
    %v2846 = vrcp.pop %v2844
    %v2847 = vmul.f32 1.0, %v2846
    %v2848 = vrcp.pop %v2845
    %v2849 = vmul.f32 1.0, %v2848
    %v2850 = vtanh.pop %v2836
    %v2851 = vtanh.pop %v2837
    %v2852 = vmul.f32 %v2847, 0.0
    %v2853 = vmul.f32 %v2849, 0.0
    %2856 = vrot.lane.b32.xlu0 %v2850, 64
    %v2857 = vpop.permute.xlu0 %2856
    %2858 = vrot.lane.b32.xlu0 %v2851, 64
    %v2859 = vpop.permute.xlu0 %2858
    %v2862 = vmul.f32 %v2847, %v2857
    %v2863 = vmul.f32 %v2849, %v2859
    %2866 = vrot.lane.b32.xlu0 %v2862, 32
    %v2867 = vpop.permute.xlu0 %2866
    %2868 = vrot.lane.b32.xlu0 %v2863, 32
    %v2869 = vpop.permute.xlu0 %2868
    %v2872 = vadd.f32 %v2852, %v2867
    %v2873 = vadd.f32 %v2853, %v2869
    %v2874 = vtanh.pop %v2872
    %v2875 = vtanh.pop %v2873
    %2878 = vrot.lane.b32.xlu0 %v2874, 64
    %v2879 = vpop.permute.xlu0 %2878
    %2880 = vrot.lane.b32.xlu0 %v2875, 64
    %v2881 = vpop.permute.xlu0 %2880
    %v2884 = vmul.f32 %v2847, %v2879
    %v2885 = vmul.f32 %v2849, %v2881
    %vm2886 = vcmask 1048327
    %2887 = vst.msk [vmem:[#allocation2] sm:$0x80] %vm2886, %v2884
    %2888 = vst.msk [vmem:[#allocation2 + $0x8] sm:$0x80] %vm2886, %v2885
    %v2889 = vrot.slane %v2478, 7
    %vm2890 = vcmask 1041409
    %v2891 = vsel %vm2890, %v2889, %v2477
    %2892 = vrot.lane.b32.xlu0 %v2891, 32
    %v2893 = vpop.permute.xlu0 %2892
    %v2894 = vsel %vm2351, %v2893, 0
    %2896 = vmatprep.subr.mxu0 0.0
    %2897 = vmatpush1.msra.mxu0 %v2335
    %2898 = vmatprep.subr.mxu0 0.0
    %2899 = vmatpush1.msra.mxu0 %v2336
    %2900 = vmatprep.subr.mxu0 0.0
    %2901 = vmatpush1.msra.mxu0 %v2337
    %2902 = vmatprep.subr.mxu0 0.0
    %2903 = vmatpush1.msra.mxu0 %v2338
    %2904 = vmatprep.subr.mxu0 0.0
    %2905 = vmatpush1.msra.mxu0 0.0
    %2906 = vmatprep.subr.mxu0 0.0
    %2907 = vmatpush1.msra.mxu0 0.0
    %2908 = vmatprep.subr.mxu0 0.0
    %2909 = vmatpush1.msra.mxu0 0.0
    %2910 = vmatprep.subr.mxu0 0.0
    %2911 = vmatpush1.msra.mxu0 0.0
    %2912 = vmatprep.subr.mxu0 0.0
    %2913 = vmatpush1.msra.mxu0 0.0
    %2914 = vmatprep.subr.mxu0 0.0
    %2915 = vmatpush1.msra.mxu0 0.0
    %2916 = vmatprep.subr.mxu0 0.0
    %2917 = vmatpush1.msra.mxu0 0.0
    %2918 = vmatprep.subr.mxu0 0.0
    %2919 = vmatpush1.msra.mxu0 0.0
    %2920 = vmatprep.subr.mxu0 0.0
    %2921 = vmatpush1.msra.mxu0 0.0
    %2922 = vmatprep.subr.mxu0 0.0
    %2923 = vmatpush1.msra.mxu0 0.0
    %2924 = vmatprep.subr.mxu0 0.0
    %2925 = vmatpush1.msra.mxu0 0.0
    %2926 = vmatprep.subr.mxu0 0.0
    %2927 = vmatpush1.msra.mxu0 0.0
    %2928 = vmatprep.subr.mxu0 0.0
    %2929 = vmatpush1.msra.mxu0 0.0
    %2930 = vmatprep.subr.mxu0 0.0
    %2931 = vmatpush1.msra.mxu0 0.0
    %2932 = vmatprep.subr.mxu0 0.0
    %2933 = vmatpush1.msra.mxu0 0.0
    %2934 = vmatprep.subr.mxu0 0.0
    %2935 = vmatpush1.msra.mxu0 0.0
    %2936 = vmatprep.subr.mxu0 0.0
    %2937 = vmatpush1.msra.mxu0 0.0
    %2938 = vmatprep.subr.mxu0 0.0
    %2939 = vmatpush1.msra.mxu0 0.0
    %2940 = vmatprep.subr.mxu0 0.0
    %2941 = vmatpush1.msra.mxu0 0.0
    %2942 = vmatprep.subr.mxu0 0.0
    %2943 = vmatpush1.msra.mxu0 0.0
    %2944 = vmatprep.subr.mxu0 0.0
    %2945 = vmatpush1.msra.mxu0 0.0
    %2946 = vmatprep.subr.mxu0 0.0
    %2947 = vmatpush1.msra.mxu0 0.0
    %2948 = vmatprep.subr.mxu0 0.0
    %2949 = vmatpush1.msra.mxu0 0.0
    %2950 = vmatprep.subr.mxu0 0.0
    %2951 = vmatpush1.msra.mxu0 0.0
    %2952 = vmatprep.subr.mxu0 0.0
    %2953 = vmatpush1.msra.mxu0 0.0
    %2954 = vmatprep.subr.mxu0 0.0
    %2955 = vmatpush1.msra.mxu0 0.0
    %2956 = vmatprep.subr.mxu0 0.0
    %2957 = vmatpush1.msra.mxu0 0.0
    %2958 = vmatprep.subr.mxu0 0.0
    %2959 = vmatpush1.msra.mxu0 0.0
    %2960 = vmatprep.mubr.f32.mxu0 0.0
    %2961 = vmatmul.mubr.f32.gmra.mrb[0].mxu0 %v2894
    %v2962 = vpop.f32.mrb[0].mxu0
    %v2963 = vadd.f32 0.0, %v2962
    %v2964 = vpop.f32.mrb[0].mxu0
    %2965 = vdwg.mxu0
    %v2967 = vrot.slane %v2963, 7
    %v2970 = vadd.f32 %v2327, %v2967
    %v2971 = vadd.f32 %v2331, %v2963
    %v2972 = vxor.u32 %v2970, 2147483648
    %v2973 = vxor.u32 %v2971, 2147483648
    %v2974 = vmul.f32 %v2972, 1.442695
    %v2975 = vpow.pop %v2974
    %v2976 = vmul.f32 %v2973, 1.442695
    %v2977 = vpow.pop %v2976
    %v2978 = vadd.f32 %v2975, 1.0
    %v2979 = vadd.f32 %v2977, 1.0
    %v2980 = vrcp.pop %v2978
    %v2981 = vmul.f32 1.0, %v2980
    %v2982 = vrcp.pop %v2979
    %v2983 = vmul.f32 1.0, %v2982
    %v2984 = vtanh.pop %v2970
    %v2985 = vtanh.pop %v2971
    %v2988 = vrot.slane %v2465, 7
    %v2989 = vrot.slane %v2466, 7
    %v2992 = vmul.f32 %v2981, %v2988
    %v2993 = vmul.f32 %v2983, %v2989
    %2996 = vrot.lane.b32.xlu0 %v2984, 64
    %v2997 = vpop.permute.xlu0 %2996
    %2998 = vrot.lane.b32.xlu0 %v2985, 64
    %v2999 = vpop.permute.xlu0 %2998
    %v3002 = vmul.f32 %v2981, %v2997
    %v3003 = vmul.f32 %v2983, %v2999
    %3006 = vrot.lane.b32.xlu0 %v3002, 32
    %v3007 = vpop.permute.xlu0 %3006
    %3008 = vrot.lane.b32.xlu0 %v3003, 32
    %v3009 = vpop.permute.xlu0 %3008
    %v3012 = vadd.f32 %v2992, %v3007
    %v3013 = vadd.f32 %v2993, %v3009
    %v3014 = vtanh.pop %v3012
    %v3015 = vtanh.pop %v3013
    %3018 = vrot.lane.b32.xlu0 %v3014, 64
    %v3019 = vpop.permute.xlu0 %3018
    %3020 = vrot.lane.b32.xlu0 %v3015, 64
    %v3021 = vpop.permute.xlu0 %3020
    %v3024 = vmul.f32 %v2981, %v3019
    %v3025 = vmul.f32 %v2983, %v3021
    %3028 = vrot.lane.b32.xlu0 %v3024, 32
    %v3029 = vpop.permute.xlu0 %3028
    %3030 = vrot.lane.b32.xlu0 %v3025, 32
    %v3031 = vpop.permute.xlu0 %3030
    %vm3034 = vcmask 254977
    %3035 = vst.msk [vmem:[#allocation2] sm:$0x2] %vm3034, %v3029
    %3036 = vst.msk [vmem:[#allocation2 + $0x8] sm:$0x2] %vm3034, %v3031
    %v3037 = vrot.slane %v2613, 7
    %v3038 = vrot.slane %v2614, 6
    %v3039 = vsel %vm2890, %v3038, %v3037
    %3040 = vrot.lane.b32.xlu0 %v3039, 32
    %v3041 = vpop.permute.xlu0 %3040
    %v3042 = vsel %vm2351, %v3041, 0
    %3044 = vmatprep.subr.mxu0 0.0
    %3045 = vmatpush1.msra.mxu0 %v2339
    %3046 = vmatprep.subr.mxu0 0.0
    %3047 = vmatpush1.msra.mxu0 %v2340
    %3048 = vmatprep.subr.mxu0 0.0
    %3049 = vmatpush1.msra.mxu0 %v2341
    %3050 = vmatprep.subr.mxu0 0.0
    %3051 = vmatpush1.msra.mxu0 %v2342
    %3052 = vmatprep.subr.mxu0 0.0
    %3053 = vmatpush1.msra.mxu0 0.0
    %3054 = vmatprep.subr.mxu0 0.0
    %3055 = vmatpush1.msra.mxu0 0.0
    %3056 = vmatprep.subr.mxu0 0.0
    %3057 = vmatpush1.msra.mxu0 0.0
    %3058 = vmatprep.subr.mxu0 0.0
    %3059 = vmatpush1.msra.mxu0 0.0
    %3060 = vmatprep.subr.mxu0 0.0
    %3061 = vmatpush1.msra.mxu0 0.0
    %3062 = vmatprep.subr.mxu0 0.0
    %3063 = vmatpush1.msra.mxu0 0.0
    %3064 = vmatprep.subr.mxu0 0.0
    %3065 = vmatpush1.msra.mxu0 0.0
    %3066 = vmatprep.subr.mxu0 0.0
    %3067 = vmatpush1.msra.mxu0 0.0
    %3068 = vmatprep.subr.mxu0 0.0
    %3069 = vmatpush1.msra.mxu0 0.0
    %3070 = vmatprep.subr.mxu0 0.0
    %3071 = vmatpush1.msra.mxu0 0.0
    %3072 = vmatprep.subr.mxu0 0.0
    %3073 = vmatpush1.msra.mxu0 0.0
    %3074 = vmatprep.subr.mxu0 0.0
    %3075 = vmatpush1.msra.mxu0 0.0
    %3076 = vmatprep.subr.mxu0 0.0
    %3077 = vmatpush1.msra.mxu0 0.0
    %3078 = vmatprep.subr.mxu0 0.0
    %3079 = vmatpush1.msra.mxu0 0.0
    %3080 = vmatprep.subr.mxu0 0.0
    %3081 = vmatpush1.msra.mxu0 0.0
    %3082 = vmatprep.subr.mxu0 0.0
    %3083 = vmatpush1.msra.mxu0 0.0
    %3084 = vmatprep.subr.mxu0 0.0
    %3085 = vmatpush1.msra.mxu0 0.0
    %3086 = vmatprep.subr.mxu0 0.0
    %3087 = vmatpush1.msra.mxu0 0.0
    %3088 = vmatprep.subr.mxu0 0.0
    %3089 = vmatpush1.msra.mxu0 0.0
    %3090 = vmatprep.subr.mxu0 0.0
    %3091 = vmatpush1.msra.mxu0 0.0
    %3092 = vmatprep.subr.mxu0 0.0
    %3093 = vmatpush1.msra.mxu0 0.0
    %3094 = vmatprep.subr.mxu0 0.0
    %3095 = vmatpush1.msra.mxu0 0.0
    %3096 = vmatprep.subr.mxu0 0.0
    %3097 = vmatpush1.msra.mxu0 0.0
    %3098 = vmatprep.subr.mxu0 0.0
    %3099 = vmatpush1.msra.mxu0 0.0
    %3100 = vmatprep.subr.mxu0 0.0
    %3101 = vmatpush1.msra.mxu0 0.0
    %3102 = vmatprep.subr.mxu0 0.0
    %3103 = vmatpush1.msra.mxu0 0.0
    %3104 = vmatprep.subr.mxu0 0.0
    %3105 = vmatpush1.msra.mxu0 0.0
    %3106 = vmatprep.subr.mxu0 0.0
    %3107 = vmatpush1.msra.mxu0 0.0
    %3108 = vmatprep.mubr.f32.mxu0 0.0
    %3109 = vmatmul.mubr.f32.gmra.mrb[0].mxu0 %v3042
    %v3110 = vpop.f32.mrb[0].mxu0
    %v3111 = vadd.f32 0.0, %v3110
    %v3112 = vpop.f32.mrb[0].mxu0
    %3113 = vdwg.mxu0
    %v3115 = vrot.slane %v3111, 2
    %v3116 = vrot.slane %v3111, 3
    %v3119 = vadd.f32 %v2328, %v3115
    %v3120 = vadd.f32 %v2332, %v3116
    %v3121 = vxor.u32 %v3119, 2147483648
    %v3122 = vxor.u32 %v3120, 2147483648
    %v3123 = vmul.f32 %v3121, 1.442695
    %v3124 = vpow.pop %v3123
    %v3125 = vmul.f32 %v3122, 1.442695
    %v3126 = vpow.pop %v3125
    %v3127 = vadd.f32 %v3124, 1.0
    %v3128 = vadd.f32 %v3126, 1.0
    %v3129 = vrcp.pop %v3127
    %v3130 = vmul.f32 1.0, %v3129
    %v3131 = vrcp.pop %v3128
    %v3132 = vmul.f32 1.0, %v3131
    %v3133 = vtanh.pop %v3119
    %v3134 = vtanh.pop %v3120
    %v3137 = vrot.slane %v2601, 1
    %v3138 = vrot.slane %v2602, 1
    %v3141 = vmul.f32 %v3130, %v3137
    %v3142 = vmul.f32 %v3132, %v3138
    %3145 = vrot.lane.b32.xlu0 %v3133, 64
    %v3146 = vpop.permute.xlu0 %3145
    %3147 = vrot.lane.b32.xlu0 %v3134, 64
    %v3148 = vpop.permute.xlu0 %3147
    %v3151 = vmul.f32 %v3130, %v3146
    %v3152 = vmul.f32 %v3132, %v3148
    %3155 = vrot.lane.b32.xlu0 %v3151, 32
    %v3156 = vpop.permute.xlu0 %3155
    %3157 = vrot.lane.b32.xlu0 %v3152, 32
    %v3158 = vpop.permute.xlu0 %3157
    %v3161 = vadd.f32 %v3141, %v3156
    %v3162 = vadd.f32 %v3142, %v3158
    %v3163 = vtanh.pop %v3161
    %v3164 = vtanh.pop %v3162
    %3167 = vrot.lane.b32.xlu0 %v3163, 64
    %v3168 = vpop.permute.xlu0 %3167
    %3169 = vrot.lane.b32.xlu0 %v3164, 64
    %v3170 = vpop.permute.xlu0 %3169
    %v3173 = vmul.f32 %v3130, %v3168
    %v3174 = vmul.f32 %v3132, %v3170
    %3177 = vrot.lane.b32.xlu0 %v3173, 64
    %v3178 = vpop.permute.xlu0 %3177
    %3179 = vrot.lane.b32.xlu0 %v3174, 64
    %v3180 = vpop.permute.xlu0 %3179
    %vm3183 = vcmask 522502
    %3184 = vst.msk [vmem:[#allocation2] sm:$0x40] %vm3183, %v3178
    %3185 = vst.msk [vmem:[#allocation2 + $0x8] sm:$0x40] %vm3183, %v3180
    %v3186 = vrot.slane %v2749, 7
    %v3187 = vsel %vm2890, %v3186, %v2748
    %3188 = vrot.lane.b32.xlu0 %v3187, 32
    %v3189 = vpop.permute.xlu0 %3188
    %v3190 = vsel %vm2351, %v3189, 0
    %3192 = vmatprep.subr.mxu0 0.0
    %3193 = vmatpush1.msra.mxu0 %v2343
    %3194 = vmatprep.subr.mxu0 0.0
    %3195 = vmatpush1.msra.mxu0 %v2344
    %3196 = vmatprep.subr.mxu0 0.0
    %3197 = vmatpush1.msra.mxu0 %v2345
    %3198 = vmatprep.subr.mxu0 0.0
    %3199 = vmatpush1.msra.mxu0 %v2346
    %3200 = vmatprep.subr.mxu0 0.0
    %3201 = vmatpush1.msra.mxu0 0.0
    %3202 = vmatprep.subr.mxu0 0.0
    %3203 = vmatpush1.msra.mxu0 0.0
    %3204 = vmatprep.subr.mxu0 0.0
    %3205 = vmatpush1.msra.mxu0 0.0
    %3206 = vmatprep.subr.mxu0 0.0
    %3207 = vmatpush1.msra.mxu0 0.0
    %3208 = vmatprep.subr.mxu0 0.0
    %3209 = vmatpush1.msra.mxu0 0.0
    %3210 = vmatprep.subr.mxu0 0.0
    %3211 = vmatpush1.msra.mxu0 0.0
    %3212 = vmatprep.subr.mxu0 0.0
    %3213 = vmatpush1.msra.mxu0 0.0
    %3214 = vmatprep.subr.mxu0 0.0
    %3215 = vmatpush1.msra.mxu0 0.0
    %3216 = vmatprep.subr.mxu0 0.0
    %3217 = vmatpush1.msra.mxu0 0.0
    %3218 = vmatprep.subr.mxu0 0.0
    %3219 = vmatpush1.msra.mxu0 0.0
    %3220 = vmatprep.subr.mxu0 0.0
    %3221 = vmatpush1.msra.mxu0 0.0
    %3222 = vmatprep.subr.mxu0 0.0
    %3223 = vmatpush1.msra.mxu0 0.0
    %3224 = vmatprep.subr.mxu0 0.0
    %3225 = vmatpush1.msra.mxu0 0.0
    %3226 = vmatprep.subr.mxu0 0.0
    %3227 = vmatpush1.msra.mxu0 0.0
    %3228 = vmatprep.subr.mxu0 0.0
    %3229 = vmatpush1.msra.mxu0 0.0
    %3230 = vmatprep.subr.mxu0 0.0
    %3231 = vmatpush1.msra.mxu0 0.0
    %3232 = vmatprep.subr.mxu0 0.0
    %3233 = vmatpush1.msra.mxu0 0.0
    %3234 = vmatprep.subr.mxu0 0.0
    %3235 = vmatpush1.msra.mxu0 0.0
    %3236 = vmatprep.subr.mxu0 0.0
    %3237 = vmatpush1.msra.mxu0 0.0
    %3238 = vmatprep.subr.mxu0 0.0
    %3239 = vmatpush1.msra.mxu0 0.0
    %3240 = vmatprep.subr.mxu0 0.0
    %3241 = vmatpush1.msra.mxu0 0.0
    %3242 = vmatprep.subr.mxu0 0.0
    %3243 = vmatpush1.msra.mxu0 0.0
    %3244 = vmatprep.subr.mxu0 0.0
    %3245 = vmatpush1.msra.mxu0 0.0
    %3246 = vmatprep.subr.mxu0 0.0
    %3247 = vmatpush1.msra.mxu0 0.0
    %3248 = vmatprep.subr.mxu0 0.0
    %3249 = vmatpush1.msra.mxu0 0.0
    %3250 = vmatprep.subr.mxu0 0.0
    %3251 = vmatpush1.msra.mxu0 0.0
    %3252 = vmatprep.subr.mxu0 0.0
    %3253 = vmatpush1.msra.mxu0 0.0
    %3254 = vmatprep.subr.mxu0 0.0
    %3255 = vmatpush1.msra.mxu0 0.0
    %3256 = vmatprep.mubr.f32.mxu0 0.0
    %3257 = vmatmul.mubr.f32.gmra.mrb[0].mxu0 %v3190
    %v3258 = vpop.f32.mrb[0].mxu0
    %v3259 = vadd.f32 0.0, %v3258
    %v3260 = vpop.f32.mrb[0].mxu0
    %3261 = vdwg.mxu0
    %v3263 = vrot.slane %v3259, 7
    %v3266 = vadd.f32 %v2329, %v3263
    %v3267 = vadd.f32 %v2333, %v3259
    %v3268 = vxor.u32 %v3266, 2147483648
    %v3269 = vxor.u32 %v3267, 2147483648
    %v3270 = vmul.f32 %v3268, 1.442695
    %v3271 = vpow.pop %v3270
    %v3272 = vmul.f32 %v3269, 1.442695
    %v3273 = vpow.pop %v3272
    %v3274 = vadd.f32 %v3271, 1.0
    %v3275 = vadd.f32 %v3273, 1.0
    %v3276 = vrcp.pop %v3274
    %v3277 = vmul.f32 1.0, %v3276
    %v3278 = vrcp.pop %v3275
    %v3279 = vmul.f32 1.0, %v3278
    %v3280 = vtanh.pop %v3266
    %v3281 = vtanh.pop %v3267
    %v3284 = vrot.slane %v2736, 7
    %v3285 = vrot.slane %v2737, 7
    %v3288 = vmul.f32 %v3277, %v3284
    %v3289 = vmul.f32 %v3279, %v3285
    %3292 = vrot.lane.b32.xlu0 %v3280, 64
    %v3293 = vpop.permute.xlu0 %3292
    %3294 = vrot.lane.b32.xlu0 %v3281, 64
    %v3295 = vpop.permute.xlu0 %3294
    %v3298 = vmul.f32 %v3277, %v3293
    %v3299 = vmul.f32 %v3279, %v3295
    %3302 = vrot.lane.b32.xlu0 %v3298, 32
    %v3303 = vpop.permute.xlu0 %3302
    %3304 = vrot.lane.b32.xlu0 %v3299, 32
    %v3305 = vpop.permute.xlu0 %3304
    %v3308 = vadd.f32 %v3288, %v3303
    %v3309 = vadd.f32 %v3289, %v3305
    %v3310 = vtanh.pop %v3308
    %v3311 = vtanh.pop %v3309
    %3314 = vrot.lane.b32.xlu0 %v3310, 64
    %v3315 = vpop.permute.xlu0 %3314
    %3316 = vrot.lane.b32.xlu0 %v3311, 64
    %v3317 = vpop.permute.xlu0 %3316
    %v3320 = vmul.f32 %v3277, %v3315
    %v3321 = vmul.f32 %v3279, %v3317
    %3324 = vrot.lane.b32.xlu0 %v3320, 96
    %v3325 = vpop.permute.xlu0 %3324
    %3326 = vrot.lane.b32.xlu0 %v3321, 96
    %v3327 = vpop.permute.xlu0 %3326
    %vm3330 = vcmask 779777
    %3331 = vst.msk [vmem:[#allocation2] sm:$0x2] %vm3330, %v3325
    %3332 = vst.msk [vmem:[#allocation2 + $0x8] sm:$0x2] %vm3330, %v3327
    %v3335 = vrot.slane %v2884, 7
    %v3336 = vrot.slane %v2885, 6
    %v3337 = vsel %vm2890, %v3336, %v3335
    %3338 = vrot.lane.b32.xlu0 %v3337, 32
    %v3339 = vpop.permute.xlu0 %3338
    %v3340 = vsel %vm2351, %v3339, 0
    %3342 = vmatprep.subr.mxu0 0.0
    %3343 = vmatpush1.msra.mxu0 %v2347
    %3344 = vmatprep.subr.mxu0 0.0
    %3345 = vmatpush1.msra.mxu0 %v2348
    %3346 = vmatprep.subr.mxu0 0.0
    %3347 = vmatpush1.msra.mxu0 %v2349
    %3348 = vmatprep.subr.mxu0 0.0
    %3349 = vmatpush1.msra.mxu0 %v2350
    %3350 = vmatprep.subr.mxu0 0.0
    %3351 = vmatpush1.msra.mxu0 0.0
    %3352 = vmatprep.subr.mxu0 0.0
    %3353 = vmatpush1.msra.mxu0 0.0
    %3354 = vmatprep.subr.mxu0 0.0
    %3355 = vmatpush1.msra.mxu0 0.0
    %3356 = vmatprep.subr.mxu0 0.0
    %3357 = vmatpush1.msra.mxu0 0.0
    %3358 = vmatprep.subr.mxu0 0.0
    %3359 = vmatpush1.msra.mxu0 0.0
    %3360 = vmatprep.subr.mxu0 0.0
    %3361 = vmatpush1.msra.mxu0 0.0
    %3362 = vmatprep.subr.mxu0 0.0
    %3363 = vmatpush1.msra.mxu0 0.0
    %3364 = vmatprep.subr.mxu0 0.0
    %3365 = vmatpush1.msra.mxu0 0.0
    %3366 = vmatprep.subr.mxu0 0.0
    %3367 = vmatpush1.msra.mxu0 0.0
    %3368 = vmatprep.subr.mxu0 0.0
    %3369 = vmatpush1.msra.mxu0 0.0
    %3370 = vmatprep.subr.mxu0 0.0
    %3371 = vmatpush1.msra.mxu0 0.0
    %3372 = vmatprep.subr.mxu0 0.0
    %3373 = vmatpush1.msra.mxu0 0.0
    %3374 = vmatprep.subr.mxu0 0.0
    %3375 = vmatpush1.msra.mxu0 0.0
    %3376 = vmatprep.subr.mxu0 0.0
    %3377 = vmatpush1.msra.mxu0 0.0
    %3378 = vmatprep.subr.mxu0 0.0
    %3379 = vmatpush1.msra.mxu0 0.0
    %3380 = vmatprep.subr.mxu0 0.0
    %3381 = vmatpush1.msra.mxu0 0.0
    %3382 = vmatprep.subr.mxu0 0.0
    %3383 = vmatpush1.msra.mxu0 0.0
    %3384 = vmatprep.subr.mxu0 0.0
    %3385 = vmatpush1.msra.mxu0 0.0
    %3386 = vmatprep.subr.mxu0 0.0
    %3387 = vmatpush1.msra.mxu0 0.0
    %3388 = vmatprep.subr.mxu0 0.0
    %3389 = vmatpush1.msra.mxu0 0.0
    %3390 = vmatprep.subr.mxu0 0.0
    %3391 = vmatpush1.msra.mxu0 0.0
    %3392 = vmatprep.subr.mxu0 0.0
    %3393 = vmatpush1.msra.mxu0 0.0
    %3394 = vmatprep.subr.mxu0 0.0
    %3395 = vmatpush1.msra.mxu0 0.0
    %3396 = vmatprep.subr.mxu0 0.0
    %3397 = vmatpush1.msra.mxu0 0.0
    %3398 = vmatprep.subr.mxu0 0.0
    %3399 = vmatpush1.msra.mxu0 0.0
    %3400 = vmatprep.subr.mxu0 0.0
    %3401 = vmatpush1.msra.mxu0 0.0
    %3402 = vmatprep.subr.mxu0 0.0
    %3403 = vmatpush1.msra.mxu0 0.0
    %3404 = vmatprep.subr.mxu0 0.0
    %3405 = vmatpush1.msra.mxu0 0.0
    %3406 = vmatprep.mubr.f32.mxu0 0.0
    %3407 = vmatmul.mubr.f32.gmra.mrb[0].mxu0 %v3340
    %v3408 = vpop.f32.mrb[0].mxu0
    %v3409 = vadd.f32 0.0, %v3408
    %v3410 = vpop.f32.mrb[0].mxu0
    %3411 = vdwg.mxu0
    %v3413 = vrot.slane %v3409, 2
    %v3414 = vrot.slane %v3409, 3
    %v3417 = vadd.f32 %v2330, %v3413
    %v3418 = vadd.f32 %v2334, %v3414
    %v3419 = vxor.u32 %v3417, 2147483648
    %v3420 = vxor.u32 %v3418, 2147483648
    %v3421 = vmul.f32 %v3419, 1.442695
    %v3422 = vpow.pop %v3421
    %v3423 = vmul.f32 %v3420, 1.442695
    %v3424 = vpow.pop %v3423
    %v3425 = vadd.f32 %v3422, 1.0
    %v3426 = vadd.f32 %v3424, 1.0
    %v3427 = vrcp.pop %v3425
    %v3428 = vmul.f32 1.0, %v3427
    %v3429 = vrcp.pop %v3426
    %v3430 = vmul.f32 1.0, %v3429
    %v3431 = vtanh.pop %v3417
    %v3432 = vtanh.pop %v3418
    %v3435 = vrot.slane %v2872, 1
    %v3436 = vrot.slane %v2873, 1
    %v3439 = vmul.f32 %v3428, %v3435
    %v3440 = vmul.f32 %v3430, %v3436
    %3443 = vrot.lane.b32.xlu0 %v3431, 64
    %v3444 = vpop.permute.xlu0 %3443
    %3445 = vrot.lane.b32.xlu0 %v3432, 64
    %v3446 = vpop.permute.xlu0 %3445
    %v3449 = vmul.f32 %v3428, %v3444
    %v3450 = vmul.f32 %v3430, %v3446
    %3453 = vrot.lane.b32.xlu0 %v3449, 32
    %v3454 = vpop.permute.xlu0 %3453
    %3455 = vrot.lane.b32.xlu0 %v3450, 32
    %v3456 = vpop.permute.xlu0 %3455
    %v3459 = vadd.f32 %v3439, %v3454
    %v3460 = vadd.f32 %v3440, %v3456
    %v3461 = vtanh.pop %v3459
    %v3462 = vtanh.pop %v3460
    %3465 = vrot.lane.b32.xlu0 %v3461, 64
    %v3466 = vpop.permute.xlu0 %3465
    %3467 = vrot.lane.b32.xlu0 %v3462, 64
    %v3468 = vpop.permute.xlu0 %3467
    %v3471 = vmul.f32 %v3428, %v3466
    %v3472 = vmul.f32 %v3430, %v3468
    %vm3473 = vcmask 1047302
    %3474 = vst.msk [vmem:[#allocation2] sm:$0x40] %vm3473, %v3471
    %3475 = vst.msk [vmem:[#allocation2 + $0x8] sm:$0x40] %vm3473, %v3472
    %v3476 = vrot.slane %v3024, 1
    %v3477 = vsel %vm2890, %v3025, %v3476
    %3478 = vrot.lane.b32.xlu0 %v3477, 32
    %v3479 = vpop.permute.xlu0 %3478
    %v3480 = vsel %vm2351, %v3479, 0
    %3482 = vmatprep.subr.mxu0 0.0
    %3483 = vmatpush1.msra.mxu0 %v2335
    %3484 = vmatprep.subr.mxu0 0.0
    %3485 = vmatpush1.msra.mxu0 %v2336
    %3486 = vmatprep.subr.mxu0 0.0
    %3487 = vmatpush1.msra.mxu0 %v2337
    %3488 = vmatprep.subr.mxu0 0.0
    %3489 = vmatpush1.msra.mxu0 %v2338
    %3490 = vmatprep.subr.mxu0 0.0
    %3491 = vmatpush1.msra.mxu0 0.0
    %3492 = vmatprep.subr.mxu0 0.0
    %3493 = vmatpush1.msra.mxu0 0.0
    %3494 = vmatprep.subr.mxu0 0.0
    %3495 = vmatpush1.msra.mxu0 0.0
    %3496 = vmatprep.subr.mxu0 0.0
    %3497 = vmatpush1.msra.mxu0 0.0
    %3498 = vmatprep.subr.mxu0 0.0
    %3499 = vmatpush1.msra.mxu0 0.0
    %3500 = vmatprep.subr.mxu0 0.0
    %3501 = vmatpush1.msra.mxu0 0.0
    %3502 = vmatprep.subr.mxu0 0.0
    %3503 = vmatpush1.msra.mxu0 0.0
    %3504 = vmatprep.subr.mxu0 0.0
    %3505 = vmatpush1.msra.mxu0 0.0
    %3506 = vmatprep.subr.mxu0 0.0
    %3507 = vmatpush1.msra.mxu0 0.0
    %3508 = vmatprep.subr.mxu0 0.0
    %3509 = vmatpush1.msra.mxu0 0.0
    %3510 = vmatprep.subr.mxu0 0.0
    %3511 = vmatpush1.msra.mxu0 0.0
    %3512 = vmatprep.subr.mxu0 0.0
    %3513 = vmatpush1.msra.mxu0 0.0
    %3514 = vmatprep.subr.mxu0 0.0
    %3515 = vmatpush1.msra.mxu0 0.0
    %3516 = vmatprep.subr.mxu0 0.0
    %3517 = vmatpush1.msra.mxu0 0.0
    %3518 = vmatprep.subr.mxu0 0.0
    %3519 = vmatpush1.msra.mxu0 0.0
    %3520 = vmatprep.subr.mxu0 0.0
    %3521 = vmatpush1.msra.mxu0 0.0
    %3522 = vmatprep.subr.mxu0 0.0
    %3523 = vmatpush1.msra.mxu0 0.0
    %3524 = vmatprep.subr.mxu0 0.0
    %3525 = vmatpush1.msra.mxu0 0.0
    %3526 = vmatprep.subr.mxu0 0.0
    %3527 = vmatpush1.msra.mxu0 0.0
    %3528 = vmatprep.subr.mxu0 0.0
    %3529 = vmatpush1.msra.mxu0 0.0
    %3530 = vmatprep.subr.mxu0 0.0
    %3531 = vmatpush1.msra.mxu0 0.0
    %3532 = vmatprep.subr.mxu0 0.0
    %3533 = vmatpush1.msra.mxu0 0.0
    %3534 = vmatprep.subr.mxu0 0.0
    %3535 = vmatpush1.msra.mxu0 0.0
    %3536 = vmatprep.subr.mxu0 0.0
    %3537 = vmatpush1.msra.mxu0 0.0
    %3538 = vmatprep.subr.mxu0 0.0
    %3539 = vmatpush1.msra.mxu0 0.0
    %3540 = vmatprep.subr.mxu0 0.0
    %3541 = vmatpush1.msra.mxu0 0.0
    %3542 = vmatprep.subr.mxu0 0.0
    %3543 = vmatpush1.msra.mxu0 0.0
    %3544 = vmatprep.subr.mxu0 0.0
    %3545 = vmatpush1.msra.mxu0 0.0
    %3546 = vmatprep.mubr.f32.mxu0 0.0
    %3547 = vmatmul.mubr.f32.gmra.mrb[0].mxu0 %v3480
    %v3548 = vpop.f32.mrb[0].mxu0
    %v3549 = vadd.f32 0.0, %v3548
    %v3550 = vpop.f32.mrb[0].mxu0
    %3551 = vdwg.mxu0
    %v3553 = vrot.slane %v3549, 6
    %v3554 = vrot.slane %v3549, 7
    %v3557 = vadd.f32 %v2327, %v3553
    %v3558 = vadd.f32 %v2331, %v3554
    %v3559 = vxor.u32 %v3557, 2147483648
    %v3560 = vxor.u32 %v3558, 2147483648
    %v3561 = vmul.f32 %v3559, 1.442695
    %v3562 = vpow.pop %v3561
    %v3563 = vmul.f32 %v3560, 1.442695
    %v3564 = vpow.pop %v3563
    %v3565 = vadd.f32 %v3562, 1.0
    %v3566 = vadd.f32 %v3564, 1.0
    %v3567 = vrcp.pop %v3565
    %v3568 = vmul.f32 1.0, %v3567
    %v3569 = vrcp.pop %v3566
    %v3570 = vmul.f32 1.0, %v3569
    %v3571 = vtanh.pop %v3557
    %v3572 = vtanh.pop %v3558
    %v3575 = vrot.slane %v3012, 7
    %v3576 = vrot.slane %v3013, 7
    %v3579 = vmul.f32 %v3568, %v3575
    %v3580 = vmul.f32 %v3570, %v3576
    %3583 = vrot.lane.b32.xlu0 %v3571, 64
    %v3584 = vpop.permute.xlu0 %3583
    %3585 = vrot.lane.b32.xlu0 %v3572, 64
    %v3586 = vpop.permute.xlu0 %3585
    %v3589 = vmul.f32 %v3568, %v3584
    %v3590 = vmul.f32 %v3570, %v3586
    %3593 = vrot.lane.b32.xlu0 %v3589, 32
    %v3594 = vpop.permute.xlu0 %3593
    %3595 = vrot.lane.b32.xlu0 %v3590, 32
    %v3596 = vpop.permute.xlu0 %3595
    %v3599 = vadd.f32 %v3579, %v3594
    %v3600 = vadd.f32 %v3580, %v3596
    %v3601 = vtanh.pop %v3599
    %v3602 = vtanh.pop %v3600
    %3605 = vrot.lane.b32.xlu0 %v3601, 64
    %v3606 = vpop.permute.xlu0 %3605
    %3607 = vrot.lane.b32.xlu0 %v3602, 64
    %v3608 = vpop.permute.xlu0 %3607
    %v3611 = vmul.f32 %v3568, %v3606
    %v3612 = vmul.f32 %v3570, %v3608
    %3615 = vrot.lane.b32.xlu0 %v3611, 32
    %v3616 = vpop.permute.xlu0 %3615
    %3617 = vrot.lane.b32.xlu0 %v3612, 32
    %v3618 = vpop.permute.xlu0 %3617
    %vm3621 = vcmask 256002
    %3622 = vst.msk [vmem:[#allocation2] sm:$0x4] %vm3621, %v3616
    %3623 = vst.msk [vmem:[#allocation2 + $0x8] sm:$0x4] %vm3621, %v3618
    %v3624 = vrot.slane %v3173, 6
    %v3625 = vrot.slane %v3174, 5
    %v3626 = vsel %vm2890, %v3625, %v3624
    %3627 = vrot.lane.b32.xlu0 %v3626, 32
    %v3628 = vpop.permute.xlu0 %3627
    %v3629 = vsel %vm2351, %v3628, 0
    %3631 = vmatprep.subr.mxu0 0.0
    %3632 = vmatpush1.msra.mxu0 %v2339
    %3633 = vmatprep.subr.mxu0 0.0
    %3634 = vmatpush1.msra.mxu0 %v2340
    %3635 = vmatprep.subr.mxu0 0.0
    %3636 = vmatpush1.msra.mxu0 %v2341
    %3637 = vmatprep.subr.mxu0 0.0
    %3638 = vmatpush1.msra.mxu0 %v2342
    %3639 = vmatprep.subr.mxu0 0.0
    %3640 = vmatpush1.msra.mxu0 0.0
    %3641 = vmatprep.subr.mxu0 0.0
    %3642 = vmatpush1.msra.mxu0 0.0
    %3643 = vmatprep.subr.mxu0 0.0
    %3644 = vmatpush1.msra.mxu0 0.0
    %3645 = vmatprep.subr.mxu0 0.0
    %3646 = vmatpush1.msra.mxu0 0.0
    %3647 = vmatprep.subr.mxu0 0.0
    %3648 = vmatpush1.msra.mxu0 0.0
    %3649 = vmatprep.subr.mxu0 0.0
    %3650 = vmatpush1.msra.mxu0 0.0
    %3651 = vmatprep.subr.mxu0 0.0
    %3652 = vmatpush1.msra.mxu0 0.0
    %3653 = vmatprep.subr.mxu0 0.0
    %3654 = vmatpush1.msra.mxu0 0.0
    %3655 = vmatprep.subr.mxu0 0.0
    %3656 = vmatpush1.msra.mxu0 0.0
    %3657 = vmatprep.subr.mxu0 0.0
    %3658 = vmatpush1.msra.mxu0 0.0
    %3659 = vmatprep.subr.mxu0 0.0
    %3660 = vmatpush1.msra.mxu0 0.0
    %3661 = vmatprep.subr.mxu0 0.0
    %3662 = vmatpush1.msra.mxu0 0.0
    %3663 = vmatprep.subr.mxu0 0.0
    %3664 = vmatpush1.msra.mxu0 0.0
    %3665 = vmatprep.subr.mxu0 0.0
    %3666 = vmatpush1.msra.mxu0 0.0
    %3667 = vmatprep.subr.mxu0 0.0
    %3668 = vmatpush1.msra.mxu0 0.0
    %3669 = vmatprep.subr.mxu0 0.0
    %3670 = vmatpush1.msra.mxu0 0.0
    %3671 = vmatprep.subr.mxu0 0.0
    %3672 = vmatpush1.msra.mxu0 0.0
    %3673 = vmatprep.subr.mxu0 0.0
    %3674 = vmatpush1.msra.mxu0 0.0
    %3675 = vmatprep.subr.mxu0 0.0
    %3676 = vmatpush1.msra.mxu0 0.0
    %3677 = vmatprep.subr.mxu0 0.0
    %3678 = vmatpush1.msra.mxu0 0.0
    %3679 = vmatprep.subr.mxu0 0.0
    %3680 = vmatpush1.msra.mxu0 0.0
    %3681 = vmatprep.subr.mxu0 0.0
    %3682 = vmatpush1.msra.mxu0 0.0
    %3683 = vmatprep.subr.mxu0 0.0
    %3684 = vmatpush1.msra.mxu0 0.0
    %3685 = vmatprep.subr.mxu0 0.0
    %3686 = vmatpush1.msra.mxu0 0.0
    %3687 = vmatprep.subr.mxu0 0.0
    %3688 = vmatpush1.msra.mxu0 0.0
    %3689 = vmatprep.subr.mxu0 0.0
    %3690 = vmatpush1.msra.mxu0 0.0
    %3691 = vmatprep.subr.mxu0 0.0
    %3692 = vmatpush1.msra.mxu0 0.0
    %3693 = vmatprep.subr.mxu0 0.0
    %3694 = vmatpush1.msra.mxu0 0.0
    %3695 = vmatprep.mubr.f32.mxu0 0.0
    %3696 = vmatmul.mubr.f32.gmra.mrb[0].mxu0 %v3629
    %v3697 = vpop.f32.mrb[0].mxu0
    %v3698 = vadd.f32 0.0, %v3697
    %v3699 = vpop.f32.mrb[0].mxu0
    %3700 = vdwg.mxu0
    %v3702 = vrot.slane %v3698, 3
    %v3703 = vrot.slane %v3698, 4
    %v3706 = vadd.f32 %v2328, %v3702
    %v3707 = vadd.f32 %v2332, %v3703
    %v3708 = vxor.u32 %v3706, 2147483648
    %v3709 = vxor.u32 %v3707, 2147483648
    %v3710 = vmul.f32 %v3708, 1.442695
    %v3711 = vpow.pop %v3710
    %v3712 = vmul.f32 %v3709, 1.442695
    %v3713 = vpow.pop %v3712
    %v3714 = vadd.f32 %v3711, 1.0
    %v3715 = vadd.f32 %v3713, 1.0
    %v3716 = vrcp.pop %v3714
    %v3717 = vmul.f32 1.0, %v3716
    %v3718 = vrcp.pop %v3715
    %v3719 = vmul.f32 1.0, %v3718
    %v3720 = vtanh.pop %v3706
    %v3721 = vtanh.pop %v3707
    %v3724 = vrot.slane %v3161, 1
    %v3725 = vrot.slane %v3162, 1
    %v3728 = vmul.f32 %v3717, %v3724
    %v3729 = vmul.f32 %v3719, %v3725
    %3732 = vrot.lane.b32.xlu0 %v3720, 64
    %v3733 = vpop.permute.xlu0 %3732
    %3734 = vrot.lane.b32.xlu0 %v3721, 64
    %v3735 = vpop.permute.xlu0 %3734
    %v3738 = vmul.f32 %v3717, %v3733
    %v3739 = vmul.f32 %v3719, %v3735
    %3742 = vrot.lane.b32.xlu0 %v3738, 32
    %v3743 = vpop.permute.xlu0 %3742
    %3744 = vrot.lane.b32.xlu0 %v3739, 32
    %v3745 = vpop.permute.xlu0 %3744
    %v3748 = vadd.f32 %v3728, %v3743
    %v3749 = vadd.f32 %v3729, %v3745
    %v3750 = vtanh.pop %v3748
    %v3751 = vtanh.pop %v3749
    %3754 = vrot.lane.b32.xlu0 %v3750, 64
    %v3755 = vpop.permute.xlu0 %3754
    %3756 = vrot.lane.b32.xlu0 %v3751, 64
    %v3757 = vpop.permute.xlu0 %3756
    %v3760 = vmul.f32 %v3717, %v3755
    %v3761 = vmul.f32 %v3719, %v3757
    %3764 = vrot.lane.b32.xlu0 %v3760, 64
    %v3765 = vpop.permute.xlu0 %3764
    %3766 = vrot.lane.b32.xlu0 %v3761, 64
    %v3767 = vpop.permute.xlu0 %3766
    %vm3770 = vcmask 521477
    %3771 = vst.msk [vmem:[#allocation2] sm:$0x20] %vm3770, %v3765
    %3772 = vst.msk [vmem:[#allocation2 + $0x8] sm:$0x20] %vm3770, %v3767
    %v3773 = vrot.slane %v3320, 1
    %v3774 = vsel %vm2890, %v3321, %v3773
    %3775 = vrot.lane.b32.xlu0 %v3774, 32
    %v3776 = vpop.permute.xlu0 %3775
    %v3777 = vsel %vm2351, %v3776, 0
    %3779 = vmatprep.subr.mxu0 0.0
    %3780 = vmatpush1.msra.mxu0 %v2343
    %3781 = vmatprep.subr.mxu0 0.0
    %3782 = vmatpush1.msra.mxu0 %v2344
    %3783 = vmatprep.subr.mxu0 0.0
    %3784 = vmatpush1.msra.mxu0 %v2345
    %3785 = vmatprep.subr.mxu0 0.0
    %3786 = vmatpush1.msra.mxu0 %v2346
    %3787 = vmatprep.subr.mxu0 0.0
    %3788 = vmatpush1.msra.mxu0 0.0
    %3789 = vmatprep.subr.mxu0 0.0
    %3790 = vmatpush1.msra.mxu0 0.0
    %3791 = vmatprep.subr.mxu0 0.0
    %3792 = vmatpush1.msra.mxu0 0.0
    %3793 = vmatprep.subr.mxu0 0.0
    %3794 = vmatpush1.msra.mxu0 0.0
    %3795 = vmatprep.subr.mxu0 0.0
    %3796 = vmatpush1.msra.mxu0 0.0
    %3797 = vmatprep.subr.mxu0 0.0
    %3798 = vmatpush1.msra.mxu0 0.0
    %3799 = vmatprep.subr.mxu0 0.0
    %3800 = vmatpush1.msra.mxu0 0.0
    %3801 = vmatprep.subr.mxu0 0.0
    %3802 = vmatpush1.msra.mxu0 0.0
    %3803 = vmatprep.subr.mxu0 0.0
    %3804 = vmatpush1.msra.mxu0 0.0
    %3805 = vmatprep.subr.mxu0 0.0
    %3806 = vmatpush1.msra.mxu0 0.0
    %3807 = vmatprep.subr.mxu0 0.0
    %3808 = vmatpush1.msra.mxu0 0.0
    %3809 = vmatprep.subr.mxu0 0.0
    %3810 = vmatpush1.msra.mxu0 0.0
    %3811 = vmatprep.subr.mxu0 0.0
    %3812 = vmatpush1.msra.mxu0 0.0
    %3813 = vmatprep.subr.mxu0 0.0
    %3814 = vmatpush1.msra.mxu0 0.0
    %3815 = vmatprep.subr.mxu0 0.0
    %3816 = vmatpush1.msra.mxu0 0.0
    %3817 = vmatprep.subr.mxu0 0.0
    %3818 = vmatpush1.msra.mxu0 0.0
    %3819 = vmatprep.subr.mxu0 0.0
    %3820 = vmatpush1.msra.mxu0 0.0
    %3821 = vmatprep.subr.mxu0 0.0
    %3822 = vmatpush1.msra.mxu0 0.0
    %3823 = vmatprep.subr.mxu0 0.0
    %3824 = vmatpush1.msra.mxu0 0.0
    %3825 = vmatprep.subr.mxu0 0.0
    %3826 = vmatpush1.msra.mxu0 0.0
    %3827 = vmatprep.subr.mxu0 0.0
    %3828 = vmatpush1.msra.mxu0 0.0
    %3829 = vmatprep.subr.mxu0 0.0
    %3830 = vmatpush1.msra.mxu0 0.0
    %3831 = vmatprep.subr.mxu0 0.0
    %3832 = vmatpush1.msra.mxu0 0.0
    %3833 = vmatprep.subr.mxu0 0.0
    %3834 = vmatpush1.msra.mxu0 0.0
    %3835 = vmatprep.subr.mxu0 0.0
    %3836 = vmatpush1.msra.mxu0 0.0
    %3837 = vmatprep.subr.mxu0 0.0
    %3838 = vmatpush1.msra.mxu0 0.0
    %3839 = vmatprep.subr.mxu0 0.0
    %3840 = vmatpush1.msra.mxu0 0.0
    %3841 = vmatprep.subr.mxu0 0.0
    %3842 = vmatpush1.msra.mxu0 0.0
    %3843 = vmatprep.mubr.f32.mxu0 0.0
    %3844 = vmatmul.mubr.f32.gmra.mrb[0].mxu0 %v3777
    %v3845 = vpop.f32.mrb[0].mxu0
    %v3846 = vadd.f32 0.0, %v3845
    %v3847 = vpop.f32.mrb[0].mxu0
    %3848 = vdwg.mxu0
    %v3850 = vrot.slane %v3846, 6
    %v3851 = vrot.slane %v3846, 7
    %v3854 = vadd.f32 %v2329, %v3850
    %v3855 = vadd.f32 %v2333, %v3851
    %v3856 = vxor.u32 %v3854, 2147483648
    %v3857 = vxor.u32 %v3855, 2147483648
    %v3858 = vmul.f32 %v3856, 1.442695
    %v3859 = vpow.pop %v3858
    %v3860 = vmul.f32 %v3857, 1.442695
    %v3861 = vpow.pop %v3860
    %v3862 = vadd.f32 %v3859, 1.0
    %v3863 = vadd.f32 %v3861, 1.0
    %v3864 = vrcp.pop %v3862
    %v3865 = vmul.f32 1.0, %v3864
    %v3866 = vrcp.pop %v3863
    %v3867 = vmul.f32 1.0, %v3866
    %v3868 = vtanh.pop %v3854
    %v3869 = vtanh.pop %v3855
    %v3872 = vrot.slane %v3308, 7
    %v3873 = vrot.slane %v3309, 7
    %v3876 = vmul.f32 %v3865, %v3872
    %v3877 = vmul.f32 %v3867, %v3873
    %3880 = vrot.lane.b32.xlu0 %v3868, 64
    %v3881 = vpop.permute.xlu0 %3880
    %3882 = vrot.lane.b32.xlu0 %v3869, 64
    %v3883 = vpop.permute.xlu0 %3882
    %v3886 = vmul.f32 %v3865, %v3881
    %v3887 = vmul.f32 %v3867, %v3883
    %3890 = vrot.lane.b32.xlu0 %v3886, 32
    %v3891 = vpop.permute.xlu0 %3890
    %3892 = vrot.lane.b32.xlu0 %v3887, 32
    %v3893 = vpop.permute.xlu0 %3892
    %v3896 = vadd.f32 %v3876, %v3891
    %v3897 = vadd.f32 %v3877, %v3893
    %v3898 = vtanh.pop %v3896
    %v3899 = vtanh.pop %v3897
    %3902 = vrot.lane.b32.xlu0 %v3898, 64
    %v3903 = vpop.permute.xlu0 %3902
    %3904 = vrot.lane.b32.xlu0 %v3899, 64
    %v3905 = vpop.permute.xlu0 %3904
    %v3908 = vmul.f32 %v3865, %v3903
    %v3909 = vmul.f32 %v3867, %v3905
    %3912 = vrot.lane.b32.xlu0 %v3908, 96
    %v3913 = vpop.permute.xlu0 %3912
    %3914 = vrot.lane.b32.xlu0 %v3909, 96
    %v3915 = vpop.permute.xlu0 %3914
    %vm3918 = vcmask 780802
    %3919 = vst.msk [vmem:[#allocation2] sm:$0x4] %vm3918, %v3913
    %3920 = vst.msk [vmem:[#allocation2 + $0x8] sm:$0x4] %vm3918, %v3915
    %v3923 = vrot.slane %v3471, 6
    %v3924 = vrot.slane %v3472, 5
    %v3925 = vsel %vm2890, %v3924, %v3923
    %3926 = vrot.lane.b32.xlu0 %v3925, 32
    %v3927 = vpop.permute.xlu0 %3926
    %v3928 = vsel %vm2351, %v3927, 0
    %3930 = vmatprep.subr.mxu0 0.0
    %3931 = vmatpush1.msra.mxu0 %v2347
    %3932 = vmatprep.subr.mxu0 0.0
    %3933 = vmatpush1.msra.mxu0 %v2348
    %3934 = vmatprep.subr.mxu0 0.0
    %3935 = vmatpush1.msra.mxu0 %v2349
    %3936 = vmatprep.subr.mxu0 0.0
    %3937 = vmatpush1.msra.mxu0 %v2350
    %3938 = vmatprep.subr.mxu0 0.0
    %3939 = vmatpush1.msra.mxu0 0.0
    %3940 = vmatprep.subr.mxu0 0.0
    %3941 = vmatpush1.msra.mxu0 0.0
    %3942 = vmatprep.subr.mxu0 0.0
    %3943 = vmatpush1.msra.mxu0 0.0
    %3944 = vmatprep.subr.mxu0 0.0
    %3945 = vmatpush1.msra.mxu0 0.0
    %3946 = vmatprep.subr.mxu0 0.0
    %3947 = vmatpush1.msra.mxu0 0.0
    %3948 = vmatprep.subr.mxu0 0.0
    %3949 = vmatpush1.msra.mxu0 0.0
    %3950 = vmatprep.subr.mxu0 0.0
    %3951 = vmatpush1.msra.mxu0 0.0
    %3952 = vmatprep.subr.mxu0 0.0
    %3953 = vmatpush1.msra.mxu0 0.0
    %3954 = vmatprep.subr.mxu0 0.0
    %3955 = vmatpush1.msra.mxu0 0.0
    %3956 = vmatprep.subr.mxu0 0.0
    %3957 = vmatpush1.msra.mxu0 0.0
    %3958 = vmatprep.subr.mxu0 0.0
    %3959 = vmatpush1.msra.mxu0 0.0
    %3960 = vmatprep.subr.mxu0 0.0
    %3961 = vmatpush1.msra.mxu0 0.0
    %3962 = vmatprep.subr.mxu0 0.0
    %3963 = vmatpush1.msra.mxu0 0.0
    %3964 = vmatprep.subr.mxu0 0.0
    %3965 = vmatpush1.msra.mxu0 0.0
    %3966 = vmatprep.subr.mxu0 0.0
    %3967 = vmatpush1.msra.mxu0 0.0
    %3968 = vmatprep.subr.mxu0 0.0
    %3969 = vmatpush1.msra.mxu0 0.0
    %3970 = vmatprep.subr.mxu0 0.0
    %3971 = vmatpush1.msra.mxu0 0.0
    %3972 = vmatprep.subr.mxu0 0.0
    %3973 = vmatpush1.msra.mxu0 0.0
    %3974 = vmatprep.subr.mxu0 0.0
    %3975 = vmatpush1.msra.mxu0 0.0
    %3976 = vmatprep.subr.mxu0 0.0
    %3977 = vmatpush1.msra.mxu0 0.0
    %3978 = vmatprep.subr.mxu0 0.0
    %3979 = vmatpush1.msra.mxu0 0.0
    %3980 = vmatprep.subr.mxu0 0.0
    %3981 = vmatpush1.msra.mxu0 0.0
    %3982 = vmatprep.subr.mxu0 0.0
    %3983 = vmatpush1.msra.mxu0 0.0
    %3984 = vmatprep.subr.mxu0 0.0
    %3985 = vmatpush1.msra.mxu0 0.0
    %3986 = vmatprep.subr.mxu0 0.0
    %3987 = vmatpush1.msra.mxu0 0.0
    %3988 = vmatprep.subr.mxu0 0.0
    %3989 = vmatpush1.msra.mxu0 0.0
    %3990 = vmatprep.subr.mxu0 0.0
    %3991 = vmatpush1.msra.mxu0 0.0
    %3992 = vmatprep.subr.mxu0 0.0
    %3993 = vmatpush1.msra.mxu0 0.0
    %3994 = vmatprep.mubr.f32.mxu0 0.0
    %3995 = vmatmul.mubr.f32.gmra.mrb[0].mxu0 %v3928
    %v3996 = vpop.f32.mrb[0].mxu0
    %v3997 = vadd.f32 0.0, %v3996
    %v3998 = vpop.f32.mrb[0].mxu0
    %3999 = vdwg.mxu0
    %v4001 = vrot.slane %v3997, 3
    %v4002 = vrot.slane %v3997, 4
    %v4005 = vadd.f32 %v2330, %v4001
    %v4006 = vadd.f32 %v2334, %v4002
    %v4007 = vxor.u32 %v4005, 2147483648
    %v4008 = vxor.u32 %v4006, 2147483648
    %v4009 = vmul.f32 %v4007, 1.442695
    %v4010 = vpow.pop %v4009
    %v4011 = vmul.f32 %v4008, 1.442695
    %v4012 = vpow.pop %v4011
    %v4013 = vadd.f32 %v4010, 1.0
    %v4014 = vadd.f32 %v4012, 1.0
    %v4015 = vrcp.pop %v4013
    %v4016 = vmul.f32 1.0, %v4015
    %v4017 = vrcp.pop %v4014
    %v4018 = vmul.f32 1.0, %v4017
    %v4019 = vtanh.pop %v4005
    %v4020 = vtanh.pop %v4006
    %v4023 = vrot.slane %v3459, 1
    %v4024 = vrot.slane %v3460, 1
    %v4027 = vmul.f32 %v4016, %v4023
    %v4028 = vmul.f32 %v4018, %v4024
    %4031 = vrot.lane.b32.xlu0 %v4019, 64
    %v4032 = vpop.permute.xlu0 %4031
    %4033 = vrot.lane.b32.xlu0 %v4020, 64
    %v4034 = vpop.permute.xlu0 %4033
    %v4037 = vmul.f32 %v4016, %v4032
    %v4038 = vmul.f32 %v4018, %v4034
    %4041 = vrot.lane.b32.xlu0 %v4037, 32
    %v4042 = vpop.permute.xlu0 %4041
    %4043 = vrot.lane.b32.xlu0 %v4038, 32
    %v4044 = vpop.permute.xlu0 %4043
    %v4047 = vadd.f32 %v4027, %v4042
    %v4048 = vadd.f32 %v4028, %v4044
    %v4049 = vtanh.pop %v4047
    %v4050 = vtanh.pop %v4048
    %4053 = vrot.lane.b32.xlu0 %v4049, 64
    %v4054 = vpop.permute.xlu0 %4053
    %4055 = vrot.lane.b32.xlu0 %v4050, 64
    %v4056 = vpop.permute.xlu0 %4055
    %v4059 = vmul.f32 %v4016, %v4054
    %v4060 = vmul.f32 %v4018, %v4056
    %vm4061 = vcmask 1046277
    %4062 = vst.msk [vmem:[#allocation2] sm:$0x20] %vm4061, %v4059
    %4063 = vst.msk [vmem:[#allocation2 + $0x8] sm:$0x20] %vm4061, %v4060
    %v4064 = vrot.slane %v3611, 2
    %v4065 = vrot.slane %v3612, 1
    %v4066 = vsel %vm2890, %v4065, %v4064
    %4067 = vrot.lane.b32.xlu0 %v4066, 32
    %v4068 = vpop.permute.xlu0 %4067
    %v4069 = vsel %vm2351, %v4068, 0
    %4071 = vmatprep.subr.mxu0 0.0
    %4072 = vmatpush1.msra.mxu0 %v2335
    %4073 = vmatprep.subr.mxu0 0.0
    %4074 = vmatpush1.msra.mxu0 %v2336
    %4075 = vmatprep.subr.mxu0 0.0
    %4076 = vmatpush1.msra.mxu0 %v2337
    %4077 = vmatprep.subr.mxu0 0.0
    %4078 = vmatpush1.msra.mxu0 %v2338
    %4079 = vmatprep.subr.mxu0 0.0
    %4080 = vmatpush1.msra.mxu0 0.0
    %4081 = vmatprep.subr.mxu0 0.0
    %4082 = vmatpush1.msra.mxu0 0.0
    %4083 = vmatprep.subr.mxu0 0.0
    %4084 = vmatpush1.msra.mxu0 0.0
    %4085 = vmatprep.subr.mxu0 0.0
    %4086 = vmatpush1.msra.mxu0 0.0
    %4087 = vmatprep.subr.mxu0 0.0
    %4088 = vmatpush1.msra.mxu0 0.0
    %4089 = vmatprep.subr.mxu0 0.0
    %4090 = vmatpush1.msra.mxu0 0.0
    %4091 = vmatprep.subr.mxu0 0.0
    %4092 = vmatpush1.msra.mxu0 0.0
    %4093 = vmatprep.subr.mxu0 0.0
    %4094 = vmatpush1.msra.mxu0 0.0
    %4095 = vmatprep.subr.mxu0 0.0
    %4096 = vmatpush1.msra.mxu0 0.0
    %4097 = vmatprep.subr.mxu0 0.0
    %4098 = vmatpush1.msra.mxu0 0.0
    %4099 = vmatprep.subr.mxu0 0.0
    %4100 = vmatpush1.msra.mxu0 0.0
    %4101 = vmatprep.subr.mxu0 0.0
    %4102 = vmatpush1.msra.mxu0 0.0
    %4103 = vmatprep.subr.mxu0 0.0
    %4104 = vmatpush1.msra.mxu0 0.0
    %4105 = vmatprep.subr.mxu0 0.0
    %4106 = vmatpush1.msra.mxu0 0.0
    %4107 = vmatprep.subr.mxu0 0.0
    %4108 = vmatpush1.msra.mxu0 0.0
    %4109 = vmatprep.subr.mxu0 0.0
    %4110 = vmatpush1.msra.mxu0 0.0
    %4111 = vmatprep.subr.mxu0 0.0
    %4112 = vmatpush1.msra.mxu0 0.0
    %4113 = vmatprep.subr.mxu0 0.0
    %4114 = vmatpush1.msra.mxu0 0.0
    %4115 = vmatprep.subr.mxu0 0.0
    %4116 = vmatpush1.msra.mxu0 0.0
    %4117 = vmatprep.subr.mxu0 0.0
    %4118 = vmatpush1.msra.mxu0 0.0
    %4119 = vmatprep.subr.mxu0 0.0
    %4120 = vmatpush1.msra.mxu0 0.0
    %4121 = vmatprep.subr.mxu0 0.0
    %4122 = vmatpush1.msra.mxu0 0.0
    %4123 = vmatprep.subr.mxu0 0.0
    %4124 = vmatpush1.msra.mxu0 0.0
    %4125 = vmatprep.subr.mxu0 0.0
    %4126 = vmatpush1.msra.mxu0 0.0
    %4127 = vmatprep.subr.mxu0 0.0
    %4128 = vmatpush1.msra.mxu0 0.0
    %4129 = vmatprep.subr.mxu0 0.0
    %4130 = vmatpush1.msra.mxu0 0.0
    %4131 = vmatprep.subr.mxu0 0.0
    %4132 = vmatpush1.msra.mxu0 0.0
    %4133 = vmatprep.subr.mxu0 0.0
    %4134 = vmatpush1.msra.mxu0 0.0
    %4135 = vmatprep.mubr.f32.mxu0 0.0
    %4136 = vmatmul.mubr.f32.gmra.mrb[0].mxu0 %v4069
    %v4137 = vpop.f32.mrb[0].mxu0
    %v4138 = vadd.f32 0.0, %v4137
    %v4139 = vpop.f32.mrb[0].mxu0
    %4140 = vdwg.mxu0
    %v4142 = vrot.slane %v4138, 5
    %v4143 = vrot.slane %v4138, 6
    %v4146 = vadd.f32 %v2327, %v4142
    %v4147 = vadd.f32 %v2331, %v4143
    %v4148 = vxor.u32 %v4146, 2147483648
    %v4149 = vxor.u32 %v4147, 2147483648
    %v4150 = vmul.f32 %v4148, 1.442695
    %v4151 = vpow.pop %v4150
    %v4152 = vmul.f32 %v4149, 1.442695
    %v4153 = vpow.pop %v4152
    %v4154 = vadd.f32 %v4151, 1.0
    %v4155 = vadd.f32 %v4153, 1.0
    %v4156 = vrcp.pop %v4154
    %v4157 = vmul.f32 1.0, %v4156
    %v4158 = vrcp.pop %v4155
    %v4159 = vmul.f32 1.0, %v4158
    %v4160 = vtanh.pop %v4146
    %v4161 = vtanh.pop %v4147
    %v4164 = vrot.slane %v3599, 7
    %v4165 = vrot.slane %v3600, 7
    %v4168 = vmul.f32 %v4157, %v4164
    %v4169 = vmul.f32 %v4159, %v4165
    %4172 = vrot.lane.b32.xlu0 %v4160, 64
    %v4173 = vpop.permute.xlu0 %4172
    %4174 = vrot.lane.b32.xlu0 %v4161, 64
    %v4175 = vpop.permute.xlu0 %4174
    %v4178 = vmul.f32 %v4157, %v4173
    %v4179 = vmul.f32 %v4159, %v4175
    %4182 = vrot.lane.b32.xlu0 %v4178, 32
    %v4183 = vpop.permute.xlu0 %4182
    %4184 = vrot.lane.b32.xlu0 %v4179, 32
    %v4185 = vpop.permute.xlu0 %4184
    %v4188 = vadd.f32 %v4168, %v4183
    %v4189 = vadd.f32 %v4169, %v4185
    %v4190 = vtanh.pop %v4188
    %v4191 = vtanh.pop %v4189
    %4194 = vrot.lane.b32.xlu0 %v4190, 64
    %v4195 = vpop.permute.xlu0 %4194
    %4196 = vrot.lane.b32.xlu0 %v4191, 64
    %v4197 = vpop.permute.xlu0 %4196
    %v4200 = vmul.f32 %v4157, %v4195
    %v4201 = vmul.f32 %v4159, %v4197
    %4204 = vrot.lane.b32.xlu0 %v4200, 32
    %v4205 = vpop.permute.xlu0 %4204
    %4206 = vrot.lane.b32.xlu0 %v4201, 32
    %v4207 = vpop.permute.xlu0 %4206
    %vm4210 = vcmask 257027
    %4211 = vst.msk [vmem:[#allocation2] sm:$0x8] %vm4210, %v4205
    %4212 = vst.msk [vmem:[#allocation2 + $0x8] sm:$0x8] %vm4210, %v4207
    %v4213 = vrot.slane %v3760, 5
    %v4214 = vrot.slane %v3761, 4
    %v4215 = vsel %vm2890, %v4214, %v4213
    %4216 = vrot.lane.b32.xlu0 %v4215, 32
    %v4217 = vpop.permute.xlu0 %4216
    %v4218 = vsel %vm2351, %v4217, 0
    %4220 = vmatprep.subr.mxu0 0.0
    %4221 = vmatpush1.msra.mxu0 %v2339
    %4222 = vmatprep.subr.mxu0 0.0
    %4223 = vmatpush1.msra.mxu0 %v2340
    %4224 = vmatprep.subr.mxu0 0.0
    %4225 = vmatpush1.msra.mxu0 %v2341
    %4226 = vmatprep.subr.mxu0 0.0
    %4227 = vmatpush1.msra.mxu0 %v2342
    %4228 = vmatprep.subr.mxu0 0.0
    %4229 = vmatpush1.msra.mxu0 0.0
    %4230 = vmatprep.subr.mxu0 0.0
    %4231 = vmatpush1.msra.mxu0 0.0
    %4232 = vmatprep.subr.mxu0 0.0
    %4233 = vmatpush1.msra.mxu0 0.0
    %4234 = vmatprep.subr.mxu0 0.0
    %4235 = vmatpush1.msra.mxu0 0.0
    %4236 = vmatprep.subr.mxu0 0.0
    %4237 = vmatpush1.msra.mxu0 0.0
    %4238 = vmatprep.subr.mxu0 0.0
    %4239 = vmatpush1.msra.mxu0 0.0
    %4240 = vmatprep.subr.mxu0 0.0
    %4241 = vmatpush1.msra.mxu0 0.0
    %4242 = vmatprep.subr.mxu0 0.0
    %4243 = vmatpush1.msra.mxu0 0.0
    %4244 = vmatprep.subr.mxu0 0.0
    %4245 = vmatpush1.msra.mxu0 0.0
    %4246 = vmatprep.subr.mxu0 0.0
    %4247 = vmatpush1.msra.mxu0 0.0
    %4248 = vmatprep.subr.mxu0 0.0
    %4249 = vmatpush1.msra.mxu0 0.0
    %4250 = vmatprep.subr.mxu0 0.0
    %4251 = vmatpush1.msra.mxu0 0.0
    %4252 = vmatprep.subr.mxu0 0.0
    %4253 = vmatpush1.msra.mxu0 0.0
    %4254 = vmatprep.subr.mxu0 0.0
    %4255 = vmatpush1.msra.mxu0 0.0
    %4256 = vmatprep.subr.mxu0 0.0
    %4257 = vmatpush1.msra.mxu0 0.0
    %4258 = vmatprep.subr.mxu0 0.0
    %4259 = vmatpush1.msra.mxu0 0.0
    %4260 = vmatprep.subr.mxu0 0.0
    %4261 = vmatpush1.msra.mxu0 0.0
    %4262 = vmatprep.subr.mxu0 0.0
    %4263 = vmatpush1.msra.mxu0 0.0
    %4264 = vmatprep.subr.mxu0 0.0
    %4265 = vmatpush1.msra.mxu0 0.0
    %4266 = vmatprep.subr.mxu0 0.0
    %4267 = vmatpush1.msra.mxu0 0.0
    %4268 = vmatprep.subr.mxu0 0.0
    %4269 = vmatpush1.msra.mxu0 0.0
    %4270 = vmatprep.subr.mxu0 0.0
    %4271 = vmatpush1.msra.mxu0 0.0
    %4272 = vmatprep.subr.mxu0 0.0
    %4273 = vmatpush1.msra.mxu0 0.0
    %4274 = vmatprep.subr.mxu0 0.0
    %4275 = vmatpush1.msra.mxu0 0.0
    %4276 = vmatprep.subr.mxu0 0.0
    %4277 = vmatpush1.msra.mxu0 0.0
    %4278 = vmatprep.subr.mxu0 0.0
    %4279 = vmatpush1.msra.mxu0 0.0
    %4280 = vmatprep.subr.mxu0 0.0
    %4281 = vmatpush1.msra.mxu0 0.0
    %4282 = vmatprep.subr.mxu0 0.0
    %4283 = vmatpush1.msra.mxu0 0.0
    %4284 = vmatprep.mubr.f32.mxu0 0.0
    %4285 = vmatmul.mubr.f32.gmra.mrb[0].mxu0 %v4218
    %v4286 = vpop.f32.mrb[0].mxu0
    %v4287 = vadd.f32 0.0, %v4286
    %v4288 = vpop.f32.mrb[0].mxu0
    %4289 = vdwg.mxu0
    %v4291 = vrot.slane %v4287, 4
    %v4292 = vrot.slane %v4287, 5
    %v4295 = vadd.f32 %v2328, %v4291
    %v4296 = vadd.f32 %v2332, %v4292
    %v4297 = vxor.u32 %v4295, 2147483648
    %v4298 = vxor.u32 %v4296, 2147483648
    %v4299 = vmul.f32 %v4297, 1.442695
    %v4300 = vpow.pop %v4299
    %v4301 = vmul.f32 %v4298, 1.442695
    %v4302 = vpow.pop %v4301
    %v4303 = vadd.f32 %v4300, 1.0
    %v4304 = vadd.f32 %v4302, 1.0
    %v4305 = vrcp.pop %v4303
    %v4306 = vmul.f32 1.0, %v4305
    %v4307 = vrcp.pop %v4304
    %v4308 = vmul.f32 1.0, %v4307
    %v4309 = vtanh.pop %v4295
    %v4310 = vtanh.pop %v4296
    %v4313 = vrot.slane %v3748, 1
    %v4314 = vrot.slane %v3749, 1
    %v4317 = vmul.f32 %v4306, %v4313
    %v4318 = vmul.f32 %v4308, %v4314
    %4321 = vrot.lane.b32.xlu0 %v4309, 64
    %v4322 = vpop.permute.xlu0 %4321
    %4323 = vrot.lane.b32.xlu0 %v4310, 64
    %v4324 = vpop.permute.xlu0 %4323
    %v4327 = vmul.f32 %v4306, %v4322
    %v4328 = vmul.f32 %v4308, %v4324
    %4331 = vrot.lane.b32.xlu0 %v4327, 32
    %v4332 = vpop.permute.xlu0 %4331
    %4333 = vrot.lane.b32.xlu0 %v4328, 32
    %v4334 = vpop.permute.xlu0 %4333
    %v4337 = vadd.f32 %v4317, %v4332
    %v4338 = vadd.f32 %v4318, %v4334
    %v4339 = vtanh.pop %v4337
    %v4340 = vtanh.pop %v4338
    %4343 = vrot.lane.b32.xlu0 %v4339, 64
    %v4344 = vpop.permute.xlu0 %4343
    %4345 = vrot.lane.b32.xlu0 %v4340, 64
    %v4346 = vpop.permute.xlu0 %4345
    %v4349 = vmul.f32 %v4306, %v4344
    %v4350 = vmul.f32 %v4308, %v4346
    %4353 = vrot.lane.b32.xlu0 %v4349, 64
    %v4354 = vpop.permute.xlu0 %4353
    %4355 = vrot.lane.b32.xlu0 %v4350, 64
    %v4356 = vpop.permute.xlu0 %4355
    %vm4359 = vcmask 520452
    %4360 = vst.msk [vmem:[#allocation2] sm:$0x10] %vm4359, %v4354
    %4361 = vst.msk [vmem:[#allocation2 + $0x8] sm:$0x10] %vm4359, %v4356
    %v4362 = vrot.slane %v3908, 2
    %v4363 = vrot.slane %v3909, 1
    %v4364 = vsel %vm2890, %v4363, %v4362
    %4365 = vrot.lane.b32.xlu0 %v4364, 32
    %v4366 = vpop.permute.xlu0 %4365
    %v4367 = vsel %vm2351, %v4366, 0
    %4369 = vmatprep.subr.mxu0 0.0
    %4370 = vmatpush1.msra.mxu0 %v2343
    %4371 = vmatprep.subr.mxu0 0.0
    %4372 = vmatpush1.msra.mxu0 %v2344
    %4373 = vmatprep.subr.mxu0 0.0
    %4374 = vmatpush1.msra.mxu0 %v2345
    %4375 = vmatprep.subr.mxu0 0.0
    %4376 = vmatpush1.msra.mxu0 %v2346
    %4377 = vmatprep.subr.mxu0 0.0
    %4378 = vmatpush1.msra.mxu0 0.0
    %4379 = vmatprep.subr.mxu0 0.0
    %4380 = vmatpush1.msra.mxu0 0.0
    %4381 = vmatprep.subr.mxu0 0.0
    %4382 = vmatpush1.msra.mxu0 0.0
    %4383 = vmatprep.subr.mxu0 0.0
    %4384 = vmatpush1.msra.mxu0 0.0
    %4385 = vmatprep.subr.mxu0 0.0
    %4386 = vmatpush1.msra.mxu0 0.0
    %4387 = vmatprep.subr.mxu0 0.0
    %4388 = vmatpush1.msra.mxu0 0.0
    %4389 = vmatprep.subr.mxu0 0.0
    %4390 = vmatpush1.msra.mxu0 0.0
    %4391 = vmatprep.subr.mxu0 0.0
    %4392 = vmatpush1.msra.mxu0 0.0
    %4393 = vmatprep.subr.mxu0 0.0
    %4394 = vmatpush1.msra.mxu0 0.0
    %4395 = vmatprep.subr.mxu0 0.0
    %4396 = vmatpush1.msra.mxu0 0.0
    %4397 = vmatprep.subr.mxu0 0.0
    %4398 = vmatpush1.msra.mxu0 0.0
    %4399 = vmatprep.subr.mxu0 0.0
    %4400 = vmatpush1.msra.mxu0 0.0
    %4401 = vmatprep.subr.mxu0 0.0
    %4402 = vmatpush1.msra.mxu0 0.0
    %4403 = vmatprep.subr.mxu0 0.0
    %4404 = vmatpush1.msra.mxu0 0.0
    %4405 = vmatprep.subr.mxu0 0.0
    %4406 = vmatpush1.msra.mxu0 0.0
    %4407 = vmatprep.subr.mxu0 0.0
    %4408 = vmatpush1.msra.mxu0 0.0
    %4409 = vmatprep.subr.mxu0 0.0
    %4410 = vmatpush1.msra.mxu0 0.0
    %4411 = vmatprep.subr.mxu0 0.0
    %4412 = vmatpush1.msra.mxu0 0.0
    %4413 = vmatprep.subr.mxu0 0.0
    %4414 = vmatpush1.msra.mxu0 0.0
    %4415 = vmatprep.subr.mxu0 0.0
    %4416 = vmatpush1.msra.mxu0 0.0
    %4417 = vmatprep.subr.mxu0 0.0
    %4418 = vmatpush1.msra.mxu0 0.0
    %4419 = vmatprep.subr.mxu0 0.0
    %4420 = vmatpush1.msra.mxu0 0.0
    %4421 = vmatprep.subr.mxu0 0.0
    %4422 = vmatpush1.msra.mxu0 0.0
    %4423 = vmatprep.subr.mxu0 0.0
    %4424 = vmatpush1.msra.mxu0 0.0
    %4425 = vmatprep.subr.mxu0 0.0
    %4426 = vmatpush1.msra.mxu0 0.0
    %4427 = vmatprep.subr.mxu0 0.0
    %4428 = vmatpush1.msra.mxu0 0.0
    %4429 = vmatprep.subr.mxu0 0.0
    %4430 = vmatpush1.msra.mxu0 0.0
    %4431 = vmatprep.subr.mxu0 0.0
    %4432 = vmatpush1.msra.mxu0 0.0
    %4433 = vmatprep.mubr.f32.mxu0 0.0
    %4434 = vmatmul.mubr.f32.gmra.mrb[0].mxu0 %v4367
    %v4435 = vpop.f32.mrb[0].mxu0
    %v4436 = vadd.f32 0.0, %v4435
    %v4437 = vpop.f32.mrb[0].mxu0
    %4438 = vdwg.mxu0
    %v4440 = vrot.slane %v4436, 5
    %v4441 = vrot.slane %v4436, 6
    %v4444 = vadd.f32 %v2329, %v4440
    %v4445 = vadd.f32 %v2333, %v4441
    %v4446 = vxor.u32 %v4444, 2147483648
    %v4447 = vxor.u32 %v4445, 2147483648
    %v4448 = vmul.f32 %v4446, 1.442695
    %v4449 = vpow.pop %v4448
    %v4450 = vmul.f32 %v4447, 1.442695
    %v4451 = vpow.pop %v4450
    %v4452 = vadd.f32 %v4449, 1.0
    %v4453 = vadd.f32 %v4451, 1.0
    %v4454 = vrcp.pop %v4452
    %v4455 = vmul.f32 1.0, %v4454
    %v4456 = vrcp.pop %v4453
    %v4457 = vmul.f32 1.0, %v4456
    %v4458 = vtanh.pop %v4444
    %v4459 = vtanh.pop %v4445
    %v4462 = vrot.slane %v3896, 7
    %v4463 = vrot.slane %v3897, 7
    %v4466 = vmul.f32 %v4455, %v4462
    %v4467 = vmul.f32 %v4457, %v4463
    %4470 = vrot.lane.b32.xlu0 %v4458, 64
    %v4471 = vpop.permute.xlu0 %4470
    %4472 = vrot.lane.b32.xlu0 %v4459, 64
    %v4473 = vpop.permute.xlu0 %4472
    %v4476 = vmul.f32 %v4455, %v4471
    %v4477 = vmul.f32 %v4457, %v4473
    %4480 = vrot.lane.b32.xlu0 %v4476, 32
    %v4481 = vpop.permute.xlu0 %4480
    %4482 = vrot.lane.b32.xlu0 %v4477, 32
    %v4483 = vpop.permute.xlu0 %4482
    %v4486 = vadd.f32 %v4466, %v4481
    %v4487 = vadd.f32 %v4467, %v4483
    %v4488 = vtanh.pop %v4486
    %v4489 = vtanh.pop %v4487
    %4492 = vrot.lane.b32.xlu0 %v4488, 64
    %v4493 = vpop.permute.xlu0 %4492
    %4494 = vrot.lane.b32.xlu0 %v4489, 64
    %v4495 = vpop.permute.xlu0 %4494
    %v4498 = vmul.f32 %v4455, %v4493
    %v4499 = vmul.f32 %v4457, %v4495
    %4502 = vrot.lane.b32.xlu0 %v4498, 96
    %v4503 = vpop.permute.xlu0 %4502
    %4504 = vrot.lane.b32.xlu0 %v4499, 96
    %v4505 = vpop.permute.xlu0 %4504
    %vm4508 = vcmask 781827
    %4509 = vst.msk [vmem:[#allocation2] sm:$0x8] %vm4508, %v4503
    %4510 = vst.msk [vmem:[#allocation2 + $0x8] sm:$0x8] %vm4508, %v4505
    %v4513 = vrot.slane %v4059, 5
    %v4514 = vrot.slane %v4060, 4
    %v4515 = vsel %vm2890, %v4514, %v4513
    %4516 = vrot.lane.b32.xlu0 %v4515, 32
    %v4517 = vpop.permute.xlu0 %4516
    %v4518 = vsel %vm2351, %v4517, 0
    %4520 = vmatprep.subr.mxu0 0.0
    %4521 = vmatpush1.msra.mxu0 %v2347
    %4522 = vmatprep.subr.mxu0 0.0
    %4523 = vmatpush1.msra.mxu0 %v2348
    %4524 = vmatprep.subr.mxu0 0.0
    %4525 = vmatpush1.msra.mxu0 %v2349
    %4526 = vmatprep.subr.mxu0 0.0
    %4527 = vmatpush1.msra.mxu0 %v2350
    %4528 = vmatprep.subr.mxu0 0.0
    %4529 = vmatpush1.msra.mxu0 0.0
    %4530 = vmatprep.subr.mxu0 0.0
    %4531 = vmatpush1.msra.mxu0 0.0
    %4532 = vmatprep.subr.mxu0 0.0
    %4533 = vmatpush1.msra.mxu0 0.0
    %4534 = vmatprep.subr.mxu0 0.0
    %4535 = vmatpush1.msra.mxu0 0.0
    %4536 = vmatprep.subr.mxu0 0.0
    %4537 = vmatpush1.msra.mxu0 0.0
    %4538 = vmatprep.subr.mxu0 0.0
    %4539 = vmatpush1.msra.mxu0 0.0
    %4540 = vmatprep.subr.mxu0 0.0
    %4541 = vmatpush1.msra.mxu0 0.0
    %4542 = vmatprep.subr.mxu0 0.0
    %4543 = vmatpush1.msra.mxu0 0.0
    %4544 = vmatprep.subr.mxu0 0.0
    %4545 = vmatpush1.msra.mxu0 0.0
    %4546 = vmatprep.subr.mxu0 0.0
    %4547 = vmatpush1.msra.mxu0 0.0
    %4548 = vmatprep.subr.mxu0 0.0
    %4549 = vmatpush1.msra.mxu0 0.0
    %4550 = vmatprep.subr.mxu0 0.0
    %4551 = vmatpush1.msra.mxu0 0.0
    %4552 = vmatprep.subr.mxu0 0.0
    %4553 = vmatpush1.msra.mxu0 0.0
    %4554 = vmatprep.subr.mxu0 0.0
    %4555 = vmatpush1.msra.mxu0 0.0
    %4556 = vmatprep.subr.mxu0 0.0
    %4557 = vmatpush1.msra.mxu0 0.0
    %4558 = vmatprep.subr.mxu0 0.0
    %4559 = vmatpush1.msra.mxu0 0.0
    %4560 = vmatprep.subr.mxu0 0.0
    %4561 = vmatpush1.msra.mxu0 0.0
    %4562 = vmatprep.subr.mxu0 0.0
    %4563 = vmatpush1.msra.mxu0 0.0
    %4564 = vmatprep.subr.mxu0 0.0
    %4565 = vmatpush1.msra.mxu0 0.0
    %4566 = vmatprep.subr.mxu0 0.0
    %4567 = vmatpush1.msra.mxu0 0.0
    %4568 = vmatprep.subr.mxu0 0.0
    %4569 = vmatpush1.msra.mxu0 0.0
    %4570 = vmatprep.subr.mxu0 0.0
    %4571 = vmatpush1.msra.mxu0 0.0
    %4572 = vmatprep.subr.mxu0 0.0
    %4573 = vmatpush1.msra.mxu0 0.0
    %4574 = vmatprep.subr.mxu0 0.0
    %4575 = vmatpush1.msra.mxu0 0.0
    %4576 = vmatprep.subr.mxu0 0.0
    %4577 = vmatpush1.msra.mxu0 0.0
    %4578 = vmatprep.subr.mxu0 0.0
    %4579 = vmatpush1.msra.mxu0 0.0
    %4580 = vmatprep.subr.mxu0 0.0
    %4581 = vmatpush1.msra.mxu0 0.0
    %4582 = vmatprep.subr.mxu0 0.0
    %4583 = vmatpush1.msra.mxu0 0.0
    %4584 = vmatprep.mubr.f32.mxu0 0.0
    %4585 = vmatmul.mubr.f32.gmra.mrb[0].mxu0 %v4518
    %v4586 = vpop.f32.mrb[0].mxu0
    %v4587 = vadd.f32 0.0, %v4586
    %v4588 = vpop.f32.mrb[0].mxu0
    %4589 = vdwg.mxu0
    %v4591 = vrot.slane %v4587, 4
    %v4592 = vrot.slane %v4587, 5
    %v4595 = vadd.f32 %v2330, %v4591
    %v4596 = vadd.f32 %v2334, %v4592
    %v4597 = vxor.u32 %v4595, 2147483648
    %v4598 = vxor.u32 %v4596, 2147483648
    %v4599 = vmul.f32 %v4597, 1.442695
    %v4600 = vpow.pop %v4599
    %v4601 = vmul.f32 %v4598, 1.442695
    %v4602 = vpow.pop %v4601
    %v4603 = vadd.f32 %v4600, 1.0
    %v4604 = vadd.f32 %v4602, 1.0
    %v4605 = vrcp.pop %v4603
    %v4606 = vmul.f32 1.0, %v4605
    %v4607 = vrcp.pop %v4604
    %v4608 = vmul.f32 1.0, %v4607
    %v4609 = vtanh.pop %v4595
    %v4610 = vtanh.pop %v4596
    %v4613 = vrot.slane %v4047, 1
    %v4614 = vrot.slane %v4048, 1
    %v4617 = vmul.f32 %v4606, %v4613
    %v4618 = vmul.f32 %v4608, %v4614
    %4621 = vrot.lane.b32.xlu0 %v4609, 64
    %v4622 = vpop.permute.xlu0 %4621
    %4623 = vrot.lane.b32.xlu0 %v4610, 64
    %v4624 = vpop.permute.xlu0 %4623
    %v4627 = vmul.f32 %v4606, %v4622
    %v4628 = vmul.f32 %v4608, %v4624
    %4631 = vrot.lane.b32.xlu0 %v4627, 32
    %v4632 = vpop.permute.xlu0 %4631
    %4633 = vrot.lane.b32.xlu0 %v4628, 32
    %v4634 = vpop.permute.xlu0 %4633
    %v4637 = vadd.f32 %v4617, %v4632
    %v4638 = vadd.f32 %v4618, %v4634
    %v4639 = vtanh.pop %v4637
    %v4640 = vtanh.pop %v4638
    %4643 = vrot.lane.b32.xlu0 %v4639, 64
    %v4644 = vpop.permute.xlu0 %4643
    %4645 = vrot.lane.b32.xlu0 %v4640, 64
    %v4646 = vpop.permute.xlu0 %4645
    %v4649 = vmul.f32 %v4606, %v4644
    %v4650 = vmul.f32 %v4608, %v4646
    %vm4651 = vcmask 1045252
    %4652 = vst.msk [vmem:[#allocation2] sm:$0x10] %vm4651, %v4649
    %4653 = vst.msk [vmem:[#allocation2 + $0x8] sm:$0x10] %vm4651, %v4650
    %v4654 = vrot.slane %v4200, 3
    %v4655 = vrot.slane %v4201, 2
    %v4656 = vsel %vm2890, %v4655, %v4654
    %4657 = vrot.lane.b32.xlu0 %v4656, 32
    %v4658 = vpop.permute.xlu0 %4657
    %v4659 = vsel %vm2351, %v4658, 0
    %4661 = vmatprep.subr.mxu0 0.0
    %4662 = vmatpush1.msra.mxu0 %v2335
    %4663 = vmatprep.subr.mxu0 0.0
    %4664 = vmatpush1.msra.mxu0 %v2336
    %4665 = vmatprep.subr.mxu0 0.0
    %4666 = vmatpush1.msra.mxu0 %v2337
    %4667 = vmatprep.subr.mxu0 0.0
    %4668 = vmatpush1.msra.mxu0 %v2338
    %4669 = vmatprep.subr.mxu0 0.0
    %4670 = vmatpush1.msra.mxu0 0.0
    %4671 = vmatprep.subr.mxu0 0.0
    %4672 = vmatpush1.msra.mxu0 0.0
    %4673 = vmatprep.subr.mxu0 0.0
    %4674 = vmatpush1.msra.mxu0 0.0
    %4675 = vmatprep.subr.mxu0 0.0
    %4676 = vmatpush1.msra.mxu0 0.0
    %4677 = vmatprep.subr.mxu0 0.0
    %4678 = vmatpush1.msra.mxu0 0.0
    %4679 = vmatprep.subr.mxu0 0.0
    %4680 = vmatpush1.msra.mxu0 0.0
    %4681 = vmatprep.subr.mxu0 0.0
    %4682 = vmatpush1.msra.mxu0 0.0
    %4683 = vmatprep.subr.mxu0 0.0
    %4684 = vmatpush1.msra.mxu0 0.0
    %4685 = vmatprep.subr.mxu0 0.0
    %4686 = vmatpush1.msra.mxu0 0.0
    %4687 = vmatprep.subr.mxu0 0.0
    %4688 = vmatpush1.msra.mxu0 0.0
    %4689 = vmatprep.subr.mxu0 0.0
    %4690 = vmatpush1.msra.mxu0 0.0
    %4691 = vmatprep.subr.mxu0 0.0
    %4692 = vmatpush1.msra.mxu0 0.0
    %4693 = vmatprep.subr.mxu0 0.0
    %4694 = vmatpush1.msra.mxu0 0.0
    %4695 = vmatprep.subr.mxu0 0.0
    %4696 = vmatpush1.msra.mxu0 0.0
    %4697 = vmatprep.subr.mxu0 0.0
    %4698 = vmatpush1.msra.mxu0 0.0
    %4699 = vmatprep.subr.mxu0 0.0
    %4700 = vmatpush1.msra.mxu0 0.0
    %4701 = vmatprep.subr.mxu0 0.0
    %4702 = vmatpush1.msra.mxu0 0.0
    %4703 = vmatprep.subr.mxu0 0.0
    %4704 = vmatpush1.msra.mxu0 0.0
    %4705 = vmatprep.subr.mxu0 0.0
    %4706 = vmatpush1.msra.mxu0 0.0
    %4707 = vmatprep.subr.mxu0 0.0
    %4708 = vmatpush1.msra.mxu0 0.0
    %4709 = vmatprep.subr.mxu0 0.0
    %4710 = vmatpush1.msra.mxu0 0.0
    %4711 = vmatprep.subr.mxu0 0.0
    %4712 = vmatpush1.msra.mxu0 0.0
    %4713 = vmatprep.subr.mxu0 0.0
    %4714 = vmatpush1.msra.mxu0 0.0
    %4715 = vmatprep.subr.mxu0 0.0
    %4716 = vmatpush1.msra.mxu0 0.0
    %4717 = vmatprep.subr.mxu0 0.0
    %4718 = vmatpush1.msra.mxu0 0.0
    %4719 = vmatprep.subr.mxu0 0.0
    %4720 = vmatpush1.msra.mxu0 0.0
    %4721 = vmatprep.subr.mxu0 0.0
    %4722 = vmatpush1.msra.mxu0 0.0
    %4723 = vmatprep.subr.mxu0 0.0
    %4724 = vmatpush1.msra.mxu0 0.0
    %4725 = vmatprep.mubr.f32.mxu0 0.0
    %4726 = vmatmul.mubr.f32.gmra.mrb[0].mxu0 %v4659
    %v4727 = vpop.f32.mrb[0].mxu0
    %v4728 = vadd.f32 0.0, %v4727
    %v4729 = vpop.f32.mrb[0].mxu0
    %4730 = vdwg.mxu0
    %v4732 = vrot.slane %v4728, 4
    %v4733 = vrot.slane %v4728, 5
    %v4736 = vadd.f32 %v2327, %v4732
    %v4737 = vadd.f32 %v2331, %v4733
    %v4738 = vxor.u32 %v4736, 2147483648
    %v4739 = vxor.u32 %v4737, 2147483648
    %v4740 = vmul.f32 %v4738, 1.442695
    %v4741 = vpow.pop %v4740
    %v4742 = vmul.f32 %v4739, 1.442695
    %v4743 = vpow.pop %v4742
    %v4744 = vadd.f32 %v4741, 1.0
    %v4745 = vadd.f32 %v4743, 1.0
    %v4746 = vrcp.pop %v4744
    %v4747 = vmul.f32 1.0, %v4746
    %v4748 = vrcp.pop %v4745
    %v4749 = vmul.f32 1.0, %v4748
    %v4750 = vtanh.pop %v4736
    %v4751 = vtanh.pop %v4737
    %v4754 = vrot.slane %v4188, 7
    %v4755 = vrot.slane %v4189, 7
    %v4758 = vmul.f32 %v4747, %v4754
    %v4759 = vmul.f32 %v4749, %v4755
    %4762 = vrot.lane.b32.xlu0 %v4750, 64
    %v4763 = vpop.permute.xlu0 %4762
    %4764 = vrot.lane.b32.xlu0 %v4751, 64
    %v4765 = vpop.permute.xlu0 %4764
    %v4768 = vmul.f32 %v4747, %v4763
    %v4769 = vmul.f32 %v4749, %v4765
    %4772 = vrot.lane.b32.xlu0 %v4768, 32
    %v4773 = vpop.permute.xlu0 %4772
    %4774 = vrot.lane.b32.xlu0 %v4769, 32
    %v4775 = vpop.permute.xlu0 %4774
    %v4778 = vadd.f32 %v4758, %v4773
    %v4779 = vadd.f32 %v4759, %v4775
    %v4780 = vtanh.pop %v4778
    %v4781 = vtanh.pop %v4779
    %4784 = vrot.lane.b32.xlu0 %v4780, 64
    %v4785 = vpop.permute.xlu0 %4784
    %4786 = vrot.lane.b32.xlu0 %v4781, 64
    %v4787 = vpop.permute.xlu0 %4786
    %v4790 = vmul.f32 %v4747, %v4785
    %v4791 = vmul.f32 %v4749, %v4787
    %4794 = vrot.lane.b32.xlu0 %v4790, 32
    %v4795 = vpop.permute.xlu0 %4794
    %4796 = vrot.lane.b32.xlu0 %v4791, 32
    %v4797 = vpop.permute.xlu0 %4796
    %vm4800 = vcmask 258052
    %4801 = vst.msk [vmem:[#allocation2] sm:$0x10] %vm4800, %v4795
    %4802 = vst.msk [vmem:[#allocation2 + $0x8] sm:$0x10] %vm4800, %v4797
    %v4803 = vrot.slane %v4349, 4
    %v4804 = vrot.slane %v4350, 3
    %v4805 = vsel %vm2890, %v4804, %v4803
    %4806 = vrot.lane.b32.xlu0 %v4805, 32
    %v4807 = vpop.permute.xlu0 %4806
    %v4808 = vsel %vm2351, %v4807, 0
    %4810 = vmatprep.subr.mxu0 0.0
    %4811 = vmatpush1.msra.mxu0 %v2339
    %4812 = vmatprep.subr.mxu0 0.0
    %4813 = vmatpush1.msra.mxu0 %v2340
    %4814 = vmatprep.subr.mxu0 0.0
    %4815 = vmatpush1.msra.mxu0 %v2341
    %4816 = vmatprep.subr.mxu0 0.0
    %4817 = vmatpush1.msra.mxu0 %v2342
    %4818 = vmatprep.subr.mxu0 0.0
    %4819 = vmatpush1.msra.mxu0 0.0
    %4820 = vmatprep.subr.mxu0 0.0
    %4821 = vmatpush1.msra.mxu0 0.0
    %4822 = vmatprep.subr.mxu0 0.0
    %4823 = vmatpush1.msra.mxu0 0.0
    %4824 = vmatprep.subr.mxu0 0.0
    %4825 = vmatpush1.msra.mxu0 0.0
    %4826 = vmatprep.subr.mxu0 0.0
    %4827 = vmatpush1.msra.mxu0 0.0
    %4828 = vmatprep.subr.mxu0 0.0
    %4829 = vmatpush1.msra.mxu0 0.0
    %4830 = vmatprep.subr.mxu0 0.0
    %4831 = vmatpush1.msra.mxu0 0.0
    %4832 = vmatprep.subr.mxu0 0.0
    %4833 = vmatpush1.msra.mxu0 0.0
    %4834 = vmatprep.subr.mxu0 0.0
    %4835 = vmatpush1.msra.mxu0 0.0
    %4836 = vmatprep.subr.mxu0 0.0
    %4837 = vmatpush1.msra.mxu0 0.0
    %4838 = vmatprep.subr.mxu0 0.0
    %4839 = vmatpush1.msra.mxu0 0.0
    %4840 = vmatprep.subr.mxu0 0.0
    %4841 = vmatpush1.msra.mxu0 0.0
    %4842 = vmatprep.subr.mxu0 0.0
    %4843 = vmatpush1.msra.mxu0 0.0
    %4844 = vmatprep.subr.mxu0 0.0
    %4845 = vmatpush1.msra.mxu0 0.0
    %4846 = vmatprep.subr.mxu0 0.0
    %4847 = vmatpush1.msra.mxu0 0.0
    %4848 = vmatprep.subr.mxu0 0.0
    %4849 = vmatpush1.msra.mxu0 0.0
    %4850 = vmatprep.subr.mxu0 0.0
    %4851 = vmatpush1.msra.mxu0 0.0
    %4852 = vmatprep.subr.mxu0 0.0
    %4853 = vmatpush1.msra.mxu0 0.0
    %4854 = vmatprep.subr.mxu0 0.0
    %4855 = vmatpush1.msra.mxu0 0.0
    %4856 = vmatprep.subr.mxu0 0.0
    %4857 = vmatpush1.msra.mxu0 0.0
    %4858 = vmatprep.subr.mxu0 0.0
    %4859 = vmatpush1.msra.mxu0 0.0
    %4860 = vmatprep.subr.mxu0 0.0
    %4861 = vmatpush1.msra.mxu0 0.0
    %4862 = vmatprep.subr.mxu0 0.0
    %4863 = vmatpush1.msra.mxu0 0.0
    %4864 = vmatprep.subr.mxu0 0.0
    %4865 = vmatpush1.msra.mxu0 0.0
    %4866 = vmatprep.subr.mxu0 0.0
    %4867 = vmatpush1.msra.mxu0 0.0
    %4868 = vmatprep.subr.mxu0 0.0
    %4869 = vmatpush1.msra.mxu0 0.0
    %4870 = vmatprep.subr.mxu0 0.0
    %4871 = vmatpush1.msra.mxu0 0.0
    %4872 = vmatprep.subr.mxu0 0.0
    %4873 = vmatpush1.msra.mxu0 0.0
    %4874 = vmatprep.mubr.f32.mxu0 0.0
    %4875 = vmatmul.mubr.f32.gmra.mrb[0].mxu0 %v4808
    %v4876 = vpop.f32.mrb[0].mxu0
    %v4877 = vadd.f32 0.0, %v4876
    %v4878 = vpop.f32.mrb[0].mxu0
    %4879 = vdwg.mxu0
    %v4881 = vrot.slane %v4877, 5
    %v4882 = vrot.slane %v4877, 6
    %v4885 = vadd.f32 %v2328, %v4881
    %v4886 = vadd.f32 %v2332, %v4882
    %v4887 = vxor.u32 %v4885, 2147483648
    %v4888 = vxor.u32 %v4886, 2147483648
    %v4889 = vmul.f32 %v4887, 1.442695
    %v4890 = vpow.pop %v4889
    %v4891 = vmul.f32 %v4888, 1.442695
    %v4892 = vpow.pop %v4891
    %v4893 = vadd.f32 %v4890, 1.0
    %v4894 = vadd.f32 %v4892, 1.0
    %v4895 = vrcp.pop %v4893
    %v4896 = vmul.f32 1.0, %v4895
    %v4897 = vrcp.pop %v4894
    %v4898 = vmul.f32 1.0, %v4897
    %v4899 = vtanh.pop %v4885
    %v4900 = vtanh.pop %v4886
    %v4903 = vrot.slane %v4337, 1
    %v4904 = vrot.slane %v4338, 1
    %v4907 = vmul.f32 %v4896, %v4903
    %v4908 = vmul.f32 %v4898, %v4904
    %4911 = vrot.lane.b32.xlu0 %v4899, 64
    %v4912 = vpop.permute.xlu0 %4911
    %4913 = vrot.lane.b32.xlu0 %v4900, 64
    %v4914 = vpop.permute.xlu0 %4913
    %v4917 = vmul.f32 %v4896, %v4912
    %v4918 = vmul.f32 %v4898, %v4914
    %4921 = vrot.lane.b32.xlu0 %v4917, 32
    %v4922 = vpop.permute.xlu0 %4921
    %4923 = vrot.lane.b32.xlu0 %v4918, 32
    %v4924 = vpop.permute.xlu0 %4923
    %v4927 = vadd.f32 %v4907, %v4922
    %v4928 = vadd.f32 %v4908, %v4924
    %v4929 = vtanh.pop %v4927
    %v4930 = vtanh.pop %v4928
    %4933 = vrot.lane.b32.xlu0 %v4929, 64
    %v4934 = vpop.permute.xlu0 %4933
    %4935 = vrot.lane.b32.xlu0 %v4930, 64
    %v4936 = vpop.permute.xlu0 %4935
    %v4939 = vmul.f32 %v4896, %v4934
    %v4940 = vmul.f32 %v4898, %v4936
    %4943 = vrot.lane.b32.xlu0 %v4939, 64
    %v4944 = vpop.permute.xlu0 %4943
    %4945 = vrot.lane.b32.xlu0 %v4940, 64
    %v4946 = vpop.permute.xlu0 %4945
    %vm4949 = vcmask 519427
    %4950 = vst.msk [vmem:[#allocation2] sm:$0x8] %vm4949, %v4944
    %4951 = vst.msk [vmem:[#allocation2 + $0x8] sm:$0x8] %vm4949, %v4946
    %v4952 = vrot.slane %v4498, 3
    %v4953 = vrot.slane %v4499, 2
    %v4954 = vsel %vm2890, %v4953, %v4952
    %4955 = vrot.lane.b32.xlu0 %v4954, 32
    %v4956 = vpop.permute.xlu0 %4955
    %v4957 = vsel %vm2351, %v4956, 0
    %4959 = vmatprep.subr.mxu0 0.0
    %4960 = vmatpush1.msra.mxu0 %v2343
    %4961 = vmatprep.subr.mxu0 0.0
    %4962 = vmatpush1.msra.mxu0 %v2344
    %4963 = vmatprep.subr.mxu0 0.0
    %4964 = vmatpush1.msra.mxu0 %v2345
    %4965 = vmatprep.subr.mxu0 0.0
    %4966 = vmatpush1.msra.mxu0 %v2346
    %4967 = vmatprep.subr.mxu0 0.0
    %4968 = vmatpush1.msra.mxu0 0.0
    %4969 = vmatprep.subr.mxu0 0.0
    %4970 = vmatpush1.msra.mxu0 0.0
    %4971 = vmatprep.subr.mxu0 0.0
    %4972 = vmatpush1.msra.mxu0 0.0
    %4973 = vmatprep.subr.mxu0 0.0
    %4974 = vmatpush1.msra.mxu0 0.0
    %4975 = vmatprep.subr.mxu0 0.0
    %4976 = vmatpush1.msra.mxu0 0.0
    %4977 = vmatprep.subr.mxu0 0.0
    %4978 = vmatpush1.msra.mxu0 0.0
    %4979 = vmatprep.subr.mxu0 0.0
    %4980 = vmatpush1.msra.mxu0 0.0
    %4981 = vmatprep.subr.mxu0 0.0
    %4982 = vmatpush1.msra.mxu0 0.0
    %4983 = vmatprep.subr.mxu0 0.0
    %4984 = vmatpush1.msra.mxu0 0.0
    %4985 = vmatprep.subr.mxu0 0.0
    %4986 = vmatpush1.msra.mxu0 0.0
    %4987 = vmatprep.subr.mxu0 0.0
    %4988 = vmatpush1.msra.mxu0 0.0
    %4989 = vmatprep.subr.mxu0 0.0
    %4990 = vmatpush1.msra.mxu0 0.0
    %4991 = vmatprep.subr.mxu0 0.0
    %4992 = vmatpush1.msra.mxu0 0.0
    %4993 = vmatprep.subr.mxu0 0.0
    %4994 = vmatpush1.msra.mxu0 0.0
    %4995 = vmatprep.subr.mxu0 0.0
    %4996 = vmatpush1.msra.mxu0 0.0
    %4997 = vmatprep.subr.mxu0 0.0
    %4998 = vmatpush1.msra.mxu0 0.0
    %4999 = vmatprep.subr.mxu0 0.0
    %5000 = vmatpush1.msra.mxu0 0.0
    %5001 = vmatprep.subr.mxu0 0.0
    %5002 = vmatpush1.msra.mxu0 0.0
    %5003 = vmatprep.subr.mxu0 0.0
    %5004 = vmatpush1.msra.mxu0 0.0
    %5005 = vmatprep.subr.mxu0 0.0
    %5006 = vmatpush1.msra.mxu0 0.0
    %5007 = vmatprep.subr.mxu0 0.0
    %5008 = vmatpush1.msra.mxu0 0.0
    %5009 = vmatprep.subr.mxu0 0.0
    %5010 = vmatpush1.msra.mxu0 0.0
    %5011 = vmatprep.subr.mxu0 0.0
    %5012 = vmatpush1.msra.mxu0 0.0
    %5013 = vmatprep.subr.mxu0 0.0
    %5014 = vmatpush1.msra.mxu0 0.0
    %5015 = vmatprep.subr.mxu0 0.0
    %5016 = vmatpush1.msra.mxu0 0.0
    %5017 = vmatprep.subr.mxu0 0.0
    %5018 = vmatpush1.msra.mxu0 0.0
    %5019 = vmatprep.subr.mxu0 0.0
    %5020 = vmatpush1.msra.mxu0 0.0
    %5021 = vmatprep.subr.mxu0 0.0
    %5022 = vmatpush1.msra.mxu0 0.0
    %5023 = vmatprep.mubr.f32.mxu0 0.0
    %5024 = vmatmul.mubr.f32.gmra.mrb[0].mxu0 %v4957
    %v5025 = vpop.f32.mrb[0].mxu0
    %v5026 = vadd.f32 0.0, %v5025
    %v5027 = vpop.f32.mrb[0].mxu0
    %5028 = vdwg.mxu0
    %v5030 = vrot.slane %v5026, 4
    %v5031 = vrot.slane %v5026, 5
    %v5034 = vadd.f32 %v2329, %v5030
    %v5035 = vadd.f32 %v2333, %v5031
    %v5036 = vxor.u32 %v5034, 2147483648
    %v5037 = vxor.u32 %v5035, 2147483648
    %v5038 = vmul.f32 %v5036, 1.442695
    %v5039 = vpow.pop %v5038
    %v5040 = vmul.f32 %v5037, 1.442695
    %v5041 = vpow.pop %v5040
    %v5042 = vadd.f32 %v5039, 1.0
    %v5043 = vadd.f32 %v5041, 1.0
    %v5044 = vrcp.pop %v5042
    %v5045 = vmul.f32 1.0, %v5044
    %v5046 = vrcp.pop %v5043
    %v5047 = vmul.f32 1.0, %v5046
    %v5048 = vtanh.pop %v5034
    %v5049 = vtanh.pop %v5035
    %v5052 = vrot.slane %v4486, 7
    %v5053 = vrot.slane %v4487, 7
    %v5056 = vmul.f32 %v5045, %v5052
    %v5057 = vmul.f32 %v5047, %v5053
    %5060 = vrot.lane.b32.xlu0 %v5048, 64
    %v5061 = vpop.permute.xlu0 %5060
    %5062 = vrot.lane.b32.xlu0 %v5049, 64
    %v5063 = vpop.permute.xlu0 %5062
    %v5066 = vmul.f32 %v5045, %v5061
    %v5067 = vmul.f32 %v5047, %v5063
    %5070 = vrot.lane.b32.xlu0 %v5066, 32
    %v5071 = vpop.permute.xlu0 %5070
    %5072 = vrot.lane.b32.xlu0 %v5067, 32
    %v5073 = vpop.permute.xlu0 %5072
    %v5076 = vadd.f32 %v5056, %v5071
    %v5077 = vadd.f32 %v5057, %v5073
    %v5078 = vtanh.pop %v5076
    %v5079 = vtanh.pop %v5077
    %5082 = vrot.lane.b32.xlu0 %v5078, 64
    %v5083 = vpop.permute.xlu0 %5082
    %5084 = vrot.lane.b32.xlu0 %v5079, 64
    %v5085 = vpop.permute.xlu0 %5084
    %v5088 = vmul.f32 %v5045, %v5083
    %v5089 = vmul.f32 %v5047, %v5085
    %5092 = vrot.lane.b32.xlu0 %v5088, 96
    %v5093 = vpop.permute.xlu0 %5092
    %5094 = vrot.lane.b32.xlu0 %v5089, 96
    %v5095 = vpop.permute.xlu0 %5094
    %vm5098 = vcmask 782852
    %5099 = vst.msk [vmem:[#allocation2] sm:$0x10] %vm5098, %v5093
    %5100 = vst.msk [vmem:[#allocation2 + $0x8] sm:$0x10] %vm5098, %v5095
    %v5103 = vrot.slane %v4649, 4
    %v5104 = vrot.slane %v4650, 3
    %v5105 = vsel %vm2890, %v5104, %v5103
    %5106 = vrot.lane.b32.xlu0 %v5105, 32
    %v5107 = vpop.permute.xlu0 %5106
    %v5108 = vsel %vm2351, %v5107, 0
    %5110 = vmatprep.subr.mxu0 0.0
    %5111 = vmatpush1.msra.mxu0 %v2347
    %5112 = vmatprep.subr.mxu0 0.0
    %5113 = vmatpush1.msra.mxu0 %v2348
    %5114 = vmatprep.subr.mxu0 0.0
    %5115 = vmatpush1.msra.mxu0 %v2349
    %5116 = vmatprep.subr.mxu0 0.0
    %5117 = vmatpush1.msra.mxu0 %v2350
    %5118 = vmatprep.subr.mxu0 0.0
    %5119 = vmatpush1.msra.mxu0 0.0
    %5120 = vmatprep.subr.mxu0 0.0
    %5121 = vmatpush1.msra.mxu0 0.0
    %5122 = vmatprep.subr.mxu0 0.0
    %5123 = vmatpush1.msra.mxu0 0.0
    %5124 = vmatprep.subr.mxu0 0.0
    %5125 = vmatpush1.msra.mxu0 0.0
    %5126 = vmatprep.subr.mxu0 0.0
    %5127 = vmatpush1.msra.mxu0 0.0
    %5128 = vmatprep.subr.mxu0 0.0
    %5129 = vmatpush1.msra.mxu0 0.0
    %5130 = vmatprep.subr.mxu0 0.0
    %5131 = vmatpush1.msra.mxu0 0.0
    %5132 = vmatprep.subr.mxu0 0.0
    %5133 = vmatpush1.msra.mxu0 0.0
    %5134 = vmatprep.subr.mxu0 0.0
    %5135 = vmatpush1.msra.mxu0 0.0
    %5136 = vmatprep.subr.mxu0 0.0
    %5137 = vmatpush1.msra.mxu0 0.0
    %5138 = vmatprep.subr.mxu0 0.0
    %5139 = vmatpush1.msra.mxu0 0.0
    %5140 = vmatprep.subr.mxu0 0.0
    %5141 = vmatpush1.msra.mxu0 0.0
    %5142 = vmatprep.subr.mxu0 0.0
    %5143 = vmatpush1.msra.mxu0 0.0
    %5144 = vmatprep.subr.mxu0 0.0
    %5145 = vmatpush1.msra.mxu0 0.0
    %5146 = vmatprep.subr.mxu0 0.0
    %5147 = vmatpush1.msra.mxu0 0.0
    %5148 = vmatprep.subr.mxu0 0.0
    %5149 = vmatpush1.msra.mxu0 0.0
    %5150 = vmatprep.subr.mxu0 0.0
    %5151 = vmatpush1.msra.mxu0 0.0
    %5152 = vmatprep.subr.mxu0 0.0
    %5153 = vmatpush1.msra.mxu0 0.0
    %5154 = vmatprep.subr.mxu0 0.0
    %5155 = vmatpush1.msra.mxu0 0.0
    %5156 = vmatprep.subr.mxu0 0.0
    %5157 = vmatpush1.msra.mxu0 0.0
    %5158 = vmatprep.subr.mxu0 0.0
    %5159 = vmatpush1.msra.mxu0 0.0
    %5160 = vmatprep.subr.mxu0 0.0
    %5161 = vmatpush1.msra.mxu0 0.0
    %5162 = vmatprep.subr.mxu0 0.0
    %5163 = vmatpush1.msra.mxu0 0.0
    %5164 = vmatprep.subr.mxu0 0.0
    %5165 = vmatpush1.msra.mxu0 0.0
    %5166 = vmatprep.subr.mxu0 0.0
    %5167 = vmatpush1.msra.mxu0 0.0
    %5168 = vmatprep.subr.mxu0 0.0
    %5169 = vmatpush1.msra.mxu0 0.0
    %5170 = vmatprep.subr.mxu0 0.0
    %5171 = vmatpush1.msra.mxu0 0.0
    %5172 = vmatprep.subr.mxu0 0.0
    %5173 = vmatpush1.msra.mxu0 0.0
    %5174 = vmatprep.mubr.f32.mxu0 0.0
    %5175 = vmatmul.mubr.f32.gmra.mrb[0].mxu0 %v5108
    %v5176 = vpop.f32.mrb[0].mxu0
    %v5177 = vadd.f32 0.0, %v5176
    %v5178 = vpop.f32.mrb[0].mxu0
    %5179 = vdwg.mxu0
    %v5181 = vrot.slane %v5177, 5
    %v5182 = vrot.slane %v5177, 6
    %v5185 = vadd.f32 %v2330, %v5181
    %v5186 = vadd.f32 %v2334, %v5182
    %v5187 = vxor.u32 %v5185, 2147483648
    %v5188 = vxor.u32 %v5186, 2147483648
    %v5189 = vmul.f32 %v5187, 1.442695
    %v5190 = vpow.pop %v5189
    %v5191 = vmul.f32 %v5188, 1.442695
    %v5192 = vpow.pop %v5191
    %v5193 = vadd.f32 %v5190, 1.0
    %v5194 = vadd.f32 %v5192, 1.0
    %v5195 = vrcp.pop %v5193
    %v5196 = vmul.f32 1.0, %v5195
    %v5197 = vrcp.pop %v5194
    %v5198 = vmul.f32 1.0, %v5197
    %v5199 = vtanh.pop %v5185
    %v5200 = vtanh.pop %v5186
    %v5203 = vrot.slane %v4637, 1
    %v5204 = vrot.slane %v4638, 1
    %v5207 = vmul.f32 %v5196, %v5203
    %v5208 = vmul.f32 %v5198, %v5204
    %5211 = vrot.lane.b32.xlu0 %v5199, 64
    %v5212 = vpop.permute.xlu0 %5211
    %5213 = vrot.lane.b32.xlu0 %v5200, 64
    %v5214 = vpop.permute.xlu0 %5213
    %v5217 = vmul.f32 %v5196, %v5212
    %v5218 = vmul.f32 %v5198, %v5214
    %5221 = vrot.lane.b32.xlu0 %v5217, 32
    %v5222 = vpop.permute.xlu0 %5221
    %5223 = vrot.lane.b32.xlu0 %v5218, 32
    %v5224 = vpop.permute.xlu0 %5223
    %v5227 = vadd.f32 %v5207, %v5222
    %v5228 = vadd.f32 %v5208, %v5224
    %v5229 = vtanh.pop %v5227
    %v5230 = vtanh.pop %v5228
    %5233 = vrot.lane.b32.xlu0 %v5229, 64
    %v5234 = vpop.permute.xlu0 %5233
    %5235 = vrot.lane.b32.xlu0 %v5230, 64
    %v5236 = vpop.permute.xlu0 %5235
    %v5239 = vmul.f32 %v5196, %v5234
    %v5240 = vmul.f32 %v5198, %v5236
    %vm5241 = vcmask 1044227
    %5242 = vst.msk [vmem:[#allocation2] sm:$0x8] %vm5241, %v5239
    %5243 = vst.msk [vmem:[#allocation2 + $0x8] sm:$0x8] %vm5241, %v5240
    %v5244 = vrot.slane %v4790, 4
    %v5245 = vrot.slane %v4791, 3
    %v5246 = vsel %vm2890, %v5245, %v5244
    %5247 = vrot.lane.b32.xlu0 %v5246, 32
    %v5248 = vpop.permute.xlu0 %5247
    %v5249 = vsel %vm2351, %v5248, 0
    %5251 = vmatprep.subr.mxu0 0.0
    %5252 = vmatpush1.msra.mxu0 %v2335
    %5253 = vmatprep.subr.mxu0 0.0
    %5254 = vmatpush1.msra.mxu0 %v2336
    %5255 = vmatprep.subr.mxu0 0.0
    %5256 = vmatpush1.msra.mxu0 %v2337
    %5257 = vmatprep.subr.mxu0 0.0
    %5258 = vmatpush1.msra.mxu0 %v2338
    %5259 = vmatprep.subr.mxu0 0.0
    %5260 = vmatpush1.msra.mxu0 0.0
    %5261 = vmatprep.subr.mxu0 0.0
    %5262 = vmatpush1.msra.mxu0 0.0
    %5263 = vmatprep.subr.mxu0 0.0
    %5264 = vmatpush1.msra.mxu0 0.0
    %5265 = vmatprep.subr.mxu0 0.0
    %5266 = vmatpush1.msra.mxu0 0.0
    %5267 = vmatprep.subr.mxu0 0.0
    %5268 = vmatpush1.msra.mxu0 0.0
    %5269 = vmatprep.subr.mxu0 0.0
    %5270 = vmatpush1.msra.mxu0 0.0
    %5271 = vmatprep.subr.mxu0 0.0
    %5272 = vmatpush1.msra.mxu0 0.0
    %5273 = vmatprep.subr.mxu0 0.0
    %5274 = vmatpush1.msra.mxu0 0.0
    %5275 = vmatprep.subr.mxu0 0.0
    %5276 = vmatpush1.msra.mxu0 0.0
    %5277 = vmatprep.subr.mxu0 0.0
    %5278 = vmatpush1.msra.mxu0 0.0
    %5279 = vmatprep.subr.mxu0 0.0
    %5280 = vmatpush1.msra.mxu0 0.0
    %5281 = vmatprep.subr.mxu0 0.0
    %5282 = vmatpush1.msra.mxu0 0.0
    %5283 = vmatprep.subr.mxu0 0.0
    %5284 = vmatpush1.msra.mxu0 0.0
    %5285 = vmatprep.subr.mxu0 0.0
    %5286 = vmatpush1.msra.mxu0 0.0
    %5287 = vmatprep.subr.mxu0 0.0
    %5288 = vmatpush1.msra.mxu0 0.0
    %5289 = vmatprep.subr.mxu0 0.0
    %5290 = vmatpush1.msra.mxu0 0.0
    %5291 = vmatprep.subr.mxu0 0.0
    %5292 = vmatpush1.msra.mxu0 0.0
    %5293 = vmatprep.subr.mxu0 0.0
    %5294 = vmatpush1.msra.mxu0 0.0
    %5295 = vmatprep.subr.mxu0 0.0
    %5296 = vmatpush1.msra.mxu0 0.0
    %5297 = vmatprep.subr.mxu0 0.0
    %5298 = vmatpush1.msra.mxu0 0.0
    %5299 = vmatprep.subr.mxu0 0.0
    %5300 = vmatpush1.msra.mxu0 0.0
    %5301 = vmatprep.subr.mxu0 0.0
    %5302 = vmatpush1.msra.mxu0 0.0
    %5303 = vmatprep.subr.mxu0 0.0
    %5304 = vmatpush1.msra.mxu0 0.0
    %5305 = vmatprep.subr.mxu0 0.0
    %5306 = vmatpush1.msra.mxu0 0.0
    %5307 = vmatprep.subr.mxu0 0.0
    %5308 = vmatpush1.msra.mxu0 0.0
    %5309 = vmatprep.subr.mxu0 0.0
    %5310 = vmatpush1.msra.mxu0 0.0
    %5311 = vmatprep.subr.mxu0 0.0
    %5312 = vmatpush1.msra.mxu0 0.0
    %5313 = vmatprep.subr.mxu0 0.0
    %5314 = vmatpush1.msra.mxu0 0.0
    %5315 = vmatprep.mubr.f32.mxu0 0.0
    %5316 = vmatmul.mubr.f32.gmra.mrb[0].mxu0 %v5249
    %v5317 = vpop.f32.mrb[0].mxu0
    %v5318 = vadd.f32 0.0, %v5317
    %v5319 = vpop.f32.mrb[0].mxu0
    %5320 = vdwg.mxu0
    %v5322 = vrot.slane %v5318, 3
    %v5323 = vrot.slane %v5318, 4
    %v5326 = vadd.f32 %v2327, %v5322
    %v5327 = vadd.f32 %v2331, %v5323
    %v5328 = vxor.u32 %v5326, 2147483648
    %v5329 = vxor.u32 %v5327, 2147483648
    %v5330 = vmul.f32 %v5328, 1.442695
    %v5331 = vpow.pop %v5330
    %v5332 = vmul.f32 %v5329, 1.442695
    %v5333 = vpow.pop %v5332
    %v5334 = vadd.f32 %v5331, 1.0
    %v5335 = vadd.f32 %v5333, 1.0
    %v5336 = vrcp.pop %v5334
    %v5337 = vmul.f32 1.0, %v5336
    %v5338 = vrcp.pop %v5335
    %v5339 = vmul.f32 1.0, %v5338
    %v5340 = vtanh.pop %v5326
    %v5341 = vtanh.pop %v5327
    %v5344 = vrot.slane %v4778, 7
    %v5345 = vrot.slane %v4779, 7
    %v5348 = vmul.f32 %v5337, %v5344
    %v5349 = vmul.f32 %v5339, %v5345
    %5352 = vrot.lane.b32.xlu0 %v5340, 64
    %v5353 = vpop.permute.xlu0 %5352
    %5354 = vrot.lane.b32.xlu0 %v5341, 64
    %v5355 = vpop.permute.xlu0 %5354
    %v5358 = vmul.f32 %v5337, %v5353
    %v5359 = vmul.f32 %v5339, %v5355
    %5362 = vrot.lane.b32.xlu0 %v5358, 32
    %v5363 = vpop.permute.xlu0 %5362
    %5364 = vrot.lane.b32.xlu0 %v5359, 32
    %v5365 = vpop.permute.xlu0 %5364
    %v5368 = vadd.f32 %v5348, %v5363
    %v5369 = vadd.f32 %v5349, %v5365
    %v5370 = vtanh.pop %v5368
    %v5371 = vtanh.pop %v5369
    %5374 = vrot.lane.b32.xlu0 %v5370, 64
    %v5375 = vpop.permute.xlu0 %5374
    %5376 = vrot.lane.b32.xlu0 %v5371, 64
    %v5377 = vpop.permute.xlu0 %5376
    %v5380 = vmul.f32 %v5337, %v5375
    %v5381 = vmul.f32 %v5339, %v5377
    %5384 = vrot.lane.b32.xlu0 %v5380, 32
    %v5385 = vpop.permute.xlu0 %5384
    %5386 = vrot.lane.b32.xlu0 %v5381, 32
    %v5387 = vpop.permute.xlu0 %5386
    %vm5390 = vcmask 259077
    %5391 = vst.msk [vmem:[#allocation2] sm:$0x20] %vm5390, %v5385
    %5392 = vst.msk [vmem:[#allocation2 + $0x8] sm:$0x20] %vm5390, %v5387
    %v5393 = vrot.slane %v4939, 3
    %v5394 = vrot.slane %v4940, 2
    %v5395 = vsel %vm2890, %v5394, %v5393
    %5396 = vrot.lane.b32.xlu0 %v5395, 32
    %v5397 = vpop.permute.xlu0 %5396
    %v5398 = vsel %vm2351, %v5397, 0
    %5400 = vmatprep.subr.mxu0 0.0
    %5401 = vmatpush1.msra.mxu0 %v2339
    %5402 = vmatprep.subr.mxu0 0.0
    %5403 = vmatpush1.msra.mxu0 %v2340
    %5404 = vmatprep.subr.mxu0 0.0
    %5405 = vmatpush1.msra.mxu0 %v2341
    %5406 = vmatprep.subr.mxu0 0.0
    %5407 = vmatpush1.msra.mxu0 %v2342
    %5408 = vmatprep.subr.mxu0 0.0
    %5409 = vmatpush1.msra.mxu0 0.0
    %5410 = vmatprep.subr.mxu0 0.0
    %5411 = vmatpush1.msra.mxu0 0.0
    %5412 = vmatprep.subr.mxu0 0.0
    %5413 = vmatpush1.msra.mxu0 0.0
    %5414 = vmatprep.subr.mxu0 0.0
    %5415 = vmatpush1.msra.mxu0 0.0
    %5416 = vmatprep.subr.mxu0 0.0
    %5417 = vmatpush1.msra.mxu0 0.0
    %5418 = vmatprep.subr.mxu0 0.0
    %5419 = vmatpush1.msra.mxu0 0.0
    %5420 = vmatprep.subr.mxu0 0.0
    %5421 = vmatpush1.msra.mxu0 0.0
    %5422 = vmatprep.subr.mxu0 0.0
    %5423 = vmatpush1.msra.mxu0 0.0
    %5424 = vmatprep.subr.mxu0 0.0
    %5425 = vmatpush1.msra.mxu0 0.0
    %5426 = vmatprep.subr.mxu0 0.0
    %5427 = vmatpush1.msra.mxu0 0.0
    %5428 = vmatprep.subr.mxu0 0.0
    %5429 = vmatpush1.msra.mxu0 0.0
    %5430 = vmatprep.subr.mxu0 0.0
    %5431 = vmatpush1.msra.mxu0 0.0
    %5432 = vmatprep.subr.mxu0 0.0
    %5433 = vmatpush1.msra.mxu0 0.0
    %5434 = vmatprep.subr.mxu0 0.0
    %5435 = vmatpush1.msra.mxu0 0.0
    %5436 = vmatprep.subr.mxu0 0.0
    %5437 = vmatpush1.msra.mxu0 0.0
    %5438 = vmatprep.subr.mxu0 0.0
    %5439 = vmatpush1.msra.mxu0 0.0
    %5440 = vmatprep.subr.mxu0 0.0
    %5441 = vmatpush1.msra.mxu0 0.0
    %5442 = vmatprep.subr.mxu0 0.0
    %5443 = vmatpush1.msra.mxu0 0.0
    %5444 = vmatprep.subr.mxu0 0.0
    %5445 = vmatpush1.msra.mxu0 0.0
    %5446 = vmatprep.subr.mxu0 0.0
    %5447 = vmatpush1.msra.mxu0 0.0
    %5448 = vmatprep.subr.mxu0 0.0
    %5449 = vmatpush1.msra.mxu0 0.0
    %5450 = vmatprep.subr.mxu0 0.0
    %5451 = vmatpush1.msra.mxu0 0.0
    %5452 = vmatprep.subr.mxu0 0.0
    %5453 = vmatpush1.msra.mxu0 0.0
    %5454 = vmatprep.subr.mxu0 0.0
    %5455 = vmatpush1.msra.mxu0 0.0
    %5456 = vmatprep.subr.mxu0 0.0
    %5457 = vmatpush1.msra.mxu0 0.0
    %5458 = vmatprep.subr.mxu0 0.0
    %5459 = vmatpush1.msra.mxu0 0.0
    %5460 = vmatprep.subr.mxu0 0.0
    %5461 = vmatpush1.msra.mxu0 0.0
    %5462 = vmatprep.subr.mxu0 0.0
    %5463 = vmatpush1.msra.mxu0 0.0
    %5464 = vmatprep.mubr.f32.mxu0 0.0
    %5465 = vmatmul.mubr.f32.gmra.mrb[0].mxu0 %v5398
    %v5466 = vpop.f32.mrb[0].mxu0
    %v5467 = vadd.f32 0.0, %v5466
    %v5468 = vpop.f32.mrb[0].mxu0
    %5469 = vdwg.mxu0
    %v5471 = vrot.slane %v5467, 6
    %v5472 = vrot.slane %v5467, 7
    %v5475 = vadd.f32 %v2328, %v5471
    %v5476 = vadd.f32 %v2332, %v5472
    %v5477 = vxor.u32 %v5475, 2147483648
    %v5478 = vxor.u32 %v5476, 2147483648
    %v5479 = vmul.f32 %v5477, 1.442695
    %v5480 = vpow.pop %v5479
    %v5481 = vmul.f32 %v5478, 1.442695
    %v5482 = vpow.pop %v5481
    %v5483 = vadd.f32 %v5480, 1.0
    %v5484 = vadd.f32 %v5482, 1.0
    %v5485 = vrcp.pop %v5483
    %v5486 = vmul.f32 1.0, %v5485
    %v5487 = vrcp.pop %v5484
    %v5488 = vmul.f32 1.0, %v5487
    %v5489 = vtanh.pop %v5475
    %v5490 = vtanh.pop %v5476
    %v5493 = vrot.slane %v4927, 1
    %v5494 = vrot.slane %v4928, 1
    %v5497 = vmul.f32 %v5486, %v5493
    %v5498 = vmul.f32 %v5488, %v5494
    %5501 = vrot.lane.b32.xlu0 %v5489, 64
    %v5502 = vpop.permute.xlu0 %5501
    %5503 = vrot.lane.b32.xlu0 %v5490, 64
    %v5504 = vpop.permute.xlu0 %5503
    %v5507 = vmul.f32 %v5486, %v5502
    %v5508 = vmul.f32 %v5488, %v5504
    %5511 = vrot.lane.b32.xlu0 %v5507, 32
    %v5512 = vpop.permute.xlu0 %5511
    %5513 = vrot.lane.b32.xlu0 %v5508, 32
    %v5514 = vpop.permute.xlu0 %5513
    %v5517 = vadd.f32 %v5497, %v5512
    %v5518 = vadd.f32 %v5498, %v5514
    %v5519 = vtanh.pop %v5517
    %v5520 = vtanh.pop %v5518
    %5523 = vrot.lane.b32.xlu0 %v5519, 64
    %v5524 = vpop.permute.xlu0 %5523
    %5525 = vrot.lane.b32.xlu0 %v5520, 64
    %v5526 = vpop.permute.xlu0 %5525
    %v5529 = vmul.f32 %v5486, %v5524
    %v5530 = vmul.f32 %v5488, %v5526
    %5533 = vrot.lane.b32.xlu0 %v5529, 64
    %v5534 = vpop.permute.xlu0 %5533
    %5535 = vrot.lane.b32.xlu0 %v5530, 64
    %v5536 = vpop.permute.xlu0 %5535
    %vm5539 = vcmask 518402
    %5540 = vst.msk [vmem:[#allocation2] sm:$0x4] %vm5539, %v5534
    %5541 = vst.msk [vmem:[#allocation2 + $0x8] sm:$0x4] %vm5539, %v5536
    %v5542 = vrot.slane %v5088, 4
    %v5543 = vrot.slane %v5089, 3
    %v5544 = vsel %vm2890, %v5543, %v5542
    %5545 = vrot.lane.b32.xlu0 %v5544, 32
    %v5546 = vpop.permute.xlu0 %5545
    %v5547 = vsel %vm2351, %v5546, 0
    %5549 = vmatprep.subr.mxu0 0.0
    %5550 = vmatpush1.msra.mxu0 %v2343
    %5551 = vmatprep.subr.mxu0 0.0
    %5552 = vmatpush1.msra.mxu0 %v2344
    %5553 = vmatprep.subr.mxu0 0.0
    %5554 = vmatpush1.msra.mxu0 %v2345
    %5555 = vmatprep.subr.mxu0 0.0
    %5556 = vmatpush1.msra.mxu0 %v2346
    %5557 = vmatprep.subr.mxu0 0.0
    %5558 = vmatpush1.msra.mxu0 0.0
    %5559 = vmatprep.subr.mxu0 0.0
    %5560 = vmatpush1.msra.mxu0 0.0
    %5561 = vmatprep.subr.mxu0 0.0
    %5562 = vmatpush1.msra.mxu0 0.0
    %5563 = vmatprep.subr.mxu0 0.0
    %5564 = vmatpush1.msra.mxu0 0.0
    %5565 = vmatprep.subr.mxu0 0.0
    %5566 = vmatpush1.msra.mxu0 0.0
    %5567 = vmatprep.subr.mxu0 0.0
    %5568 = vmatpush1.msra.mxu0 0.0
    %5569 = vmatprep.subr.mxu0 0.0
    %5570 = vmatpush1.msra.mxu0 0.0
    %5571 = vmatprep.subr.mxu0 0.0
    %5572 = vmatpush1.msra.mxu0 0.0
    %5573 = vmatprep.subr.mxu0 0.0
    %5574 = vmatpush1.msra.mxu0 0.0
    %5575 = vmatprep.subr.mxu0 0.0
    %5576 = vmatpush1.msra.mxu0 0.0
    %5577 = vmatprep.subr.mxu0 0.0
    %5578 = vmatpush1.msra.mxu0 0.0
    %5579 = vmatprep.subr.mxu0 0.0
    %5580 = vmatpush1.msra.mxu0 0.0
    %5581 = vmatprep.subr.mxu0 0.0
    %5582 = vmatpush1.msra.mxu0 0.0
    %5583 = vmatprep.subr.mxu0 0.0
    %5584 = vmatpush1.msra.mxu0 0.0
    %5585 = vmatprep.subr.mxu0 0.0
    %5586 = vmatpush1.msra.mxu0 0.0
    %5587 = vmatprep.subr.mxu0 0.0
    %5588 = vmatpush1.msra.mxu0 0.0
    %5589 = vmatprep.subr.mxu0 0.0
    %5590 = vmatpush1.msra.mxu0 0.0
    %5591 = vmatprep.subr.mxu0 0.0
    %5592 = vmatpush1.msra.mxu0 0.0
    %5593 = vmatprep.subr.mxu0 0.0
    %5594 = vmatpush1.msra.mxu0 0.0
    %5595 = vmatprep.subr.mxu0 0.0
    %5596 = vmatpush1.msra.mxu0 0.0
    %5597 = vmatprep.subr.mxu0 0.0
    %5598 = vmatpush1.msra.mxu0 0.0
    %5599 = vmatprep.subr.mxu0 0.0
    %5600 = vmatpush1.msra.mxu0 0.0
    %5601 = vmatprep.subr.mxu0 0.0
    %5602 = vmatpush1.msra.mxu0 0.0
    %5603 = vmatprep.subr.mxu0 0.0
    %5604 = vmatpush1.msra.mxu0 0.0
    %5605 = vmatprep.subr.mxu0 0.0
    %5606 = vmatpush1.msra.mxu0 0.0
    %5607 = vmatprep.subr.mxu0 0.0
    %5608 = vmatpush1.msra.mxu0 0.0
    %5609 = vmatprep.subr.mxu0 0.0
    %5610 = vmatpush1.msra.mxu0 0.0
    %5611 = vmatprep.subr.mxu0 0.0
    %5612 = vmatpush1.msra.mxu0 0.0
    %5613 = vmatprep.mubr.f32.mxu0 0.0
    %5614 = vmatmul.mubr.f32.gmra.mrb[0].mxu0 %v5547
    %v5615 = vpop.f32.mrb[0].mxu0
    %v5616 = vadd.f32 0.0, %v5615
    %v5617 = vpop.f32.mrb[0].mxu0
    %5618 = vdwg.mxu0
    %v5620 = vrot.slane %v5616, 3
    %v5621 = vrot.slane %v5616, 4
    %v5624 = vadd.f32 %v2329, %v5620
    %v5625 = vadd.f32 %v2333, %v5621
    %v5626 = vxor.u32 %v5624, 2147483648
    %v5627 = vxor.u32 %v5625, 2147483648
    %v5628 = vmul.f32 %v5626, 1.442695
    %v5629 = vpow.pop %v5628
    %v5630 = vmul.f32 %v5627, 1.442695
    %v5631 = vpow.pop %v5630
    %v5632 = vadd.f32 %v5629, 1.0
    %v5633 = vadd.f32 %v5631, 1.0
    %v5634 = vrcp.pop %v5632
    %v5635 = vmul.f32 1.0, %v5634
    %v5636 = vrcp.pop %v5633
    %v5637 = vmul.f32 1.0, %v5636
    %v5638 = vtanh.pop %v5624
    %v5639 = vtanh.pop %v5625
    %v5642 = vrot.slane %v5076, 7
    %v5643 = vrot.slane %v5077, 7
    %v5646 = vmul.f32 %v5635, %v5642
    %v5647 = vmul.f32 %v5637, %v5643
    %5650 = vrot.lane.b32.xlu0 %v5638, 64
    %v5651 = vpop.permute.xlu0 %5650
    %5652 = vrot.lane.b32.xlu0 %v5639, 64
    %v5653 = vpop.permute.xlu0 %5652
    %v5656 = vmul.f32 %v5635, %v5651
    %v5657 = vmul.f32 %v5637, %v5653
    %5660 = vrot.lane.b32.xlu0 %v5656, 32
    %v5661 = vpop.permute.xlu0 %5660
    %5662 = vrot.lane.b32.xlu0 %v5657, 32
    %v5663 = vpop.permute.xlu0 %5662
    %v5666 = vadd.f32 %v5646, %v5661
    %v5667 = vadd.f32 %v5647, %v5663
    %v5668 = vtanh.pop %v5666
    %v5669 = vtanh.pop %v5667
    %5672 = vrot.lane.b32.xlu0 %v5668, 64
    %v5673 = vpop.permute.xlu0 %5672
    %5674 = vrot.lane.b32.xlu0 %v5669, 64
    %v5675 = vpop.permute.xlu0 %5674
    %v5678 = vmul.f32 %v5635, %v5673
    %v5679 = vmul.f32 %v5637, %v5675
    %5682 = vrot.lane.b32.xlu0 %v5678, 96
    %v5683 = vpop.permute.xlu0 %5682
    %5684 = vrot.lane.b32.xlu0 %v5679, 96
    %v5685 = vpop.permute.xlu0 %5684
    %vm5688 = vcmask 783877
    %5689 = vst.msk [vmem:[#allocation2] sm:$0x20] %vm5688, %v5683
    %5690 = vst.msk [vmem:[#allocation2 + $0x8] sm:$0x20] %vm5688, %v5685
    %v5693 = vrot.slane %v5239, 3
    %v5694 = vrot.slane %v5240, 2
    %v5695 = vsel %vm2890, %v5694, %v5693
    %5696 = vrot.lane.b32.xlu0 %v5695, 32
    %v5697 = vpop.permute.xlu0 %5696
    %v5698 = vsel %vm2351, %v5697, 0
    %5700 = vmatprep.subr.mxu0 0.0
    %5701 = vmatpush1.msra.mxu0 %v2347
    %5702 = vmatprep.subr.mxu0 0.0
    %5703 = vmatpush1.msra.mxu0 %v2348
    %5704 = vmatprep.subr.mxu0 0.0
    %5705 = vmatpush1.msra.mxu0 %v2349
    %5706 = vmatprep.subr.mxu0 0.0
    %5707 = vmatpush1.msra.mxu0 %v2350
    %5708 = vmatprep.subr.mxu0 0.0
    %5709 = vmatpush1.msra.mxu0 0.0
    %5710 = vmatprep.subr.mxu0 0.0
    %5711 = vmatpush1.msra.mxu0 0.0
    %5712 = vmatprep.subr.mxu0 0.0
    %5713 = vmatpush1.msra.mxu0 0.0
    %5714 = vmatprep.subr.mxu0 0.0
    %5715 = vmatpush1.msra.mxu0 0.0
    %5716 = vmatprep.subr.mxu0 0.0
    %5717 = vmatpush1.msra.mxu0 0.0
    %5718 = vmatprep.subr.mxu0 0.0
    %5719 = vmatpush1.msra.mxu0 0.0
    %5720 = vmatprep.subr.mxu0 0.0
    %5721 = vmatpush1.msra.mxu0 0.0
    %5722 = vmatprep.subr.mxu0 0.0
    %5723 = vmatpush1.msra.mxu0 0.0
    %5724 = vmatprep.subr.mxu0 0.0
    %5725 = vmatpush1.msra.mxu0 0.0
    %5726 = vmatprep.subr.mxu0 0.0
    %5727 = vmatpush1.msra.mxu0 0.0
    %5728 = vmatprep.subr.mxu0 0.0
    %5729 = vmatpush1.msra.mxu0 0.0
    %5730 = vmatprep.subr.mxu0 0.0
    %5731 = vmatpush1.msra.mxu0 0.0
    %5732 = vmatprep.subr.mxu0 0.0
    %5733 = vmatpush1.msra.mxu0 0.0
    %5734 = vmatprep.subr.mxu0 0.0
    %5735 = vmatpush1.msra.mxu0 0.0
    %5736 = vmatprep.subr.mxu0 0.0
    %5737 = vmatpush1.msra.mxu0 0.0
    %5738 = vmatprep.subr.mxu0 0.0
    %5739 = vmatpush1.msra.mxu0 0.0
    %5740 = vmatprep.subr.mxu0 0.0
    %5741 = vmatpush1.msra.mxu0 0.0
    %5742 = vmatprep.subr.mxu0 0.0
    %5743 = vmatpush1.msra.mxu0 0.0
    %5744 = vmatprep.subr.mxu0 0.0
    %5745 = vmatpush1.msra.mxu0 0.0
    %5746 = vmatprep.subr.mxu0 0.0
    %5747 = vmatpush1.msra.mxu0 0.0
    %5748 = vmatprep.subr.mxu0 0.0
    %5749 = vmatpush1.msra.mxu0 0.0
    %5750 = vmatprep.subr.mxu0 0.0
    %5751 = vmatpush1.msra.mxu0 0.0
    %5752 = vmatprep.subr.mxu0 0.0
    %5753 = vmatpush1.msra.mxu0 0.0
    %5754 = vmatprep.subr.mxu0 0.0
    %5755 = vmatpush1.msra.mxu0 0.0
    %5756 = vmatprep.subr.mxu0 0.0
    %5757 = vmatpush1.msra.mxu0 0.0
    %5758 = vmatprep.subr.mxu0 0.0
    %5759 = vmatpush1.msra.mxu0 0.0
    %5760 = vmatprep.subr.mxu0 0.0
    %5761 = vmatpush1.msra.mxu0 0.0
    %5762 = vmatprep.subr.mxu0 0.0
    %5763 = vmatpush1.msra.mxu0 0.0
    %5764 = vmatprep.mubr.f32.mxu0 0.0
    %5765 = vmatmul.mubr.f32.gmra.mrb[0].mxu0 %v5698
    %v5766 = vpop.f32.mrb[0].mxu0
    %v5767 = vadd.f32 0.0, %v5766
    %v5768 = vpop.f32.mrb[0].mxu0
    %5769 = vdwg.mxu0
    %v5771 = vrot.slane %v5767, 6
    %v5772 = vrot.slane %v5767, 7
    %v5775 = vadd.f32 %v2330, %v5771
    %v5776 = vadd.f32 %v2334, %v5772
    %v5777 = vxor.u32 %v5775, 2147483648
    %v5778 = vxor.u32 %v5776, 2147483648
    %v5779 = vmul.f32 %v5777, 1.442695
    %v5780 = vpow.pop %v5779
    %v5781 = vmul.f32 %v5778, 1.442695
    %v5782 = vpow.pop %v5781
    %v5783 = vadd.f32 %v5780, 1.0
    %v5784 = vadd.f32 %v5782, 1.0
    %v5785 = vrcp.pop %v5783
    %v5786 = vmul.f32 1.0, %v5785
    %v5787 = vrcp.pop %v5784
    %v5788 = vmul.f32 1.0, %v5787
    %v5789 = vtanh.pop %v5775
    %v5790 = vtanh.pop %v5776
    %v5793 = vrot.slane %v5227, 1
    %v5794 = vrot.slane %v5228, 1
    %v5797 = vmul.f32 %v5786, %v5793
    %v5798 = vmul.f32 %v5788, %v5794
    %5801 = vrot.lane.b32.xlu0 %v5789, 64
    %v5802 = vpop.permute.xlu0 %5801
    %5803 = vrot.lane.b32.xlu0 %v5790, 64
    %v5804 = vpop.permute.xlu0 %5803
    %v5807 = vmul.f32 %v5786, %v5802
    %v5808 = vmul.f32 %v5788, %v5804
    %5811 = vrot.lane.b32.xlu0 %v5807, 32
    %v5812 = vpop.permute.xlu0 %5811
    %5813 = vrot.lane.b32.xlu0 %v5808, 32
    %v5814 = vpop.permute.xlu0 %5813
    %v5817 = vadd.f32 %v5797, %v5812
    %v5818 = vadd.f32 %v5798, %v5814
    %v5819 = vtanh.pop %v5817
    %v5820 = vtanh.pop %v5818
    %5823 = vrot.lane.b32.xlu0 %v5819, 64
    %v5824 = vpop.permute.xlu0 %5823
    %5825 = vrot.lane.b32.xlu0 %v5820, 64
    %v5826 = vpop.permute.xlu0 %5825
    %v5829 = vmul.f32 %v5786, %v5824
    %v5830 = vmul.f32 %v5788, %v5826
    %vm5831 = vcmask 1043202
    %5832 = vst.msk [vmem:[#allocation2] sm:$0x4] %vm5831, %v5829
    %5833 = vst.msk [vmem:[#allocation2 + $0x8] sm:$0x4] %vm5831, %v5830
    %v5834 = vrot.slane %v5380, 5
    %v5835 = vrot.slane %v5381, 4
    %v5836 = vsel %vm2890, %v5835, %v5834
    %5837 = vrot.lane.b32.xlu0 %v5836, 32
    %v5838 = vpop.permute.xlu0 %5837
    %v5839 = vsel %vm2351, %v5838, 0
    %5841 = vmatprep.subr.mxu0 0.0
    %5842 = vmatpush1.msra.mxu0 %v2335
    %5843 = vmatprep.subr.mxu0 0.0
    %5844 = vmatpush1.msra.mxu0 %v2336
    %5845 = vmatprep.subr.mxu0 0.0
    %5846 = vmatpush1.msra.mxu0 %v2337
    %5847 = vmatprep.subr.mxu0 0.0
    %5848 = vmatpush1.msra.mxu0 %v2338
    %5849 = vmatprep.subr.mxu0 0.0
    %5850 = vmatpush1.msra.mxu0 0.0
    %5851 = vmatprep.subr.mxu0 0.0
    %5852 = vmatpush1.msra.mxu0 0.0
    %5853 = vmatprep.subr.mxu0 0.0
    %5854 = vmatpush1.msra.mxu0 0.0
    %5855 = vmatprep.subr.mxu0 0.0
    %5856 = vmatpush1.msra.mxu0 0.0
    %5857 = vmatprep.subr.mxu0 0.0
    %5858 = vmatpush1.msra.mxu0 0.0
    %5859 = vmatprep.subr.mxu0 0.0
    %5860 = vmatpush1.msra.mxu0 0.0
    %5861 = vmatprep.subr.mxu0 0.0
    %5862 = vmatpush1.msra.mxu0 0.0
    %5863 = vmatprep.subr.mxu0 0.0
    %5864 = vmatpush1.msra.mxu0 0.0
    %5865 = vmatprep.subr.mxu0 0.0
    %5866 = vmatpush1.msra.mxu0 0.0
    %5867 = vmatprep.subr.mxu0 0.0
    %5868 = vmatpush1.msra.mxu0 0.0
    %5869 = vmatprep.subr.mxu0 0.0
    %5870 = vmatpush1.msra.mxu0 0.0
    %5871 = vmatprep.subr.mxu0 0.0
    %5872 = vmatpush1.msra.mxu0 0.0
    %5873 = vmatprep.subr.mxu0 0.0
    %5874 = vmatpush1.msra.mxu0 0.0
    %5875 = vmatprep.subr.mxu0 0.0
    %5876 = vmatpush1.msra.mxu0 0.0
    %5877 = vmatprep.subr.mxu0 0.0
    %5878 = vmatpush1.msra.mxu0 0.0
    %5879 = vmatprep.subr.mxu0 0.0
    %5880 = vmatpush1.msra.mxu0 0.0
    %5881 = vmatprep.subr.mxu0 0.0
    %5882 = vmatpush1.msra.mxu0 0.0
    %5883 = vmatprep.subr.mxu0 0.0
    %5884 = vmatpush1.msra.mxu0 0.0
    %5885 = vmatprep.subr.mxu0 0.0
    %5886 = vmatpush1.msra.mxu0 0.0
    %5887 = vmatprep.subr.mxu0 0.0
    %5888 = vmatpush1.msra.mxu0 0.0
    %5889 = vmatprep.subr.mxu0 0.0
    %5890 = vmatpush1.msra.mxu0 0.0
    %5891 = vmatprep.subr.mxu0 0.0
    %5892 = vmatpush1.msra.mxu0 0.0
    %5893 = vmatprep.subr.mxu0 0.0
    %5894 = vmatpush1.msra.mxu0 0.0
    %5895 = vmatprep.subr.mxu0 0.0
    %5896 = vmatpush1.msra.mxu0 0.0
    %5897 = vmatprep.subr.mxu0 0.0
    %5898 = vmatpush1.msra.mxu0 0.0
    %5899 = vmatprep.subr.mxu0 0.0
    %5900 = vmatpush1.msra.mxu0 0.0
    %5901 = vmatprep.subr.mxu0 0.0
    %5902 = vmatpush1.msra.mxu0 0.0
    %5903 = vmatprep.subr.mxu0 0.0
    %5904 = vmatpush1.msra.mxu0 0.0
    %5905 = vmatprep.mubr.f32.mxu0 0.0
    %5906 = vmatmul.mubr.f32.gmra.mrb[0].mxu0 %v5839
    %v5907 = vpop.f32.mrb[0].mxu0
    %v5908 = vadd.f32 0.0, %v5907
    %v5909 = vpop.f32.mrb[0].mxu0
    %5910 = vdwg.mxu0
    %v5912 = vrot.slane %v5908, 2
    %v5913 = vrot.slane %v5908, 3
    %v5916 = vadd.f32 %v2327, %v5912
    %v5917 = vadd.f32 %v2331, %v5913
    %v5918 = vxor.u32 %v5916, 2147483648
    %v5919 = vxor.u32 %v5917, 2147483648
    %v5920 = vmul.f32 %v5918, 1.442695
    %v5921 = vpow.pop %v5920
    %v5922 = vmul.f32 %v5919, 1.442695
    %v5923 = vpow.pop %v5922
    %v5924 = vadd.f32 %v5921, 1.0
    %v5925 = vadd.f32 %v5923, 1.0
    %v5926 = vrcp.pop %v5924
    %v5927 = vmul.f32 1.0, %v5926
    %v5928 = vrcp.pop %v5925
    %v5929 = vmul.f32 1.0, %v5928
    %v5930 = vtanh.pop %v5916
    %v5931 = vtanh.pop %v5917
    %v5934 = vrot.slane %v5368, 7
    %v5935 = vrot.slane %v5369, 7
    %v5938 = vmul.f32 %v5927, %v5934
    %v5939 = vmul.f32 %v5929, %v5935
    %5942 = vrot.lane.b32.xlu0 %v5930, 64
    %v5943 = vpop.permute.xlu0 %5942
    %5944 = vrot.lane.b32.xlu0 %v5931, 64
    %v5945 = vpop.permute.xlu0 %5944
    %v5948 = vmul.f32 %v5927, %v5943
    %v5949 = vmul.f32 %v5929, %v5945
    %5952 = vrot.lane.b32.xlu0 %v5948, 32
    %v5953 = vpop.permute.xlu0 %5952
    %5954 = vrot.lane.b32.xlu0 %v5949, 32
    %v5955 = vpop.permute.xlu0 %5954
    %v5958 = vadd.f32 %v5938, %v5953
    %v5959 = vadd.f32 %v5939, %v5955
    %v5960 = vtanh.pop %v5958
    %v5961 = vtanh.pop %v5959
    %5964 = vrot.lane.b32.xlu0 %v5960, 64
    %v5965 = vpop.permute.xlu0 %5964
    %5966 = vrot.lane.b32.xlu0 %v5961, 64
    %v5967 = vpop.permute.xlu0 %5966
    %v5970 = vmul.f32 %v5927, %v5965
    %v5971 = vmul.f32 %v5929, %v5967
    %5974 = vrot.lane.b32.xlu0 %v5970, 32
    %v5975 = vpop.permute.xlu0 %5974
    %5976 = vrot.lane.b32.xlu0 %v5971, 32
    %v5977 = vpop.permute.xlu0 %5976
    %vm5980 = vcmask 260102
    %5981 = vst.msk [vmem:[#allocation2] sm:$0x40] %vm5980, %v5975
    %5982 = vst.msk [vmem:[#allocation2 + $0x8] sm:$0x40] %vm5980, %v5977
    %v5983 = vrot.slane %v5529, 2
    %v5984 = vrot.slane %v5530, 1
    %v5985 = vsel %vm2890, %v5984, %v5983
    %5986 = vrot.lane.b32.xlu0 %v5985, 32
    %v5987 = vpop.permute.xlu0 %5986
    %v5988 = vsel %vm2351, %v5987, 0
    %5990 = vmatprep.subr.mxu0 0.0
    %5991 = vmatpush1.msra.mxu0 %v2339
    %5992 = vmatprep.subr.mxu0 0.0
    %5993 = vmatpush1.msra.mxu0 %v2340
    %5994 = vmatprep.subr.mxu0 0.0
    %5995 = vmatpush1.msra.mxu0 %v2341
    %5996 = vmatprep.subr.mxu0 0.0
    %5997 = vmatpush1.msra.mxu0 %v2342
    %5998 = vmatprep.subr.mxu0 0.0
    %5999 = vmatpush1.msra.mxu0 0.0
    %6000 = vmatprep.subr.mxu0 0.0
    %6001 = vmatpush1.msra.mxu0 0.0
    %6002 = vmatprep.subr.mxu0 0.0
    %6003 = vmatpush1.msra.mxu0 0.0
    %6004 = vmatprep.subr.mxu0 0.0
    %6005 = vmatpush1.msra.mxu0 0.0
    %6006 = vmatprep.subr.mxu0 0.0
    %6007 = vmatpush1.msra.mxu0 0.0
    %6008 = vmatprep.subr.mxu0 0.0
    %6009 = vmatpush1.msra.mxu0 0.0
    %6010 = vmatprep.subr.mxu0 0.0
    %6011 = vmatpush1.msra.mxu0 0.0
    %6012 = vmatprep.subr.mxu0 0.0
    %6013 = vmatpush1.msra.mxu0 0.0
    %6014 = vmatprep.subr.mxu0 0.0
    %6015 = vmatpush1.msra.mxu0 0.0
    %6016 = vmatprep.subr.mxu0 0.0
    %6017 = vmatpush1.msra.mxu0 0.0
    %6018 = vmatprep.subr.mxu0 0.0
    %6019 = vmatpush1.msra.mxu0 0.0
    %6020 = vmatprep.subr.mxu0 0.0
    %6021 = vmatpush1.msra.mxu0 0.0
    %6022 = vmatprep.subr.mxu0 0.0
    %6023 = vmatpush1.msra.mxu0 0.0
    %6024 = vmatprep.subr.mxu0 0.0
    %6025 = vmatpush1.msra.mxu0 0.0
    %6026 = vmatprep.subr.mxu0 0.0
    %6027 = vmatpush1.msra.mxu0 0.0
    %6028 = vmatprep.subr.mxu0 0.0
    %6029 = vmatpush1.msra.mxu0 0.0
    %6030 = vmatprep.subr.mxu0 0.0
    %6031 = vmatpush1.msra.mxu0 0.0
    %6032 = vmatprep.subr.mxu0 0.0
    %6033 = vmatpush1.msra.mxu0 0.0
    %6034 = vmatprep.subr.mxu0 0.0
    %6035 = vmatpush1.msra.mxu0 0.0
    %6036 = vmatprep.subr.mxu0 0.0
    %6037 = vmatpush1.msra.mxu0 0.0
    %6038 = vmatprep.subr.mxu0 0.0
    %6039 = vmatpush1.msra.mxu0 0.0
    %6040 = vmatprep.subr.mxu0 0.0
    %6041 = vmatpush1.msra.mxu0 0.0
    %6042 = vmatprep.subr.mxu0 0.0
    %6043 = vmatpush1.msra.mxu0 0.0
    %6044 = vmatprep.subr.mxu0 0.0
    %6045 = vmatpush1.msra.mxu0 0.0
    %6046 = vmatprep.subr.mxu0 0.0
    %6047 = vmatpush1.msra.mxu0 0.0
    %6048 = vmatprep.subr.mxu0 0.0
    %6049 = vmatpush1.msra.mxu0 0.0
    %6050 = vmatprep.subr.mxu0 0.0
    %6051 = vmatpush1.msra.mxu0 0.0
    %6052 = vmatprep.subr.mxu0 0.0
    %6053 = vmatpush1.msra.mxu0 0.0
    %6054 = vmatprep.mubr.f32.mxu0 0.0
    %6055 = vmatmul.mubr.f32.gmra.mrb[0].mxu0 %v5988
    %v6056 = vpop.f32.mrb[0].mxu0
    %v6057 = vadd.f32 0.0, %v6056
    %v6058 = vpop.f32.mrb[0].mxu0
    %6059 = vdwg.mxu0
    %v6061 = vrot.slane %v6057, 7
    %v6064 = vadd.f32 %v2328, %v6061
    %v6065 = vadd.f32 %v2332, %v6057
    %v6066 = vxor.u32 %v6064, 2147483648
    %v6067 = vxor.u32 %v6065, 2147483648
    %v6068 = vmul.f32 %v6066, 1.442695
    %v6069 = vpow.pop %v6068
    %v6070 = vmul.f32 %v6067, 1.442695
    %v6071 = vpow.pop %v6070
    %v6072 = vadd.f32 %v6069, 1.0
    %v6073 = vadd.f32 %v6071, 1.0
    %v6074 = vrcp.pop %v6072
    %v6075 = vmul.f32 1.0, %v6074
    %v6076 = vrcp.pop %v6073
    %v6077 = vmul.f32 1.0, %v6076
    %v6078 = vtanh.pop %v6064
    %v6079 = vtanh.pop %v6065
    %v6082 = vrot.slane %v5517, 1
    %v6083 = vrot.slane %v5518, 1
    %v6086 = vmul.f32 %v6075, %v6082
    %v6087 = vmul.f32 %v6077, %v6083
    %6090 = vrot.lane.b32.xlu0 %v6078, 64
    %v6091 = vpop.permute.xlu0 %6090
    %6092 = vrot.lane.b32.xlu0 %v6079, 64
    %v6093 = vpop.permute.xlu0 %6092
    %v6096 = vmul.f32 %v6075, %v6091
    %v6097 = vmul.f32 %v6077, %v6093
    %6100 = vrot.lane.b32.xlu0 %v6096, 32
    %v6101 = vpop.permute.xlu0 %6100
    %6102 = vrot.lane.b32.xlu0 %v6097, 32
    %v6103 = vpop.permute.xlu0 %6102
    %v6106 = vadd.f32 %v6086, %v6101
    %v6107 = vadd.f32 %v6087, %v6103
    %v6108 = vtanh.pop %v6106
    %v6109 = vtanh.pop %v6107
    %6112 = vrot.lane.b32.xlu0 %v6108, 64
    %v6113 = vpop.permute.xlu0 %6112
    %6114 = vrot.lane.b32.xlu0 %v6109, 64
    %v6115 = vpop.permute.xlu0 %6114
    %v6118 = vmul.f32 %v6075, %v6113
    %v6119 = vmul.f32 %v6077, %v6115
    %6122 = vrot.lane.b32.xlu0 %v6118, 64
    %v6123 = vpop.permute.xlu0 %6122
    %6124 = vrot.lane.b32.xlu0 %v6119, 64
    %v6125 = vpop.permute.xlu0 %6124
    %vm6128 = vcmask 517377
    %6129 = vst.msk [vmem:[#allocation2] sm:$0x2] %vm6128, %v6123
    %6130 = vst.msk [vmem:[#allocation2 + $0x8] sm:$0x2] %vm6128, %v6125
    %v6131 = vrot.slane %v5678, 5
    %v6132 = vrot.slane %v5679, 4
    %v6133 = vsel %vm2890, %v6132, %v6131
    %6134 = vrot.lane.b32.xlu0 %v6133, 32
    %v6135 = vpop.permute.xlu0 %6134
    %v6136 = vsel %vm2351, %v6135, 0
    %6138 = vmatprep.subr.mxu0 0.0
    %6139 = vmatpush1.msra.mxu0 %v2343
    %6140 = vmatprep.subr.mxu0 0.0
    %6141 = vmatpush1.msra.mxu0 %v2344
    %6142 = vmatprep.subr.mxu0 0.0
    %6143 = vmatpush1.msra.mxu0 %v2345
    %6144 = vmatprep.subr.mxu0 0.0
    %6145 = vmatpush1.msra.mxu0 %v2346
    %6146 = vmatprep.subr.mxu0 0.0
    %6147 = vmatpush1.msra.mxu0 0.0
    %6148 = vmatprep.subr.mxu0 0.0
    %6149 = vmatpush1.msra.mxu0 0.0
    %6150 = vmatprep.subr.mxu0 0.0
    %6151 = vmatpush1.msra.mxu0 0.0
    %6152 = vmatprep.subr.mxu0 0.0
    %6153 = vmatpush1.msra.mxu0 0.0
    %6154 = vmatprep.subr.mxu0 0.0
    %6155 = vmatpush1.msra.mxu0 0.0
    %6156 = vmatprep.subr.mxu0 0.0
    %6157 = vmatpush1.msra.mxu0 0.0
    %6158 = vmatprep.subr.mxu0 0.0
    %6159 = vmatpush1.msra.mxu0 0.0
    %6160 = vmatprep.subr.mxu0 0.0
    %6161 = vmatpush1.msra.mxu0 0.0
    %6162 = vmatprep.subr.mxu0 0.0
    %6163 = vmatpush1.msra.mxu0 0.0
    %6164 = vmatprep.subr.mxu0 0.0
    %6165 = vmatpush1.msra.mxu0 0.0
    %6166 = vmatprep.subr.mxu0 0.0
    %6167 = vmatpush1.msra.mxu0 0.0
    %6168 = vmatprep.subr.mxu0 0.0
    %6169 = vmatpush1.msra.mxu0 0.0
    %6170 = vmatprep.subr.mxu0 0.0
    %6171 = vmatpush1.msra.mxu0 0.0
    %6172 = vmatprep.subr.mxu0 0.0
    %6173 = vmatpush1.msra.mxu0 0.0
    %6174 = vmatprep.subr.mxu0 0.0
    %6175 = vmatpush1.msra.mxu0 0.0
    %6176 = vmatprep.subr.mxu0 0.0
    %6177 = vmatpush1.msra.mxu0 0.0
    %6178 = vmatprep.subr.mxu0 0.0
    %6179 = vmatpush1.msra.mxu0 0.0
    %6180 = vmatprep.subr.mxu0 0.0
    %6181 = vmatpush1.msra.mxu0 0.0
    %6182 = vmatprep.subr.mxu0 0.0
    %6183 = vmatpush1.msra.mxu0 0.0
    %6184 = vmatprep.subr.mxu0 0.0
    %6185 = vmatpush1.msra.mxu0 0.0
    %6186 = vmatprep.subr.mxu0 0.0
    %6187 = vmatpush1.msra.mxu0 0.0
    %6188 = vmatprep.subr.mxu0 0.0
    %6189 = vmatpush1.msra.mxu0 0.0
    %6190 = vmatprep.subr.mxu0 0.0
    %6191 = vmatpush1.msra.mxu0 0.0
    %6192 = vmatprep.subr.mxu0 0.0
    %6193 = vmatpush1.msra.mxu0 0.0
    %6194 = vmatprep.subr.mxu0 0.0
    %6195 = vmatpush1.msra.mxu0 0.0
    %6196 = vmatprep.subr.mxu0 0.0
    %6197 = vmatpush1.msra.mxu0 0.0
    %6198 = vmatprep.subr.mxu0 0.0
    %6199 = vmatpush1.msra.mxu0 0.0
    %6200 = vmatprep.subr.mxu0 0.0
    %6201 = vmatpush1.msra.mxu0 0.0
    %6202 = vmatprep.mubr.f32.mxu0 0.0
    %6203 = vmatmul.mubr.f32.gmra.mrb[0].mxu0 %v6136
    %v6204 = vpop.f32.mrb[0].mxu0
    %v6205 = vadd.f32 0.0, %v6204
    %v6206 = vpop.f32.mrb[0].mxu0
    %6207 = vdwg.mxu0
    %v6209 = vrot.slane %v6205, 2
    %v6210 = vrot.slane %v6205, 3
    %v6213 = vadd.f32 %v2329, %v6209
    %v6214 = vadd.f32 %v2333, %v6210
    %v6215 = vxor.u32 %v6213, 2147483648
    %v6216 = vxor.u32 %v6214, 2147483648
    %v6217 = vmul.f32 %v6215, 1.442695
    %v6218 = vpow.pop %v6217
    %v6219 = vmul.f32 %v6216, 1.442695
    %v6220 = vpow.pop %v6219
    %v6221 = vadd.f32 %v6218, 1.0
    %v6222 = vadd.f32 %v6220, 1.0
    %v6223 = vrcp.pop %v6221
    %v6224 = vmul.f32 1.0, %v6223
    %v6225 = vrcp.pop %v6222
    %v6226 = vmul.f32 1.0, %v6225
    %v6227 = vtanh.pop %v6213
    %v6228 = vtanh.pop %v6214
    %v6231 = vrot.slane %v5666, 7
    %v6232 = vrot.slane %v5667, 7
    %v6235 = vmul.f32 %v6224, %v6231
    %v6236 = vmul.f32 %v6226, %v6232
    %6239 = vrot.lane.b32.xlu0 %v6227, 64
    %v6240 = vpop.permute.xlu0 %6239
    %6241 = vrot.lane.b32.xlu0 %v6228, 64
    %v6242 = vpop.permute.xlu0 %6241
    %v6245 = vmul.f32 %v6224, %v6240
    %v6246 = vmul.f32 %v6226, %v6242
    %6249 = vrot.lane.b32.xlu0 %v6245, 32
    %v6250 = vpop.permute.xlu0 %6249
    %6251 = vrot.lane.b32.xlu0 %v6246, 32
    %v6252 = vpop.permute.xlu0 %6251
    %v6255 = vadd.f32 %v6235, %v6250
    %v6256 = vadd.f32 %v6236, %v6252
    %v6257 = vtanh.pop %v6255
    %v6258 = vtanh.pop %v6256
    %6261 = vrot.lane.b32.xlu0 %v6257, 64
    %v6262 = vpop.permute.xlu0 %6261
    %6263 = vrot.lane.b32.xlu0 %v6258, 64
    %v6264 = vpop.permute.xlu0 %6263
    %v6267 = vmul.f32 %v6224, %v6262
    %v6268 = vmul.f32 %v6226, %v6264
    %6271 = vrot.lane.b32.xlu0 %v6267, 96
    %v6272 = vpop.permute.xlu0 %6271
    %6273 = vrot.lane.b32.xlu0 %v6268, 96
    %v6274 = vpop.permute.xlu0 %6273
    %vm6277 = vcmask 784902
    %6278 = vst.msk [vmem:[#allocation2] sm:$0x40] %vm6277, %v6272
    %6279 = vst.msk [vmem:[#allocation2 + $0x8] sm:$0x40] %vm6277, %v6274
    %v6282 = vrot.slane %v5829, 2
    %v6283 = vrot.slane %v5830, 1
    %v6284 = vsel %vm2890, %v6283, %v6282
    %6285 = vrot.lane.b32.xlu0 %v6284, 32
    %v6286 = vpop.permute.xlu0 %6285
    %v6287 = vsel %vm2351, %v6286, 0
    %6289 = vmatprep.subr.mxu0 0.0
    %6290 = vmatpush1.msra.mxu0 %v2347
    %6291 = vmatprep.subr.mxu0 0.0
    %6292 = vmatpush1.msra.mxu0 %v2348
    %6293 = vmatprep.subr.mxu0 0.0
    %6294 = vmatpush1.msra.mxu0 %v2349
    %6295 = vmatprep.subr.mxu0 0.0
    %6296 = vmatpush1.msra.mxu0 %v2350
    %6297 = vmatprep.subr.mxu0 0.0
    %6298 = vmatpush1.msra.mxu0 0.0
    %6299 = vmatprep.subr.mxu0 0.0
    %6300 = vmatpush1.msra.mxu0 0.0
    %6301 = vmatprep.subr.mxu0 0.0
    %6302 = vmatpush1.msra.mxu0 0.0
    %6303 = vmatprep.subr.mxu0 0.0
    %6304 = vmatpush1.msra.mxu0 0.0
    %6305 = vmatprep.subr.mxu0 0.0
    %6306 = vmatpush1.msra.mxu0 0.0
    %6307 = vmatprep.subr.mxu0 0.0
    %6308 = vmatpush1.msra.mxu0 0.0
    %6309 = vmatprep.subr.mxu0 0.0
    %6310 = vmatpush1.msra.mxu0 0.0
    %6311 = vmatprep.subr.mxu0 0.0
    %6312 = vmatpush1.msra.mxu0 0.0
    %6313 = vmatprep.subr.mxu0 0.0
    %6314 = vmatpush1.msra.mxu0 0.0
    %6315 = vmatprep.subr.mxu0 0.0
    %6316 = vmatpush1.msra.mxu0 0.0
    %6317 = vmatprep.subr.mxu0 0.0
    %6318 = vmatpush1.msra.mxu0 0.0
    %6319 = vmatprep.subr.mxu0 0.0
    %6320 = vmatpush1.msra.mxu0 0.0
    %6321 = vmatprep.subr.mxu0 0.0
    %6322 = vmatpush1.msra.mxu0 0.0
    %6323 = vmatprep.subr.mxu0 0.0
    %6324 = vmatpush1.msra.mxu0 0.0
    %6325 = vmatprep.subr.mxu0 0.0
    %6326 = vmatpush1.msra.mxu0 0.0
    %6327 = vmatprep.subr.mxu0 0.0
    %6328 = vmatpush1.msra.mxu0 0.0
    %6329 = vmatprep.subr.mxu0 0.0
    %6330 = vmatpush1.msra.mxu0 0.0
    %6331 = vmatprep.subr.mxu0 0.0
    %6332 = vmatpush1.msra.mxu0 0.0
    %6333 = vmatprep.subr.mxu0 0.0
    %6334 = vmatpush1.msra.mxu0 0.0
    %6335 = vmatprep.subr.mxu0 0.0
    %6336 = vmatpush1.msra.mxu0 0.0
    %6337 = vmatprep.subr.mxu0 0.0
    %6338 = vmatpush1.msra.mxu0 0.0
    %6339 = vmatprep.subr.mxu0 0.0
    %6340 = vmatpush1.msra.mxu0 0.0
    %6341 = vmatprep.subr.mxu0 0.0
    %6342 = vmatpush1.msra.mxu0 0.0
    %6343 = vmatprep.subr.mxu0 0.0
    %6344 = vmatpush1.msra.mxu0 0.0
    %6345 = vmatprep.subr.mxu0 0.0
    %6346 = vmatpush1.msra.mxu0 0.0
    %6347 = vmatprep.subr.mxu0 0.0
    %6348 = vmatpush1.msra.mxu0 0.0
    %6349 = vmatprep.subr.mxu0 0.0
    %6350 = vmatpush1.msra.mxu0 0.0
    %6351 = vmatprep.subr.mxu0 0.0
    %6352 = vmatpush1.msra.mxu0 0.0
    %6353 = vmatprep.mubr.f32.mxu0 0.0
    %6354 = vmatmul.mubr.f32.gmra.mrb[0].mxu0 %v6287
    %v6355 = vpop.f32.mrb[0].mxu0
    %v6356 = vadd.f32 0.0, %v6355
    %v6357 = vpop.f32.mrb[0].mxu0
    %6358 = vdwg.mxu0
    %v6360 = vrot.slane %v6356, 7
    %v6363 = vadd.f32 %v2330, %v6360
    %v6364 = vadd.f32 %v2334, %v6356
    %v6365 = vxor.u32 %v6363, 2147483648
    %v6366 = vxor.u32 %v6364, 2147483648
    %v6367 = vmul.f32 %v6365, 1.442695
    %v6368 = vpow.pop %v6367
    %v6369 = vmul.f32 %v6366, 1.442695
    %v6370 = vpow.pop %v6369
    %v6371 = vadd.f32 %v6368, 1.0
    %v6372 = vadd.f32 %v6370, 1.0
    %v6373 = vrcp.pop %v6371
    %v6374 = vmul.f32 1.0, %v6373
    %v6375 = vrcp.pop %v6372
    %v6376 = vmul.f32 1.0, %v6375
    %v6377 = vtanh.pop %v6363
    %v6378 = vtanh.pop %v6364
    %v6381 = vrot.slane %v5817, 1
    %v6382 = vrot.slane %v5818, 1
    %v6385 = vmul.f32 %v6374, %v6381
    %v6386 = vmul.f32 %v6376, %v6382
    %6389 = vrot.lane.b32.xlu0 %v6377, 64
    %v6390 = vpop.permute.xlu0 %6389
    %6391 = vrot.lane.b32.xlu0 %v6378, 64
    %v6392 = vpop.permute.xlu0 %6391
    %v6395 = vmul.f32 %v6374, %v6390
    %v6396 = vmul.f32 %v6376, %v6392
    %6399 = vrot.lane.b32.xlu0 %v6395, 32
    %v6400 = vpop.permute.xlu0 %6399
    %6401 = vrot.lane.b32.xlu0 %v6396, 32
    %v6402 = vpop.permute.xlu0 %6401
    %v6405 = vadd.f32 %v6385, %v6400
    %v6406 = vadd.f32 %v6386, %v6402
    %v6407 = vtanh.pop %v6405
    %v6408 = vtanh.pop %v6406
    %6411 = vrot.lane.b32.xlu0 %v6407, 64
    %v6412 = vpop.permute.xlu0 %6411
    %6413 = vrot.lane.b32.xlu0 %v6408, 64
    %v6414 = vpop.permute.xlu0 %6413
    %v6417 = vmul.f32 %v6374, %v6412
    %v6418 = vmul.f32 %v6376, %v6414
    %vm6419 = vcmask 1042177
    %6420 = vst.msk [vmem:[#allocation2] sm:$0x2] %vm6419, %v6417
    %6421 = vst.msk [vmem:[#allocation2 + $0x8] sm:$0x2] %vm6419, %v6418
    %v6422 = vrot.slane %v5970, 6
    %v6423 = vrot.slane %v5971, 5
    %v6424 = vsel %vm2890, %v6423, %v6422
    %6425 = vrot.lane.b32.xlu0 %v6424, 32
    %v6426 = vpop.permute.xlu0 %6425
    %v6427 = vsel %vm2351, %v6426, 0
    %6429 = vmatprep.subr.mxu0 0.0
    %6430 = vmatpush1.msra.mxu0 %v2335
    %6431 = vmatprep.subr.mxu0 0.0
    %6432 = vmatpush1.msra.mxu0 %v2336
    %6433 = vmatprep.subr.mxu0 0.0
    %6434 = vmatpush1.msra.mxu0 %v2337
    %6435 = vmatprep.subr.mxu0 0.0
    %6436 = vmatpush1.msra.mxu0 %v2338
    %6437 = vmatprep.subr.mxu0 0.0
    %6438 = vmatpush1.msra.mxu0 0.0
    %6439 = vmatprep.subr.mxu0 0.0
    %6440 = vmatpush1.msra.mxu0 0.0
    %6441 = vmatprep.subr.mxu0 0.0
    %6442 = vmatpush1.msra.mxu0 0.0
    %6443 = vmatprep.subr.mxu0 0.0
    %6444 = vmatpush1.msra.mxu0 0.0
    %6445 = vmatprep.subr.mxu0 0.0
    %6446 = vmatpush1.msra.mxu0 0.0
    %6447 = vmatprep.subr.mxu0 0.0
    %6448 = vmatpush1.msra.mxu0 0.0
    %6449 = vmatprep.subr.mxu0 0.0
    %6450 = vmatpush1.msra.mxu0 0.0
    %6451 = vmatprep.subr.mxu0 0.0
    %6452 = vmatpush1.msra.mxu0 0.0
    %6453 = vmatprep.subr.mxu0 0.0
    %6454 = vmatpush1.msra.mxu0 0.0
    %6455 = vmatprep.subr.mxu0 0.0
    %6456 = vmatpush1.msra.mxu0 0.0
    %6457 = vmatprep.subr.mxu0 0.0
    %6458 = vmatpush1.msra.mxu0 0.0
    %6459 = vmatprep.subr.mxu0 0.0
    %6460 = vmatpush1.msra.mxu0 0.0
    %6461 = vmatprep.subr.mxu0 0.0
    %6462 = vmatpush1.msra.mxu0 0.0
    %6463 = vmatprep.subr.mxu0 0.0
    %6464 = vmatpush1.msra.mxu0 0.0
    %6465 = vmatprep.subr.mxu0 0.0
    %6466 = vmatpush1.msra.mxu0 0.0
    %6467 = vmatprep.subr.mxu0 0.0
    %6468 = vmatpush1.msra.mxu0 0.0
    %6469 = vmatprep.subr.mxu0 0.0
    %6470 = vmatpush1.msra.mxu0 0.0
    %6471 = vmatprep.subr.mxu0 0.0
    %6472 = vmatpush1.msra.mxu0 0.0
    %6473 = vmatprep.subr.mxu0 0.0
    %6474 = vmatpush1.msra.mxu0 0.0
    %6475 = vmatprep.subr.mxu0 0.0
    %6476 = vmatpush1.msra.mxu0 0.0
    %6477 = vmatprep.subr.mxu0 0.0
    %6478 = vmatpush1.msra.mxu0 0.0
    %6479 = vmatprep.subr.mxu0 0.0
    %6480 = vmatpush1.msra.mxu0 0.0
    %6481 = vmatprep.subr.mxu0 0.0
    %6482 = vmatpush1.msra.mxu0 0.0
    %6483 = vmatprep.subr.mxu0 0.0
    %6484 = vmatpush1.msra.mxu0 0.0
    %6485 = vmatprep.subr.mxu0 0.0
    %6486 = vmatpush1.msra.mxu0 0.0
    %6487 = vmatprep.subr.mxu0 0.0
    %6488 = vmatpush1.msra.mxu0 0.0
    %6489 = vmatprep.subr.mxu0 0.0
    %6490 = vmatpush1.msra.mxu0 0.0
    %6491 = vmatprep.subr.mxu0 0.0
    %6492 = vmatpush1.msra.mxu0 0.0
    %6493 = vmatprep.mubr.f32.mxu0 0.0
    %6494 = vmatmul.mubr.f32.gmra.mrb[0].mxu0 %v6427
    %v6495 = vpop.f32.mrb[0].mxu0
    %v6496 = vadd.f32 0.0, %v6495
    %v6497 = vpop.f32.mrb[0].mxu0
    %6498 = vdwg.mxu0
    %v6500 = vrot.slane %v6496, 1
    %v6501 = vrot.slane %v6496, 2
    %v6504 = vadd.f32 %v2327, %v6500
    %v6505 = vadd.f32 %v2331, %v6501
    %v6506 = vxor.u32 %v6504, 2147483648
    %v6507 = vxor.u32 %v6505, 2147483648
    %v6508 = vmul.f32 %v6506, 1.442695
    %v6509 = vpow.pop %v6508
    %v6510 = vmul.f32 %v6507, 1.442695
    %v6511 = vpow.pop %v6510
    %v6512 = vadd.f32 %v6509, 1.0
    %v6513 = vadd.f32 %v6511, 1.0
    %v6514 = vrcp.pop %v6512
    %v6515 = vmul.f32 1.0, %v6514
    %v6516 = vrcp.pop %v6513
    %v6517 = vmul.f32 1.0, %v6516
    %v6518 = vtanh.pop %v6504
    %v6519 = vtanh.pop %v6505
    %v6522 = vrot.slane %v5958, 7
    %v6523 = vrot.slane %v5959, 7
    %v6526 = vmul.f32 %v6515, %v6522
    %v6527 = vmul.f32 %v6517, %v6523
    %6530 = vrot.lane.b32.xlu0 %v6518, 64
    %v6531 = vpop.permute.xlu0 %6530
    %6532 = vrot.lane.b32.xlu0 %v6519, 64
    %v6533 = vpop.permute.xlu0 %6532
    %v6536 = vmul.f32 %v6515, %v6531
    %v6537 = vmul.f32 %v6517, %v6533
    %6540 = vrot.lane.b32.xlu0 %v6536, 32
    %v6541 = vpop.permute.xlu0 %6540
    %6542 = vrot.lane.b32.xlu0 %v6537, 32
    %v6543 = vpop.permute.xlu0 %6542
    %v6546 = vadd.f32 %v6526, %v6541
    %v6547 = vadd.f32 %v6527, %v6543
    %v6548 = vtanh.pop %v6546
    %v6549 = vtanh.pop %v6547
    %6552 = vrot.lane.b32.xlu0 %v6548, 64
    %v6553 = vpop.permute.xlu0 %6552
    %6554 = vrot.lane.b32.xlu0 %v6549, 64
    %v6555 = vpop.permute.xlu0 %6554
    %v6558 = vmul.f32 %v6515, %v6553
    %v6559 = vmul.f32 %v6517, %v6555
    %6562 = vrot.lane.b32.xlu0 %v6558, 32
    %v6563 = vpop.permute.xlu0 %6562
    %6564 = vrot.lane.b32.xlu0 %v6559, 32
    %v6565 = vpop.permute.xlu0 %6564
    %vm6568 = vcmask 261127
    %6569 = vst.msk [vmem:[#allocation2] sm:$0x80] %vm6568, %v6563
    %6570 = vst.msk [vmem:[#allocation2 + $0x8] sm:$0x80] %vm6568, %v6565
    %v6571 = vrot.slane %v6118, 1
    %v6572 = vsel %vm2890, %v6119, %v6571
    %6573 = vrot.lane.b32.xlu0 %v6572, 32
    %v6574 = vpop.permute.xlu0 %6573
    %v6575 = vsel %vm2351, %v6574, 0
    %6577 = vmatprep.subr.mxu0 0.0
    %6578 = vmatpush1.msra.mxu0 %v2339
    %6579 = vmatprep.subr.mxu0 0.0
    %6580 = vmatpush1.msra.mxu0 %v2340
    %6581 = vmatprep.subr.mxu0 0.0
    %6582 = vmatpush1.msra.mxu0 %v2341
    %6583 = vmatprep.subr.mxu0 0.0
    %6584 = vmatpush1.msra.mxu0 %v2342
    %6585 = vmatprep.subr.mxu0 0.0
    %6586 = vmatpush1.msra.mxu0 0.0
    %6587 = vmatprep.subr.mxu0 0.0
    %6588 = vmatpush1.msra.mxu0 0.0
    %6589 = vmatprep.subr.mxu0 0.0
    %6590 = vmatpush1.msra.mxu0 0.0
    %6591 = vmatprep.subr.mxu0 0.0
    %6592 = vmatpush1.msra.mxu0 0.0
    %6593 = vmatprep.subr.mxu0 0.0
    %6594 = vmatpush1.msra.mxu0 0.0
    %6595 = vmatprep.subr.mxu0 0.0
    %6596 = vmatpush1.msra.mxu0 0.0
    %6597 = vmatprep.subr.mxu0 0.0
    %6598 = vmatpush1.msra.mxu0 0.0
    %6599 = vmatprep.subr.mxu0 0.0
    %6600 = vmatpush1.msra.mxu0 0.0
    %6601 = vmatprep.subr.mxu0 0.0
    %6602 = vmatpush1.msra.mxu0 0.0
    %6603 = vmatprep.subr.mxu0 0.0
    %6604 = vmatpush1.msra.mxu0 0.0
    %6605 = vmatprep.subr.mxu0 0.0
    %6606 = vmatpush1.msra.mxu0 0.0
    %6607 = vmatprep.subr.mxu0 0.0
    %6608 = vmatpush1.msra.mxu0 0.0
    %6609 = vmatprep.subr.mxu0 0.0
    %6610 = vmatpush1.msra.mxu0 0.0
    %6611 = vmatprep.subr.mxu0 0.0
    %6612 = vmatpush1.msra.mxu0 0.0
    %6613 = vmatprep.subr.mxu0 0.0
    %6614 = vmatpush1.msra.mxu0 0.0
    %6615 = vmatprep.subr.mxu0 0.0
    %6616 = vmatpush1.msra.mxu0 0.0
    %6617 = vmatprep.subr.mxu0 0.0
    %6618 = vmatpush1.msra.mxu0 0.0
    %6619 = vmatprep.subr.mxu0 0.0
    %6620 = vmatpush1.msra.mxu0 0.0
    %6621 = vmatprep.subr.mxu0 0.0
    %6622 = vmatpush1.msra.mxu0 0.0
    %6623 = vmatprep.subr.mxu0 0.0
    %6624 = vmatpush1.msra.mxu0 0.0
    %6625 = vmatprep.subr.mxu0 0.0
    %6626 = vmatpush1.msra.mxu0 0.0
    %6627 = vmatprep.subr.mxu0 0.0
    %6628 = vmatpush1.msra.mxu0 0.0
    %6629 = vmatprep.subr.mxu0 0.0
    %6630 = vmatpush1.msra.mxu0 0.0
    %6631 = vmatprep.subr.mxu0 0.0
    %6632 = vmatpush1.msra.mxu0 0.0
    %6633 = vmatprep.subr.mxu0 0.0
    %6634 = vmatpush1.msra.mxu0 0.0
    %6635 = vmatprep.subr.mxu0 0.0
    %6636 = vmatpush1.msra.mxu0 0.0
    %6637 = vmatprep.subr.mxu0 0.0
    %6638 = vmatpush1.msra.mxu0 0.0
    %6639 = vmatprep.subr.mxu0 0.0
    %6640 = vmatpush1.msra.mxu0 0.0
    %6641 = vmatprep.mubr.f32.mxu0 0.0
    %6642 = vmatmul.mubr.f32.gmra.mrb[0].mxu0 %v6575
    %v6643 = vpop.f32.mrb[0].mxu0
    %v6644 = vadd.f32 0.0, %v6643
    %v6645 = vpop.f32.mrb[0].mxu0
    %6646 = vdwg.mxu0
    %v6648 = vrot.slane %v6644, 1
    %v6651 = vadd.f32 %v2328, %v6644
    %v6652 = vadd.f32 %v2332, %v6648
    %v6653 = vxor.u32 %v6651, 2147483648
    %v6654 = vxor.u32 %v6652, 2147483648
    %v6655 = vmul.f32 %v6653, 1.442695
    %v6656 = vpow.pop %v6655
    %v6657 = vmul.f32 %v6654, 1.442695
    %v6658 = vpow.pop %v6657
    %v6659 = vadd.f32 %v6656, 1.0
    %v6660 = vadd.f32 %v6658, 1.0
    %v6661 = vrcp.pop %v6659
    %v6662 = vmul.f32 1.0, %v6661
    %v6663 = vrcp.pop %v6660
    %v6664 = vmul.f32 1.0, %v6663
    %v6665 = vtanh.pop %v6651
    %v6666 = vtanh.pop %v6652
    %v6669 = vrot.slane %v6106, 1
    %v6670 = vrot.slane %v6107, 1
    %v6673 = vmul.f32 %v6662, %v6669
    %v6674 = vmul.f32 %v6664, %v6670
    %6677 = vrot.lane.b32.xlu0 %v6665, 64
    %v6678 = vpop.permute.xlu0 %6677
    %6679 = vrot.lane.b32.xlu0 %v6666, 64
    %v6680 = vpop.permute.xlu0 %6679
    %v6683 = vmul.f32 %v6662, %v6678
    %v6684 = vmul.f32 %v6664, %v6680
    %6687 = vrot.lane.b32.xlu0 %v6683, 32
    %v6688 = vpop.permute.xlu0 %6687
    %6689 = vrot.lane.b32.xlu0 %v6684, 32
    %v6690 = vpop.permute.xlu0 %6689
    %v6693 = vadd.f32 %v6673, %v6688
    %v6694 = vadd.f32 %v6674, %v6690
    %v6695 = vtanh.pop %v6693
    %v6696 = vtanh.pop %v6694
    %6699 = vrot.lane.b32.xlu0 %v6695, 64
    %v6700 = vpop.permute.xlu0 %6699
    %6701 = vrot.lane.b32.xlu0 %v6696, 64
    %v6702 = vpop.permute.xlu0 %6701
    %v6705 = vmul.f32 %v6662, %v6700
    %v6706 = vmul.f32 %v6664, %v6702
    %6709 = vrot.lane.b32.xlu0 %v6705, 64
    %v6710 = vpop.permute.xlu0 %6709
    %6711 = vrot.lane.b32.xlu0 %v6706, 64
    %v6712 = vpop.permute.xlu0 %6711
    %vm6715 = vcmask 516352
    %6716 = vst.msk [vmem:[#allocation2] sm:$0x1] %vm6715, %v6710
    %6717 = vst.msk [vmem:[#allocation2 + $0x8] sm:$0x1] %vm6715, %v6712
    %v6718 = vrot.slane %v6267, 6
    %v6719 = vrot.slane %v6268, 5
    %v6720 = vsel %vm2890, %v6719, %v6718
    %6721 = vrot.lane.b32.xlu0 %v6720, 32
    %v6722 = vpop.permute.xlu0 %6721
    %v6723 = vsel %vm2351, %v6722, 0
    %6725 = vmatprep.subr.mxu0 0.0
    %6726 = vmatpush1.msra.mxu0 %v2343
    %6727 = vmatprep.subr.mxu0 0.0
    %6728 = vmatpush1.msra.mxu0 %v2344
    %6729 = vmatprep.subr.mxu0 0.0
    %6730 = vmatpush1.msra.mxu0 %v2345
    %6731 = vmatprep.subr.mxu0 0.0
    %6732 = vmatpush1.msra.mxu0 %v2346
    %6733 = vmatprep.subr.mxu0 0.0
    %6734 = vmatpush1.msra.mxu0 0.0
    %6735 = vmatprep.subr.mxu0 0.0
    %6736 = vmatpush1.msra.mxu0 0.0
    %6737 = vmatprep.subr.mxu0 0.0
    %6738 = vmatpush1.msra.mxu0 0.0
    %6739 = vmatprep.subr.mxu0 0.0
    %6740 = vmatpush1.msra.mxu0 0.0
    %6741 = vmatprep.subr.mxu0 0.0
    %6742 = vmatpush1.msra.mxu0 0.0
    %6743 = vmatprep.subr.mxu0 0.0
    %6744 = vmatpush1.msra.mxu0 0.0
    %6745 = vmatprep.subr.mxu0 0.0
    %6746 = vmatpush1.msra.mxu0 0.0
    %6747 = vmatprep.subr.mxu0 0.0
    %6748 = vmatpush1.msra.mxu0 0.0
    %6749 = vmatprep.subr.mxu0 0.0
    %6750 = vmatpush1.msra.mxu0 0.0
    %6751 = vmatprep.subr.mxu0 0.0
    %6752 = vmatpush1.msra.mxu0 0.0
    %6753 = vmatprep.subr.mxu0 0.0
    %6754 = vmatpush1.msra.mxu0 0.0
    %6755 = vmatprep.subr.mxu0 0.0
    %6756 = vmatpush1.msra.mxu0 0.0
    %6757 = vmatprep.subr.mxu0 0.0
    %6758 = vmatpush1.msra.mxu0 0.0
    %6759 = vmatprep.subr.mxu0 0.0
    %6760 = vmatpush1.msra.mxu0 0.0
    %6761 = vmatprep.subr.mxu0 0.0
    %6762 = vmatpush1.msra.mxu0 0.0
    %6763 = vmatprep.subr.mxu0 0.0
    %6764 = vmatpush1.msra.mxu0 0.0
    %6765 = vmatprep.subr.mxu0 0.0
    %6766 = vmatpush1.msra.mxu0 0.0
    %6767 = vmatprep.subr.mxu0 0.0
    %6768 = vmatpush1.msra.mxu0 0.0
    %6769 = vmatprep.subr.mxu0 0.0
    %6770 = vmatpush1.msra.mxu0 0.0
    %6771 = vmatprep.subr.mxu0 0.0
    %6772 = vmatpush1.msra.mxu0 0.0
    %6773 = vmatprep.subr.mxu0 0.0
    %6774 = vmatpush1.msra.mxu0 0.0
    %6775 = vmatprep.subr.mxu0 0.0
    %6776 = vmatpush1.msra.mxu0 0.0
    %6777 = vmatprep.subr.mxu0 0.0
    %6778 = vmatpush1.msra.mxu0 0.0
    %6779 = vmatprep.subr.mxu0 0.0
    %6780 = vmatpush1.msra.mxu0 0.0
    %6781 = vmatprep.subr.mxu0 0.0
    %6782 = vmatpush1.msra.mxu0 0.0
    %6783 = vmatprep.subr.mxu0 0.0
    %6784 = vmatpush1.msra.mxu0 0.0
    %6785 = vmatprep.subr.mxu0 0.0
    %6786 = vmatpush1.msra.mxu0 0.0
    %6787 = vmatprep.subr.mxu0 0.0
    %6788 = vmatpush1.msra.mxu0 0.0
    %6789 = vmatprep.mubr.f32.mxu0 0.0
    %6790 = vmatmul.mubr.f32.gmra.mrb[0].mxu0 %v6723
    %v6791 = vpop.f32.mrb[0].mxu0
    %v6792 = vadd.f32 0.0, %v6791
    %v6793 = vpop.f32.mrb[0].mxu0
    %6794 = vdwg.mxu0
    %v6796 = vrot.slane %v6792, 1
    %v6797 = vrot.slane %v6792, 2
    %v6800 = vadd.f32 %v2329, %v6796
    %v6801 = vadd.f32 %v2333, %v6797
    %v6802 = vxor.u32 %v6800, 2147483648
    %v6803 = vxor.u32 %v6801, 2147483648
    %v6804 = vmul.f32 %v6802, 1.442695
    %v6805 = vpow.pop %v6804
    %v6806 = vmul.f32 %v6803, 1.442695
    %v6807 = vpow.pop %v6806
    %v6808 = vadd.f32 %v6805, 1.0
    %v6809 = vadd.f32 %v6807, 1.0
    %v6810 = vrcp.pop %v6808
    %v6811 = vmul.f32 1.0, %v6810
    %v6812 = vrcp.pop %v6809
    %v6813 = vmul.f32 1.0, %v6812
    %v6814 = vtanh.pop %v6800
    %v6815 = vtanh.pop %v6801
    %v6818 = vrot.slane %v6255, 7
    %v6819 = vrot.slane %v6256, 7
    %v6822 = vmul.f32 %v6811, %v6818
    %v6823 = vmul.f32 %v6813, %v6819
    %6826 = vrot.lane.b32.xlu0 %v6814, 64
    %v6827 = vpop.permute.xlu0 %6826
    %6828 = vrot.lane.b32.xlu0 %v6815, 64
    %v6829 = vpop.permute.xlu0 %6828
    %v6832 = vmul.f32 %v6811, %v6827
    %v6833 = vmul.f32 %v6813, %v6829
    %6836 = vrot.lane.b32.xlu0 %v6832, 32
    %v6837 = vpop.permute.xlu0 %6836
    %6838 = vrot.lane.b32.xlu0 %v6833, 32
    %v6839 = vpop.permute.xlu0 %6838
    %v6842 = vadd.f32 %v6822, %v6837
    %v6843 = vadd.f32 %v6823, %v6839
    %v6844 = vtanh.pop %v6842
    %v6845 = vtanh.pop %v6843
    %6848 = vrot.lane.b32.xlu0 %v6844, 64
    %v6849 = vpop.permute.xlu0 %6848
    %6850 = vrot.lane.b32.xlu0 %v6845, 64
    %v6851 = vpop.permute.xlu0 %6850
    %v6854 = vmul.f32 %v6811, %v6849
    %v6855 = vmul.f32 %v6813, %v6851
    %6858 = vrot.lane.b32.xlu0 %v6854, 96
    %v6859 = vpop.permute.xlu0 %6858
    %6860 = vrot.lane.b32.xlu0 %v6855, 96
    %v6861 = vpop.permute.xlu0 %6860
    %vm6864 = vcmask 785927
    %6865 = vst.msk [vmem:[#allocation2] sm:$0x80] %vm6864, %v6859
    %6866 = vst.msk [vmem:[#allocation2 + $0x8] sm:$0x80] %vm6864, %v6861
    %v6869 = vrot.slane %v6417, 1
    %v6870 = vsel %vm2890, %v6418, %v6869
    %6871 = vrot.lane.b32.xlu0 %v6870, 32
    %v6872 = vpop.permute.xlu0 %6871
    %v6873 = vsel %vm2351, %v6872, 0
    %6875 = vmatprep.subr.mxu0 0.0
    %6876 = vmatpush1.msra.mxu0 %v2347
    %6877 = vmatprep.subr.mxu0 0.0
    %6878 = vmatpush1.msra.mxu0 %v2348
    %6879 = vmatprep.subr.mxu0 0.0
    %6880 = vmatpush1.msra.mxu0 %v2349
    %6881 = vmatprep.subr.mxu0 0.0
    %6882 = vmatpush1.msra.mxu0 %v2350
    %6883 = vmatprep.subr.mxu0 0.0
    %6884 = vmatpush1.msra.mxu0 0.0
    %6885 = vmatprep.subr.mxu0 0.0
    %6886 = vmatpush1.msra.mxu0 0.0
    %6887 = vmatprep.subr.mxu0 0.0
    %6888 = vmatpush1.msra.mxu0 0.0
    %6889 = vmatprep.subr.mxu0 0.0
    %6890 = vmatpush1.msra.mxu0 0.0
    %6891 = vmatprep.subr.mxu0 0.0
    %6892 = vmatpush1.msra.mxu0 0.0
    %6893 = vmatprep.subr.mxu0 0.0
    %6894 = vmatpush1.msra.mxu0 0.0
    %6895 = vmatprep.subr.mxu0 0.0
    %6896 = vmatpush1.msra.mxu0 0.0
    %6897 = vmatprep.subr.mxu0 0.0
    %6898 = vmatpush1.msra.mxu0 0.0
    %6899 = vmatprep.subr.mxu0 0.0
    %6900 = vmatpush1.msra.mxu0 0.0
    %6901 = vmatprep.subr.mxu0 0.0
    %6902 = vmatpush1.msra.mxu0 0.0
    %6903 = vmatprep.subr.mxu0 0.0
    %6904 = vmatpush1.msra.mxu0 0.0
    %6905 = vmatprep.subr.mxu0 0.0
    %6906 = vmatpush1.msra.mxu0 0.0
    %6907 = vmatprep.subr.mxu0 0.0
    %6908 = vmatpush1.msra.mxu0 0.0
    %6909 = vmatprep.subr.mxu0 0.0
    %6910 = vmatpush1.msra.mxu0 0.0
    %6911 = vmatprep.subr.mxu0 0.0
    %6912 = vmatpush1.msra.mxu0 0.0
    %6913 = vmatprep.subr.mxu0 0.0
    %6914 = vmatpush1.msra.mxu0 0.0
    %6915 = vmatprep.subr.mxu0 0.0
    %6916 = vmatpush1.msra.mxu0 0.0
    %6917 = vmatprep.subr.mxu0 0.0
    %6918 = vmatpush1.msra.mxu0 0.0
    %6919 = vmatprep.subr.mxu0 0.0
    %6920 = vmatpush1.msra.mxu0 0.0
    %6921 = vmatprep.subr.mxu0 0.0
    %6922 = vmatpush1.msra.mxu0 0.0
    %6923 = vmatprep.subr.mxu0 0.0
    %6924 = vmatpush1.msra.mxu0 0.0
    %6925 = vmatprep.subr.mxu0 0.0
    %6926 = vmatpush1.msra.mxu0 0.0
    %6927 = vmatprep.subr.mxu0 0.0
    %6928 = vmatpush1.msra.mxu0 0.0
    %6929 = vmatprep.subr.mxu0 0.0
    %6930 = vmatpush1.msra.mxu0 0.0
    %6931 = vmatprep.subr.mxu0 0.0
    %6932 = vmatpush1.msra.mxu0 0.0
    %6933 = vmatprep.subr.mxu0 0.0
    %6934 = vmatpush1.msra.mxu0 0.0
    %6935 = vmatprep.subr.mxu0 0.0
    %6936 = vmatpush1.msra.mxu0 0.0
    %6937 = vmatprep.subr.mxu0 0.0
    %6938 = vmatpush1.msra.mxu0 0.0
    %6939 = vmatprep.mubr.f32.mxu0 0.0
    %6940 = vmatmul.mubr.f32.gmra.mrb[0].mxu0 %v6873
    %v6941 = vpop.f32.mrb[0].mxu0
    %v6942 = vadd.f32 0.0, %v6941
    %v6943 = vpop.f32.mrb[0].mxu0
    %6944 = vdwg.mxu0
    %v6946 = vrot.slane %v6942, 1
    %v6949 = vadd.f32 %v2330, %v6942
    %v6950 = vadd.f32 %v2334, %v6946
    %v6951 = vxor.u32 %v6949, 2147483648
    %v6952 = vxor.u32 %v6950, 2147483648
    %v6953 = vmul.f32 %v6951, 1.442695
    %v6954 = vpow.pop %v6953
    %v6955 = vmul.f32 %v6952, 1.442695
    %v6956 = vpow.pop %v6955
    %v6957 = vadd.f32 %v6954, 1.0
    %v6958 = vadd.f32 %v6956, 1.0
    %v6959 = vrcp.pop %v6957
    %v6960 = vmul.f32 1.0, %v6959
    %v6961 = vrcp.pop %v6958
    %v6962 = vmul.f32 1.0, %v6961
    %v6963 = vtanh.pop %v6949
    %v6964 = vtanh.pop %v6950
    %v6967 = vrot.slane %v6405, 1
    %v6968 = vrot.slane %v6406, 1
    %v6971 = vmul.f32 %v6960, %v6967
    %v6972 = vmul.f32 %v6962, %v6968
    %6975 = vrot.lane.b32.xlu0 %v6963, 64
    %v6976 = vpop.permute.xlu0 %6975
    %6977 = vrot.lane.b32.xlu0 %v6964, 64
    %v6978 = vpop.permute.xlu0 %6977
    %v6981 = vmul.f32 %v6960, %v6976
    %v6982 = vmul.f32 %v6962, %v6978
    %6985 = vrot.lane.b32.xlu0 %v6981, 32
    %v6986 = vpop.permute.xlu0 %6985
    %6987 = vrot.lane.b32.xlu0 %v6982, 32
    %v6988 = vpop.permute.xlu0 %6987
    %v6991 = vadd.f32 %v6971, %v6986
    %v6992 = vadd.f32 %v6972, %v6988
    %v6993 = vtanh.pop %v6991
    %v6994 = vtanh.pop %v6992
    %6997 = vrot.lane.b32.xlu0 %v6993, 64
    %v6998 = vpop.permute.xlu0 %6997
    %6999 = vrot.lane.b32.xlu0 %v6994, 64
    %v7000 = vpop.permute.xlu0 %6999
    %v7003 = vmul.f32 %v6960, %v6998
    %v7004 = vmul.f32 %v6962, %v7000
    %vm7005 = vcmask 1041152
    %7006 = vst.msk [vmem:[#allocation2] sm:$0x1] %vm7005, %v7003
    %7007 = vst.msk [vmem:[#allocation2 + $0x8] sm:$0x1] %vm7005, %v7004
    %v7008 = vld [vmem:[#allocation2] sm:$0xff]
    %v7009 = vld [vmem:[#allocation2 + $0x8] sm:$0xff]
    %v7010 = vld [vmem:[%s4] sm:$0xff]
    %v7011 = vld [vmem:[%s4 + $0x8] sm:$0xff]
    %v7012 = vld [vmem:[%s4 + $0x10] sm:$0xff]
    %v7013 = vld [vmem:[%s4 + $0x18] sm:$0xff]
    %v7014 = vld [vmem:[%s4 + $0x20] sm:$0xff]
    %v7015 = vld [vmem:[%s4 + $0x28] sm:$0xff]
    %v7016 = vld [vmem:[%s4 + $0x30] sm:$0xff]
    %v7017 = vld [vmem:[%s4 + $0x38] sm:$0xff]
    %vm7018 = vcmask 523264
    %v7020 = vsel %vm7018, %v7008, 0
    %v7023 = vsel %vm7018, %v7009, 0
    %7025 = vmatprep.subr.mxu0 0.0
    %7026 = vmatpush1.msra.mxu0 %v7010
    %7027 = vmatprep.subr.mxu0 0.0
    %7028 = vmatpush1.msra.mxu0 %v7011
    %7029 = vmatprep.subr.mxu0 0.0
    %7030 = vmatpush1.msra.mxu0 %v7012
    %7031 = vmatprep.subr.mxu0 0.0
    %7032 = vmatpush1.msra.mxu0 %v7013
    %7033 = vmatprep.subr.mxu0 0.0
    %7034 = vmatpush1.msra.mxu0 %v7014
    %7035 = vmatprep.subr.mxu0 0.0
    %7036 = vmatpush1.msra.mxu0 %v7015
    %7037 = vmatprep.subr.mxu0 0.0
    %7038 = vmatpush1.msra.mxu0 %v7016
    %7039 = vmatprep.subr.mxu0 0.0
    %7040 = vmatpush1.msra.mxu0 %v7017
    %7041 = vmatprep.subr.mxu0 0.0
    %7042 = vmatpush1.msra.mxu0 0.0
    %7043 = vmatprep.subr.mxu0 0.0
    %7044 = vmatpush1.msra.mxu0 0.0
    %7045 = vmatprep.subr.mxu0 0.0
    %7046 = vmatpush1.msra.mxu0 0.0
    %7047 = vmatprep.subr.mxu0 0.0
    %7048 = vmatpush1.msra.mxu0 0.0
    %7049 = vmatprep.subr.mxu0 0.0
    %7050 = vmatpush1.msra.mxu0 0.0
    %7051 = vmatprep.subr.mxu0 0.0
    %7052 = vmatpush1.msra.mxu0 0.0
    %7053 = vmatprep.subr.mxu0 0.0
    %7054 = vmatpush1.msra.mxu0 0.0
    %7055 = vmatprep.subr.mxu0 0.0
    %7056 = vmatpush1.msra.mxu0 0.0
    %7057 = vmatprep.subr.mxu0 0.0
    %7058 = vmatpush1.msra.mxu0 0.0
    %7059 = vmatprep.subr.mxu0 0.0
    %7060 = vmatpush1.msra.mxu0 0.0
    %7061 = vmatprep.subr.mxu0 0.0
    %7062 = vmatpush1.msra.mxu0 0.0
    %7063 = vmatprep.subr.mxu0 0.0
    %7064 = vmatpush1.msra.mxu0 0.0
    %7065 = vmatprep.subr.mxu0 0.0
    %7066 = vmatpush1.msra.mxu0 0.0
    %7067 = vmatprep.subr.mxu0 0.0
    %7068 = vmatpush1.msra.mxu0 0.0
    %7069 = vmatprep.subr.mxu0 0.0
    %7070 = vmatpush1.msra.mxu0 0.0
    %7071 = vmatprep.subr.mxu0 0.0
    %7072 = vmatpush1.msra.mxu0 0.0
    %7073 = vmatprep.subr.mxu0 0.0
    %7074 = vmatpush1.msra.mxu0 0.0
    %7075 = vmatprep.subr.mxu0 0.0
    %7076 = vmatpush1.msra.mxu0 0.0
    %7077 = vmatprep.subr.mxu0 0.0
    %7078 = vmatpush1.msra.mxu0 0.0
    %7079 = vmatprep.subr.mxu0 0.0
    %7080 = vmatpush1.msra.mxu0 0.0
    %7081 = vmatprep.subr.mxu0 0.0
    %7082 = vmatpush1.msra.mxu0 0.0
    %7083 = vmatprep.subr.mxu0 0.0
    %7084 = vmatpush1.msra.mxu0 0.0
    %7085 = vmatprep.subr.mxu0 0.0
    %7086 = vmatpush1.msra.mxu0 0.0
    %7087 = vmatprep.subr.mxu0 0.0
    %7088 = vmatpush1.msra.mxu0 0.0
    %7089 = vmatprep.mubr.f32.mxu0 0.0
    %7090 = vmatmul.mubr.f32.gmra.mrb[0].mxu0 %v7020
    %v7091 = vpop.f32.mrb[0].mxu0
    %v7092 = vadd.f32 0.0, %v7091
    %v7093 = vpop.f32.mrb[0].mxu0
    %7094 = vmatprep.mubr.f32.mxu0 0.0
    %7095 = vmatmul.mubr.f32.gmra.mrb[0].mxu0 %v7023
    %v7096 = vpop.f32.mrb[0].mxu0
    %v7097 = vadd.f32 0.0, %v7096
    %v7098 = vpop.f32.mrb[0].mxu0
    %7099 = vdwg.mxu0
    %vm7100 = vcmask 7168
    %v7101 = vsel %vm7100, %v7092, -inf
    %v7102 = vrot.slane %v7101, 4
    %v7103 = vmax.f32 %v7101, %v7102
    %v7104 = vrot.slane %v7103, 2
    %v7105 = vmax.f32 %v7103, %v7104
    %v7106 = vrot.slane %v7105, 1
    %v7107 = vmax.f32 %v7105, %v7106
    %v7108 = vsel %vm7100, %v7097, -inf
    %v7109 = vrot.slane %v7108, 4
    %v7110 = vmax.f32 %v7108, %v7109
    %v7111 = vrot.slane %v7110, 2
    %v7112 = vmax.f32 %v7110, %v7111
    %v7113 = vrot.slane %v7112, 1
    %v7114 = vmax.f32 %v7112, %v7113
    %v7115 = vsub.f32 %v7092, %v7107
    %v7116 = vsub.f32 %v7097, %v7114
    %v7117 = vmul.f32 %v7115, 1.442695
    %v7118 = vpow.pop %v7117
    %v7119 = vmul.f32 %v7116, 1.442695
    %v7120 = vpow.pop %v7119
    %v7121 = vsel %vm7100, %v7118, 0.0
    %v7122 = vrot.slane %v7121, 4
    %v7123 = vadd.f32 %v7121, %v7122
    %v7124 = vrot.slane %v7123, 2
    %v7125 = vadd.f32 %v7123, %v7124
    %v7126 = vrot.slane %v7125, 1
    %v7127 = vadd.f32 %v7125, %v7126
    %v7128 = vsel %vm7100, %v7120, 0.0
    %v7129 = vrot.slane %v7128, 4
    %v7130 = vadd.f32 %v7128, %v7129
    %v7131 = vrot.slane %v7130, 2
    %v7132 = vadd.f32 %v7130, %v7131
    %v7133 = vrot.slane %v7132, 1
    %v7134 = vadd.f32 %v7132, %v7133
    %v7135 = vrcp.pop %v7127
    %v7136 = vmul.f32 %v7118, %v7135
    %v7137 = vrcp.pop %v7134
    %v7138 = vmul.f32 %v7120, %v7137
    %v7139 = vld [vmem:[%s5] sm:$0xff]
    %v7140 = vld [vmem:[%s5 + $0x8] sm:$0xff]
    %v7141 = vld [vmem:[%s5 + $0x10] sm:$0xff]
    %v7142 = vld [vmem:[%s5 + $0x18] sm:$0xff]
    %v7143 = vld [vmem:[%s5 + $0x20] sm:$0xff]
    %v7144 = vld [vmem:[%s5 + $0x28] sm:$0xff]
    %v7145 = vld [vmem:[%s5 + $0x30] sm:$0xff]
    %v7146 = vld [vmem:[%s5 + $0x38] sm:$0xff]
    %7147 = vrot.lane.b32.xlu0 %v7008, 64
    %v7148 = vpop.permute.xlu0 %7147
    %7149 = vrot.lane.b32.xlu0 %v7009, 64
    %v7150 = vpop.permute.xlu0 %7149
    %v7151 = vsel %vm7018, %v7148, 0
    %v7153 = vsel %vm7018, %v7150, 0
    %7155 = vmatprep.subr.mxu0 0.0
    %7156 = vmatpush1.msra.mxu0 %v7139
    %7157 = vmatprep.subr.mxu0 0.0
    %7158 = vmatpush1.msra.mxu0 %v7140
    %7159 = vmatprep.subr.mxu0 0.0
    %7160 = vmatpush1.msra.mxu0 %v7141
    %7161 = vmatprep.subr.mxu0 0.0
    %7162 = vmatpush1.msra.mxu0 %v7142
    %7163 = vmatprep.subr.mxu0 0.0
    %7164 = vmatpush1.msra.mxu0 %v7143
    %7165 = vmatprep.subr.mxu0 0.0
    %7166 = vmatpush1.msra.mxu0 %v7144
    %7167 = vmatprep.subr.mxu0 0.0
    %7168 = vmatpush1.msra.mxu0 %v7145
    %7169 = vmatprep.subr.mxu0 0.0
    %7170 = vmatpush1.msra.mxu0 %v7146
    %7171 = vmatprep.subr.mxu0 0.0
    %7172 = vmatpush1.msra.mxu0 0.0
    %7173 = vmatprep.subr.mxu0 0.0
    %7174 = vmatpush1.msra.mxu0 0.0
    %7175 = vmatprep.subr.mxu0 0.0
    %7176 = vmatpush1.msra.mxu0 0.0
    %7177 = vmatprep.subr.mxu0 0.0
    %7178 = vmatpush1.msra.mxu0 0.0
    %7179 = vmatprep.subr.mxu0 0.0
    %7180 = vmatpush1.msra.mxu0 0.0
    %7181 = vmatprep.subr.mxu0 0.0
    %7182 = vmatpush1.msra.mxu0 0.0
    %7183 = vmatprep.subr.mxu0 0.0
    %7184 = vmatpush1.msra.mxu0 0.0
    %7185 = vmatprep.subr.mxu0 0.0
    %7186 = vmatpush1.msra.mxu0 0.0
    %7187 = vmatprep.subr.mxu0 0.0
    %7188 = vmatpush1.msra.mxu0 0.0
    %7189 = vmatprep.subr.mxu0 0.0
    %7190 = vmatpush1.msra.mxu0 0.0
    %7191 = vmatprep.subr.mxu0 0.0
    %7192 = vmatpush1.msra.mxu0 0.0
    %7193 = vmatprep.subr.mxu0 0.0
    %7194 = vmatpush1.msra.mxu0 0.0
    %7195 = vmatprep.subr.mxu0 0.0
    %7196 = vmatpush1.msra.mxu0 0.0
    %7197 = vmatprep.subr.mxu0 0.0
    %7198 = vmatpush1.msra.mxu0 0.0
    %7199 = vmatprep.subr.mxu0 0.0
    %7200 = vmatpush1.msra.mxu0 0.0
    %7201 = vmatprep.subr.mxu0 0.0
    %7202 = vmatpush1.msra.mxu0 0.0
    %7203 = vmatprep.subr.mxu0 0.0
    %7204 = vmatpush1.msra.mxu0 0.0
    %7205 = vmatprep.subr.mxu0 0.0
    %7206 = vmatpush1.msra.mxu0 0.0
    %7207 = vmatprep.subr.mxu0 0.0
    %7208 = vmatpush1.msra.mxu0 0.0
    %7209 = vmatprep.subr.mxu0 0.0
    %7210 = vmatpush1.msra.mxu0 0.0
    %7211 = vmatprep.subr.mxu0 0.0
    %7212 = vmatpush1.msra.mxu0 0.0
    %7213 = vmatprep.subr.mxu0 0.0
    %7214 = vmatpush1.msra.mxu0 0.0
    %7215 = vmatprep.subr.mxu0 0.0
    %7216 = vmatpush1.msra.mxu0 0.0
    %7217 = vmatprep.subr.mxu0 0.0
    %7218 = vmatpush1.msra.mxu0 0.0
    %7219 = vmatprep.mubr.f32.mxu0 0.0
    %7220 = vmatmul.mubr.f32.gmra.mrb[0].mxu0 %v7151
    %v7221 = vpop.f32.mrb[0].mxu0
    %v7222 = vadd.f32 0.0, %v7221
    %v7223 = vpop.f32.mrb[0].mxu0
    %7224 = vmatprep.mubr.f32.mxu0 0.0
    %7225 = vmatmul.mubr.f32.gmra.mrb[0].mxu0 %v7153
    %v7226 = vpop.f32.mrb[0].mxu0
    %v7227 = vadd.f32 0.0, %v7226
    %v7228 = vpop.f32.mrb[0].mxu0
    %7229 = vdwg.mxu0
    %v7230 = vtanh.pop %v7222
    %v7231 = vtanh.pop %v7227
    %v7232 = vmul.f32 %v2297, %v7230
    %v7233 = vmul.f32 %v2302, %v7231
    %7235 = vset.pattern.permute.xlu0 0
    %7236 = vperm.xlu0 %7235, %v7136
    %v7237 = vpop.permute.xlu0 %7236
    %7240 = vset.pattern.permute.xlu0 0
    %7241 = vperm.xlu0 %7240, %v7138
    %v7242 = vpop.permute.xlu0 %7241
    %v7244 = vmul.f32 %v7232, %v7237
    %v7245 = vmul.f32 %v7233, %v7242
    %v7246 = vsel %vm2351, %v7244, 0.0
    %v7247 = vrot.slane %v7246, 4
    %v7248 = vadd.f32 %v7246, %v7247
    %v7249 = vrot.slane %v7248, 2
    %v7250 = vadd.f32 %v7248, %v7249
    %v7251 = vrot.slane %v7250, 1
    %v7252 = vadd.f32 %v7250, %v7251
    %v7253 = vsel %vm2351, %v7245, 0.0
    %v7254 = vrot.slane %v7253, 4
    %v7255 = vadd.f32 %v7253, %v7254
    %v7256 = vrot.slane %v7255, 2
    %v7257 = vadd.f32 %v7255, %v7256
    %v7258 = vrot.slane %v7257, 1
    %v7259 = vadd.f32 %v7257, %v7258
    %v7260 = vld [vmem:[%s6] sm:$0xff]
    %v7261 = vld [vmem:[%s6 + $0x8] sm:$0xff]
    %v7262 = vld [vmem:[%s6 + $0x10] sm:$0xff]
    %v7263 = vld [vmem:[%s6 + $0x18] sm:$0xff]
    %v7266 = vsel %vm2890, %v7259, %v7252
    %v7267 = vsel %vm2351, %v7266, 0
    %7269 = vmatprep.subr.mxu0 0.0
    %7270 = vmatpush1.msra.mxu0 %v7260
    %7271 = vmatprep.subr.mxu0 0.0
    %7272 = vmatpush1.msra.mxu0 %v7261
    %7273 = vmatprep.subr.mxu0 0.0
    %7274 = vmatpush1.msra.mxu0 %v7262
    %7275 = vmatprep.subr.mxu0 0.0
    %7276 = vmatpush1.msra.mxu0 %v7263
    %7277 = vmatprep.subr.mxu0 0.0
    %7278 = vmatpush1.msra.mxu0 0.0
    %7279 = vmatprep.subr.mxu0 0.0
    %7280 = vmatpush1.msra.mxu0 0.0
    %7281 = vmatprep.subr.mxu0 0.0
    %7282 = vmatpush1.msra.mxu0 0.0
    %7283 = vmatprep.subr.mxu0 0.0
    %7284 = vmatpush1.msra.mxu0 0.0
    %7285 = vmatprep.subr.mxu0 0.0
    %7286 = vmatpush1.msra.mxu0 0.0
    %7287 = vmatprep.subr.mxu0 0.0
    %7288 = vmatpush1.msra.mxu0 0.0
    %7289 = vmatprep.subr.mxu0 0.0
    %7290 = vmatpush1.msra.mxu0 0.0
    %7291 = vmatprep.subr.mxu0 0.0
    %7292 = vmatpush1.msra.mxu0 0.0
    %7293 = vmatprep.subr.mxu0 0.0
    %7294 = vmatpush1.msra.mxu0 0.0
    %7295 = vmatprep.subr.mxu0 0.0
    %7296 = vmatpush1.msra.mxu0 0.0
    %7297 = vmatprep.subr.mxu0 0.0
    %7298 = vmatpush1.msra.mxu0 0.0
    %7299 = vmatprep.subr.mxu0 0.0
    %7300 = vmatpush1.msra.mxu0 0.0
    %7301 = vmatprep.subr.mxu0 0.0
    %7302 = vmatpush1.msra.mxu0 0.0
    %7303 = vmatprep.subr.mxu0 0.0
    %7304 = vmatpush1.msra.mxu0 0.0
    %7305 = vmatprep.subr.mxu0 0.0
    %7306 = vmatpush1.msra.mxu0 0.0
    %7307 = vmatprep.subr.mxu0 0.0
    %7308 = vmatpush1.msra.mxu0 0.0
    %7309 = vmatprep.subr.mxu0 0.0
    %7310 = vmatpush1.msra.mxu0 0.0
    %7311 = vmatprep.subr.mxu0 0.0
    %7312 = vmatpush1.msra.mxu0 0.0
    %7313 = vmatprep.subr.mxu0 0.0
    %7314 = vmatpush1.msra.mxu0 0.0
    %7315 = vmatprep.subr.mxu0 0.0
    %7316 = vmatpush1.msra.mxu0 0.0
    %7317 = vmatprep.subr.mxu0 0.0
    %7318 = vmatpush1.msra.mxu0 0.0
    %7319 = vmatprep.subr.mxu0 0.0
    %7320 = vmatpush1.msra.mxu0 0.0
    %7321 = vmatprep.subr.mxu0 0.0
    %7322 = vmatpush1.msra.mxu0 0.0
    %7323 = vmatprep.subr.mxu0 0.0
    %7324 = vmatpush1.msra.mxu0 0.0
    %7325 = vmatprep.subr.mxu0 0.0
    %7326 = vmatpush1.msra.mxu0 0.0
    %7327 = vmatprep.subr.mxu0 0.0
    %7328 = vmatpush1.msra.mxu0 0.0
    %7329 = vmatprep.subr.mxu0 0.0
    %7330 = vmatpush1.msra.mxu0 0.0
    %7331 = vmatprep.subr.mxu0 0.0
    %7332 = vmatpush1.msra.mxu0 0.0
    %7333 = vmatprep.mubr.f32.mxu0 0.0
    %7334 = vmatmul.mubr.f32.gmra.mrb[0].mxu0 %v7267
    %v7335 = vpop.f32.mrb[0].mxu0
    %v7336 = vadd.f32 0.0, %v7335
    %v7337 = vpop.f32.mrb[0].mxu0
    %7338 = vdwg.mxu0
    %vm7339 = vcmask 25600
    %7340 = vst.msk [vmem:[#allocation3] sm:$0x3] %vm7339, %v7336
    // Predicated region
    $region30: #{retain_forward.1} parent=1 // pred_check
      _
    $region31: #{retain_forward.1} parent=1 // pred_check_branch
      %7342 = sbr.rel (0) target = $region33
    $region32: #{retain_forward.1} parent=1 // pred_region
      %s7344 = ssub.s32 32, 32
      %7345 = vsyncadd [#allocation4], %s7344
      %s7347 = sshll.u32 [#allocation3], 4
      %s7348 = int_to_ptr.vmem [resolvable:$true] %s7347
      %7350 = dma.vmem_to_hbm [thread:$0]  %s7348, 32, %s7, [#allocation4]
    $region33: #{retain_forward.1} parent=1 // pred_fallthru
      _
    // Predicated region
    $region34: #{retain_forward.1} parent=1 // pred_check
      _
    $region35: #{retain_forward.1} parent=1 // pred_check_branch
      %7352 = sbr.rel (0) target = $region37
    $region36: #{retain_forward.1} parent=1 // pred_region
      %7353 = dma.done [#allocation4], 32
    $region37: #{retain_forward.1} parent=1 // pred_fallthru
      _
    %7354 = vsyncpa [#allocation4], 1

</llo_original>
